<compile_context>
chip_gen: v5e
topology: v5e:2x2
jax: 0.10.0
libtpu: 0.0.40
codegen_flags: <defaults>
</compile_context>

<pallas_src>
import jax
import jax.numpy as jnp
from jax.experimental import pallas as pl
from jax.experimental.pallas import tpu as pltpu

_LANE = 128
_SUB = 16                         # bf16 sublane packing for the M dimension
_TILE_M_MAX = 512
_VMEM_LIMIT = 32 * 1024 * 1024    # safe on v5e/v6e (128 MiB) and v7x (64 MiB)
_FUSED_BN_MAX_ELEMS = 512 * 512   # Mp*Np bound for the single-call BN path


def _round_up(x, m):
    return (x + m - 1) // m * m


def _cdiv(a, b):
    return (a + b - 1) // b


def _pad2(a, rows, cols):
    r, c = a.shape
    if r == rows and c == cols:
        return a
    return jnp.pad(a, ((0, rows - r), (0, cols - c)))


def _tiling(M):
    # >= 2 grid steps whenever M permits (feeds v7x's 2nd TensorCore) while
    # keeping M padding small for awkward sizes just above a tile boundary.
    tile_m = _round_up(_cdiv(M, max(2, _cdiv(M, _TILE_M_MAX))), _SUB)
    Mp = _round_up(M, tile_m)
    return tile_m, Mp, Mp // tile_m


def _params(sem):
    return pltpu.CompilerParams(dimension_semantics=sem,
                                vmem_limit_bytes=_VMEM_LIMIT)


# ----------------------------------------------------------------------------
# Pallas kernels
# ----------------------------------------------------------------------------
def _mm_bias_kernel(relu):
    def kernel(a_ref, w_ref, b_ref, o_ref):
        y = jnp.dot(a_ref[...], w_ref[...], preferred_element_type=jnp.float32)
        y = y + b_ref[...]
        if relu:
            y = jnp.maximum(y, 0.0)
        o_ref[...] = y.astype(o_ref.dtype)
    return kernel


def _mm_bn_fused_kernel(n_rows, eps, use_res):
    # Single-call fused path: matmul + exact batch stats + scale/shift
    # (+resid) (+masked ReLU).  Columns with mask==0 get out = y + shift.
    inv_n = 1.0 / float(n_rows)

    def kernel(*refs):
        if use_res:
            a_ref, w_ref, g_ref, b_ref, m_ref, r_ref, o_ref = refs
        else:
            a_ref, w_ref, g_ref, b_ref, m_ref, o_ref = refs
        y = jnp.dot(a_ref[...], w_ref[...], preferred_element_type=jnp.float32)
        # Padded rows of A are zero -> they contribute nothing to the sums;
        # divide by the TRUE row count.  Variance is centered + row-masked to
        # avoid the cancellation-prone E[x^2] - E[x]^2 form.
        mean = jnp.sum(y, axis=0, keepdims=True) * inv_n
        rows = jax.lax.broadcasted_iota(jnp.int32, y.shape, 0)
        d = jnp.where(rows < n_rows, y - mean, 0.0)
        var = jnp.sum(d * d, axis=0, keepdims=True) * inv_n
        inv = jax.lax.rsqrt(var + eps)
        mask = m_ref[...]
        scale = g_ref[...] * jnp.where(mask > 0, inv, 1.0)
        shift = b_ref[...] - jnp.where(mask > 0, mean, 0.0) * scale
        z = y * scale + shift
        if use_res:
            z = z + r_ref[...].astype(jnp.float32)
        z = jnp.where(mask > 0, jnp.maximum(z, 0.0), z)
        o_ref[...] = z.astype(o_ref.dtype)
    return kernel


def _mm_stats_kernel(a_ref, w_ref, y_ref, s_ref):
    # Fallback BN pass 1 (large M): matmul (bf16 store) + per-tile partial
    # channel stats written directly as two rows (no zero-pad concat).
    y = jnp.dot(a_ref[...], w_ref[...], preferred_element_type=jnp.float32)
    y_ref[...] = y.astype(y_ref.dtype)
    cs = jnp.sum(y, axis=0, keepdims=True)
    cq = jnp.sum(y * y, axis=0, keepdims=True)
    s_ref[0] = jnp.concatenate([cs, cq], axis=0)


def _bn_apply_kernel(use_res):
    # Fallback BN pass 2: scale/shift (+resid) (+masked ReLU), f32 math,
    # bf16 stores (store bytes are the binding resource, esp. on v5e).
    def kernel(*refs):
        if use_res:
            y_ref, sc_ref, sh_ref, m_ref, r_ref, o_ref = refs
        else:
            y_ref, sc_ref, sh_ref, m_ref, o_ref = refs
        z = y_ref[...].astype(jnp.float32) * sc_ref[...] + sh_ref[...]
        if use_res:
            z = z + r_ref[...].astype(jnp.float32)
        z = jnp.where(m_ref[...] > 0, jnp.maximum(z, 0.0), z)
        o_ref[...] = z.astype(o_ref.dtype)
    return kernel


# ----------------------------------------------------------------------------
# Fused matmul wrappers (padding, tiling, pallas_call plumbing)
# ----------------------------------------------------------------------------
def matmul_bias_act(a, w, bias, *, relu=False):
    """(M,K)@(K,N) + bias (+ReLU). bf16 MXU operands, f32 acc, bf16 stores."""
    M, K = a.shape
    _, N = w.shape
    Np = _round_up(N, _LANE)
    tile_m, Mp, grid_m = _tiling(M)
    ap = _pad2(a.astype(jnp.bfloat16), Mp, K)
    wp = _pad2(w.astype(jnp.bfloat16), K, Np)
    bp = jnp.pad(bias.astype(jnp.float32), (0, Np - N)).reshape(1, Np)
    out = pl.pallas_call(
        _mm_bias_kernel(relu),
        out_shape=jax.ShapeDtypeStruct((Mp, Np), jnp.bfloat16),
        grid=(grid_m,),
        in_specs=[pl.BlockSpec((tile_m, K), lambda i: (i, 0)),
                  pl.BlockSpec((K, Np), lambda i: (0, 0)),
                  pl.BlockSpec((1, Np), lambda i: (0, 0))],
        out_specs=pl.BlockSpec((tile_m, Np), lambda i: (i, 0)),
        compiler_params=_params(("parallel",)),
        cost_estimate=pl.CostEstimate(
            flops=2 * Mp * K * Np, transcendentals=0,
            bytes_accessed=2 * Mp * K + 2 * K * Np + 4 * Np + 2 * Mp * Np),
    )(ap, wp, bp)
    return out[:M, :N]


def matmul_bn_act(a, w, gamma, beta, bn_mask, resid=None, *, eps=1e-5):
    """(M,K)@(K,N), then per output column:
         bn_mask==1 : training-mode BatchNorm(gamma,beta) (+resid) + ReLU
         bn_mask==0 : y + beta   (plain bias, e.g. the fused 1x1 skip conv)
       Returns (M,N) bf16.  All BN/stat math stays in f32."""
    M, K = a.shape
    _, N = w.shape
    Np = _round_up(N, _LANE)
    g = jnp.pad(gamma.astype(jnp.float32), (0, Np - N)).reshape(1, Np)
    b = jnp.pad(beta.astype(jnp.float32), (0, Np - N)).reshape(1, Np)
    m = jnp.pad(bn_mask.astype(jnp.float32), (0, Np - N)).reshape(1, Np)
    wp = _pad2(w.astype(jnp.bfloat16), K, Np)
    use_res = resid is not None

    Mp1 = _round_up(M, _SUB)
    if Mp1 * Np <= _FUSED_BN_MAX_ELEMS:
        # Single fused pallas_call: activation never round-trips HBM between
        # the matmul and the BN epilogue.
        ap = _pad2(a.astype(jnp.bfloat16), Mp1, K)
        ins = [ap, wp, g, b, m]
        in_specs = [pl.BlockSpec((Mp1, K), lambda i: (0, 0)),
                    pl.BlockSpec((K, Np), lambda i: (0, 0)),
                    pl.BlockSpec((1, Np), lambda i: (0, 0)),
                    pl.BlockSpec((1, Np), lambda i: (0, 0)),
                    pl.BlockSpec((1, Np), lambda i: (0, 0))]
        if use_res:
            ins.append(_pad2(resid.astype(jnp.bfloat16), Mp1, Np))
            in_specs.append(pl.BlockSpec((Mp1, Np), lambda i: (0, 0)))
        out = pl.pallas_call(
            _mm_bn_fused_kernel(M, eps, use_res),
            out_shape=jax.ShapeDtypeStruct((Mp1, Np), jnp.bfloat16),
            grid=(1,),
            in_specs=in_specs,
            out_specs=pl.BlockSpec((Mp1, Np), lambda i: (0, 0)),
            compiler_params=_params(("arbitrary",)),
            cost_estimate=pl.CostEstimate(
                flops=2 * Mp1 * K * Np + 10 * Mp1 * Np,
                transcendentals=Np,
                bytes_accessed=(2 * Mp1 * K + 2 * K * Np + 12 * Np
                                + 2 * Mp1 * Np * (1 + int(use_res)))),
        )(*ins)
        return out[:M, :N]

    # ---- Fallback for large M: two tiled calls with a bf16 intermediate ----
    tile_m, Mp, grid_m = _tiling(M)
    ap = _pad2(a.astype(jnp.bfloat16), Mp, K)
    y_pad, part = pl.pallas_call(
        _mm_stats_kernel,
        out_shape=(jax.ShapeDtypeStruct((Mp, Np), jnp.bfloat16),
                   jax.ShapeDtypeStruct((grid_m, 2, Np), jnp.float32)),
        grid=(grid_m,),
        in_specs=[pl.BlockSpec((tile_m, K), lambda i: (i, 0)),
                  pl.BlockSpec((K, Np), lambda i: (0, 0))],
        out_specs=(pl.BlockSpec((tile_m, Np), lambda i: (i, 0)),
                   pl.BlockSpec((1, 2, Np), lambda i: (i, 0, 0))),
        compiler_params=_params(("parallel",)),
        cost_estimate=pl.CostEstimate(
            flops=2 * Mp * K * Np + 3 * Mp * Np, transcendentals=0,
            bytes_accessed=2 * Mp * K + 2 * K * Np + 2 * Mp * Np),
    )(ap, wp)
    # Tiny stat fold in plain JAX (padded rows are zero; divide by true M).
    sums = jnp.sum(part, axis=0)                              # (2, Np)
    mean = (sums[0] / M).reshape(1, Np)
    var = jnp.maximum(sums[1].reshape(1, Np) / M - mean * mean, 0.0)
    inv = jax.lax.rsqrt(var + eps)
    scale = g * jnp.where(m > 0, inv, 1.0)
    shift = b - jnp.where(m > 0, mean, 0.0) * scale
    ins = [y_pad, scale, shift, m]
    in_specs = [pl.BlockSpec((tile_m, Np), lambda i: (i, 0)),
                pl.BlockSpec((1, Np), lambda i: (0, 0)),
                pl.BlockSpec((1, Np), lambda i: (0, 0)),
                pl.BlockSpec((1, Np), lambda i: (0, 0))]
    if use_res:
        ins.append(_pad2(resid.astype(jnp.bfloat16), Mp, Np))
        in_specs.append(pl.BlockSpec((tile_m, Np), lambda i: (i, 0)))
    out = pl.pallas_call(
        _bn_apply_kernel(use_res),
        out_shape=jax.ShapeDtypeStruct((Mp, Np), jnp.bfloat16),
        grid=(grid_m,),
        in_specs=in_specs,
        out_specs=pl.BlockSpec((tile_m, Np), lambda i: (i, 0)),
        compiler_params=_params(("parallel",)),
        cost_estimate=pl.CostEstimate(
            flops=5 * Mp * Np, transcendentals=0,
            bytes_accessed=(6 + 2 * int(use_res)) * Mp * Np),
    )(*ins)
    return out[:M, :N]


# ----------------------------------------------------------------------------
# Plain-JAX glue: im2col, weight reshapes, conv-transpose decomposition
# ----------------------------------------------------------------------------
def _im2col(x, kh, kw, stride, padding):
    # TODO(synk): move the patch gather in-kernel (reduction grid axis over
    # the kh*kw taps) to avoid the ~kh*kw x HBM expansion of the input.
    N, H, W, C = x.shape
    xp = jnp.pad(x, ((0, 0), (padding, padding), (padding, padding), (0, 0)))
    Ho = (H + 2 * padding - kh) // stride + 1
    Wo = (W + 2 * padding - kw) // stride + 1
    cols = []
    for dy in range(kh):
        for dx in range(kw):
            cols.append(xp[:, dy:dy + stride * Ho:stride,
                           dx:dx + stride * Wo:stride, :])
    patches = jnp.concatenate(cols, axis=-1)
    return (patches.reshape(N * Ho * Wo, kh * kw * C).astype(jnp.bfloat16),
            (N, Ho, Wo))


def _conv_w(weight):
    # PyTorch (Cout, Cin, kh, kw) -> (kh*kw*Cin, Cout) matching im2col order.
    Cout, Cin, kh, kw = weight.shape
    return jnp.transpose(weight, (2, 3, 1, 0)).reshape(kh * kw * Cin, Cout)


def block_forward(p, x, k=3, stride=2):
    """Encoder block: relu(BN3(c3(relu(BN2(c2(relu(BN1(c1 x))))))) + skip x).
    The 1x1 stride-2 skip conv shares c1's matmul (it reads exactly the
    centre im2col tap): output columns are [c1 | skip]; skip columns bypass
    BN/ReLU (mask==0) and receive the conv bias.  c1/c2/c3 biases are dropped:
    per-channel constants cancel under batch-stat mean subtraction."""
    pad = k // 2
    Cout, Cin = p['c1'][0].shape[0], p['c1'][0].shape[1]
    cols, (N, Ho, Wo) = _im2col(x, k, k, stride, pad)

    w_c1 = _conv_w(p['c1'][0])                               # (k*k*Cin, Cout)
    ctr = (k // 2) * k + (k // 2)                            # centre tap index
    w_sk = jnp.zeros_like(w_c1).at[ctr * Cin:(ctr + 1) * Cin, :].set(
        jnp.transpose(p['skip'][0][:, :, 0, 0], (1, 0)))
    w_cat = jnp.concatenate([w_c1, w_sk], axis=1)            # (K, 2*Cout)
    ones = jnp.ones((Cout,), jnp.float32)
    zeros = jnp.zeros((Cout,), jnp.float32)
    gamma = jnp.concatenate([p['b1'][0], ones])
    beta = jnp.concatenate([p['b1'][1], p['skip'][1].astype(jnp.float32)])
    mask = jnp.concatenate([ones, zeros])
    hs = matmul_bn_act(cols, w_cat, gamma, beta, mask)       # (M, 2*Cout) bf16
    h = hs[:, :Cout].reshape(N, Ho, Wo, Cout)
    s = hs[:, Cout:]                                         # skip residual

    cols2, _ = _im2col(h, k, k, 1, pad)
    h = matmul_bn_act(cols2, _conv_w(p['c2'][0]), p['b2'][0], p['b2'][1], ones)
    h = h.reshape(N, Ho, Wo, Cout)

    cols3, _ = _im2col(h, k, k, 1, pad)
    h = matmul_bn_act(cols3, _conv_w(p['c3'][0]), p['b3'][0], p['b3'][1], ones,
                      resid=s)                               # relu(BN3+skip)
    return h.reshape(N, Ho, Wo, Cout)


def conv_transpose2d(x, weight, bias, *, relu=False):
    """PyTorch ConvTranspose2d(kernel=3, stride=2, padding=1, output_padding=1)
    decomposed by output stride phase into ONE lane-dense fused matmul
    (N*H*W, 4*Cin) @ (4*Cin, 4*Cout)."""
    Cin, Cout, kh, kw = weight.shape
    assert (kh, kw) == (3, 3)
    N, H, W, C = x.shape
    assert C == Cin
    xp = jnp.pad(x, ((0, 0), (0, 1), (0, 1), (0, 0)))
    taps = jnp.concatenate([xp[:, :H, :W, :],             # x[a,   b  ]
                            xp[:, :H, 1:W + 1, :],        # x[a,   b+1]
                            xp[:, 1:H + 1, :W, :],        # x[a+1, b  ]
                            xp[:, 1:H + 1, 1:W + 1, :]],  # x[a+1, b+1]
                           axis=-1)
    A = taps.reshape(N * H * W, 4 * Cin)

    def wk(i, j):
        return weight[:, :, i, j]                          # (Cin, Cout)
    Z = jnp.zeros((Cin, Cout), weight.dtype)
    # column blocks = output phases [(0,0),(0,1),(1,0),(1,1)], rows = taps
    Wbig = jnp.block([[wk(1, 1), wk(1, 2), wk(2, 1), wk(2, 2)],
                      [Z,        wk(1, 0), Z,        wk(2, 0)],
                      [Z,        Z,        wk(0, 1), wk(0, 2)],
                      [Z,        Z,        Z,        wk(0, 0)]])
    bbig = jnp.tile(bias, 4)
    y = matmul_bias_act(A, Wbig, bbig, relu=relu)          # (N*H*W, 4*Cout)
    y = y.reshape(N, H, W, 2, 2, Cout)
    # TODO(synk): write the 4 phases to their strided output rows from the
    # kernel (index-mapped out_spec) to avoid this host-side de-interleave.
    return jnp.transpose(y, (0, 1, 3, 2, 4, 5)).reshape(N, 2 * H, 2 * W, Cout)


# ----------------------------------------------------------------------------
# UNet parameters (deterministic init) and forward pass
# ----------------------------------------------------------------------------
def _init_conv(key, cout, cin, kh, kw):
    k1, k2 = jax.random.split(key)
    w = jax.random.normal(k1, (cout, cin, kh, kw), jnp.float32) \
        * (1.0 / jnp.sqrt(float(cin * kh * kw)))
    b = jax.random.normal(k2, (cout,), jnp.float32) * 0.05
    return w, b


def init_block(key, cin, cout, k=3):
    keys = jax.random.split(key, 4)
    p = {'c1': _init_conv(keys[0], cout, cin, k, k),
         'c2': _init_conv(keys[1], cout, cout, k, k),
         'c3': _init_conv(keys[2], cout, cout, k, k),
         'skip': _init_conv(keys[3], cout, cin, 1, 1)}
    for name in ('b1', 'b2', 'b3'):   # PyTorch BN init: gamma=1, beta=0
        p[name] = (jnp.ones((cout,), jnp.float32),
                   jnp.zeros((cout,), jnp.float32))
    return p


def init_unet(key, input_channels=3, layers=(16, 32, 64, 128), n_class=1, k=3):
    params = {}
    skip_layer_size = [input_channels] + list(layers[:-1])
    keys = jax.random.split(key, 2 * len(layers) + 1)
    c = input_channels
    for i, l in enumerate(layers):
        params[f'conv{i}'] = init_block(keys[i], c, l, k)
        c = l
    for j, (i, l) in enumerate(reversed(list(enumerate(layers)))):
        k1, k2 = jax.random.split(keys[len(layers) + j])
        wt = jax.random.normal(k1, (c, l, k, k), jnp.float32) \
            * (1.0 / jnp.sqrt(float(c * k * k)))
        bt = jax.random.normal(k2, (l,), jnp.float32) * 0.05
        params[f'upconv{i}'] = (wt, bt)
        c = l + skip_layer_size[i]
    params['classifier'] = _init_conv(keys[-1], n_class, c, 1, 1)
    return params


def unet_forward(params, x_nchw, use_skip=True):
    # TODO(synk): carry the 128-padded channel layout end-to-end (pad weights
    # in K) instead of slicing/re-padding activations between layers.
    x = jnp.transpose(x_nchw, (0, 2, 3, 1))          # NCHW -> NHWC
    n_conv = sum(1 for name in params
                 if name.startswith('conv') and name[4:].isdigit())
    up_acts = []
    for i in range(n_conv):
        up_acts.append(x)
        x = block_forward(params[f'conv{i}'], x)
    for i in reversed(range(n_conv)):
        w, b = params[f'upconv{i}']
        x = conv_transpose2d(x, w, b, relu=True)
        x = x[:, :up_acts[i].shape[1], :up_acts[i].shape[2], :]
        if use_skip:
            x = jnp.concatenate([x, up_acts[i].astype(x.dtype)], axis=-1)
    # Classifier 1x1 conv, Cout=1: plain XLA einsum in f32 (a Pallas call
    # would waste 127/128 of the padded output lanes on launch overhead).
    w, b = params['classifier']
    y = jnp.einsum('nhwc,oc->nhwo', x.astype(jnp.float32),
                   w[:, :, 0, 0].astype(jnp.float32)) + b.astype(jnp.float32)
    return jnp.transpose(y, (0, 3, 1, 2))            # NHWC -> NCHW


if __name__ == "__main__":
    key = jax.random.PRNGKey(0)
    pkey, xkey = jax.random.split(key)
    params = init_unet(pkey, input_channels=3, layers=(16, 32, 64, 128),
                       n_class=1, k=3)
    x = jax.random.normal(xkey, (2, 3, 16, 16), jnp.float32)   # NCHW input
    out = jax.jit(unet_forward)(params, x)
    jax.block_until_ready(out)
    assert out.shape == (2, 1, 16, 16), out.shape
    print("KERNEL_OK")
</pallas_src>

<mosaic_0001>
module attributes {stable_mosaic.version = 11 : i64} {
  func.func @kernel(%arg0: i32, %arg1: memref<128x27xbf16, #tpu.memory_space<vmem>>, %arg2: memref<27x128xbf16, #tpu.memory_space<vmem>>, %arg3: memref<1x128xf32, #tpu.memory_space<vmem>>, %arg4: memref<1x128xf32, #tpu.memory_space<vmem>>, %arg5: memref<1x128xf32, #tpu.memory_space<vmem>>, %arg6: memref<128x128xbf16, #tpu.memory_space<vmem>>) attributes {dimension_semantics = [#tpu.dimension_semantics<arbitrary>], iteration_bounds = array<i64: 1>, scalar_prefetch = 0 : i64, scratch_operands = 0 : i64, tpu.core_type = #tpu.core_type<tc>, window_params = [{pipeline_mode = #tpu.pipeline_mode<synchronous>, transform_indices = @transform_0, window_bounds = array<i64: 128, 27>}, {pipeline_mode = #tpu.pipeline_mode<synchronous>, transform_indices = @transform_1, window_bounds = array<i64: 27, 128>}, {pipeline_mode = #tpu.pipeline_mode<synchronous>, transform_indices = @transform_2, window_bounds = array<i64: 1, 128>}, {pipeline_mode = #tpu.pipeline_mode<synchronous>, transform_indices = @transform_3, window_bounds = array<i64: 1, 128>}, {pipeline_mode = #tpu.pipeline_mode<synchronous>, transform_indices = @transform_4, window_bounds = array<i64: 1, 128>}, {pipeline_mode = #tpu.pipeline_mode<synchronous>, transform_indices = @transform_5, window_bounds = array<i64: 128, 128>}]} {
    %c0 = arith.constant 0 : index
    %c0_0 = arith.constant 0 : index
    %0 = vector.load %arg1[%c0, %c0_0] : memref<128x27xbf16, #tpu.memory_space<vmem>>, vector<128x27xbf16>
    %c0_1 = arith.constant 0 : index
    %c0_2 = arith.constant 0 : index
    %1 = vector.load %arg2[%c0_1, %c0_2] : memref<27x128xbf16, #tpu.memory_space<vmem>>, vector<27x128xbf16>
    %cst = arith.constant dense<0.000000e+00> : vector<128x128xf32>
    %2 = tpu.matmul %0, %1, %cst {dimension_numbers = #tpu.dot_dimension_numbers<[1], [0], [0], [1], [0, 0, 1, 1], [], []>} : vector<128x27xbf16>, vector<27x128xbf16>, vector<128x128xf32> -> vector<128x128xf32>
    %cst_3 = arith.constant dense<0.000000e+00> : vector<128xf32>
    %3 = vector.multi_reduction <add>, %2, %cst_3 [0] : vector<128x128xf32> to vector<128xf32>
    %4 = vector.shape_cast %3 : vector<128xf32> to vector<1x128xf32>
    %cst_4 = arith.constant 7.812500e-03 : f32
    %5 = vector.broadcast %cst_4 : f32 to vector<1x128xf32>
    %6 = arith.mulf %4, %5 : vector<1x128xf32>
    %7 = tpu.iota {dimensions = array<i32: 0>} : vector<128x128xi32>
    %c128_i32 = arith.constant 128 : i32
    %8 = vector.broadcast %c128_i32 : i32 to vector<128x128xi32>
    %9 = arith.cmpi slt, %7, %8 : vector<128x128xi32>
    %10 = vector.broadcast %6 : vector<1x128xf32> to vector<128x128xf32>
    %11 = arith.subf %2, %10 : vector<128x128xf32>
    %cst_5 = arith.constant 0.000000e+00 : f32
    %12 = vector.broadcast %cst_5 : f32 to vector<128x128xf32>
    %13 = arith.select %9, %11, %12 : vector<128x128xi1>, vector<128x128xf32>
    %14 = arith.mulf %13, %13 : vector<128x128xf32>
    %cst_6 = arith.constant dense<0.000000e+00> : vector<128xf32>
    %15 = vector.multi_reduction <add>, %14, %cst_6 [0] : vector<128x128xf32> to vector<128xf32>
    %16 = vector.shape_cast %15 : vector<128xf32> to vector<1x128xf32>
    %cst_7 = arith.constant 7.812500e-03 : f32
    %17 = vector.broadcast %cst_7 : f32 to vector<1x128xf32>
    %18 = arith.mulf %16, %17 : vector<1x128xf32>
    %cst_8 = arith.constant 9.99999974E-6 : f32
    %19 = vector.broadcast %cst_8 : f32 to vector<1x128xf32>
    %20 = arith.addf %18, %19 : vector<1x128xf32>
    %21 = math.rsqrt %20 : vector<1x128xf32>
    %c0_9 = arith.constant 0 : index
    %c0_10 = arith.constant 0 : index
    %22 = vector.load %arg5[%c0_9, %c0_10] : memref<1x128xf32, #tpu.memory_space<vmem>>, vector<1x128xf32>
    %c0_11 = arith.constant 0 : index
    %c0_12 = arith.constant 0 : index
    %23 = vector.load %arg3[%c0_11, %c0_12] : memref<1x128xf32, #tpu.memory_space<vmem>>, vector<1x128xf32>
    %cst_13 = arith.constant 0.000000e+00 : f32
    %24 = vector.broadcast %cst_13 : f32 to vector<1x128xf32>
    %25 = arith.cmpf ogt, %22, %24 : vector<1x128xf32>
    %cst_14 = arith.constant 1.000000e+00 : f32
    %26 = vector.broadcast %cst_14 : f32 to vector<1x128xf32>
    %27 = arith.select %25, %21, %26 : vector<1x128xi1>, vector<1x128xf32>
    %28 = arith.mulf %23, %27 : vector<1x128xf32>
    %c0_15 = arith.constant 0 : index
    %c0_16 = arith.constant 0 : index
    %29 = vector.load %arg4[%c0_15, %c0_16] : memref<1x128xf32, #tpu.memory_space<vmem>>, vector<1x128xf32>
    %cst_17 = arith.constant 0.000000e+00 : f32
    %30 = vector.broadcast %cst_17 : f32 to vector<1x128xf32>
    %31 = arith.cmpf ogt, %22, %30 : vector<1x128xf32>
    %cst_18 = arith.constant 0.000000e+00 : f32
    %32 = vector.broadcast %cst_18 : f32 to vector<1x128xf32>
    %33 = arith.select %31, %6, %32 : vector<1x128xi1>, vector<1x128xf32>
    %34 = arith.mulf %33, %28 : vector<1x128xf32>
    %35 = arith.subf %29, %34 : vector<1x128xf32>
    %36 = vector.broadcast %28 : vector<1x128xf32> to vector<128x128xf32>
    %37 = arith.mulf %2, %36 : vector<128x128xf32>
    %38 = vector.broadcast %35 : vector<1x128xf32> to vector<128x128xf32>
    %39 = arith.addf %37, %38 : vector<128x128xf32>
    %cst_19 = arith.constant 0.000000e+00 : f32
    %40 = vector.broadcast %cst_19 : f32 to vector<1x128xf32>
    %41 = arith.cmpf ogt, %22, %40 : vector<1x128xf32>
    %cst_20 = arith.constant 0.000000e+00 : f32
    %42 = vector.broadcast %cst_20 : f32 to vector<128x128xf32>
    %43 = arith.maximumf %39, %42 : vector<128x128xf32>
    %44 = vector.shape_cast %41 : vector<1x128xi1> to vector<1x128xi1>
    %45 = vector.broadcast %44 : vector<1x128xi1> to vector<128x128xi1>
    %46 = arith.select %45, %43, %39 : vector<128x128xi1>, vector<128x128xf32>
    %47 = arith.truncf %46 : vector<128x128xf32> to vector<128x128xbf16>
    %c0_21 = arith.constant 0 : index
    %c0_22 = arith.constant 0 : index
    %48 = vector.load %arg6[%c0_21, %c0_22] : memref<128x128xbf16, #tpu.memory_space<vmem>>, vector<128x128xbf16>
    tpu.vector_store %arg6[%c0_21, %c0_22], %47 {strides = array<i32>} : memref<128x128xbf16, #tpu.memory_space<vmem>>, vector<128x128xbf16>,
    return
  }
  func.func @transform_0(%arg0: i32) -> (i32, i32) {
    %c0_i32 = arith.constant 0 : i32
    %c0_i32_0 = arith.constant 0 : i32
    %c0_i32_1 = arith.constant 0 : i32
    return %c0_i32, %c0_i32_0 : i32, i32
  }
  func.func @transform_1(%arg0: i32) -> (i32, i32) {
    %c0_i32 = arith.constant 0 : i32
    %c0_i32_0 = arith.constant 0 : i32
    %c0_i32_1 = arith.constant 0 : i32
    return %c0_i32, %c0_i32_0 : i32, i32
  }
  func.func @transform_2(%arg0: i32) -> (i32, i32) {
    %c0_i32 = arith.constant 0 : i32
    %c0_i32_0 = arith.constant 0 : i32
    %c0_i32_1 = arith.constant 0 : i32
    return %c0_i32, %c0_i32_0 : i32, i32
  }
  func.func @transform_3(%arg0: i32) -> (i32, i32) {
    %c0_i32 = arith.constant 0 : i32
    %c0_i32_0 = arith.constant 0 : i32
    %c0_i32_1 = arith.constant 0 : i32
    return %c0_i32, %c0_i32_0 : i32, i32
  }
  func.func @transform_4(%arg0: i32) -> (i32, i32) {
    %c0_i32 = arith.constant 0 : i32
    %c0_i32_0 = arith.constant 0 : i32
    %c0_i32_1 = arith.constant 0 : i32
    return %c0_i32, %c0_i32_0 : i32, i32
  }
  func.func @transform_5(%arg0: i32) -> (i32, i32) {
    %c0_i32 = arith.constant 0 : i32
    %c0_i32_0 = arith.constant 0 : i32
    %c0_i32_1 = arith.constant 0 : i32
    return %c0_i32, %c0_i32_0 : i32, i32
  }
}

module attributes {stable_mosaic.version = 11 : i64} {
  func.func @kernel(%arg0: i32, %arg1: memref<128x144xbf16, #tpu.memory_space<vmem>>, %arg2: memref<144x128xbf16, #tpu.memory_space<vmem>>, %arg3: memref<1x128xf32, #tpu.memory_space<vmem>>, %arg4: memref<1x128xf32, #tpu.memory_space<vmem>>, %arg5: memref<1x128xf32, #tpu.memory_space<vmem>>, %arg6: memref<128x128xbf16, #tpu.memory_space<vmem>>) attributes {dimension_semantics = [#tpu.dimension_semantics<arbitrary>], iteration_bounds = array<i64: 1>, scalar_prefetch = 0 : i64, scratch_operands = 0 : i64, tpu.core_type = #tpu.core_type<tc>, window_params = [{pipeline_mode = #tpu.pipeline_mode<synchronous>, transform_indices = @transform_0, window_bounds = array<i64: 128, 144>}, {pipeline_mode = #tpu.pipeline_mode<synchronous>, transform_indices = @transform_1, window_bounds = array<i64: 144, 128>}, {pipeline_mode = #tpu.pipeline_mode<synchronous>, transform_indices = @transform_2, window_bounds = array<i64: 1, 128>}, {pipeline_mode = #tpu.pipeline_mode<synchronous>, transform_indices = @transform_3, window_bounds = array<i64: 1, 128>}, {pipeline_mode = #tpu.pipeline_mode<synchronous>, transform_indices = @transform_4, window_bounds = array<i64: 1, 128>}, {pipeline_mode = #tpu.pipeline_mode<synchronous>, transform_indices = @transform_5, window_bounds = array<i64: 128, 128>}]} {
    %c0 = arith.constant 0 : index
    %c0_0 = arith.constant 0 : index
    %0 = vector.load %arg1[%c0, %c0_0] : memref<128x144xbf16, #tpu.memory_space<vmem>>, vector<128x144xbf16>
    %c0_1 = arith.constant 0 : index
    %c0_2 = arith.constant 0 : index
    %1 = vector.load %arg2[%c0_1, %c0_2] : memref<144x128xbf16, #tpu.memory_space<vmem>>, vector<144x128xbf16>
    %cst = arith.constant dense<0.000000e+00> : vector<128x128xf32>
    %2 = tpu.matmul %0, %1, %cst {dimension_numbers = #tpu.dot_dimension_numbers<[1], [0], [0], [1], [0, 0, 1, 1], [], []>} : vector<128x144xbf16>, vector<144x128xbf16>, vector<128x128xf32> -> vector<128x128xf32>
    %cst_3 = arith.constant dense<0.000000e+00> : vector<128xf32>
    %3 = vector.multi_reduction <add>, %2, %cst_3 [0] : vector<128x128xf32> to vector<128xf32>
    %4 = vector.shape_cast %3 : vector<128xf32> to vector<1x128xf32>
    %cst_4 = arith.constant 7.812500e-03 : f32
    %5 = vector.broadcast %cst_4 : f32 to vector<1x128xf32>
    %6 = arith.mulf %4, %5 : vector<1x128xf32>
    %7 = tpu.iota {dimensions = array<i32: 0>} : vector<128x128xi32>
    %c128_i32 = arith.constant 128 : i32
    %8 = vector.broadcast %c128_i32 : i32 to vector<128x128xi32>
    %9 = arith.cmpi slt, %7, %8 : vector<128x128xi32>
    %10 = vector.broadcast %6 : vector<1x128xf32> to vector<128x128xf32>
    %11 = arith.subf %2, %10 : vector<128x128xf32>
    %cst_5 = arith.constant 0.000000e+00 : f32
    %12 = vector.broadcast %cst_5 : f32 to vector<128x128xf32>
    %13 = arith.select %9, %11, %12 : vector<128x128xi1>, vector<128x128xf32>
    %14 = arith.mulf %13, %13 : vector<128x128xf32>
    %cst_6 = arith.constant dense<0.000000e+00> : vector<128xf32>
    %15 = vector.multi_reduction <add>, %14, %cst_6 [0] : vector<128x128xf32> to vector<128xf32>
    %16 = vector.shape_cast %15 : vector<128xf32> to vector<1x128xf32>
    %cst_7 = arith.constant 7.812500e-03 : f32
    %17 = vector.broadcast %cst_7 : f32 to vector<1x128xf32>
    %18 = arith.mulf %16, %17 : vector<1x128xf32>
    %cst_8 = arith.constant 9.99999974E-6 : f32
    %19 = vector.broadcast %cst_8 : f32 to vector<1x128xf32>
    %20 = arith.addf %18, %19 : vector<1x128xf32>
    %21 = math.rsqrt %20 : vector<1x128xf32>
    %c0_9 = arith.constant 0 : index
    %c0_10 = arith.constant 0 : index
    %22 = vector.load %arg5[%c0_9, %c0_10] : memref<1x128xf32, #tpu.memory_space<vmem>>, vector<1x128xf32>
    %c0_11 = arith.constant 0 : index
    %c0_12 = arith.constant 0 : index
    %23 = vector.load %arg3[%c0_11, %c0_12] : memref<1x128xf32, #tpu.memory_space<vmem>>, vector<1x128xf32>
    %cst_13 = arith.constant 0.000000e+00 : f32
    %24 = vector.broadcast %cst_13 : f32 to vector<1x128xf32>
    %25 = arith.cmpf ogt, %22, %24 : vector<1x128xf32>
    %cst_14 = arith.constant 1.000000e+00 : f32
    %26 = vector.broadcast %cst_14 : f32 to vector<1x128xf32>
    %27 = arith.select %25, %21, %26 : vector<1x128xi1>, vector<1x128xf32>
    %28 = arith.mulf %23, %27 : vector<1x128xf32>
    %c0_15 = arith.constant 0 : index
    %c0_16 = arith.constant 0 : index
    %29 = vector.load %arg4[%c0_15, %c0_16] : memref<1x128xf32, #tpu.memory_space<vmem>>, vector<1x128xf32>
    %cst_17 = arith.constant 0.000000e+00 : f32
    %30 = vector.broadcast %cst_17 : f32 to vector<1x128xf32>
    %31 = arith.cmpf ogt, %22, %30 : vector<1x128xf32>
    %cst_18 = arith.constant 0.000000e+00 : f32
    %32 = vector.broadcast %cst_18 : f32 to vector<1x128xf32>
    %33 = arith.select %31, %6, %32 : vector<1x128xi1>, vector<1x128xf32>
    %34 = arith.mulf %33, %28 : vector<1x128xf32>
    %35 = arith.subf %29, %34 : vector<1x128xf32>
    %36 = vector.broadcast %28 : vector<1x128xf32> to vector<128x128xf32>
    %37 = arith.mulf %2, %36 : vector<128x128xf32>
    %38 = vector.broadcast %35 : vector<1x128xf32> to vector<128x128xf32>
    %39 = arith.addf %37, %38 : vector<128x128xf32>
    %cst_19 = arith.constant 0.000000e+00 : f32
    %40 = vector.broadcast %cst_19 : f32 to vector<1x128xf32>
    %41 = arith.cmpf ogt, %22, %40 : vector<1x128xf32>
    %cst_20 = arith.constant 0.000000e+00 : f32
    %42 = vector.broadcast %cst_20 : f32 to vector<128x128xf32>
    %43 = arith.maximumf %39, %42 : vector<128x128xf32>
    %44 = vector.shape_cast %41 : vector<1x128xi1> to vector<1x128xi1>
    %45 = vector.broadcast %44 : vector<1x128xi1> to vector<128x128xi1>
    %46 = arith.select %45, %43, %39 : vector<128x128xi1>, vector<128x128xf32>
    %47 = arith.truncf %46 : vector<128x128xf32> to vector<128x128xbf16>
    %c0_21 = arith.constant 0 : index
    %c0_22 = arith.constant 0 : index
    %48 = vector.load %arg6[%c0_21, %c0_22] : memref<128x128xbf16, #tpu.memory_space<vmem>>, vector<128x128xbf16>
    tpu.vector_store %arg6[%c0_21, %c0_22], %47 {strides = array<i32>} : memref<128x128xbf16, #tpu.memory_space<vmem>>, vector<128x128xbf16>,
    return
  }
  func.func @transform_0(%arg0: i32) -> (i32, i32) {
    %c0_i32 = arith.constant 0 : i32
    %c0_i32_0 = arith.constant 0 : i32
    %c0_i32_1 = arith.constant 0 : i32
    return %c0_i32, %c0_i32_0 : i32, i32
  }
  func.func @transform_1(%arg0: i32) -> (i32, i32) {
    %c0_i32 = arith.constant 0 : i32
    %c0_i32_0 = arith.constant 0 : i32
    %c0_i32_1 = arith.constant 0 : i32
    return %c0_i32, %c0_i32_0 : i32, i32
  }
  func.func @transform_2(%arg0: i32) -> (i32, i32) {
    %c0_i32 = arith.constant 0 : i32
    %c0_i32_0 = arith.constant 0 : i32
    %c0_i32_1 = arith.constant 0 : i32
    return %c0_i32, %c0_i32_0 : i32, i32
  }
  func.func @transform_3(%arg0: i32) -> (i32, i32) {
    %c0_i32 = arith.constant 0 : i32
    %c0_i32_0 = arith.constant 0 : i32
    %c0_i32_1 = arith.constant 0 : i32
    return %c0_i32, %c0_i32_0 : i32, i32
  }
  func.func @transform_4(%arg0: i32) -> (i32, i32) {
    %c0_i32 = arith.constant 0 : i32
    %c0_i32_0 = arith.constant 0 : i32
    %c0_i32_1 = arith.constant 0 : i32
    return %c0_i32, %c0_i32_0 : i32, i32
  }
  func.func @transform_5(%arg0: i32) -> (i32, i32) {
    %c0_i32 = arith.constant 0 : i32
    %c0_i32_0 = arith.constant 0 : i32
    %c0_i32_1 = arith.constant 0 : i32
    return %c0_i32, %c0_i32_0 : i32, i32
  }
}

module attributes {stable_mosaic.version = 11 : i64} {
  func.func @kernel(%arg0: i32, %arg1: memref<128x144xbf16, #tpu.memory_space<vmem>>, %arg2: memref<144x128xbf16, #tpu.memory_space<vmem>>, %arg3: memref<1x128xf32, #tpu.memory_space<vmem>>, %arg4: memref<1x128xf32, #tpu.memory_space<vmem>>, %arg5: memref<1x128xf32, #tpu.memory_space<vmem>>, %arg6: memref<128x128xbf16, #tpu.memory_space<vmem>>, %arg7: memref<128x128xbf16, #tpu.memory_space<vmem>>) attributes {dimension_semantics = [#tpu.dimension_semantics<arbitrary>], iteration_bounds = array<i64: 1>, scalar_prefetch = 0 : i64, scratch_operands = 0 : i64, tpu.core_type = #tpu.core_type<tc>, window_params = [{pipeline_mode = #tpu.pipeline_mode<synchronous>, transform_indices = @transform_0, window_bounds = array<i64: 128, 144>}, {pipeline_mode = #tpu.pipeline_mode<synchronous>, transform_indices = @transform_1, window_bounds = array<i64: 144, 128>}, {pipeline_mode = #tpu.pipeline_mode<synchronous>, transform_indices = @transform_2, window_bounds = array<i64: 1, 128>}, {pipeline_mode = #tpu.pipeline_mode<synchronous>, transform_indices = @transform_3, window_bounds = array<i64: 1, 128>}, {pipeline_mode = #tpu.pipeline_mode<synchronous>, transform_indices = @transform_4, window_bounds = array<i64: 1, 128>}, {pipeline_mode = #tpu.pipeline_mode<synchronous>, transform_indices = @transform_5, window_bounds = array<i64: 128, 128>}, {pipeline_mode = #tpu.pipeline_mode<synchronous>, transform_indices = @transform_6, window_bounds = array<i64: 128, 128>}]} {
    %c0 = arith.constant 0 : index
    %c0_0 = arith.constant 0 : index
    %0 = vector.load %arg1[%c0, %c0_0] : memref<128x144xbf16, #tpu.memory_space<vmem>>, vector<128x144xbf16>
    %c0_1 = arith.constant 0 : index
    %c0_2 = arith.constant 0 : index
    %1 = vector.load %arg2[%c0_1, %c0_2] : memref<144x128xbf16, #tpu.memory_space<vmem>>, vector<144x128xbf16>
    %cst = arith.constant dense<0.000000e+00> : vector<128x128xf32>
    %2 = tpu.matmul %0, %1, %cst {dimension_numbers = #tpu.dot_dimension_numbers<[1], [0], [0], [1], [0, 0, 1, 1], [], []>} : vector<128x144xbf16>, vector<144x128xbf16>, vector<128x128xf32> -> vector<128x128xf32>
    %cst_3 = arith.constant dense<0.000000e+00> : vector<128xf32>
    %3 = vector.multi_reduction <add>, %2, %cst_3 [0] : vector<128x128xf32> to vector<128xf32>
    %4 = vector.shape_cast %3 : vector<128xf32> to vector<1x128xf32>
    %cst_4 = arith.constant 7.812500e-03 : f32
    %5 = vector.broadcast %cst_4 : f32 to vector<1x128xf32>
    %6 = arith.mulf %4, %5 : vector<1x128xf32>
    %7 = tpu.iota {dimensions = array<i32: 0>} : vector<128x128xi32>
    %c128_i32 = arith.constant 128 : i32
    %8 = vector.broadcast %c128_i32 : i32 to vector<128x128xi32>
    %9 = arith.cmpi slt, %7, %8 : vector<128x128xi32>
    %10 = vector.broadcast %6 : vector<1x128xf32> to vector<128x128xf32>
    %11 = arith.subf %2, %10 : vector<128x128xf32>
    %cst_5 = arith.constant 0.000000e+00 : f32
    %12 = vector.broadcast %cst_5 : f32 to vector<128x128xf32>
    %13 = arith.select %9, %11, %12 : vector<128x128xi1>, vector<128x128xf32>
    %14 = arith.mulf %13, %13 : vector<128x128xf32>
    %cst_6 = arith.constant dense<0.000000e+00> : vector<128xf32>
    %15 = vector.multi_reduction <add>, %14, %cst_6 [0] : vector<128x128xf32> to vector<128xf32>
    %16 = vector.shape_cast %15 : vector<128xf32> to vector<1x128xf32>
    %cst_7 = arith.constant 7.812500e-03 : f32
    %17 = vector.broadcast %cst_7 : f32 to vector<1x128xf32>
    %18 = arith.mulf %16, %17 : vector<1x128xf32>
    %cst_8 = arith.constant 9.99999974E-6 : f32
    %19 = vector.broadcast %cst_8 : f32 to vector<1x128xf32>
    %20 = arith.addf %18, %19 : vector<1x128xf32>
    %21 = math.rsqrt %20 : vector<1x128xf32>
    %c0_9 = arith.constant 0 : index
    %c0_10 = arith.constant 0 : index
    %22 = vector.load %arg5[%c0_9, %c0_10] : memref<1x128xf32, #tpu.memory_space<vmem>>, vector<1x128xf32>
    %c0_11 = arith.constant 0 : index
    %c0_12 = arith.constant 0 : index
    %23 = vector.load %arg3[%c0_11, %c0_12] : memref<1x128xf32, #tpu.memory_space<vmem>>, vector<1x128xf32>
    %cst_13 = arith.constant 0.000000e+00 : f32
    %24 = vector.broadcast %cst_13 : f32 to vector<1x128xf32>
    %25 = arith.cmpf ogt, %22, %24 : vector<1x128xf32>
    %cst_14 = arith.constant 1.000000e+00 : f32
    %26 = vector.broadcast %cst_14 : f32 to vector<1x128xf32>
    %27 = arith.select %25, %21, %26 : vector<1x128xi1>, vector<1x128xf32>
    %28 = arith.mulf %23, %27 : vector<1x128xf32>
    %c0_15 = arith.constant 0 : index
    %c0_16 = arith.constant 0 : index
    %29 = vector.load %arg4[%c0_15, %c0_16] : memref<1x128xf32, #tpu.memory_space<vmem>>, vector<1x128xf32>
    %cst_17 = arith.constant 0.000000e+00 : f32
    %30 = vector.broadcast %cst_17 : f32 to vector<1x128xf32>
    %31 = arith.cmpf ogt, %22, %30 : vector<1x128xf32>
    %cst_18 = arith.constant 0.000000e+00 : f32
    %32 = vector.broadcast %cst_18 : f32 to vector<1x128xf32>
    %33 = arith.select %31, %6, %32 : vector<1x128xi1>, vector<1x128xf32>
    %34 = arith.mulf %33, %28 : vector<1x128xf32>
    %35 = arith.subf %29, %34 : vector<1x128xf32>
    %36 = vector.broadcast %28 : vector<1x128xf32> to vector<128x128xf32>
    %37 = arith.mulf %2, %36 : vector<128x128xf32>
    %38 = vector.broadcast %35 : vector<1x128xf32> to vector<128x128xf32>
    %39 = arith.addf %37, %38 : vector<128x128xf32>
    %c0_19 = arith.constant 0 : index
    %c0_20 = arith.constant 0 : index
    %40 = vector.load %arg6[%c0_19, %c0_20] : memref<128x128xbf16, #tpu.memory_space<vmem>>, vector<128x128xbf16>
    %41 = arith.extf %40 : vector<128x128xbf16> to vector<128x128xf32>
    %42 = arith.addf %39, %41 : vector<128x128xf32>
    %cst_21 = arith.constant 0.000000e+00 : f32
    %43 = vector.broadcast %cst_21 : f32 to vector<1x128xf32>
    %44 = arith.cmpf ogt, %22, %43 : vector<1x128xf32>
    %cst_22 = arith.constant 0.000000e+00 : f32
    %45 = vector.broadcast %cst_22 : f32 to vector<128x128xf32>
    %46 = arith.maximumf %42, %45 : vector<128x128xf32>
    %47 = vector.shape_cast %44 : vector<1x128xi1> to vector<1x128xi1>
    %48 = vector.broadcast %47 : vector<1x128xi1> to vector<128x128xi1>
    %49 = arith.select %48, %46, %42 : vector<128x128xi1>, vector<128x128xf32>
    %50 = arith.truncf %49 : vector<128x128xf32> to vector<128x128xbf16>
    %c0_23 = arith.constant 0 : index
    %c0_24 = arith.constant 0 : index
    %51 = vector.load %arg7[%c0_23, %c0_24] : memref<128x128xbf16, #tpu.memory_space<vmem>>, vector<128x128xbf16>
    tpu.vector_store %arg7[%c0_23, %c0_24], %50 {strides = array<i32>} : memref<128x128xbf16, #tpu.memory_space<vmem>>, vector<128x128xbf16>,
    return
  }
  func.func @transform_0(%arg0: i32) -> (i32, i32) {
    %c0_i32 = arith.constant 0 : i32
    %c0_i32_0 = arith.constant 0 : i32
    %c0_i32_1 = arith.constant 0 : i32
    return %c0_i32, %c0_i32_0 : i32, i32
  }
  func.func @transform_1(%arg0: i32) -> (i32, i32) {
    %c0_i32 = arith.constant 0 : i32
    %c0_i32_0 = arith.constant 0 : i32
    %c0_i32_1 = arith.constant 0 : i32
    return %c0_i32, %c0_i32_0 : i32, i32
  }
  func.func @transform_2(%arg0: i32) -> (i32, i32) {
    %c0_i32 = arith.constant 0 : i32
    %c0_i32_0 = arith.constant 0 : i32
    %c0_i32_1 = arith.constant 0 : i32
    return %c0_i32, %c0_i32_0 : i32, i32
  }
  func.func @transform_3(%arg0: i32) -> (i32, i32) {
    %c0_i32 = arith.constant 0 : i32
    %c0_i32_0 = arith.constant 0 : i32
    %c0_i32_1 = arith.constant 0 : i32
    return %c0_i32, %c0_i32_0 : i32, i32
  }
  func.func @transform_4(%arg0: i32) -> (i32, i32) {
    %c0_i32 = arith.constant 0 : i32
    %c0_i32_0 = arith.constant 0 : i32
    %c0_i32_1 = arith.constant 0 : i32
    return %c0_i32, %c0_i32_0 : i32, i32
  }
  func.func @transform_5(%arg0: i32) -> (i32, i32) {
    %c0_i32 = arith.constant 0 : i32
    %c0_i32_0 = arith.constant 0 : i32
    %c0_i32_1 = arith.constant 0 : i32
    return %c0_i32, %c0_i32_0 : i32, i32
  }
  func.func @transform_6(%arg0: i32) -> (i32, i32) {
    %c0_i32 = arith.constant 0 : i32
    %c0_i32_0 = arith.constant 0 : i32
    %c0_i32_1 = arith.constant 0 : i32
    return %c0_i32, %c0_i32_0 : i32, i32
  }
}

module attributes {stable_mosaic.version = 11 : i64} {
  func.func @kernel(%arg0: i32, %arg1: memref<32x144xbf16, #tpu.memory_space<vmem>>, %arg2: memref<144x128xbf16, #tpu.memory_space<vmem>>, %arg3: memref<1x128xf32, #tpu.memory_space<vmem>>, %arg4: memref<1x128xf32, #tpu.memory_space<vmem>>, %arg5: memref<1x128xf32, #tpu.memory_space<vmem>>, %arg6: memref<32x128xbf16, #tpu.memory_space<vmem>>) attributes {dimension_semantics = [#tpu.dimension_semantics<arbitrary>], iteration_bounds = array<i64: 1>, scalar_prefetch = 0 : i64, scratch_operands = 0 : i64, tpu.core_type = #tpu.core_type<tc>, window_params = [{pipeline_mode = #tpu.pipeline_mode<synchronous>, transform_indices = @transform_0, window_bounds = array<i64: 32, 144>}, {pipeline_mode = #tpu.pipeline_mode<synchronous>, transform_indices = @transform_1, window_bounds = array<i64: 144, 128>}, {pipeline_mode = #tpu.pipeline_mode<synchronous>, transform_indices = @transform_2, window_bounds = array<i64: 1, 128>}, {pipeline_mode = #tpu.pipeline_mode<synchronous>, transform_indices = @transform_3, window_bounds = array<i64: 1, 128>}, {pipeline_mode = #tpu.pipeline_mode<synchronous>, transform_indices = @transform_4, window_bounds = array<i64: 1, 128>}, {pipeline_mode = #tpu.pipeline_mode<synchronous>, transform_indices = @transform_5, window_bounds = array<i64: 32, 128>}]} {
    %c0 = arith.constant 0 : index
    %c0_0 = arith.constant 0 : index
    %0 = vector.load %arg1[%c0, %c0_0] : memref<32x144xbf16, #tpu.memory_space<vmem>>, vector<32x144xbf16>
    %c0_1 = arith.constant 0 : index
    %c0_2 = arith.constant 0 : index
    %1 = vector.load %arg2[%c0_1, %c0_2] : memref<144x128xbf16, #tpu.memory_space<vmem>>, vector<144x128xbf16>
    %cst = arith.constant dense<0.000000e+00> : vector<32x128xf32>
    %2 = tpu.matmul %0, %1, %cst {dimension_numbers = #tpu.dot_dimension_numbers<[1], [0], [0], [1], [0, 0, 1, 1], [], []>} : vector<32x144xbf16>, vector<144x128xbf16>, vector<32x128xf32> -> vector<32x128xf32>
    %cst_3 = arith.constant dense<0.000000e+00> : vector<128xf32>
    %3 = vector.multi_reduction <add>, %2, %cst_3 [0] : vector<32x128xf32> to vector<128xf32>
    %4 = vector.shape_cast %3 : vector<128xf32> to vector<1x128xf32>
    %cst_4 = arith.constant 3.125000e-02 : f32
    %5 = vector.broadcast %cst_4 : f32 to vector<1x128xf32>
    %6 = arith.mulf %4, %5 : vector<1x128xf32>
    %7 = tpu.iota {dimensions = array<i32: 0>} : vector<32x128xi32>
    %c32_i32 = arith.constant 32 : i32
    %8 = vector.broadcast %c32_i32 : i32 to vector<32x128xi32>
    %9 = arith.cmpi slt, %7, %8 : vector<32x128xi32>
    %10 = vector.broadcast %6 : vector<1x128xf32> to vector<32x128xf32>
    %11 = arith.subf %2, %10 : vector<32x128xf32>
    %cst_5 = arith.constant 0.000000e+00 : f32
    %12 = vector.broadcast %cst_5 : f32 to vector<32x128xf32>
    %13 = arith.select %9, %11, %12 : vector<32x128xi1>, vector<32x128xf32>
    %14 = arith.mulf %13, %13 : vector<32x128xf32>
    %cst_6 = arith.constant dense<0.000000e+00> : vector<128xf32>
    %15 = vector.multi_reduction <add>, %14, %cst_6 [0] : vector<32x128xf32> to vector<128xf32>
    %16 = vector.shape_cast %15 : vector<128xf32> to vector<1x128xf32>
    %cst_7 = arith.constant 3.125000e-02 : f32
    %17 = vector.broadcast %cst_7 : f32 to vector<1x128xf32>
    %18 = arith.mulf %16, %17 : vector<1x128xf32>
    %cst_8 = arith.constant 9.99999974E-6 : f32
    %19 = vector.broadcast %cst_8 : f32 to vector<1x128xf32>
    %20 = arith.addf %18, %19 : vector<1x128xf32>
    %21 = math.rsqrt %20 : vector<1x128xf32>
    %c0_9 = arith.constant 0 : index
    %c0_10 = arith.constant 0 : index
    %22 = vector.load %arg5[%c0_9, %c0_10] : memref<1x128xf32, #tpu.memory_space<vmem>>, vector<1x128xf32>
    %c0_11 = arith.constant 0 : index
    %c0_12 = arith.constant 0 : index
    %23 = vector.load %arg3[%c0_11, %c0_12] : memref<1x128xf32, #tpu.memory_space<vmem>>, vector<1x128xf32>
    %cst_13 = arith.constant 0.000000e+00 : f32
    %24 = vector.broadcast %cst_13 : f32 to vector<1x128xf32>
    %25 = arith.cmpf ogt, %22, %24 : vector<1x128xf32>
    %cst_14 = arith.constant 1.000000e+00 : f32
    %26 = vector.broadcast %cst_14 : f32 to vector<1x128xf32>
    %27 = arith.select %25, %21, %26 : vector<1x128xi1>, vector<1x128xf32>
    %28 = arith.mulf %23, %27 : vector<1x128xf32>
    %c0_15 = arith.constant 0 : index
    %c0_16 = arith.constant 0 : index
    %29 = vector.load %arg4[%c0_15, %c0_16] : memref<1x128xf32, #tpu.memory_space<vmem>>, vector<1x128xf32>
    %cst_17 = arith.constant 0.000000e+00 : f32
    %30 = vector.broadcast %cst_17 : f32 to vector<1x128xf32>
    %31 = arith.cmpf ogt, %22, %30 : vector<1x128xf32>
    %cst_18 = arith.constant 0.000000e+00 : f32
    %32 = vector.broadcast %cst_18 : f32 to vector<1x128xf32>
    %33 = arith.select %31, %6, %32 : vector<1x128xi1>, vector<1x128xf32>
    %34 = arith.mulf %33, %28 : vector<1x128xf32>
    %35 = arith.subf %29, %34 : vector<1x128xf32>
    %36 = vector.broadcast %28 : vector<1x128xf32> to vector<32x128xf32>
    %37 = arith.mulf %2, %36 : vector<32x128xf32>
    %38 = vector.broadcast %35 : vector<1x128xf32> to vector<32x128xf32>
    %39 = arith.addf %37, %38 : vector<32x128xf32>
    %cst_19 = arith.constant 0.000000e+00 : f32
    %40 = vector.broadcast %cst_19 : f32 to vector<1x128xf32>
    %41 = arith.cmpf ogt, %22, %40 : vector<1x128xf32>
    %cst_20 = arith.constant 0.000000e+00 : f32
    %42 = vector.broadcast %cst_20 : f32 to vector<32x128xf32>
    %43 = arith.maximumf %39, %42 : vector<32x128xf32>
    %44 = vector.shape_cast %41 : vector<1x128xi1> to vector<1x128xi1>
    %45 = vector.broadcast %44 : vector<1x128xi1> to vector<32x128xi1>
    %46 = arith.select %45, %43, %39 : vector<32x128xi1>, vector<32x128xf32>
    %47 = arith.truncf %46 : vector<32x128xf32> to vector<32x128xbf16>
    %c0_21 = arith.constant 0 : index
    %c0_22 = arith.constant 0 : index
    %48 = vector.load %arg6[%c0_21, %c0_22] : memref<32x128xbf16, #tpu.memory_space<vmem>>, vector<32x128xbf16>
    tpu.vector_store %arg6[%c0_21, %c0_22], %47 {strides = array<i32>} : memref<32x128xbf16, #tpu.memory_space<vmem>>, vector<32x128xbf16>,
    return
  }
  func.func @transform_0(%arg0: i32) -> (i32, i32) {
    %c0_i32 = arith.constant 0 : i32
    %c0_i32_0 = arith.constant 0 : i32
    %c0_i32_1 = arith.constant 0 : i32
    return %c0_i32, %c0_i32_0 : i32, i32
  }
  func.func @transform_1(%arg0: i32) -> (i32, i32) {
    %c0_i32 = arith.constant 0 : i32
    %c0_i32_0 = arith.constant 0 : i32
    %c0_i32_1 = arith.constant 0 : i32
    return %c0_i32, %c0_i32_0 : i32, i32
  }
  func.func @transform_2(%arg0: i32) -> (i32, i32) {
    %c0_i32 = arith.constant 0 : i32
    %c0_i32_0 = arith.constant 0 : i32
    %c0_i32_1 = arith.constant 0 : i32
    return %c0_i32, %c0_i32_0 : i32, i32
  }
  func.func @transform_3(%arg0: i32) -> (i32, i32) {
    %c0_i32 = arith.constant 0 : i32
    %c0_i32_0 = arith.constant 0 : i32
    %c0_i32_1 = arith.constant 0 : i32
    return %c0_i32, %c0_i32_0 : i32, i32
  }
  func.func @transform_4(%arg0: i32) -> (i32, i32) {
    %c0_i32 = arith.constant 0 : i32
    %c0_i32_0 = arith.constant 0 : i32
    %c0_i32_1 = arith.constant 0 : i32
    return %c0_i32, %c0_i32_0 : i32, i32
  }
  func.func @transform_5(%arg0: i32) -> (i32, i32) {
    %c0_i32 = arith.constant 0 : i32
    %c0_i32_0 = arith.constant 0 : i32
    %c0_i32_1 = arith.constant 0 : i32
    return %c0_i32, %c0_i32_0 : i32, i32
  }
}

module attributes {stable_mosaic.version = 11 : i64} {
  func.func @kernel(%arg0: i32, %arg1: memref<32x288xbf16, #tpu.memory_space<vmem>>, %arg2: memref<288x128xbf16, #tpu.memory_space<vmem>>, %arg3: memref<1x128xf32, #tpu.memory_space<vmem>>, %arg4: memref<1x128xf32, #tpu.memory_space<vmem>>, %arg5: memref<1x128xf32, #tpu.memory_space<vmem>>, %arg6: memref<32x128xbf16, #tpu.memory_space<vmem>>) attributes {dimension_semantics = [#tpu.dimension_semantics<arbitrary>], iteration_bounds = array<i64: 1>, scalar_prefetch = 0 : i64, scratch_operands = 0 : i64, tpu.core_type = #tpu.core_type<tc>, window_params = [{pipeline_mode = #tpu.pipeline_mode<synchronous>, transform_indices = @transform_0, window_bounds = array<i64: 32, 288>}, {pipeline_mode = #tpu.pipeline_mode<synchronous>, transform_indices = @transform_1, window_bounds = array<i64: 288, 128>}, {pipeline_mode = #tpu.pipeline_mode<synchronous>, transform_indices = @transform_2, window_bounds = array<i64: 1, 128>}, {pipeline_mode = #tpu.pipeline_mode<synchronous>, transform_indices = @transform_3, window_bounds = array<i64: 1, 128>}, {pipeline_mode = #tpu.pipeline_mode<synchronous>, transform_indices = @transform_4, window_bounds = array<i64: 1, 128>}, {pipeline_mode = #tpu.pipeline_mode<synchronous>, transform_indices = @transform_5, window_bounds = array<i64: 32, 128>}]} {
    %c0 = arith.constant 0 : index
    %c0_0 = arith.constant 0 : index
    %0 = vector.load %arg1[%c0, %c0_0] : memref<32x288xbf16, #tpu.memory_space<vmem>>, vector<32x288xbf16>
    %c0_1 = arith.constant 0 : index
    %c0_2 = arith.constant 0 : index
    %1 = vector.load %arg2[%c0_1, %c0_2] : memref<288x128xbf16, #tpu.memory_space<vmem>>, vector<288x128xbf16>
    %cst = arith.constant dense<0.000000e+00> : vector<32x128xf32>
    %2 = tpu.matmul %0, %1, %cst {dimension_numbers = #tpu.dot_dimension_numbers<[1], [0], [0], [1], [0, 0, 1, 1], [], []>} : vector<32x288xbf16>, vector<288x128xbf16>, vector<32x128xf32> -> vector<32x128xf32>
    %cst_3 = arith.constant dense<0.000000e+00> : vector<128xf32>
    %3 = vector.multi_reduction <add>, %2, %cst_3 [0] : vector<32x128xf32> to vector<128xf32>
    %4 = vector.shape_cast %3 : vector<128xf32> to vector<1x128xf32>
    %cst_4 = arith.constant 3.125000e-02 : f32
    %5 = vector.broadcast %cst_4 : f32 to vector<1x128xf32>
    %6 = arith.mulf %4, %5 : vector<1x128xf32>
    %7 = tpu.iota {dimensions = array<i32: 0>} : vector<32x128xi32>
    %c32_i32 = arith.constant 32 : i32
    %8 = vector.broadcast %c32_i32 : i32 to vector<32x128xi32>
    %9 = arith.cmpi slt, %7, %8 : vector<32x128xi32>
    %10 = vector.broadcast %6 : vector<1x128xf32> to vector<32x128xf32>
    %11 = arith.subf %2, %10 : vector<32x128xf32>
    %cst_5 = arith.constant 0.000000e+00 : f32
    %12 = vector.broadcast %cst_5 : f32 to vector<32x128xf32>
    %13 = arith.select %9, %11, %12 : vector<32x128xi1>, vector<32x128xf32>
    %14 = arith.mulf %13, %13 : vector<32x128xf32>
    %cst_6 = arith.constant dense<0.000000e+00> : vector<128xf32>
    %15 = vector.multi_reduction <add>, %14, %cst_6 [0] : vector<32x128xf32> to vector<128xf32>
    %16 = vector.shape_cast %15 : vector<128xf32> to vector<1x128xf32>
    %cst_7 = arith.constant 3.125000e-02 : f32
    %17 = vector.broadcast %cst_7 : f32 to vector<1x128xf32>
    %18 = arith.mulf %16, %17 : vector<1x128xf32>
    %cst_8 = arith.constant 9.99999974E-6 : f32
    %19 = vector.broadcast %cst_8 : f32 to vector<1x128xf32>
    %20 = arith.addf %18, %19 : vector<1x128xf32>
    %21 = math.rsqrt %20 : vector<1x128xf32>
    %c0_9 = arith.constant 0 : index
    %c0_10 = arith.constant 0 : index
    %22 = vector.load %arg5[%c0_9, %c0_10] : memref<1x128xf32, #tpu.memory_space<vmem>>, vector<1x128xf32>
    %c0_11 = arith.constant 0 : index
    %c0_12 = arith.constant 0 : index
    %23 = vector.load %arg3[%c0_11, %c0_12] : memref<1x128xf32, #tpu.memory_space<vmem>>, vector<1x128xf32>
    %cst_13 = arith.constant 0.000000e+00 : f32
    %24 = vector.broadcast %cst_13 : f32 to vector<1x128xf32>
    %25 = arith.cmpf ogt, %22, %24 : vector<1x128xf32>
    %cst_14 = arith.constant 1.000000e+00 : f32
    %26 = vector.broadcast %cst_14 : f32 to vector<1x128xf32>
    %27 = arith.select %25, %21, %26 : vector<1x128xi1>, vector<1x128xf32>
    %28 = arith.mulf %23, %27 : vector<1x128xf32>
    %c0_15 = arith.constant 0 : index
    %c0_16 = arith.constant 0 : index
    %29 = vector.load %arg4[%c0_15, %c0_16] : memref<1x128xf32, #tpu.memory_space<vmem>>, vector<1x128xf32>
    %cst_17 = arith.constant 0.000000e+00 : f32
    %30 = vector.broadcast %cst_17 : f32 to vector<1x128xf32>
    %31 = arith.cmpf ogt, %22, %30 : vector<1x128xf32>
    %cst_18 = arith.constant 0.000000e+00 : f32
    %32 = vector.broadcast %cst_18 : f32 to vector<1x128xf32>
    %33 = arith.select %31, %6, %32 : vector<1x128xi1>, vector<1x128xf32>
    %34 = arith.mulf %33, %28 : vector<1x128xf32>
    %35 = arith.subf %29, %34 : vector<1x128xf32>
    %36 = vector.broadcast %28 : vector<1x128xf32> to vector<32x128xf32>
    %37 = arith.mulf %2, %36 : vector<32x128xf32>
    %38 = vector.broadcast %35 : vector<1x128xf32> to vector<32x128xf32>
    %39 = arith.addf %37, %38 : vector<32x128xf32>
    %cst_19 = arith.constant 0.000000e+00 : f32
    %40 = vector.broadcast %cst_19 : f32 to vector<1x128xf32>
    %41 = arith.cmpf ogt, %22, %40 : vector<1x128xf32>
    %cst_20 = arith.constant 0.000000e+00 : f32
    %42 = vector.broadcast %cst_20 : f32 to vector<32x128xf32>
    %43 = arith.maximumf %39, %42 : vector<32x128xf32>
    %44 = vector.shape_cast %41 : vector<1x128xi1> to vector<1x128xi1>
    %45 = vector.broadcast %44 : vector<1x128xi1> to vector<32x128xi1>
    %46 = arith.select %45, %43, %39 : vector<32x128xi1>, vector<32x128xf32>
    %47 = arith.truncf %46 : vector<32x128xf32> to vector<32x128xbf16>
    %c0_21 = arith.constant 0 : index
    %c0_22 = arith.constant 0 : index
    %48 = vector.load %arg6[%c0_21, %c0_22] : memref<32x128xbf16, #tpu.memory_space<vmem>>, vector<32x128xbf16>
    tpu.vector_store %arg6[%c0_21, %c0_22], %47 {strides = array<i32>} : memref<32x128xbf16, #tpu.memory_space<vmem>>, vector<32x128xbf16>,
    return
  }
  func.func @transform_0(%arg0: i32) -> (i32, i32) {
    %c0_i32 = arith.constant 0 : i32
    %c0_i32_0 = arith.constant 0 : i32
    %c0_i32_1 = arith.constant 0 : i32
    return %c0_i32, %c0_i32_0 : i32, i32
  }
  func.func @transform_1(%arg0: i32) -> (i32, i32) {
    %c0_i32 = arith.constant 0 : i32
    %c0_i32_0 = arith.constant 0 : i32
    %c0_i32_1 = arith.constant 0 : i32
    return %c0_i32, %c0_i32_0 : i32, i32
  }
  func.func @transform_2(%arg0: i32) -> (i32, i32) {
    %c0_i32 = arith.constant 0 : i32
    %c0_i32_0 = arith.constant 0 : i32
    %c0_i32_1 = arith.constant 0 : i32
    return %c0_i32, %c0_i32_0 : i32, i32
  }
  func.func @transform_3(%arg0: i32) -> (i32, i32) {
    %c0_i32 = arith.constant 0 : i32
    %c0_i32_0 = arith.constant 0 : i32
    %c0_i32_1 = arith.constant 0 : i32
    return %c0_i32, %c0_i32_0 : i32, i32
  }
  func.func @transform_4(%arg0: i32) -> (i32, i32) {
    %c0_i32 = arith.constant 0 : i32
    %c0_i32_0 = arith.constant 0 : i32
    %c0_i32_1 = arith.constant 0 : i32
    return %c0_i32, %c0_i32_0 : i32, i32
  }
  func.func @transform_5(%arg0: i32) -> (i32, i32) {
    %c0_i32 = arith.constant 0 : i32
    %c0_i32_0 = arith.constant 0 : i32
    %c0_i32_1 = arith.constant 0 : i32
    return %c0_i32, %c0_i32_0 : i32, i32
  }
}

module attributes {stable_mosaic.version = 11 : i64} {
  func.func @kernel(%arg0: i32, %arg1: memref<32x288xbf16, #tpu.memory_space<vmem>>, %arg2: memref<288x128xbf16, #tpu.memory_space<vmem>>, %arg3: memref<1x128xf32, #tpu.memory_space<vmem>>, %arg4: memref<1x128xf32, #tpu.memory_space<vmem>>, %arg5: memref<1x128xf32, #tpu.memory_space<vmem>>, %arg6: memref<32x128xbf16, #tpu.memory_space<vmem>>, %arg7: memref<32x128xbf16, #tpu.memory_space<vmem>>) attributes {dimension_semantics = [#tpu.dimension_semantics<arbitrary>], iteration_bounds = array<i64: 1>, scalar_prefetch = 0 : i64, scratch_operands = 0 : i64, tpu.core_type = #tpu.core_type<tc>, window_params = [{pipeline_mode = #tpu.pipeline_mode<synchronous>, transform_indices = @transform_0, window_bounds = array<i64: 32, 288>}, {pipeline_mode = #tpu.pipeline_mode<synchronous>, transform_indices = @transform_1, window_bounds = array<i64: 288, 128>}, {pipeline_mode = #tpu.pipeline_mode<synchronous>, transform_indices = @transform_2, window_bounds = array<i64: 1, 128>}, {pipeline_mode = #tpu.pipeline_mode<synchronous>, transform_indices = @transform_3, window_bounds = array<i64: 1, 128>}, {pipeline_mode = #tpu.pipeline_mode<synchronous>, transform_indices = @transform_4, window_bounds = array<i64: 1, 128>}, {pipeline_mode = #tpu.pipeline_mode<synchronous>, transform_indices = @transform_5, window_bounds = array<i64: 32, 128>}, {pipeline_mode = #tpu.pipeline_mode<synchronous>, transform_indices = @transform_6, window_bounds = array<i64: 32, 128>}]} {
    %c0 = arith.constant 0 : index
    %c0_0 = arith.constant 0 : index
    %0 = vector.load %arg1[%c0, %c0_0] : memref<32x288xbf16, #tpu.memory_space<vmem>>, vector<32x288xbf16>
    %c0_1 = arith.constant 0 : index
    %c0_2 = arith.constant 0 : index
    %1 = vector.load %arg2[%c0_1, %c0_2] : memref<288x128xbf16, #tpu.memory_space<vmem>>, vector<288x128xbf16>
    %cst = arith.constant dense<0.000000e+00> : vector<32x128xf32>
    %2 = tpu.matmul %0, %1, %cst {dimension_numbers = #tpu.dot_dimension_numbers<[1], [0], [0], [1], [0, 0, 1, 1], [], []>} : vector<32x288xbf16>, vector<288x128xbf16>, vector<32x128xf32> -> vector<32x128xf32>
    %cst_3 = arith.constant dense<0.000000e+00> : vector<128xf32>
    %3 = vector.multi_reduction <add>, %2, %cst_3 [0] : vector<32x128xf32> to vector<128xf32>
    %4 = vector.shape_cast %3 : vector<128xf32> to vector<1x128xf32>
    %cst_4 = arith.constant 3.125000e-02 : f32
    %5 = vector.broadcast %cst_4 : f32 to vector<1x128xf32>
    %6 = arith.mulf %4, %5 : vector<1x128xf32>
    %7 = tpu.iota {dimensions = array<i32: 0>} : vector<32x128xi32>
    %c32_i32 = arith.constant 32 : i32
    %8 = vector.broadcast %c32_i32 : i32 to vector<32x128xi32>
    %9 = arith.cmpi slt, %7, %8 : vector<32x128xi32>
    %10 = vector.broadcast %6 : vector<1x128xf32> to vector<32x128xf32>
    %11 = arith.subf %2, %10 : vector<32x128xf32>
    %cst_5 = arith.constant 0.000000e+00 : f32
    %12 = vector.broadcast %cst_5 : f32 to vector<32x128xf32>
    %13 = arith.select %9, %11, %12 : vector<32x128xi1>, vector<32x128xf32>
    %14 = arith.mulf %13, %13 : vector<32x128xf32>
    %cst_6 = arith.constant dense<0.000000e+00> : vector<128xf32>
    %15 = vector.multi_reduction <add>, %14, %cst_6 [0] : vector<32x128xf32> to vector<128xf32>
    %16 = vector.shape_cast %15 : vector<128xf32> to vector<1x128xf32>
    %cst_7 = arith.constant 3.125000e-02 : f32
    %17 = vector.broadcast %cst_7 : f32 to vector<1x128xf32>
    %18 = arith.mulf %16, %17 : vector<1x128xf32>
    %cst_8 = arith.constant 9.99999974E-6 : f32
    %19 = vector.broadcast %cst_8 : f32 to vector<1x128xf32>
    %20 = arith.addf %18, %19 : vector<1x128xf32>
    %21 = math.rsqrt %20 : vector<1x128xf32>
    %c0_9 = arith.constant 0 : index
    %c0_10 = arith.constant 0 : index
    %22 = vector.load %arg5[%c0_9, %c0_10] : memref<1x128xf32, #tpu.memory_space<vmem>>, vector<1x128xf32>
    %c0_11 = arith.constant 0 : index
    %c0_12 = arith.constant 0 : index
    %23 = vector.load %arg3[%c0_11, %c0_12] : memref<1x128xf32, #tpu.memory_space<vmem>>, vector<1x128xf32>
    %cst_13 = arith.constant 0.000000e+00 : f32
    %24 = vector.broadcast %cst_13 : f32 to vector<1x128xf32>
    %25 = arith.cmpf ogt, %22, %24 : vector<1x128xf32>
    %cst_14 = arith.constant 1.000000e+00 : f32
    %26 = vector.broadcast %cst_14 : f32 to vector<1x128xf32>
    %27 = arith.select %25, %21, %26 : vector<1x128xi1>, vector<1x128xf32>
    %28 = arith.mulf %23, %27 : vector<1x128xf32>
    %c0_15 = arith.constant 0 : index
    %c0_16 = arith.constant 0 : index
    %29 = vector.load %arg4[%c0_15, %c0_16] : memref<1x128xf32, #tpu.memory_space<vmem>>, vector<1x128xf32>
    %cst_17 = arith.constant 0.000000e+00 : f32
    %30 = vector.broadcast %cst_17 : f32 to vector<1x128xf32>
    %31 = arith.cmpf ogt, %22, %30 : vector<1x128xf32>
    %cst_18 = arith.constant 0.000000e+00 : f32
    %32 = vector.broadcast %cst_18 : f32 to vector<1x128xf32>
    %33 = arith.select %31, %6, %32 : vector<1x128xi1>, vector<1x128xf32>
    %34 = arith.mulf %33, %28 : vector<1x128xf32>
    %35 = arith.subf %29, %34 : vector<1x128xf32>
    %36 = vector.broadcast %28 : vector<1x128xf32> to vector<32x128xf32>
    %37 = arith.mulf %2, %36 : vector<32x128xf32>
    %38 = vector.broadcast %35 : vector<1x128xf32> to vector<32x128xf32>
    %39 = arith.addf %37, %38 : vector<32x128xf32>
    %c0_19 = arith.constant 0 : index
    %c0_20 = arith.constant 0 : index
    %40 = vector.load %arg6[%c0_19, %c0_20] : memref<32x128xbf16, #tpu.memory_space<vmem>>, vector<32x128xbf16>
    %41 = arith.extf %40 : vector<32x128xbf16> to vector<32x128xf32>
    %42 = arith.addf %39, %41 : vector<32x128xf32>
    %cst_21 = arith.constant 0.000000e+00 : f32
    %43 = vector.broadcast %cst_21 : f32 to vector<1x128xf32>
    %44 = arith.cmpf ogt, %22, %43 : vector<1x128xf32>
    %cst_22 = arith.constant 0.000000e+00 : f32
    %45 = vector.broadcast %cst_22 : f32 to vector<32x128xf32>
    %46 = arith.maximumf %42, %45 : vector<32x128xf32>
    %47 = vector.shape_cast %44 : vector<1x128xi1> to vector<1x128xi1>
    %48 = vector.broadcast %47 : vector<1x128xi1> to vector<32x128xi1>
    %49 = arith.select %48, %46, %42 : vector<32x128xi1>, vector<32x128xf32>
    %50 = arith.truncf %49 : vector<32x128xf32> to vector<32x128xbf16>
    %c0_23 = arith.constant 0 : index
    %c0_24 = arith.constant 0 : index
    %51 = vector.load %arg7[%c0_23, %c0_24] : memref<32x128xbf16, #tpu.memory_space<vmem>>, vector<32x128xbf16>
    tpu.vector_store %arg7[%c0_23, %c0_24], %50 {strides = array<i32>} : memref<32x128xbf16, #tpu.memory_space<vmem>>, vector<32x128xbf16>,
    return
  }
  func.func @transform_0(%arg0: i32) -> (i32, i32) {
    %c0_i32 = arith.constant 0 : i32
    %c0_i32_0 = arith.constant 0 : i32
    %c0_i32_1 = arith.constant 0 : i32
    return %c0_i32, %c0_i32_0 : i32, i32
  }
  func.func @transform_1(%arg0: i32) -> (i32, i32) {
    %c0_i32 = arith.constant 0 : i32
    %c0_i32_0 = arith.constant 0 : i32
    %c0_i32_1 = arith.constant 0 : i32
    return %c0_i32, %c0_i32_0 : i32, i32
  }
  func.func @transform_2(%arg0: i32) -> (i32, i32) {
    %c0_i32 = arith.constant 0 : i32
    %c0_i32_0 = arith.constant 0 : i32
    %c0_i32_1 = arith.constant 0 : i32
    return %c0_i32, %c0_i32_0 : i32, i32
  }
  func.func @transform_3(%arg0: i32) -> (i32, i32) {
    %c0_i32 = arith.constant 0 : i32
    %c0_i32_0 = arith.constant 0 : i32
    %c0_i32_1 = arith.constant 0 : i32
    return %c0_i32, %c0_i32_0 : i32, i32
  }
  func.func @transform_4(%arg0: i32) -> (i32, i32) {
    %c0_i32 = arith.constant 0 : i32
    %c0_i32_0 = arith.constant 0 : i32
    %c0_i32_1 = arith.constant 0 : i32
    return %c0_i32, %c0_i32_0 : i32, i32
  }
  func.func @transform_5(%arg0: i32) -> (i32, i32) {
    %c0_i32 = arith.constant 0 : i32
    %c0_i32_0 = arith.constant 0 : i32
    %c0_i32_1 = arith.constant 0 : i32
    return %c0_i32, %c0_i32_0 : i32, i32
  }
  func.func @transform_6(%arg0: i32) -> (i32, i32) {
    %c0_i32 = arith.constant 0 : i32
    %c0_i32_0 = arith.constant 0 : i32
    %c0_i32_1 = arith.constant 0 : i32
    return %c0_i32, %c0_i32_0 : i32, i32
  }
}

module attributes {stable_mosaic.version = 11 : i64} {
  func.func @kernel(%arg0: i32, %arg1: memref<16x288xbf16, #tpu.memory_space<vmem>>, %arg2: memref<288x128xbf16, #tpu.memory_space<vmem>>, %arg3: memref<1x128xf32, #tpu.memory_space<vmem>>, %arg4: memref<1x128xf32, #tpu.memory_space<vmem>>, %arg5: memref<1x128xf32, #tpu.memory_space<vmem>>, %arg6: memref<16x128xbf16, #tpu.memory_space<vmem>>) attributes {dimension_semantics = [#tpu.dimension_semantics<arbitrary>], iteration_bounds = array<i64: 1>, scalar_prefetch = 0 : i64, scratch_operands = 0 : i64, tpu.core_type = #tpu.core_type<tc>, window_params = [{pipeline_mode = #tpu.pipeline_mode<synchronous>, transform_indices = @transform_0, window_bounds = array<i64: 16, 288>}, {pipeline_mode = #tpu.pipeline_mode<synchronous>, transform_indices = @transform_1, window_bounds = array<i64: 288, 128>}, {pipeline_mode = #tpu.pipeline_mode<synchronous>, transform_indices = @transform_2, window_bounds = array<i64: 1, 128>}, {pipeline_mode = #tpu.pipeline_mode<synchronous>, transform_indices = @transform_3, window_bounds = array<i64: 1, 128>}, {pipeline_mode = #tpu.pipeline_mode<synchronous>, transform_indices = @transform_4, window_bounds = array<i64: 1, 128>}, {pipeline_mode = #tpu.pipeline_mode<synchronous>, transform_indices = @transform_5, window_bounds = array<i64: 16, 128>}]} {
    %c0 = arith.constant 0 : index
    %c0_0 = arith.constant 0 : index
    %0 = vector.load %arg1[%c0, %c0_0] : memref<16x288xbf16, #tpu.memory_space<vmem>>, vector<16x288xbf16>
    %c0_1 = arith.constant 0 : index
    %c0_2 = arith.constant 0 : index
    %1 = vector.load %arg2[%c0_1, %c0_2] : memref<288x128xbf16, #tpu.memory_space<vmem>>, vector<288x128xbf16>
    %cst = arith.constant dense<0.000000e+00> : vector<16x128xf32>
    %2 = tpu.matmul %0, %1, %cst {dimension_numbers = #tpu.dot_dimension_numbers<[1], [0], [0], [1], [0, 0, 1, 1], [], []>} : vector<16x288xbf16>, vector<288x128xbf16>, vector<16x128xf32> -> vector<16x128xf32>
    %cst_3 = arith.constant dense<0.000000e+00> : vector<128xf32>
    %3 = vector.multi_reduction <add>, %2, %cst_3 [0] : vector<16x128xf32> to vector<128xf32>
    %4 = vector.shape_cast %3 : vector<128xf32> to vector<1x128xf32>
    %cst_4 = arith.constant 1.250000e-01 : f32
    %5 = vector.broadcast %cst_4 : f32 to vector<1x128xf32>
    %6 = arith.mulf %4, %5 : vector<1x128xf32>
    %7 = tpu.iota {dimensions = array<i32: 0>} : vector<16x128xi32>
    %c8_i32 = arith.constant 8 : i32
    %8 = vector.broadcast %c8_i32 : i32 to vector<16x128xi32>
    %9 = arith.cmpi slt, %7, %8 : vector<16x128xi32>
    %10 = vector.broadcast %6 : vector<1x128xf32> to vector<16x128xf32>
    %11 = arith.subf %2, %10 : vector<16x128xf32>
    %cst_5 = arith.constant 0.000000e+00 : f32
    %12 = vector.broadcast %cst_5 : f32 to vector<16x128xf32>
    %13 = arith.select %9, %11, %12 : vector<16x128xi1>, vector<16x128xf32>
    %14 = arith.mulf %13, %13 : vector<16x128xf32>
    %cst_6 = arith.constant dense<0.000000e+00> : vector<128xf32>
    %15 = vector.multi_reduction <add>, %14, %cst_6 [0] : vector<16x128xf32> to vector<128xf32>
    %16 = vector.shape_cast %15 : vector<128xf32> to vector<1x128xf32>
    %cst_7 = arith.constant 1.250000e-01 : f32
    %17 = vector.broadcast %cst_7 : f32 to vector<1x128xf32>
    %18 = arith.mulf %16, %17 : vector<1x128xf32>
    %cst_8 = arith.constant 9.99999974E-6 : f32
    %19 = vector.broadcast %cst_8 : f32 to vector<1x128xf32>
    %20 = arith.addf %18, %19 : vector<1x128xf32>
    %21 = math.rsqrt %20 : vector<1x128xf32>
    %c0_9 = arith.constant 0 : index
    %c0_10 = arith.constant 0 : index
    %22 = vector.load %arg5[%c0_9, %c0_10] : memref<1x128xf32, #tpu.memory_space<vmem>>, vector<1x128xf32>
    %c0_11 = arith.constant 0 : index
    %c0_12 = arith.constant 0 : index
    %23 = vector.load %arg3[%c0_11, %c0_12] : memref<1x128xf32, #tpu.memory_space<vmem>>, vector<1x128xf32>
    %cst_13 = arith.constant 0.000000e+00 : f32
    %24 = vector.broadcast %cst_13 : f32 to vector<1x128xf32>
    %25 = arith.cmpf ogt, %22, %24 : vector<1x128xf32>
    %cst_14 = arith.constant 1.000000e+00 : f32
    %26 = vector.broadcast %cst_14 : f32 to vector<1x128xf32>
    %27 = arith.select %25, %21, %26 : vector<1x128xi1>, vector<1x128xf32>
    %28 = arith.mulf %23, %27 : vector<1x128xf32>
    %c0_15 = arith.constant 0 : index
    %c0_16 = arith.constant 0 : index
    %29 = vector.load %arg4[%c0_15, %c0_16] : memref<1x128xf32, #tpu.memory_space<vmem>>, vector<1x128xf32>
    %cst_17 = arith.constant 0.000000e+00 : f32
    %30 = vector.broadcast %cst_17 : f32 to vector<1x128xf32>
    %31 = arith.cmpf ogt, %22, %30 : vector<1x128xf32>
    %cst_18 = arith.constant 0.000000e+00 : f32
    %32 = vector.broadcast %cst_18 : f32 to vector<1x128xf32>
    %33 = arith.select %31, %6, %32 : vector<1x128xi1>, vector<1x128xf32>
    %34 = arith.mulf %33, %28 : vector<1x128xf32>
    %35 = arith.subf %29, %34 : vector<1x128xf32>
    %36 = vector.broadcast %28 : vector<1x128xf32> to vector<16x128xf32>
    %37 = arith.mulf %2, %36 : vector<16x128xf32>
    %38 = vector.broadcast %35 : vector<1x128xf32> to vector<16x128xf32>
    %39 = arith.addf %37, %38 : vector<16x128xf32>
    %cst_19 = arith.constant 0.000000e+00 : f32
    %40 = vector.broadcast %cst_19 : f32 to vector<1x128xf32>
    %41 = arith.cmpf ogt, %22, %40 : vector<1x128xf32>
    %cst_20 = arith.constant 0.000000e+00 : f32
    %42 = vector.broadcast %cst_20 : f32 to vector<16x128xf32>
    %43 = arith.maximumf %39, %42 : vector<16x128xf32>
    %44 = vector.shape_cast %41 : vector<1x128xi1> to vector<1x128xi1>
    %45 = vector.broadcast %44 : vector<1x128xi1> to vector<16x128xi1>
    %46 = arith.select %45, %43, %39 : vector<16x128xi1>, vector<16x128xf32>
    %47 = arith.truncf %46 : vector<16x128xf32> to vector<16x128xbf16>
    %c0_21 = arith.constant 0 : index
    %c0_22 = arith.constant 0 : index
    %48 = vector.load %arg6[%c0_21, %c0_22] : memref<16x128xbf16, #tpu.memory_space<vmem>>, vector<16x128xbf16>
    tpu.vector_store %arg6[%c0_21, %c0_22], %47 {strides = array<i32>} : memref<16x128xbf16, #tpu.memory_space<vmem>>, vector<16x128xbf16>,
    return
  }
  func.func @transform_0(%arg0: i32) -> (i32, i32) {
    %c0_i32 = arith.constant 0 : i32
    %c0_i32_0 = arith.constant 0 : i32
    %c0_i32_1 = arith.constant 0 : i32
    return %c0_i32, %c0_i32_0 : i32, i32
  }
  func.func @transform_1(%arg0: i32) -> (i32, i32) {
    %c0_i32 = arith.constant 0 : i32
    %c0_i32_0 = arith.constant 0 : i32
    %c0_i32_1 = arith.constant 0 : i32
    return %c0_i32, %c0_i32_0 : i32, i32
  }
  func.func @transform_2(%arg0: i32) -> (i32, i32) {
    %c0_i32 = arith.constant 0 : i32
    %c0_i32_0 = arith.constant 0 : i32
    %c0_i32_1 = arith.constant 0 : i32
    return %c0_i32, %c0_i32_0 : i32, i32
  }
  func.func @transform_3(%arg0: i32) -> (i32, i32) {
    %c0_i32 = arith.constant 0 : i32
    %c0_i32_0 = arith.constant 0 : i32
    %c0_i32_1 = arith.constant 0 : i32
    return %c0_i32, %c0_i32_0 : i32, i32
  }
  func.func @transform_4(%arg0: i32) -> (i32, i32) {
    %c0_i32 = arith.constant 0 : i32
    %c0_i32_0 = arith.constant 0 : i32
    %c0_i32_1 = arith.constant 0 : i32
    return %c0_i32, %c0_i32_0 : i32, i32
  }
  func.func @transform_5(%arg0: i32) -> (i32, i32) {
    %c0_i32 = arith.constant 0 : i32
    %c0_i32_0 = arith.constant 0 : i32
    %c0_i32_1 = arith.constant 0 : i32
    return %c0_i32, %c0_i32_0 : i32, i32
  }
}

module attributes {stable_mosaic.version = 11 : i64} {
  func.func @kernel(%arg0: i32, %arg1: memref<16x576xbf16, #tpu.memory_space<vmem>>, %arg2: memref<576x128xbf16, #tpu.memory_space<vmem>>, %arg3: memref<1x128xf32, #tpu.memory_space<vmem>>, %arg4: memref<1x128xf32, #tpu.memory_space<vmem>>, %arg5: memref<1x128xf32, #tpu.memory_space<vmem>>, %arg6: memref<16x128xbf16, #tpu.memory_space<vmem>>) attributes {dimension_semantics = [#tpu.dimension_semantics<arbitrary>], iteration_bounds = array<i64: 1>, scalar_prefetch = 0 : i64, scratch_operands = 0 : i64, tpu.core_type = #tpu.core_type<tc>, window_params = [{pipeline_mode = #tpu.pipeline_mode<synchronous>, transform_indices = @transform_0, window_bounds = array<i64: 16, 576>}, {pipeline_mode = #tpu.pipeline_mode<synchronous>, transform_indices = @transform_1, window_bounds = array<i64: 576, 128>}, {pipeline_mode = #tpu.pipeline_mode<synchronous>, transform_indices = @transform_2, window_bounds = array<i64: 1, 128>}, {pipeline_mode = #tpu.pipeline_mode<synchronous>, transform_indices = @transform_3, window_bounds = array<i64: 1, 128>}, {pipeline_mode = #tpu.pipeline_mode<synchronous>, transform_indices = @transform_4, window_bounds = array<i64: 1, 128>}, {pipeline_mode = #tpu.pipeline_mode<synchronous>, transform_indices = @transform_5, window_bounds = array<i64: 16, 128>}]} {
    %c0 = arith.constant 0 : index
    %c0_0 = arith.constant 0 : index
    %0 = vector.load %arg1[%c0, %c0_0] : memref<16x576xbf16, #tpu.memory_space<vmem>>, vector<16x576xbf16>
    %c0_1 = arith.constant 0 : index
    %c0_2 = arith.constant 0 : index
    %1 = vector.load %arg2[%c0_1, %c0_2] : memref<576x128xbf16, #tpu.memory_space<vmem>>, vector<576x128xbf16>
    %cst = arith.constant dense<0.000000e+00> : vector<16x128xf32>
    %2 = tpu.matmul %0, %1, %cst {dimension_numbers = #tpu.dot_dimension_numbers<[1], [0], [0], [1], [0, 0, 1, 1], [], []>} : vector<16x576xbf16>, vector<576x128xbf16>, vector<16x128xf32> -> vector<16x128xf32>
    %cst_3 = arith.constant dense<0.000000e+00> : vector<128xf32>
    %3 = vector.multi_reduction <add>, %2, %cst_3 [0] : vector<16x128xf32> to vector<128xf32>
    %4 = vector.shape_cast %3 : vector<128xf32> to vector<1x128xf32>
    %cst_4 = arith.constant 1.250000e-01 : f32
    %5 = vector.broadcast %cst_4 : f32 to vector<1x128xf32>
    %6 = arith.mulf %4, %5 : vector<1x128xf32>
    %7 = tpu.iota {dimensions = array<i32: 0>} : vector<16x128xi32>
    %c8_i32 = arith.constant 8 : i32
    %8 = vector.broadcast %c8_i32 : i32 to vector<16x128xi32>
    %9 = arith.cmpi slt, %7, %8 : vector<16x128xi32>
    %10 = vector.broadcast %6 : vector<1x128xf32> to vector<16x128xf32>
    %11 = arith.subf %2, %10 : vector<16x128xf32>
    %cst_5 = arith.constant 0.000000e+00 : f32
    %12 = vector.broadcast %cst_5 : f32 to vector<16x128xf32>
    %13 = arith.select %9, %11, %12 : vector<16x128xi1>, vector<16x128xf32>
    %14 = arith.mulf %13, %13 : vector<16x128xf32>
    %cst_6 = arith.constant dense<0.000000e+00> : vector<128xf32>
    %15 = vector.multi_reduction <add>, %14, %cst_6 [0] : vector<16x128xf32> to vector<128xf32>
    %16 = vector.shape_cast %15 : vector<128xf32> to vector<1x128xf32>
    %cst_7 = arith.constant 1.250000e-01 : f32
    %17 = vector.broadcast %cst_7 : f32 to vector<1x128xf32>
    %18 = arith.mulf %16, %17 : vector<1x128xf32>
    %cst_8 = arith.constant 9.99999974E-6 : f32
    %19 = vector.broadcast %cst_8 : f32 to vector<1x128xf32>
    %20 = arith.addf %18, %19 : vector<1x128xf32>
    %21 = math.rsqrt %20 : vector<1x128xf32>
    %c0_9 = arith.constant 0 : index
    %c0_10 = arith.constant 0 : index
    %22 = vector.load %arg5[%c0_9, %c0_10] : memref<1x128xf32, #tpu.memory_space<vmem>>, vector<1x128xf32>
    %c0_11 = arith.constant 0 : index
    %c0_12 = arith.constant 0 : index
    %23 = vector.load %arg3[%c0_11, %c0_12] : memref<1x128xf32, #tpu.memory_space<vmem>>, vector<1x128xf32>
    %cst_13 = arith.constant 0.000000e+00 : f32
    %24 = vector.broadcast %cst_13 : f32 to vector<1x128xf32>
    %25 = arith.cmpf ogt, %22, %24 : vector<1x128xf32>
    %cst_14 = arith.constant 1.000000e+00 : f32
    %26 = vector.broadcast %cst_14 : f32 to vector<1x128xf32>
    %27 = arith.select %25, %21, %26 : vector<1x128xi1>, vector<1x128xf32>
    %28 = arith.mulf %23, %27 : vector<1x128xf32>
    %c0_15 = arith.constant 0 : index
    %c0_16 = arith.constant 0 : index
    %29 = vector.load %arg4[%c0_15, %c0_16] : memref<1x128xf32, #tpu.memory_space<vmem>>, vector<1x128xf32>
    %cst_17 = arith.constant 0.000000e+00 : f32
    %30 = vector.broadcast %cst_17 : f32 to vector<1x128xf32>
    %31 = arith.cmpf ogt, %22, %30 : vector<1x128xf32>
    %cst_18 = arith.constant 0.000000e+00 : f32
    %32 = vector.broadcast %cst_18 : f32 to vector<1x128xf32>
    %33 = arith.select %31, %6, %32 : vector<1x128xi1>, vector<1x128xf32>
    %34 = arith.mulf %33, %28 : vector<1x128xf32>
    %35 = arith.subf %29, %34 : vector<1x128xf32>
    %36 = vector.broadcast %28 : vector<1x128xf32> to vector<16x128xf32>
    %37 = arith.mulf %2, %36 : vector<16x128xf32>
    %38 = vector.broadcast %35 : vector<1x128xf32> to vector<16x128xf32>
    %39 = arith.addf %37, %38 : vector<16x128xf32>
    %cst_19 = arith.constant 0.000000e+00 : f32
    %40 = vector.broadcast %cst_19 : f32 to vector<1x128xf32>
    %41 = arith.cmpf ogt, %22, %40 : vector<1x128xf32>
    %cst_20 = arith.constant 0.000000e+00 : f32
    %42 = vector.broadcast %cst_20 : f32 to vector<16x128xf32>
    %43 = arith.maximumf %39, %42 : vector<16x128xf32>
    %44 = vector.shape_cast %41 : vector<1x128xi1> to vector<1x128xi1>
    %45 = vector.broadcast %44 : vector<1x128xi1> to vector<16x128xi1>
    %46 = arith.select %45, %43, %39 : vector<16x128xi1>, vector<16x128xf32>
    %47 = arith.truncf %46 : vector<16x128xf32> to vector<16x128xbf16>
    %c0_21 = arith.constant 0 : index
    %c0_22 = arith.constant 0 : index
    %48 = vector.load %arg6[%c0_21, %c0_22] : memref<16x128xbf16, #tpu.memory_space<vmem>>, vector<16x128xbf16>
    tpu.vector_store %arg6[%c0_21, %c0_22], %47 {strides = array<i32>} : memref<16x128xbf16, #tpu.memory_space<vmem>>, vector<16x128xbf16>,
    return
  }
  func.func @transform_0(%arg0: i32) -> (i32, i32) {
    %c0_i32 = arith.constant 0 : i32
    %c0_i32_0 = arith.constant 0 : i32
    %c0_i32_1 = arith.constant 0 : i32
    return %c0_i32, %c0_i32_0 : i32, i32
  }
  func.func @transform_1(%arg0: i32) -> (i32, i32) {
    %c0_i32 = arith.constant 0 : i32
    %c0_i32_0 = arith.constant 0 : i32
    %c0_i32_1 = arith.constant 0 : i32
    return %c0_i32, %c0_i32_0 : i32, i32
  }
  func.func @transform_2(%arg0: i32) -> (i32, i32) {
    %c0_i32 = arith.constant 0 : i32
    %c0_i32_0 = arith.constant 0 : i32
    %c0_i32_1 = arith.constant 0 : i32
    return %c0_i32, %c0_i32_0 : i32, i32
  }
  func.func @transform_3(%arg0: i32) -> (i32, i32) {
    %c0_i32 = arith.constant 0 : i32
    %c0_i32_0 = arith.constant 0 : i32
    %c0_i32_1 = arith.constant 0 : i32
    return %c0_i32, %c0_i32_0 : i32, i32
  }
  func.func @transform_4(%arg0: i32) -> (i32, i32) {
    %c0_i32 = arith.constant 0 : i32
    %c0_i32_0 = arith.constant 0 : i32
    %c0_i32_1 = arith.constant 0 : i32
    return %c0_i32, %c0_i32_0 : i32, i32
  }
  func.func @transform_5(%arg0: i32) -> (i32, i32) {
    %c0_i32 = arith.constant 0 : i32
    %c0_i32_0 = arith.constant 0 : i32
    %c0_i32_1 = arith.constant 0 : i32
    return %c0_i32, %c0_i32_0 : i32, i32
  }
}

module attributes {stable_mosaic.version = 11 : i64} {
  func.func @kernel(%arg0: i32, %arg1: memref<16x576xbf16, #tpu.memory_space<vmem>>, %arg2: memref<576x128xbf16, #tpu.memory_space<vmem>>, %arg3: memref<1x128xf32, #tpu.memory_space<vmem>>, %arg4: memref<1x128xf32, #tpu.memory_space<vmem>>, %arg5: memref<1x128xf32, #tpu.memory_space<vmem>>, %arg6: memref<16x128xbf16, #tpu.memory_space<vmem>>, %arg7: memref<16x128xbf16, #tpu.memory_space<vmem>>) attributes {dimension_semantics = [#tpu.dimension_semantics<arbitrary>], iteration_bounds = array<i64: 1>, scalar_prefetch = 0 : i64, scratch_operands = 0 : i64, tpu.core_type = #tpu.core_type<tc>, window_params = [{pipeline_mode = #tpu.pipeline_mode<synchronous>, transform_indices = @transform_0, window_bounds = array<i64: 16, 576>}, {pipeline_mode = #tpu.pipeline_mode<synchronous>, transform_indices = @transform_1, window_bounds = array<i64: 576, 128>}, {pipeline_mode = #tpu.pipeline_mode<synchronous>, transform_indices = @transform_2, window_bounds = array<i64: 1, 128>}, {pipeline_mode = #tpu.pipeline_mode<synchronous>, transform_indices = @transform_3, window_bounds = array<i64: 1, 128>}, {pipeline_mode = #tpu.pipeline_mode<synchronous>, transform_indices = @transform_4, window_bounds = array<i64: 1, 128>}, {pipeline_mode = #tpu.pipeline_mode<synchronous>, transform_indices = @transform_5, window_bounds = array<i64: 16, 128>}, {pipeline_mode = #tpu.pipeline_mode<synchronous>, transform_indices = @transform_6, window_bounds = array<i64: 16, 128>}]} {
    %c0 = arith.constant 0 : index
    %c0_0 = arith.constant 0 : index
    %0 = vector.load %arg1[%c0, %c0_0] : memref<16x576xbf16, #tpu.memory_space<vmem>>, vector<16x576xbf16>
    %c0_1 = arith.constant 0 : index
    %c0_2 = arith.constant 0 : index
    %1 = vector.load %arg2[%c0_1, %c0_2] : memref<576x128xbf16, #tpu.memory_space<vmem>>, vector<576x128xbf16>
    %cst = arith.constant dense<0.000000e+00> : vector<16x128xf32>
    %2 = tpu.matmul %0, %1, %cst {dimension_numbers = #tpu.dot_dimension_numbers<[1], [0], [0], [1], [0, 0, 1, 1], [], []>} : vector<16x576xbf16>, vector<576x128xbf16>, vector<16x128xf32> -> vector<16x128xf32>
    %cst_3 = arith.constant dense<0.000000e+00> : vector<128xf32>
    %3 = vector.multi_reduction <add>, %2, %cst_3 [0] : vector<16x128xf32> to vector<128xf32>
    %4 = vector.shape_cast %3 : vector<128xf32> to vector<1x128xf32>
    %cst_4 = arith.constant 1.250000e-01 : f32
    %5 = vector.broadcast %cst_4 : f32 to vector<1x128xf32>
    %6 = arith.mulf %4, %5 : vector<1x128xf32>
    %7 = tpu.iota {dimensions = array<i32: 0>} : vector<16x128xi32>
    %c8_i32 = arith.constant 8 : i32
    %8 = vector.broadcast %c8_i32 : i32 to vector<16x128xi32>
    %9 = arith.cmpi slt, %7, %8 : vector<16x128xi32>
    %10 = vector.broadcast %6 : vector<1x128xf32> to vector<16x128xf32>
    %11 = arith.subf %2, %10 : vector<16x128xf32>
    %cst_5 = arith.constant 0.000000e+00 : f32
    %12 = vector.broadcast %cst_5 : f32 to vector<16x128xf32>
    %13 = arith.select %9, %11, %12 : vector<16x128xi1>, vector<16x128xf32>
    %14 = arith.mulf %13, %13 : vector<16x128xf32>
    %cst_6 = arith.constant dense<0.000000e+00> : vector<128xf32>
    %15 = vector.multi_reduction <add>, %14, %cst_6 [0] : vector<16x128xf32> to vector<128xf32>
    %16 = vector.shape_cast %15 : vector<128xf32> to vector<1x128xf32>
    %cst_7 = arith.constant 1.250000e-01 : f32
    %17 = vector.broadcast %cst_7 : f32 to vector<1x128xf32>
    %18 = arith.mulf %16, %17 : vector<1x128xf32>
    %cst_8 = arith.constant 9.99999974E-6 : f32
    %19 = vector.broadcast %cst_8 : f32 to vector<1x128xf32>
    %20 = arith.addf %18, %19 : vector<1x128xf32>
    %21 = math.rsqrt %20 : vector<1x128xf32>
    %c0_9 = arith.constant 0 : index
    %c0_10 = arith.constant 0 : index
    %22 = vector.load %arg5[%c0_9, %c0_10] : memref<1x128xf32, #tpu.memory_space<vmem>>, vector<1x128xf32>
    %c0_11 = arith.constant 0 : index
    %c0_12 = arith.constant 0 : index
    %23 = vector.load %arg3[%c0_11, %c0_12] : memref<1x128xf32, #tpu.memory_space<vmem>>, vector<1x128xf32>
    %cst_13 = arith.constant 0.000000e+00 : f32
    %24 = vector.broadcast %cst_13 : f32 to vector<1x128xf32>
    %25 = arith.cmpf ogt, %22, %24 : vector<1x128xf32>
    %cst_14 = arith.constant 1.000000e+00 : f32
    %26 = vector.broadcast %cst_14 : f32 to vector<1x128xf32>
    %27 = arith.select %25, %21, %26 : vector<1x128xi1>, vector<1x128xf32>
    %28 = arith.mulf %23, %27 : vector<1x128xf32>
    %c0_15 = arith.constant 0 : index
    %c0_16 = arith.constant 0 : index
    %29 = vector.load %arg4[%c0_15, %c0_16] : memref<1x128xf32, #tpu.memory_space<vmem>>, vector<1x128xf32>
    %cst_17 = arith.constant 0.000000e+00 : f32
    %30 = vector.broadcast %cst_17 : f32 to vector<1x128xf32>
    %31 = arith.cmpf ogt, %22, %30 : vector<1x128xf32>
    %cst_18 = arith.constant 0.000000e+00 : f32
    %32 = vector.broadcast %cst_18 : f32 to vector<1x128xf32>
    %33 = arith.select %31, %6, %32 : vector<1x128xi1>, vector<1x128xf32>
    %34 = arith.mulf %33, %28 : vector<1x128xf32>
    %35 = arith.subf %29, %34 : vector<1x128xf32>
    %36 = vector.broadcast %28 : vector<1x128xf32> to vector<16x128xf32>
    %37 = arith.mulf %2, %36 : vector<16x128xf32>
    %38 = vector.broadcast %35 : vector<1x128xf32> to vector<16x128xf32>
    %39 = arith.addf %37, %38 : vector<16x128xf32>
    %c0_19 = arith.constant 0 : index
    %c0_20 = arith.constant 0 : index
    %40 = vector.load %arg6[%c0_19, %c0_20] : memref<16x128xbf16, #tpu.memory_space<vmem>>, vector<16x128xbf16>
    %41 = arith.extf %40 : vector<16x128xbf16> to vector<16x128xf32>
    %42 = arith.addf %39, %41 : vector<16x128xf32>
    %cst_21 = arith.constant 0.000000e+00 : f32
    %43 = vector.broadcast %cst_21 : f32 to vector<1x128xf32>
    %44 = arith.cmpf ogt, %22, %43 : vector<1x128xf32>
    %cst_22 = arith.constant 0.000000e+00 : f32
    %45 = vector.broadcast %cst_22 : f32 to vector<16x128xf32>
    %46 = arith.maximumf %42, %45 : vector<16x128xf32>
    %47 = vector.shape_cast %44 : vector<1x128xi1> to vector<1x128xi1>
    %48 = vector.broadcast %47 : vector<1x128xi1> to vector<16x128xi1>
    %49 = arith.select %48, %46, %42 : vector<16x128xi1>, vector<16x128xf32>
    %50 = arith.truncf %49 : vector<16x128xf32> to vector<16x128xbf16>
    %c0_23 = arith.constant 0 : index
    %c0_24 = arith.constant 0 : index
    %51 = vector.load %arg7[%c0_23, %c0_24] : memref<16x128xbf16, #tpu.memory_space<vmem>>, vector<16x128xbf16>
    tpu.vector_store %arg7[%c0_23, %c0_24], %50 {strides = array<i32>} : memref<16x128xbf16, #tpu.memory_space<vmem>>, vector<16x128xbf16>,
    return
  }
  func.func @transform_0(%arg0: i32) -> (i32, i32) {
    %c0_i32 = arith.constant 0 : i32
    %c0_i32_0 = arith.constant 0 : i32
    %c0_i32_1 = arith.constant 0 : i32
    return %c0_i32, %c0_i32_0 : i32, i32
  }
  func.func @transform_1(%arg0: i32) -> (i32, i32) {
    %c0_i32 = arith.constant 0 : i32
    %c0_i32_0 = arith.constant 0 : i32
    %c0_i32_1 = arith.constant 0 : i32
    return %c0_i32, %c0_i32_0 : i32, i32
  }
  func.func @transform_2(%arg0: i32) -> (i32, i32) {
    %c0_i32 = arith.constant 0 : i32
    %c0_i32_0 = arith.constant 0 : i32
    %c0_i32_1 = arith.constant 0 : i32
    return %c0_i32, %c0_i32_0 : i32, i32
  }
  func.func @transform_3(%arg0: i32) -> (i32, i32) {
    %c0_i32 = arith.constant 0 : i32
    %c0_i32_0 = arith.constant 0 : i32
    %c0_i32_1 = arith.constant 0 : i32
    return %c0_i32, %c0_i32_0 : i32, i32
  }
  func.func @transform_4(%arg0: i32) -> (i32, i32) {
    %c0_i32 = arith.constant 0 : i32
    %c0_i32_0 = arith.constant 0 : i32
    %c0_i32_1 = arith.constant 0 : i32
    return %c0_i32, %c0_i32_0 : i32, i32
  }
  func.func @transform_5(%arg0: i32) -> (i32, i32) {
    %c0_i32 = arith.constant 0 : i32
    %c0_i32_0 = arith.constant 0 : i32
    %c0_i32_1 = arith.constant 0 : i32
    return %c0_i32, %c0_i32_0 : i32, i32
  }
  func.func @transform_6(%arg0: i32) -> (i32, i32) {
    %c0_i32 = arith.constant 0 : i32
    %c0_i32_0 = arith.constant 0 : i32
    %c0_i32_1 = arith.constant 0 : i32
    return %c0_i32, %c0_i32_0 : i32, i32
  }
}

module attributes {stable_mosaic.version = 11 : i64} {
  func.func @kernel(%arg0: i32, %arg1: memref<16x576xbf16, #tpu.memory_space<vmem>>, %arg2: memref<576x256xbf16, #tpu.memory_space<vmem>>, %arg3: memref<1x256xf32, #tpu.memory_space<vmem>>, %arg4: memref<1x256xf32, #tpu.memory_space<vmem>>, %arg5: memref<1x256xf32, #tpu.memory_space<vmem>>, %arg6: memref<16x256xbf16, #tpu.memory_space<vmem>>) attributes {dimension_semantics = [#tpu.dimension_semantics<arbitrary>], iteration_bounds = array<i64: 1>, scalar_prefetch = 0 : i64, scratch_operands = 0 : i64, tpu.core_type = #tpu.core_type<tc>, window_params = [{pipeline_mode = #tpu.pipeline_mode<synchronous>, transform_indices = @transform_0, window_bounds = array<i64: 16, 576>}, {pipeline_mode = #tpu.pipeline_mode<synchronous>, transform_indices = @transform_1, window_bounds = array<i64: 576, 256>}, {pipeline_mode = #tpu.pipeline_mode<synchronous>, transform_indices = @transform_2, window_bounds = array<i64: 1, 256>}, {pipeline_mode = #tpu.pipeline_mode<synchronous>, transform_indices = @transform_3, window_bounds = array<i64: 1, 256>}, {pipeline_mode = #tpu.pipeline_mode<synchronous>, transform_indices = @transform_4, window_bounds = array<i64: 1, 256>}, {pipeline_mode = #tpu.pipeline_mode<synchronous>, transform_indices = @transform_5, window_bounds = array<i64: 16, 256>}]} {
    %c0 = arith.constant 0 : index
    %c0_0 = arith.constant 0 : index
    %0 = vector.load %arg1[%c0, %c0_0] : memref<16x576xbf16, #tpu.memory_space<vmem>>, vector<16x576xbf16>
    %c0_1 = arith.constant 0 : index
    %c0_2 = arith.constant 0 : index
    %1 = vector.load %arg2[%c0_1, %c0_2] : memref<576x256xbf16, #tpu.memory_space<vmem>>, vector<576x256xbf16>
    %cst = arith.constant dense<0.000000e+00> : vector<16x256xf32>
    %2 = tpu.matmul %0, %1, %cst {dimension_numbers = #tpu.dot_dimension_numbers<[1], [0], [0], [1], [0, 0, 1, 1], [], []>} : vector<16x576xbf16>, vector<576x256xbf16>, vector<16x256xf32> -> vector<16x256xf32>
    %cst_3 = arith.constant dense<0.000000e+00> : vector<256xf32>
    %3 = vector.multi_reduction <add>, %2, %cst_3 [0] : vector<16x256xf32> to vector<256xf32>
    %4 = vector.shape_cast %3 : vector<256xf32> to vector<1x256xf32>
    %cst_4 = arith.constant 5.000000e-01 : f32
    %5 = vector.broadcast %cst_4 : f32 to vector<1x256xf32>
    %6 = arith.mulf %4, %5 : vector<1x256xf32>
    %7 = tpu.iota {dimensions = array<i32: 0>} : vector<16x256xi32>
    %c2_i32 = arith.constant 2 : i32
    %8 = vector.broadcast %c2_i32 : i32 to vector<16x256xi32>
    %9 = arith.cmpi slt, %7, %8 : vector<16x256xi32>
    %10 = vector.broadcast %6 : vector<1x256xf32> to vector<16x256xf32>
    %11 = arith.subf %2, %10 : vector<16x256xf32>
    %cst_5 = arith.constant 0.000000e+00 : f32
    %12 = vector.broadcast %cst_5 : f32 to vector<16x256xf32>
    %13 = arith.select %9, %11, %12 : vector<16x256xi1>, vector<16x256xf32>
    %14 = arith.mulf %13, %13 : vector<16x256xf32>
    %cst_6 = arith.constant dense<0.000000e+00> : vector<256xf32>
    %15 = vector.multi_reduction <add>, %14, %cst_6 [0] : vector<16x256xf32> to vector<256xf32>
    %16 = vector.shape_cast %15 : vector<256xf32> to vector<1x256xf32>
    %cst_7 = arith.constant 5.000000e-01 : f32
    %17 = vector.broadcast %cst_7 : f32 to vector<1x256xf32>
    %18 = arith.mulf %16, %17 : vector<1x256xf32>
    %cst_8 = arith.constant 9.99999974E-6 : f32
    %19 = vector.broadcast %cst_8 : f32 to vector<1x256xf32>
    %20 = arith.addf %18, %19 : vector<1x256xf32>
    %21 = math.rsqrt %20 : vector<1x256xf32>
    %c0_9 = arith.constant 0 : index
    %c0_10 = arith.constant 0 : index
    %22 = vector.load %arg5[%c0_9, %c0_10] : memref<1x256xf32, #tpu.memory_space<vmem>>, vector<1x256xf32>
    %c0_11 = arith.constant 0 : index
    %c0_12 = arith.constant 0 : index
    %23 = vector.load %arg3[%c0_11, %c0_12] : memref<1x256xf32, #tpu.memory_space<vmem>>, vector<1x256xf32>
    %cst_13 = arith.constant 0.000000e+00 : f32
    %24 = vector.broadcast %cst_13 : f32 to vector<1x256xf32>
    %25 = arith.cmpf ogt, %22, %24 : vector<1x256xf32>
    %cst_14 = arith.constant 1.000000e+00 : f32
    %26 = vector.broadcast %cst_14 : f32 to vector<1x256xf32>
    %27 = arith.select %25, %21, %26 : vector<1x256xi1>, vector<1x256xf32>
    %28 = arith.mulf %23, %27 : vector<1x256xf32>
    %c0_15 = arith.constant 0 : index
    %c0_16 = arith.constant 0 : index
    %29 = vector.load %arg4[%c0_15, %c0_16] : memref<1x256xf32, #tpu.memory_space<vmem>>, vector<1x256xf32>
    %cst_17 = arith.constant 0.000000e+00 : f32
    %30 = vector.broadcast %cst_17 : f32 to vector<1x256xf32>
    %31 = arith.cmpf ogt, %22, %30 : vector<1x256xf32>
    %cst_18 = arith.constant 0.000000e+00 : f32
    %32 = vector.broadcast %cst_18 : f32 to vector<1x256xf32>
    %33 = arith.select %31, %6, %32 : vector<1x256xi1>, vector<1x256xf32>
    %34 = arith.mulf %33, %28 : vector<1x256xf32>
    %35 = arith.subf %29, %34 : vector<1x256xf32>
    %36 = vector.broadcast %28 : vector<1x256xf32> to vector<16x256xf32>
    %37 = arith.mulf %2, %36 : vector<16x256xf32>
    %38 = vector.broadcast %35 : vector<1x256xf32> to vector<16x256xf32>
    %39 = arith.addf %37, %38 : vector<16x256xf32>
    %cst_19 = arith.constant 0.000000e+00 : f32
    %40 = vector.broadcast %cst_19 : f32 to vector<1x256xf32>
    %41 = arith.cmpf ogt, %22, %40 : vector<1x256xf32>
    %cst_20 = arith.constant 0.000000e+00 : f32
    %42 = vector.broadcast %cst_20 : f32 to vector<16x256xf32>
    %43 = arith.maximumf %39, %42 : vector<16x256xf32>
    %44 = vector.shape_cast %41 : vector<1x256xi1> to vector<1x256xi1>
    %45 = vector.broadcast %44 : vector<1x256xi1> to vector<16x256xi1>
    %46 = arith.select %45, %43, %39 : vector<16x256xi1>, vector<16x256xf32>
    %47 = arith.truncf %46 : vector<16x256xf32> to vector<16x256xbf16>
    %c0_21 = arith.constant 0 : index
    %c0_22 = arith.constant 0 : index
    %48 = vector.load %arg6[%c0_21, %c0_22] : memref<16x256xbf16, #tpu.memory_space<vmem>>, vector<16x256xbf16>
    tpu.vector_store %arg6[%c0_21, %c0_22], %47 {strides = array<i32>} : memref<16x256xbf16, #tpu.memory_space<vmem>>, vector<16x256xbf16>,
    return
  }
  func.func @transform_0(%arg0: i32) -> (i32, i32) {
    %c0_i32 = arith.constant 0 : i32
    %c0_i32_0 = arith.constant 0 : i32
    %c0_i32_1 = arith.constant 0 : i32
    return %c0_i32, %c0_i32_0 : i32, i32
  }
  func.func @transform_1(%arg0: i32) -> (i32, i32) {
    %c0_i32 = arith.constant 0 : i32
    %c0_i32_0 = arith.constant 0 : i32
    %c0_i32_1 = arith.constant 0 : i32
    return %c0_i32, %c0_i32_0 : i32, i32
  }
  func.func @transform_2(%arg0: i32) -> (i32, i32) {
    %c0_i32 = arith.constant 0 : i32
    %c0_i32_0 = arith.constant 0 : i32
    %c0_i32_1 = arith.constant 0 : i32
    return %c0_i32, %c0_i32_0 : i32, i32
  }
  func.func @transform_3(%arg0: i32) -> (i32, i32) {
    %c0_i32 = arith.constant 0 : i32
    %c0_i32_0 = arith.constant 0 : i32
    %c0_i32_1 = arith.constant 0 : i32
    return %c0_i32, %c0_i32_0 : i32, i32
  }
  func.func @transform_4(%arg0: i32) -> (i32, i32) {
    %c0_i32 = arith.constant 0 : i32
    %c0_i32_0 = arith.constant 0 : i32
    %c0_i32_1 = arith.constant 0 : i32
    return %c0_i32, %c0_i32_0 : i32, i32
  }
  func.func @transform_5(%arg0: i32) -> (i32, i32) {
    %c0_i32 = arith.constant 0 : i32
    %c0_i32_0 = arith.constant 0 : i32
    %c0_i32_1 = arith.constant 0 : i32
    return %c0_i32, %c0_i32_0 : i32, i32
  }
}

module attributes {stable_mosaic.version = 11 : i64} {
  func.func @kernel(%arg0: i32, %arg1: memref<16x1152xbf16, #tpu.memory_space<vmem>>, %arg2: memref<1152x128xbf16, #tpu.memory_space<vmem>>, %arg3: memref<1x128xf32, #tpu.memory_space<vmem>>, %arg4: memref<1x128xf32, #tpu.memory_space<vmem>>, %arg5: memref<1x128xf32, #tpu.memory_space<vmem>>, %arg6: memref<16x128xbf16, #tpu.memory_space<vmem>>) attributes {dimension_semantics = [#tpu.dimension_semantics<arbitrary>], iteration_bounds = array<i64: 1>, scalar_prefetch = 0 : i64, scratch_operands = 0 : i64, tpu.core_type = #tpu.core_type<tc>, window_params = [{pipeline_mode = #tpu.pipeline_mode<synchronous>, transform_indices = @transform_0, window_bounds = array<i64: 16, 1152>}, {pipeline_mode = #tpu.pipeline_mode<synchronous>, transform_indices = @transform_1, window_bounds = array<i64: 1152, 128>}, {pipeline_mode = #tpu.pipeline_mode<synchronous>, transform_indices = @transform_2, window_bounds = array<i64: 1, 128>}, {pipeline_mode = #tpu.pipeline_mode<synchronous>, transform_indices = @transform_3, window_bounds = array<i64: 1, 128>}, {pipeline_mode = #tpu.pipeline_mode<synchronous>, transform_indices = @transform_4, window_bounds = array<i64: 1, 128>}, {pipeline_mode = #tpu.pipeline_mode<synchronous>, transform_indices = @transform_5, window_bounds = array<i64: 16, 128>}]} {
    %c0 = arith.constant 0 : index
    %c0_0 = arith.constant 0 : index
    %0 = vector.load %arg1[%c0, %c0_0] : memref<16x1152xbf16, #tpu.memory_space<vmem>>, vector<16x1152xbf16>
    %c0_1 = arith.constant 0 : index
    %c0_2 = arith.constant 0 : index
    %1 = vector.load %arg2[%c0_1, %c0_2] : memref<1152x128xbf16, #tpu.memory_space<vmem>>, vector<1152x128xbf16>
    %cst = arith.constant dense<0.000000e+00> : vector<16x128xf32>
    %2 = tpu.matmul %0, %1, %cst {dimension_numbers = #tpu.dot_dimension_numbers<[1], [0], [0], [1], [0, 0, 1, 1], [], []>} : vector<16x1152xbf16>, vector<1152x128xbf16>, vector<16x128xf32> -> vector<16x128xf32>
    %cst_3 = arith.constant dense<0.000000e+00> : vector<128xf32>
    %3 = vector.multi_reduction <add>, %2, %cst_3 [0] : vector<16x128xf32> to vector<128xf32>
    %4 = vector.shape_cast %3 : vector<128xf32> to vector<1x128xf32>
    %cst_4 = arith.constant 5.000000e-01 : f32
    %5 = vector.broadcast %cst_4 : f32 to vector<1x128xf32>
    %6 = arith.mulf %4, %5 : vector<1x128xf32>
    %7 = tpu.iota {dimensions = array<i32: 0>} : vector<16x128xi32>
    %c2_i32 = arith.constant 2 : i32
    %8 = vector.broadcast %c2_i32 : i32 to vector<16x128xi32>
    %9 = arith.cmpi slt, %7, %8 : vector<16x128xi32>
    %10 = vector.broadcast %6 : vector<1x128xf32> to vector<16x128xf32>
    %11 = arith.subf %2, %10 : vector<16x128xf32>
    %cst_5 = arith.constant 0.000000e+00 : f32
    %12 = vector.broadcast %cst_5 : f32 to vector<16x128xf32>
    %13 = arith.select %9, %11, %12 : vector<16x128xi1>, vector<16x128xf32>
    %14 = arith.mulf %13, %13 : vector<16x128xf32>
    %cst_6 = arith.constant dense<0.000000e+00> : vector<128xf32>
    %15 = vector.multi_reduction <add>, %14, %cst_6 [0] : vector<16x128xf32> to vector<128xf32>
    %16 = vector.shape_cast %15 : vector<128xf32> to vector<1x128xf32>
    %cst_7 = arith.constant 5.000000e-01 : f32
    %17 = vector.broadcast %cst_7 : f32 to vector<1x128xf32>
    %18 = arith.mulf %16, %17 : vector<1x128xf32>
    %cst_8 = arith.constant 9.99999974E-6 : f32
    %19 = vector.broadcast %cst_8 : f32 to vector<1x128xf32>
    %20 = arith.addf %18, %19 : vector<1x128xf32>
    %21 = math.rsqrt %20 : vector<1x128xf32>
    %c0_9 = arith.constant 0 : index
    %c0_10 = arith.constant 0 : index
    %22 = vector.load %arg5[%c0_9, %c0_10] : memref<1x128xf32, #tpu.memory_space<vmem>>, vector<1x128xf32>
    %c0_11 = arith.constant 0 : index
    %c0_12 = arith.constant 0 : index
    %23 = vector.load %arg3[%c0_11, %c0_12] : memref<1x128xf32, #tpu.memory_space<vmem>>, vector<1x128xf32>
    %cst_13 = arith.constant 0.000000e+00 : f32
    %24 = vector.broadcast %cst_13 : f32 to vector<1x128xf32>
    %25 = arith.cmpf ogt, %22, %24 : vector<1x128xf32>
    %cst_14 = arith.constant 1.000000e+00 : f32
    %26 = vector.broadcast %cst_14 : f32 to vector<1x128xf32>
    %27 = arith.select %25, %21, %26 : vector<1x128xi1>, vector<1x128xf32>
    %28 = arith.mulf %23, %27 : vector<1x128xf32>
    %c0_15 = arith.constant 0 : index
    %c0_16 = arith.constant 0 : index
    %29 = vector.load %arg4[%c0_15, %c0_16] : memref<1x128xf32, #tpu.memory_space<vmem>>, vector<1x128xf32>
    %cst_17 = arith.constant 0.000000e+00 : f32
    %30 = vector.broadcast %cst_17 : f32 to vector<1x128xf32>
    %31 = arith.cmpf ogt, %22, %30 : vector<1x128xf32>
    %cst_18 = arith.constant 0.000000e+00 : f32
    %32 = vector.broadcast %cst_18 : f32 to vector<1x128xf32>
    %33 = arith.select %31, %6, %32 : vector<1x128xi1>, vector<1x128xf32>
    %34 = arith.mulf %33, %28 : vector<1x128xf32>
    %35 = arith.subf %29, %34 : vector<1x128xf32>
    %36 = vector.broadcast %28 : vector<1x128xf32> to vector<16x128xf32>
    %37 = arith.mulf %2, %36 : vector<16x128xf32>
    %38 = vector.broadcast %35 : vector<1x128xf32> to vector<16x128xf32>
    %39 = arith.addf %37, %38 : vector<16x128xf32>
    %cst_19 = arith.constant 0.000000e+00 : f32
    %40 = vector.broadcast %cst_19 : f32 to vector<1x128xf32>
    %41 = arith.cmpf ogt, %22, %40 : vector<1x128xf32>
    %cst_20 = arith.constant 0.000000e+00 : f32
    %42 = vector.broadcast %cst_20 : f32 to vector<16x128xf32>
    %43 = arith.maximumf %39, %42 : vector<16x128xf32>
    %44 = vector.shape_cast %41 : vector<1x128xi1> to vector<1x128xi1>
    %45 = vector.broadcast %44 : vector<1x128xi1> to vector<16x128xi1>
    %46 = arith.select %45, %43, %39 : vector<16x128xi1>, vector<16x128xf32>
    %47 = arith.truncf %46 : vector<16x128xf32> to vector<16x128xbf16>
    %c0_21 = arith.constant 0 : index
    %c0_22 = arith.constant 0 : index
    %48 = vector.load %arg6[%c0_21, %c0_22] : memref<16x128xbf16, #tpu.memory_space<vmem>>, vector<16x128xbf16>
    tpu.vector_store %arg6[%c0_21, %c0_22], %47 {strides = array<i32>} : memref<16x128xbf16, #tpu.memory_space<vmem>>, vector<16x128xbf16>,
    return
  }
  func.func @transform_0(%arg0: i32) -> (i32, i32) {
    %c0_i32 = arith.constant 0 : i32
    %c0_i32_0 = arith.constant 0 : i32
    %c0_i32_1 = arith.constant 0 : i32
    return %c0_i32, %c0_i32_0 : i32, i32
  }
  func.func @transform_1(%arg0: i32) -> (i32, i32) {
    %c0_i32 = arith.constant 0 : i32
    %c0_i32_0 = arith.constant 0 : i32
    %c0_i32_1 = arith.constant 0 : i32
    return %c0_i32, %c0_i32_0 : i32, i32
  }
  func.func @transform_2(%arg0: i32) -> (i32, i32) {
    %c0_i32 = arith.constant 0 : i32
    %c0_i32_0 = arith.constant 0 : i32
    %c0_i32_1 = arith.constant 0 : i32
    return %c0_i32, %c0_i32_0 : i32, i32
  }
  func.func @transform_3(%arg0: i32) -> (i32, i32) {
    %c0_i32 = arith.constant 0 : i32
    %c0_i32_0 = arith.constant 0 : i32
    %c0_i32_1 = arith.constant 0 : i32
    return %c0_i32, %c0_i32_0 : i32, i32
  }
  func.func @transform_4(%arg0: i32) -> (i32, i32) {
    %c0_i32 = arith.constant 0 : i32
    %c0_i32_0 = arith.constant 0 : i32
    %c0_i32_1 = arith.constant 0 : i32
    return %c0_i32, %c0_i32_0 : i32, i32
  }
  func.func @transform_5(%arg0: i32) -> (i32, i32) {
    %c0_i32 = arith.constant 0 : i32
    %c0_i32_0 = arith.constant 0 : i32
    %c0_i32_1 = arith.constant 0 : i32
    return %c0_i32, %c0_i32_0 : i32, i32
  }
}

module attributes {stable_mosaic.version = 11 : i64} {
  func.func @kernel(%arg0: i32, %arg1: memref<16x1152xbf16, #tpu.memory_space<vmem>>, %arg2: memref<1152x128xbf16, #tpu.memory_space<vmem>>, %arg3: memref<1x128xf32, #tpu.memory_space<vmem>>, %arg4: memref<1x128xf32, #tpu.memory_space<vmem>>, %arg5: memref<1x128xf32, #tpu.memory_space<vmem>>, %arg6: memref<16x128xbf16, #tpu.memory_space<vmem>>, %arg7: memref<16x128xbf16, #tpu.memory_space<vmem>>) attributes {dimension_semantics = [#tpu.dimension_semantics<arbitrary>], iteration_bounds = array<i64: 1>, scalar_prefetch = 0 : i64, scratch_operands = 0 : i64, tpu.core_type = #tpu.core_type<tc>, window_params = [{pipeline_mode = #tpu.pipeline_mode<synchronous>, transform_indices = @transform_0, window_bounds = array<i64: 16, 1152>}, {pipeline_mode = #tpu.pipeline_mode<synchronous>, transform_indices = @transform_1, window_bounds = array<i64: 1152, 128>}, {pipeline_mode = #tpu.pipeline_mode<synchronous>, transform_indices = @transform_2, window_bounds = array<i64: 1, 128>}, {pipeline_mode = #tpu.pipeline_mode<synchronous>, transform_indices = @transform_3, window_bounds = array<i64: 1, 128>}, {pipeline_mode = #tpu.pipeline_mode<synchronous>, transform_indices = @transform_4, window_bounds = array<i64: 1, 128>}, {pipeline_mode = #tpu.pipeline_mode<synchronous>, transform_indices = @transform_5, window_bounds = array<i64: 16, 128>}, {pipeline_mode = #tpu.pipeline_mode<synchronous>, transform_indices = @transform_6, window_bounds = array<i64: 16, 128>}]} {
    %c0 = arith.constant 0 : index
    %c0_0 = arith.constant 0 : index
    %0 = vector.load %arg1[%c0, %c0_0] : memref<16x1152xbf16, #tpu.memory_space<vmem>>, vector<16x1152xbf16>
    %c0_1 = arith.constant 0 : index
    %c0_2 = arith.constant 0 : index
    %1 = vector.load %arg2[%c0_1, %c0_2] : memref<1152x128xbf16, #tpu.memory_space<vmem>>, vector<1152x128xbf16>
    %cst = arith.constant dense<0.000000e+00> : vector<16x128xf32>
    %2 = tpu.matmul %0, %1, %cst {dimension_numbers = #tpu.dot_dimension_numbers<[1], [0], [0], [1], [0, 0, 1, 1], [], []>} : vector<16x1152xbf16>, vector<1152x128xbf16>, vector<16x128xf32> -> vector<16x128xf32>
    %cst_3 = arith.constant dense<0.000000e+00> : vector<128xf32>
    %3 = vector.multi_reduction <add>, %2, %cst_3 [0] : vector<16x128xf32> to vector<128xf32>
    %4 = vector.shape_cast %3 : vector<128xf32> to vector<1x128xf32>
    %cst_4 = arith.constant 5.000000e-01 : f32
    %5 = vector.broadcast %cst_4 : f32 to vector<1x128xf32>
    %6 = arith.mulf %4, %5 : vector<1x128xf32>
    %7 = tpu.iota {dimensions = array<i32: 0>} : vector<16x128xi32>
    %c2_i32 = arith.constant 2 : i32
    %8 = vector.broadcast %c2_i32 : i32 to vector<16x128xi32>
    %9 = arith.cmpi slt, %7, %8 : vector<16x128xi32>
    %10 = vector.broadcast %6 : vector<1x128xf32> to vector<16x128xf32>
    %11 = arith.subf %2, %10 : vector<16x128xf32>
    %cst_5 = arith.constant 0.000000e+00 : f32
    %12 = vector.broadcast %cst_5 : f32 to vector<16x128xf32>
    %13 = arith.select %9, %11, %12 : vector<16x128xi1>, vector<16x128xf32>
    %14 = arith.mulf %13, %13 : vector<16x128xf32>
    %cst_6 = arith.constant dense<0.000000e+00> : vector<128xf32>
    %15 = vector.multi_reduction <add>, %14, %cst_6 [0] : vector<16x128xf32> to vector<128xf32>
    %16 = vector.shape_cast %15 : vector<128xf32> to vector<1x128xf32>
    %cst_7 = arith.constant 5.000000e-01 : f32
    %17 = vector.broadcast %cst_7 : f32 to vector<1x128xf32>
    %18 = arith.mulf %16, %17 : vector<1x128xf32>
    %cst_8 = arith.constant 9.99999974E-6 : f32
    %19 = vector.broadcast %cst_8 : f32 to vector<1x128xf32>
    %20 = arith.addf %18, %19 : vector<1x128xf32>
    %21 = math.rsqrt %20 : vector<1x128xf32>
    %c0_9 = arith.constant 0 : index
    %c0_10 = arith.constant 0 : index
    %22 = vector.load %arg5[%c0_9, %c0_10] : memref<1x128xf32, #tpu.memory_space<vmem>>, vector<1x128xf32>
    %c0_11 = arith.constant 0 : index
    %c0_12 = arith.constant 0 : index
    %23 = vector.load %arg3[%c0_11, %c0_12] : memref<1x128xf32, #tpu.memory_space<vmem>>, vector<1x128xf32>
    %cst_13 = arith.constant 0.000000e+00 : f32
    %24 = vector.broadcast %cst_13 : f32 to vector<1x128xf32>
    %25 = arith.cmpf ogt, %22, %24 : vector<1x128xf32>
    %cst_14 = arith.constant 1.000000e+00 : f32
    %26 = vector.broadcast %cst_14 : f32 to vector<1x128xf32>
    %27 = arith.select %25, %21, %26 : vector<1x128xi1>, vector<1x128xf32>
    %28 = arith.mulf %23, %27 : vector<1x128xf32>
    %c0_15 = arith.constant 0 : index
    %c0_16 = arith.constant 0 : index
    %29 = vector.load %arg4[%c0_15, %c0_16] : memref<1x128xf32, #tpu.memory_space<vmem>>, vector<1x128xf32>
    %cst_17 = arith.constant 0.000000e+00 : f32
    %30 = vector.broadcast %cst_17 : f32 to vector<1x128xf32>
    %31 = arith.cmpf ogt, %22, %30 : vector<1x128xf32>
    %cst_18 = arith.constant 0.000000e+00 : f32
    %32 = vector.broadcast %cst_18 : f32 to vector<1x128xf32>
    %33 = arith.select %31, %6, %32 : vector<1x128xi1>, vector<1x128xf32>
    %34 = arith.mulf %33, %28 : vector<1x128xf32>
    %35 = arith.subf %29, %34 : vector<1x128xf32>
    %36 = vector.broadcast %28 : vector<1x128xf32> to vector<16x128xf32>
    %37 = arith.mulf %2, %36 : vector<16x128xf32>
    %38 = vector.broadcast %35 : vector<1x128xf32> to vector<16x128xf32>
    %39 = arith.addf %37, %38 : vector<16x128xf32>
    %c0_19 = arith.constant 0 : index
    %c0_20 = arith.constant 0 : index
    %40 = vector.load %arg6[%c0_19, %c0_20] : memref<16x128xbf16, #tpu.memory_space<vmem>>, vector<16x128xbf16>
    %41 = arith.extf %40 : vector<16x128xbf16> to vector<16x128xf32>
    %42 = arith.addf %39, %41 : vector<16x128xf32>
    %cst_21 = arith.constant 0.000000e+00 : f32
    %43 = vector.broadcast %cst_21 : f32 to vector<1x128xf32>
    %44 = arith.cmpf ogt, %22, %43 : vector<1x128xf32>
    %cst_22 = arith.constant 0.000000e+00 : f32
    %45 = vector.broadcast %cst_22 : f32 to vector<16x128xf32>
    %46 = arith.maximumf %42, %45 : vector<16x128xf32>
    %47 = vector.shape_cast %44 : vector<1x128xi1> to vector<1x128xi1>
    %48 = vector.broadcast %47 : vector<1x128xi1> to vector<16x128xi1>
    %49 = arith.select %48, %46, %42 : vector<16x128xi1>, vector<16x128xf32>
    %50 = arith.truncf %49 : vector<16x128xf32> to vector<16x128xbf16>
    %c0_23 = arith.constant 0 : index
    %c0_24 = arith.constant 0 : index
    %51 = vector.load %arg7[%c0_23, %c0_24] : memref<16x128xbf16, #tpu.memory_space<vmem>>, vector<16x128xbf16>
    tpu.vector_store %arg7[%c0_23, %c0_24], %50 {strides = array<i32>} : memref<16x128xbf16, #tpu.memory_space<vmem>>, vector<16x128xbf16>,
    return
  }
  func.func @transform_0(%arg0: i32) -> (i32, i32) {
    %c0_i32 = arith.constant 0 : i32
    %c0_i32_0 = arith.constant 0 : i32
    %c0_i32_1 = arith.constant 0 : i32
    return %c0_i32, %c0_i32_0 : i32, i32
  }
  func.func @transform_1(%arg0: i32) -> (i32, i32) {
    %c0_i32 = arith.constant 0 : i32
    %c0_i32_0 = arith.constant 0 : i32
    %c0_i32_1 = arith.constant 0 : i32
    return %c0_i32, %c0_i32_0 : i32, i32
  }
  func.func @transform_2(%arg0: i32) -> (i32, i32) {
    %c0_i32 = arith.constant 0 : i32
    %c0_i32_0 = arith.constant 0 : i32
    %c0_i32_1 = arith.constant 0 : i32
    return %c0_i32, %c0_i32_0 : i32, i32
  }
  func.func @transform_3(%arg0: i32) -> (i32, i32) {
    %c0_i32 = arith.constant 0 : i32
    %c0_i32_0 = arith.constant 0 : i32
    %c0_i32_1 = arith.constant 0 : i32
    return %c0_i32, %c0_i32_0 : i32, i32
  }
  func.func @transform_4(%arg0: i32) -> (i32, i32) {
    %c0_i32 = arith.constant 0 : i32
    %c0_i32_0 = arith.constant 0 : i32
    %c0_i32_1 = arith.constant 0 : i32
    return %c0_i32, %c0_i32_0 : i32, i32
  }
  func.func @transform_5(%arg0: i32) -> (i32, i32) {
    %c0_i32 = arith.constant 0 : i32
    %c0_i32_0 = arith.constant 0 : i32
    %c0_i32_1 = arith.constant 0 : i32
    return %c0_i32, %c0_i32_0 : i32, i32
  }
  func.func @transform_6(%arg0: i32) -> (i32, i32) {
    %c0_i32 = arith.constant 0 : i32
    %c0_i32_0 = arith.constant 0 : i32
    %c0_i32_1 = arith.constant 0 : i32
    return %c0_i32, %c0_i32_0 : i32, i32
  }
}

module attributes {stable_mosaic.version = 11 : i64} {
  func.func @kernel(%arg0: i32, %arg1: memref<16x512xbf16, #tpu.memory_space<vmem>>, %arg2: memref<512x512xbf16, #tpu.memory_space<vmem>>, %arg3: memref<1x512xf32, #tpu.memory_space<vmem>>, %arg4: memref<16x512xbf16, #tpu.memory_space<vmem>>) attributes {dimension_semantics = [#tpu.dimension_semantics<parallel>], iteration_bounds = array<i64: 1>, scalar_prefetch = 0 : i64, scratch_operands = 0 : i64, tpu.core_type = #tpu.core_type<tc>, window_params = [{transform_indices = @transform_0, window_bounds = array<i64: 16, 512>}, {pipeline_mode = #tpu.pipeline_mode<synchronous>, transform_indices = @transform_1, window_bounds = array<i64: 512, 512>}, {pipeline_mode = #tpu.pipeline_mode<synchronous>, transform_indices = @transform_2, window_bounds = array<i64: 1, 512>}, {transform_indices = @transform_3, window_bounds = array<i64: 16, 512>}]} {
    %c0 = arith.constant 0 : index
    %c0_0 = arith.constant 0 : index
    %0 = vector.load %arg1[%c0, %c0_0] : memref<16x512xbf16, #tpu.memory_space<vmem>>, vector<16x512xbf16>
    %c0_1 = arith.constant 0 : index
    %c0_2 = arith.constant 0 : index
    %1 = vector.load %arg2[%c0_1, %c0_2] : memref<512x512xbf16, #tpu.memory_space<vmem>>, vector<512x512xbf16>
    %cst = arith.constant dense<0.000000e+00> : vector<16x512xf32>
    %2 = tpu.matmul %0, %1, %cst {dimension_numbers = #tpu.dot_dimension_numbers<[1], [0], [0], [1], [0, 0, 1, 1], [], []>} : vector<16x512xbf16>, vector<512x512xbf16>, vector<16x512xf32> -> vector<16x512xf32>
    %c0_3 = arith.constant 0 : index
    %c0_4 = arith.constant 0 : index
    %3 = vector.load %arg3[%c0_3, %c0_4] : memref<1x512xf32, #tpu.memory_space<vmem>>, vector<1x512xf32>
    %4 = vector.broadcast %3 : vector<1x512xf32> to vector<16x512xf32>
    %5 = arith.addf %2, %4 : vector<16x512xf32>
    %cst_5 = arith.constant 0.000000e+00 : f32
    %6 = vector.broadcast %cst_5 : f32 to vector<16x512xf32>
    %7 = arith.maximumf %5, %6 : vector<16x512xf32>
    %8 = arith.truncf %7 : vector<16x512xf32> to vector<16x512xbf16>
    %c0_6 = arith.constant 0 : index
    %c0_7 = arith.constant 0 : index
    %9 = vector.load %arg4[%c0_6, %c0_7] : memref<16x512xbf16, #tpu.memory_space<vmem>>, vector<16x512xbf16>
    tpu.vector_store %arg4[%c0_6, %c0_7], %8 {strides = array<i32>} : memref<16x512xbf16, #tpu.memory_space<vmem>>, vector<16x512xbf16>,
    return
  }
  func.func @transform_0(%arg0: i32) -> (i32, i32) {
    %c0_i32 = arith.constant 0 : i32
    %c0_i32_0 = arith.constant 0 : i32
    return %arg0, %c0_i32 : i32, i32
  }
  func.func @transform_1(%arg0: i32) -> (i32, i32) {
    %c0_i32 = arith.constant 0 : i32
    %c0_i32_0 = arith.constant 0 : i32
    %c0_i32_1 = arith.constant 0 : i32
    return %c0_i32, %c0_i32_0 : i32, i32
  }
  func.func @transform_2(%arg0: i32) -> (i32, i32) {
    %c0_i32 = arith.constant 0 : i32
    %c0_i32_0 = arith.constant 0 : i32
    %c0_i32_1 = arith.constant 0 : i32
    return %c0_i32, %c0_i32_0 : i32, i32
  }
  func.func @transform_3(%arg0: i32) -> (i32, i32) {
    %c0_i32 = arith.constant 0 : i32
    %c0_i32_0 = arith.constant 0 : i32
    return %arg0, %c0_i32 : i32, i32
  }
}

module attributes {stable_mosaic.version = 11 : i64} {
  func.func @kernel(%arg0: i32, %arg1: memref<16x768xbf16, #tpu.memory_space<vmem>>, %arg2: memref<768x256xbf16, #tpu.memory_space<vmem>>, %arg3: memref<1x256xf32, #tpu.memory_space<vmem>>, %arg4: memref<16x256xbf16, #tpu.memory_space<vmem>>) attributes {dimension_semantics = [#tpu.dimension_semantics<parallel>], iteration_bounds = array<i64: 1>, scalar_prefetch = 0 : i64, scratch_operands = 0 : i64, tpu.core_type = #tpu.core_type<tc>, window_params = [{transform_indices = @transform_0, window_bounds = array<i64: 16, 768>}, {pipeline_mode = #tpu.pipeline_mode<synchronous>, transform_indices = @transform_1, window_bounds = array<i64: 768, 256>}, {pipeline_mode = #tpu.pipeline_mode<synchronous>, transform_indices = @transform_2, window_bounds = array<i64: 1, 256>}, {transform_indices = @transform_3, window_bounds = array<i64: 16, 256>}]} {
    %c0 = arith.constant 0 : index
    %c0_0 = arith.constant 0 : index
    %0 = vector.load %arg1[%c0, %c0_0] : memref<16x768xbf16, #tpu.memory_space<vmem>>, vector<16x768xbf16>
    %c0_1 = arith.constant 0 : index
    %c0_2 = arith.constant 0 : index
    %1 = vector.load %arg2[%c0_1, %c0_2] : memref<768x256xbf16, #tpu.memory_space<vmem>>, vector<768x256xbf16>
    %cst = arith.constant dense<0.000000e+00> : vector<16x256xf32>
    %2 = tpu.matmul %0, %1, %cst {dimension_numbers = #tpu.dot_dimension_numbers<[1], [0], [0], [1], [0, 0, 1, 1], [], []>} : vector<16x768xbf16>, vector<768x256xbf16>, vector<16x256xf32> -> vector<16x256xf32>
    %c0_3 = arith.constant 0 : index
    %c0_4 = arith.constant 0 : index
    %3 = vector.load %arg3[%c0_3, %c0_4] : memref<1x256xf32, #tpu.memory_space<vmem>>, vector<1x256xf32>
    %4 = vector.broadcast %3 : vector<1x256xf32> to vector<16x256xf32>
    %5 = arith.addf %2, %4 : vector<16x256xf32>
    %cst_5 = arith.constant 0.000000e+00 : f32
    %6 = vector.broadcast %cst_5 : f32 to vector<16x256xf32>
    %7 = arith.maximumf %5, %6 : vector<16x256xf32>
    %8 = arith.truncf %7 : vector<16x256xf32> to vector<16x256xbf16>
    %c0_6 = arith.constant 0 : index
    %c0_7 = arith.constant 0 : index
    %9 = vector.load %arg4[%c0_6, %c0_7] : memref<16x256xbf16, #tpu.memory_space<vmem>>, vector<16x256xbf16>
    tpu.vector_store %arg4[%c0_6, %c0_7], %8 {strides = array<i32>} : memref<16x256xbf16, #tpu.memory_space<vmem>>, vector<16x256xbf16>,
    return
  }
  func.func @transform_0(%arg0: i32) -> (i32, i32) {
    %c0_i32 = arith.constant 0 : i32
    %c0_i32_0 = arith.constant 0 : i32
    return %arg0, %c0_i32 : i32, i32
  }
  func.func @transform_1(%arg0: i32) -> (i32, i32) {
    %c0_i32 = arith.constant 0 : i32
    %c0_i32_0 = arith.constant 0 : i32
    %c0_i32_1 = arith.constant 0 : i32
    return %c0_i32, %c0_i32_0 : i32, i32
  }
  func.func @transform_2(%arg0: i32) -> (i32, i32) {
    %c0_i32 = arith.constant 0 : i32
    %c0_i32_0 = arith.constant 0 : i32
    %c0_i32_1 = arith.constant 0 : i32
    return %c0_i32, %c0_i32_0 : i32, i32
  }
  func.func @transform_3(%arg0: i32) -> (i32, i32) {
    %c0_i32 = arith.constant 0 : i32
    %c0_i32_0 = arith.constant 0 : i32
    return %arg0, %c0_i32 : i32, i32
  }
}

module attributes {stable_mosaic.version = 11 : i64} {
  func.func @kernel(%arg0: i32, %arg1: memref<16x384xbf16, #tpu.memory_space<vmem>>, %arg2: memref<384x128xbf16, #tpu.memory_space<vmem>>, %arg3: memref<1x128xf32, #tpu.memory_space<vmem>>, %arg4: memref<16x128xbf16, #tpu.memory_space<vmem>>) attributes {dimension_semantics = [#tpu.dimension_semantics<parallel>], iteration_bounds = array<i64: 2>, scalar_prefetch = 0 : i64, scratch_operands = 0 : i64, tpu.core_type = #tpu.core_type<tc>, window_params = [{transform_indices = @transform_0, window_bounds = array<i64: 16, 384>}, {pipeline_mode = #tpu.pipeline_mode<synchronous>, transform_indices = @transform_1, window_bounds = array<i64: 384, 128>}, {pipeline_mode = #tpu.pipeline_mode<synchronous>, transform_indices = @transform_2, window_bounds = array<i64: 1, 128>}, {transform_indices = @transform_3, window_bounds = array<i64: 16, 128>}]} {
    %c0 = arith.constant 0 : index
    %c0_0 = arith.constant 0 : index
    %0 = vector.load %arg1[%c0, %c0_0] : memref<16x384xbf16, #tpu.memory_space<vmem>>, vector<16x384xbf16>
    %c0_1 = arith.constant 0 : index
    %c0_2 = arith.constant 0 : index
    %1 = vector.load %arg2[%c0_1, %c0_2] : memref<384x128xbf16, #tpu.memory_space<vmem>>, vector<384x128xbf16>
    %cst = arith.constant dense<0.000000e+00> : vector<16x128xf32>
    %2 = tpu.matmul %0, %1, %cst {dimension_numbers = #tpu.dot_dimension_numbers<[1], [0], [0], [1], [0, 0, 1, 1], [], []>} : vector<16x384xbf16>, vector<384x128xbf16>, vector<16x128xf32> -> vector<16x128xf32>
    %c0_3 = arith.constant 0 : index
    %c0_4 = arith.constant 0 : index
    %3 = vector.load %arg3[%c0_3, %c0_4] : memref<1x128xf32, #tpu.memory_space<vmem>>, vector<1x128xf32>
    %4 = vector.broadcast %3 : vector<1x128xf32> to vector<16x128xf32>
    %5 = arith.addf %2, %4 : vector<16x128xf32>
    %cst_5 = arith.constant 0.000000e+00 : f32
    %6 = vector.broadcast %cst_5 : f32 to vector<16x128xf32>
    %7 = arith.maximumf %5, %6 : vector<16x128xf32>
    %8 = arith.truncf %7 : vector<16x128xf32> to vector<16x128xbf16>
    %c0_6 = arith.constant 0 : index
    %c0_7 = arith.constant 0 : index
    %9 = vector.load %arg4[%c0_6, %c0_7] : memref<16x128xbf16, #tpu.memory_space<vmem>>, vector<16x128xbf16>
    tpu.vector_store %arg4[%c0_6, %c0_7], %8 {strides = array<i32>} : memref<16x128xbf16, #tpu.memory_space<vmem>>, vector<16x128xbf16>,
    return
  }
  func.func @transform_0(%arg0: i32) -> (i32, i32) {
    %c0_i32 = arith.constant 0 : i32
    %c0_i32_0 = arith.constant 0 : i32
    return %arg0, %c0_i32 : i32, i32
  }
  func.func @transform_1(%arg0: i32) -> (i32, i32) {
    %c0_i32 = arith.constant 0 : i32
    %c0_i32_0 = arith.constant 0 : i32
    %c0_i32_1 = arith.constant 0 : i32
    return %c0_i32, %c0_i32_0 : i32, i32
  }
  func.func @transform_2(%arg0: i32) -> (i32, i32) {
    %c0_i32 = arith.constant 0 : i32
    %c0_i32_0 = arith.constant 0 : i32
    %c0_i32_1 = arith.constant 0 : i32
    return %c0_i32, %c0_i32_0 : i32, i32
  }
  func.func @transform_3(%arg0: i32) -> (i32, i32) {
    %c0_i32 = arith.constant 0 : i32
    %c0_i32_0 = arith.constant 0 : i32
    return %arg0, %c0_i32 : i32, i32
  }
}

module attributes {stable_mosaic.version = 11 : i64} {
  func.func @kernel(%arg0: i32, %arg1: memref<64x192xbf16, #tpu.memory_space<vmem>>, %arg2: memref<192x128xbf16, #tpu.memory_space<vmem>>, %arg3: memref<1x128xf32, #tpu.memory_space<vmem>>, %arg4: memref<64x128xbf16, #tpu.memory_space<vmem>>) attributes {dimension_semantics = [#tpu.dimension_semantics<parallel>], iteration_bounds = array<i64: 2>, scalar_prefetch = 0 : i64, scratch_operands = 0 : i64, tpu.core_type = #tpu.core_type<tc>, window_params = [{transform_indices = @transform_0, window_bounds = array<i64: 64, 192>}, {pipeline_mode = #tpu.pipeline_mode<synchronous>, transform_indices = @transform_1, window_bounds = array<i64: 192, 128>}, {pipeline_mode = #tpu.pipeline_mode<synchronous>, transform_indices = @transform_2, window_bounds = array<i64: 1, 128>}, {transform_indices = @transform_3, window_bounds = array<i64: 64, 128>}]} {
    %c0 = arith.constant 0 : index
    %c0_0 = arith.constant 0 : index
    %0 = vector.load %arg1[%c0, %c0_0] : memref<64x192xbf16, #tpu.memory_space<vmem>>, vector<64x192xbf16>
    %c0_1 = arith.constant 0 : index
    %c0_2 = arith.constant 0 : index
    %1 = vector.load %arg2[%c0_1, %c0_2] : memref<192x128xbf16, #tpu.memory_space<vmem>>, vector<192x128xbf16>
    %cst = arith.constant dense<0.000000e+00> : vector<64x128xf32>
    %2 = tpu.matmul %0, %1, %cst {dimension_numbers = #tpu.dot_dimension_numbers<[1], [0], [0], [1], [0, 0, 1, 1], [], []>} : vector<64x192xbf16>, vector<192x128xbf16>, vector<64x128xf32> -> vector<64x128xf32>
    %c0_3 = arith.constant 0 : index
    %c0_4 = arith.constant 0 : index
    %3 = vector.load %arg3[%c0_3, %c0_4] : memref<1x128xf32, #tpu.memory_space<vmem>>, vector<1x128xf32>
    %4 = vector.broadcast %3 : vector<1x128xf32> to vector<64x128xf32>
    %5 = arith.addf %2, %4 : vector<64x128xf32>
    %cst_5 = arith.constant 0.000000e+00 : f32
    %6 = vector.broadcast %cst_5 : f32 to vector<64x128xf32>
    %7 = arith.maximumf %5, %6 : vector<64x128xf32>
    %8 = arith.truncf %7 : vector<64x128xf32> to vector<64x128xbf16>
    %c0_6 = arith.constant 0 : index
    %c0_7 = arith.constant 0 : index
    %9 = vector.load %arg4[%c0_6, %c0_7] : memref<64x128xbf16, #tpu.memory_space<vmem>>, vector<64x128xbf16>
    tpu.vector_store %arg4[%c0_6, %c0_7], %8 {strides = array<i32>} : memref<64x128xbf16, #tpu.memory_space<vmem>>, vector<64x128xbf16>,
    return
  }
  func.func @transform_0(%arg0: i32) -> (i32, i32) {
    %c0_i32 = arith.constant 0 : i32
    %c0_i32_0 = arith.constant 0 : i32
    return %arg0, %c0_i32 : i32, i32
  }
  func.func @transform_1(%arg0: i32) -> (i32, i32) {
    %c0_i32 = arith.constant 0 : i32
    %c0_i32_0 = arith.constant 0 : i32
    %c0_i32_1 = arith.constant 0 : i32
    return %c0_i32, %c0_i32_0 : i32, i32
  }
  func.func @transform_2(%arg0: i32) -> (i32, i32) {
    %c0_i32 = arith.constant 0 : i32
    %c0_i32_0 = arith.constant 0 : i32
    %c0_i32_1 = arith.constant 0 : i32
    return %c0_i32, %c0_i32_0 : i32, i32
  }
  func.func @transform_3(%arg0: i32) -> (i32, i32) {
    %c0_i32 = arith.constant 0 : i32
    %c0_i32_0 = arith.constant 0 : i32
    return %arg0, %c0_i32 : i32, i32
  }
}

</mosaic_0001>

<llo_original>
// kernel: unet_forward.16
$region0: #{unet_forward.16}
  #allocation0 [shape = 'u32[]', space=smem, size = 0x4, offset = 0x4, fixed_abs, tag = 'smem constant byte address 0x4 - core index']
  #allocation1 [shape = 'u32[72,128]{1,0:T(1,128)}', space=vmem, size = 0x9000, scoped, tag = 'internal scratch']
  %s0 = inlined_call_operand.vmem [shape: bf16[128,27], index: 0, kind: input, shape index: {}]
  %s1 = inlined_call_operand.vmem [shape: bf16[27,128], index: 1, kind: input, shape index: {}]
  %s2 = inlined_call_operand.vmem [shape: f32[1,128], index: 2, kind: input, shape index: {}]
  %s3 = inlined_call_operand.vmem [shape: f32[1,128], index: 3, kind: input, shape index: {}]
  %s4 = inlined_call_operand.vmem [shape: f32[1,128], index: 4, kind: input, shape index: {}]
  %s5 = inlined_call_operand.vmem [shape: bf16[128,128], index: 5, kind: output, shape index: {}]
  %s6 = sld [smem:[#allocation0]]
  $region30: #{unet_forward.16} parent=0
    _
  %s8 = ssub.s32 1, %s6
  %s9 = scalar_select 0, %s8, %s6
  // Predicated region
  $region2: #{unet_forward.16} parent=0 // pred_check
    _
  $region3: #{unet_forward.16} parent=0 // pred_check_branch
    %11 = sbr.rel (0) target = $region5
  $region4: #{unet_forward.16} parent=0 // pred_region
    _
  $region5: #{unet_forward.16} parent=0 // pred_fallthru
    _
  // Predicated region
  $region6: #{unet_forward.16} parent=0 // pred_check
    _
  $region7: #{unet_forward.16} parent=0 // pred_check_branch
    %13 = sbr.rel (0) target = $region9
  $region8: #{unet_forward.16} parent=0 // pred_region
    _
  $region9: #{unet_forward.16} parent=0 // pred_fallthru
    _
  // Predicated region
  $region10: #{unet_forward.16} parent=0 // pred_check
    _
  $region11: #{unet_forward.16} parent=0 // pred_check_branch
    %15 = sbr.rel (0) target = $region13
  $region12: #{unet_forward.16} parent=0 // pred_region
    _
  $region13: #{unet_forward.16} parent=0 // pred_fallthru
    _
  // Predicated region
  $region14: #{unet_forward.16} parent=0 // pred_check
    _
  $region15: #{unet_forward.16} parent=0 // pred_check_branch
    %17 = sbr.rel (0) target = $region17
  $region16: #{unet_forward.16} parent=0 // pred_region
    _
  $region17: #{unet_forward.16} parent=0 // pred_fallthru
    _
  // Predicated region
  $region18: #{unet_forward.16} parent=0 // pred_check
    _
  $region19: #{unet_forward.16} parent=0 // pred_check_branch
    %19 = sbr.rel (0) target = $region21
  $region20: #{unet_forward.16} parent=0 // pred_region
    _
  $region21: #{unet_forward.16} parent=0 // pred_fallthru
    _
  %v21 = vld [vmem:[%s0] sm:$0xf]
  %v22 = vld [vmem:[%s0 + $0x4] sm:$0xf]
  %v23 = vld [vmem:[%s0 + $0x8] sm:$0xf]
  %v24 = vld [vmem:[%s0 + $0xc] sm:$0xf]
  %v25 = vld [vmem:[%s0 + $0x10] sm:$0xf]
  %v26 = vld [vmem:[%s0 + $0x14] sm:$0xf]
  %v27 = vld [vmem:[%s0 + $0x18] sm:$0xf]
  %v28 = vld [vmem:[%s0 + $0x1c] sm:$0xf]
  %v29 = vld [vmem:[%s0 + $0x20] sm:$0xf]
  %v30 = vld [vmem:[%s0 + $0x24] sm:$0xf]
  %v31 = vld [vmem:[%s0 + $0x28] sm:$0xf]
  %v32 = vld [vmem:[%s0 + $0x2c] sm:$0xf]
  %v33 = vld [vmem:[%s0 + $0x30] sm:$0xf]
  %v34 = vld [vmem:[%s0 + $0x34] sm:$0xf]
  %v35 = vld [vmem:[%s0 + $0x38] sm:$0xf]
  %v36 = vld [vmem:[%s0 + $0x3c] sm:$0xf]
  %v37 = vld [vmem:[%s1] sm:$0xf]
  %v38 = vld [vmem:[%s1 + $0x4] sm:$0xf]
  %v39 = vld [vmem:[%s1 + $0x8] sm:$0xf]
  %v40 = vld [vmem:[%s1 + $0xc] sm:$0x3]
  %v57 = vunpack.c.l.b16 %v21
  %v58 = vunpack.c.l.b16 %v22
  %v59 = vunpack.c.l.b16 %v23
  %v60 = vunpack.c.l.b16 %v24
  %v61 = vunpack.c.l.b16 %v25
  %v62 = vunpack.c.l.b16 %v26
  %v63 = vunpack.c.l.b16 %v27
  %v64 = vunpack.c.l.b16 %v28
  %v65 = vunpack.c.l.b16 %v29
  %v66 = vunpack.c.l.b16 %v30
  %v67 = vunpack.c.l.b16 %v31
  %v68 = vunpack.c.l.b16 %v32
  %v69 = vunpack.c.l.b16 %v33
  %v70 = vunpack.c.l.b16 %v34
  %v71 = vunpack.c.l.b16 %v35
  %v72 = vunpack.c.l.b16 %v36
  %v73 = vpack.c.b16 %v58, %v57
  %v74 = vpack.c.b16 %v60, %v59
  %v75 = vpack.c.b16 %v62, %v61
  %v76 = vpack.c.b16 %v64, %v63
  %v77 = vpack.c.b16 %v66, %v65
  %v78 = vpack.c.b16 %v68, %v67
  %v79 = vpack.c.b16 %v70, %v69
  %v80 = vpack.c.b16 %v72, %v71
  %v85 = vunpack.c.l.b16 %v37
  %v86 = vunpack.c.l.b16 %v38
  %v87 = vunpack.c.l.b16 %v39
  %v88 = vunpack.c.l.b16 %v40
  %v89 = vpack.c.b16 %v86, %v85
  %v90 = vpack.c.b16 %v88, %v87
  %vm92 = vcmask 220160
  %v94 = vsel %vm92, %v73, 0
  %v97 = vsel %vm92, %v74, 0
  %v100 = vsel %vm92, %v75, 0
  %v103 = vsel %vm92, %v76, 0
  %v106 = vsel %vm92, %v77, 0
  %v109 = vsel %vm92, %v78, 0
  %v112 = vsel %vm92, %v79, 0
  %v115 = vsel %vm92, %v80, 0
  %vm117 = vcmask 1044480
  %vm118 = vcmask 1045504
  %v119 = vsel %vm117, 4294967295, 65535
  %v120 = vsel %vm118, %v119, 0
  %v122 = vand.u32 %v90, %v120
  %124 = vmatpush.bf16.msra.mxu0 0
  %125 = vmatpush.bf16.msra.mxu0 0
  %126 = vmatpush.bf16.msra.mxu0 0
  %127 = vmatpush.bf16.msra.mxu0 0
  %128 = vmatpush.bf16.msra.mxu0 0
  %129 = vmatpush.bf16.msra.mxu0 0
  %130 = vmatpush.bf16.msra.mxu0 %v122
  %131 = vmatpush.bf16.msra.mxu0 %v89
  %132 = vmatmul.bf16.gmra.mxu0 %v94
  %v133 = vpop.f32.mrf.mxu0
  %v134 = vadd.f32 0.0, %v133
  %v135 = vpop.f32.mrf.mxu0
  %v136 = vadd.f32 0.0, %v135
  %137 = vmatmul.bf16.gmra.mxu0 %v97
  %v138 = vpop.f32.mrf.mxu0
  %v139 = vadd.f32 0.0, %v138
  %v140 = vpop.f32.mrf.mxu0
  %v141 = vadd.f32 0.0, %v140
  %142 = vmatmul.bf16.gmra.mxu0 %v100
  %v143 = vpop.f32.mrf.mxu0
  %v144 = vadd.f32 0.0, %v143
  %v145 = vpop.f32.mrf.mxu0
  %v146 = vadd.f32 0.0, %v145
  %147 = vmatmul.bf16.gmra.mxu0 %v103
  %v148 = vpop.f32.mrf.mxu0
  %v149 = vadd.f32 0.0, %v148
  %v150 = vpop.f32.mrf.mxu0
  %v151 = vadd.f32 0.0, %v150
  %152 = vmatmul.bf16.gmra.mxu0 %v106
  %v153 = vpop.f32.mrf.mxu0
  %v154 = vadd.f32 0.0, %v153
  %v155 = vpop.f32.mrf.mxu0
  %v156 = vadd.f32 0.0, %v155
  %157 = vmatmul.bf16.gmra.mxu0 %v109
  %v158 = vpop.f32.mrf.mxu0
  %v159 = vadd.f32 0.0, %v158
  %v160 = vpop.f32.mrf.mxu0
  %v161 = vadd.f32 0.0, %v160
  %162 = vmatmul.bf16.gmra.mxu0 %v112
  %v163 = vpop.f32.mrf.mxu0
  %v164 = vadd.f32 0.0, %v163
  %v165 = vpop.f32.mrf.mxu0
  %v166 = vadd.f32 0.0, %v165
  %167 = vmatmul.bf16.gmra.mxu0 %v115
  %v168 = vpop.f32.mrf.mxu0
  %v169 = vadd.f32 0.0, %v168
  %v170 = vpop.f32.mrf.mxu0
  %v171 = vadd.f32 0.0, %v170
  %172 = vdwg.mxu0
  %v173 = vadd.f32 %v134, %v136
  %v174 = vadd.f32 %v173, %v139
  %v175 = vadd.f32 %v174, %v141
  %v176 = vadd.f32 %v175, %v144
  %v177 = vadd.f32 %v176, %v146
  %v178 = vadd.f32 %v177, %v149
  %v179 = vadd.f32 %v178, %v151
  %v180 = vadd.f32 %v179, %v154
  %v181 = vadd.f32 %v180, %v156
  %v182 = vadd.f32 %v181, %v159
  %v183 = vadd.f32 %v182, %v161
  %v184 = vadd.f32 %v183, %v164
  %v185 = vadd.f32 %v184, %v166
  %v186 = vadd.f32 %v185, %v169
  %v187 = vadd.f32 %v186, %v171
  %v188 = vrot.slane %v187, 4
  %v189 = vadd.f32 %v187, %v188
  %v190 = vrot.slane %v189, 2
  %v191 = vadd.f32 %v189, %v190
  %v192 = vrot.slane %v191, 1
  %v193 = vadd.f32 %v191, %v192
  %v194 = vmul.f32 %v193, 0.0078125
  %v195 = vlaneseq
  %v196 = vshrl.u32 %v195, 7
  %v197 = vadd.s32 %v196, 8
  %v198 = vadd.s32 %v196, 16
  %v199 = vadd.s32 %v196, 24
  %v200 = vadd.s32 %v196, 32
  %v201 = vadd.s32 %v196, 40
  %v202 = vadd.s32 %v196, 48
  %v203 = vadd.s32 %v196, 56
  %v204 = vadd.s32 %v196, 64
  %v205 = vadd.s32 %v196, 72
  %v206 = vadd.s32 %v196, 80
  %v207 = vadd.s32 %v196, 88
  %v208 = vadd.s32 %v196, 96
  %v209 = vadd.s32 %v196, 104
  %v210 = vadd.s32 %v196, 112
  %v211 = vadd.s32 %v196, 120
  %vm212 = vcmp.lt.s32.totalorder %v196, 128
  %vm213 = vcmp.lt.s32.totalorder %v197, 128
  %vm214 = vcmp.lt.s32.totalorder %v198, 128
  %vm215 = vcmp.lt.s32.totalorder %v199, 128
  %vm216 = vcmp.lt.s32.totalorder %v200, 128
  %vm217 = vcmp.lt.s32.totalorder %v201, 128
  %vm218 = vcmp.lt.s32.totalorder %v202, 128
  %vm219 = vcmp.lt.s32.totalorder %v203, 128
  %vm220 = vcmp.lt.s32.totalorder %v204, 128
  %vm221 = vcmp.lt.s32.totalorder %v205, 128
  %vm222 = vcmp.lt.s32.totalorder %v206, 128
  %vm223 = vcmp.lt.s32.totalorder %v207, 128
  %vm224 = vcmp.lt.s32.totalorder %v208, 128
  %vm225 = vcmp.lt.s32.totalorder %v209, 128
  %vm226 = vcmp.lt.s32.totalorder %v210, 128
  %vm227 = vcmp.lt.s32.totalorder %v211, 128
  %v228 = vsub.f32 %v134, %v194
  %v229 = vsub.f32 %v136, %v194
  %v230 = vsub.f32 %v139, %v194
  %v231 = vsub.f32 %v141, %v194
  %v232 = vsub.f32 %v144, %v194
  %v233 = vsub.f32 %v146, %v194
  %v234 = vsub.f32 %v149, %v194
  %v235 = vsub.f32 %v151, %v194
  %v236 = vsub.f32 %v154, %v194
  %v237 = vsub.f32 %v156, %v194
  %v238 = vsub.f32 %v159, %v194
  %v239 = vsub.f32 %v161, %v194
  %v240 = vsub.f32 %v164, %v194
  %v241 = vsub.f32 %v166, %v194
  %v242 = vsub.f32 %v169, %v194
  %v243 = vsub.f32 %v171, %v194
  %v244 = vsel %vm212, %v228, 0.0
  %v245 = vsel %vm213, %v229, 0.0
  %v246 = vsel %vm214, %v230, 0.0
  %v247 = vsel %vm215, %v231, 0.0
  %v248 = vsel %vm216, %v232, 0.0
  %v249 = vsel %vm217, %v233, 0.0
  %v250 = vsel %vm218, %v234, 0.0
  %v251 = vsel %vm219, %v235, 0.0
  %v252 = vsel %vm220, %v236, 0.0
  %v253 = vsel %vm221, %v237, 0.0
  %v254 = vsel %vm222, %v238, 0.0
  %v255 = vsel %vm223, %v239, 0.0
  %v256 = vsel %vm224, %v240, 0.0
  %v257 = vsel %vm225, %v241, 0.0
  %v258 = vsel %vm226, %v242, 0.0
  %v259 = vsel %vm227, %v243, 0.0
  %v260 = vmul.f32 %v244, %v244
  %v261 = vmul.f32 %v245, %v245
  %v262 = vmul.f32 %v246, %v246
  %v263 = vmul.f32 %v247, %v247
  %v264 = vmul.f32 %v248, %v248
  %v265 = vmul.f32 %v249, %v249
  %v266 = vmul.f32 %v250, %v250
  %v267 = vmul.f32 %v251, %v251
  %v268 = vmul.f32 %v252, %v252
  %v269 = vmul.f32 %v253, %v253
  %v270 = vmul.f32 %v254, %v254
  %v271 = vmul.f32 %v255, %v255
  %v272 = vmul.f32 %v256, %v256
  %v273 = vmul.f32 %v257, %v257
  %v274 = vmul.f32 %v258, %v258
  %v275 = vmul.f32 %v259, %v259
  %v276 = vadd.f32 %v260, %v261
  %v277 = vadd.f32 %v276, %v262
  %v278 = vadd.f32 %v277, %v263
  %v279 = vadd.f32 %v278, %v264
  %v280 = vadd.f32 %v279, %v265
  %v281 = vadd.f32 %v280, %v266
  %v282 = vadd.f32 %v281, %v267
  %v283 = vadd.f32 %v282, %v268
  %v284 = vadd.f32 %v283, %v269
  %v285 = vadd.f32 %v284, %v270
  %v286 = vadd.f32 %v285, %v271
  %v287 = vadd.f32 %v286, %v272
  %v288 = vadd.f32 %v287, %v273
  %v289 = vadd.f32 %v288, %v274
  %v290 = vadd.f32 %v289, %v275
  %v291 = vrot.slane %v290, 4
  %v292 = vadd.f32 %v290, %v291
  %v293 = vrot.slane %v292, 2
  %v294 = vadd.f32 %v292, %v293
  %v295 = vrot.slane %v294, 1
  %v296 = vadd.f32 %v294, %v295
  %v297 = vmul.f32 %v296, 0.0078125
  %v298 = vadd.f32 %v297, 1e-05
  %v299 = vrsqrt.pop %v298
  %v300 = vmul.f32 %v299, %v298
  %v301 = vmul.f32 %v300, %v299
  %v302 = vmul.f32 0.5, %v301
  %v303 = vsub.f32 1.5, %v302
  %v304 = vmul.f32 %v299, %v303
  %vm305 = vweird.f32 %v298
  %vm306 = vweird.f32 %v299
  %vm307 = vmor %vm305, %vm306
  %v308 = vsel %vm307, %v299, %v304
  %v309 = vld [vmem:[%s4] sm:$0x1]
  %v310 = vld [vmem:[%s2] sm:$0x1]
  %vm311 = vcmp.gt.f32.partialorder %v309, 0.0
  %v312 = vsel %vm311, %v308, 1.0
  %v313 = vmul.f32 %v310, %v312
  %v314 = vld [vmem:[%s3] sm:$0x1]
  %v315 = vsel %vm311, %v194, 0.0
  %v316 = vmul.f32 %v315, %v313
  %v317 = vsub.f32 %v314, %v316
  %v319 = vperm.slane %v313, 0
  %v321 = vmul.f32 %v134, %v319
  %v322 = vmul.f32 %v136, %v319
  %v323 = vmul.f32 %v139, %v319
  %v324 = vmul.f32 %v141, %v319
  %v325 = vmul.f32 %v144, %v319
  %v326 = vmul.f32 %v146, %v319
  %v327 = vmul.f32 %v149, %v319
  %v328 = vmul.f32 %v151, %v319
  %v329 = vmul.f32 %v154, %v319
  %v330 = vmul.f32 %v156, %v319
  %v331 = vmul.f32 %v159, %v319
  %v332 = vmul.f32 %v161, %v319
  %v333 = vmul.f32 %v164, %v319
  %v334 = vmul.f32 %v166, %v319
  %v335 = vmul.f32 %v169, %v319
  %v336 = vmul.f32 %v171, %v319
  %v338 = vperm.slane %v317, 0
  %v340 = vadd.f32 %v321, %v338
  %v341 = vadd.f32 %v322, %v338
  %v342 = vadd.f32 %v323, %v338
  %v343 = vadd.f32 %v324, %v338
  %v344 = vadd.f32 %v325, %v338
  %v345 = vadd.f32 %v326, %v338
  %v346 = vadd.f32 %v327, %v338
  %v347 = vadd.f32 %v328, %v338
  %v348 = vadd.f32 %v329, %v338
  %v349 = vadd.f32 %v330, %v338
  %v350 = vadd.f32 %v331, %v338
  %v351 = vadd.f32 %v332, %v338
  %v352 = vadd.f32 %v333, %v338
  %v353 = vadd.f32 %v334, %v338
  %v354 = vadd.f32 %v335, %v338
  %v355 = vadd.f32 %v336, %v338
  %v356 = vmax.f32 %v340, 0.0
  %v357 = vmax.f32 %v341, 0.0
  %v358 = vmax.f32 %v342, 0.0
  %v359 = vmax.f32 %v343, 0.0
  %v360 = vmax.f32 %v344, 0.0
  %v361 = vmax.f32 %v345, 0.0
  %v362 = vmax.f32 %v346, 0.0
  %v363 = vmax.f32 %v347, 0.0
  %v364 = vmax.f32 %v348, 0.0
  %v365 = vmax.f32 %v349, 0.0
  %v366 = vmax.f32 %v350, 0.0
  %v367 = vmax.f32 %v351, 0.0
  %v368 = vmax.f32 %v352, 0.0
  %v369 = vmax.f32 %v353, 0.0
  %v370 = vmax.f32 %v354, 0.0
  %v371 = vmax.f32 %v355, 0.0
  %v372 = vsel %vm311, 1, 0
  %v373 = vperm.slane %v372, 0
  %vm374 = vcmp.eq.s32.totalorder %v373, 1
  %v375 = vsel %vm374, %v356, %v340
  %v376 = vsel %vm374, %v357, %v341
  %v377 = vsel %vm374, %v358, %v342
  %v378 = vsel %vm374, %v359, %v343
  %v379 = vsel %vm374, %v360, %v344
  %v380 = vsel %vm374, %v361, %v345
  %v381 = vsel %vm374, %v362, %v346
  %v382 = vsel %vm374, %v363, %v347
  %v383 = vsel %vm374, %v364, %v348
  %v384 = vsel %vm374, %v365, %v349
  %v385 = vsel %vm374, %v366, %v350
  %v386 = vsel %vm374, %v367, %v351
  %v387 = vsel %vm374, %v368, %v352
  %v388 = vsel %vm374, %v369, %v353
  %v389 = vsel %vm374, %v370, %v354
  %v390 = vsel %vm374, %v371, %v355
  %v391 = vpack.c.bf16 %v375, %v375
  %v392 = vpack.c.bf16 %v376, %v376
  %v393 = vpack.c.bf16 %v377, %v377
  %v394 = vpack.c.bf16 %v378, %v378
  %v395 = vpack.c.bf16 %v379, %v379
  %v396 = vpack.c.bf16 %v380, %v380
  %v397 = vpack.c.bf16 %v381, %v381
  %v398 = vpack.c.bf16 %v382, %v382
  %v399 = vpack.c.bf16 %v383, %v383
  %v400 = vpack.c.bf16 %v384, %v384
  %v401 = vpack.c.bf16 %v385, %v385
  %v402 = vpack.c.bf16 %v386, %v386
  %v403 = vpack.c.bf16 %v387, %v387
  %v404 = vpack.c.bf16 %v388, %v388
  %v405 = vpack.c.bf16 %v389, %v389
  %v406 = vpack.c.bf16 %v390, %v390
  %407 = vst [vmem:[%s5] sm:$0xf] %v391
  %408 = vst [vmem:[%s5 + $0x4] sm:$0xf] %v392
  %409 = vst [vmem:[%s5 + $0x8] sm:$0xf] %v393
  %410 = vst [vmem:[%s5 + $0xc] sm:$0xf] %v394
  %411 = vst [vmem:[%s5 + $0x10] sm:$0xf] %v395
  %412 = vst [vmem:[%s5 + $0x14] sm:$0xf] %v396
  %413 = vst [vmem:[%s5 + $0x18] sm:$0xf] %v397
  %414 = vst [vmem:[%s5 + $0x1c] sm:$0xf] %v398
  %415 = vst [vmem:[%s5 + $0x20] sm:$0xf] %v399
  %416 = vst [vmem:[%s5 + $0x24] sm:$0xf] %v400
  %417 = vst [vmem:[%s5 + $0x28] sm:$0xf] %v401
  %418 = vst [vmem:[%s5 + $0x2c] sm:$0xf] %v402
  %419 = vst [vmem:[%s5 + $0x30] sm:$0xf] %v403
  %420 = vst [vmem:[%s5 + $0x34] sm:$0xf] %v404
  %421 = vst [vmem:[%s5 + $0x38] sm:$0xf] %v405
  %422 = vst [vmem:[%s5 + $0x3c] sm:$0xf] %v406
  // Predicated region
  $region22: #{unet_forward.16} parent=0 // pred_check
    _
  $region23: #{unet_forward.16} parent=0 // pred_check_branch
    %424 = sbr.rel (0) target = $region25
  $region24: #{unet_forward.16} parent=0 // pred_region
    _
  $region25: #{unet_forward.16} parent=0 // pred_fallthru
    _
  // Predicated region
  $region26: #{unet_forward.16} parent=0 // pred_check
    _
  $region27: #{unet_forward.16} parent=0 // pred_check_branch
    %426 = sbr.rel (0) target = $region29
  $region28: #{unet_forward.16} parent=0 // pred_region
    _
  $region29: #{unet_forward.16} parent=0 // pred_fallthru
    _

// kernel: unet_forward.17
$region0: #{unet_forward.17}
  #allocation0 [shape = 'u32[]', space=smem, size = 0x4, offset = 0x4, fixed_abs, tag = 'smem constant byte address 0x4 - core index']
  #allocation1 [shape = 'u32[72,128]{1,0:T(1,128)}', space=vmem, size = 0x9000, scoped, tag = 'internal scratch']
  %s0 = inlined_call_operand.vmem [shape: bf16[128,144], index: 0, kind: input, shape index: {}]
  %s1 = inlined_call_operand.vmem [shape: bf16[144,128], index: 1, kind: input, shape index: {}]
  %s2 = inlined_call_operand.vmem [shape: f32[1,128], index: 2, kind: input, shape index: {}]
  %s3 = inlined_call_operand.vmem [shape: f32[1,128], index: 3, kind: input, shape index: {}]
  %s4 = inlined_call_operand.vmem [shape: f32[1,128], index: 4, kind: input, shape index: {}]
  %s5 = inlined_call_operand.vmem [shape: bf16[128,128], index: 5, kind: output, shape index: {}]
  %s6 = sld [smem:[#allocation0]]
  $region30: #{unet_forward.17} parent=0
    _
  %s8 = ssub.s32 1, %s6
  %s9 = scalar_select 0, %s8, %s6
  // Predicated region
  $region2: #{unet_forward.17} parent=0 // pred_check
    _
  $region3: #{unet_forward.17} parent=0 // pred_check_branch
    %11 = sbr.rel (0) target = $region5
  $region4: #{unet_forward.17} parent=0 // pred_region
    _
  $region5: #{unet_forward.17} parent=0 // pred_fallthru
    _
  // Predicated region
  $region6: #{unet_forward.17} parent=0 // pred_check
    _
  $region7: #{unet_forward.17} parent=0 // pred_check_branch
    %13 = sbr.rel (0) target = $region9
  $region8: #{unet_forward.17} parent=0 // pred_region
    _
  $region9: #{unet_forward.17} parent=0 // pred_fallthru
    _
  // Predicated region
  $region10: #{unet_forward.17} parent=0 // pred_check
    _
  $region11: #{unet_forward.17} parent=0 // pred_check_branch
    %15 = sbr.rel (0) target = $region13
  $region12: #{unet_forward.17} parent=0 // pred_region
    _
  $region13: #{unet_forward.17} parent=0 // pred_fallthru
    _
  // Predicated region
  $region14: #{unet_forward.17} parent=0 // pred_check
    _
  $region15: #{unet_forward.17} parent=0 // pred_check_branch
    %17 = sbr.rel (0) target = $region17
  $region16: #{unet_forward.17} parent=0 // pred_region
    _
  $region17: #{unet_forward.17} parent=0 // pred_fallthru
    _
  // Predicated region
  $region18: #{unet_forward.17} parent=0 // pred_check
    _
  $region19: #{unet_forward.17} parent=0 // pred_check_branch
    %19 = sbr.rel (0) target = $region21
  $region20: #{unet_forward.17} parent=0 // pred_region
    _
  $region21: #{unet_forward.17} parent=0 // pred_fallthru
    _
  %v21 = vld [vmem:[%s0] sm:$0xff]
  %v22 = vld [vmem:[%s0 + $0x8] sm:$0xff]
  %v23 = vld [vmem:[%s0 + $0x10] sm:$0xff]
  %v24 = vld [vmem:[%s0 + $0x18] sm:$0xff]
  %v25 = vld [vmem:[%s0 + $0x20] sm:$0xff]
  %v26 = vld [vmem:[%s0 + $0x28] sm:$0xff]
  %v27 = vld [vmem:[%s0 + $0x30] sm:$0xff]
  %v28 = vld [vmem:[%s0 + $0x38] sm:$0xff]
  %v29 = vld [vmem:[%s0 + $0x40] sm:$0xff]
  %v30 = vld [vmem:[%s0 + $0x48] sm:$0xff]
  %v31 = vld [vmem:[%s0 + $0x50] sm:$0xff]
  %v32 = vld [vmem:[%s0 + $0x58] sm:$0xff]
  %v33 = vld [vmem:[%s0 + $0x60] sm:$0xff]
  %v34 = vld [vmem:[%s0 + $0x68] sm:$0xff]
  %v35 = vld [vmem:[%s0 + $0x70] sm:$0xff]
  %v36 = vld [vmem:[%s0 + $0x78] sm:$0xff]
  %v37 = vld [vmem:[%s1] sm:$0xf]
  %v38 = vld [vmem:[%s1 + $0x4] sm:$0xf]
  %v39 = vld [vmem:[%s1 + $0x8] sm:$0xf]
  %v40 = vld [vmem:[%s1 + $0xc] sm:$0xf]
  %v41 = vld [vmem:[%s1 + $0x10] sm:$0xf]
  %v42 = vld [vmem:[%s1 + $0x14] sm:$0xf]
  %v43 = vld [vmem:[%s1 + $0x18] sm:$0xf]
  %v44 = vld [vmem:[%s1 + $0x1c] sm:$0xf]
  %v45 = vld [vmem:[%s1 + $0x20] sm:$0xf]
  %v46 = vld [vmem:[%s1 + $0x24] sm:$0xf]
  %v47 = vld [vmem:[%s1 + $0x28] sm:$0xf]
  %v48 = vld [vmem:[%s1 + $0x2c] sm:$0xf]
  %v49 = vld [vmem:[%s1 + $0x30] sm:$0xf]
  %v50 = vld [vmem:[%s1 + $0x34] sm:$0xf]
  %v51 = vld [vmem:[%s1 + $0x38] sm:$0xf]
  %v52 = vld [vmem:[%s1 + $0x3c] sm:$0xf]
  %v53 = vld [vmem:[%s1 + $0x40] sm:$0xf]
  %v54 = vld [vmem:[%s1 + $0x44] sm:$0xf]
  %v71 = vunpack.c.l.b16 %v21
  %v72 = vunpack.c.h.b16 %v21
  %v73 = vunpack.c.l.b16 %v22
  %v74 = vunpack.c.h.b16 %v22
  %v75 = vunpack.c.l.b16 %v23
  %v76 = vunpack.c.h.b16 %v23
  %v77 = vunpack.c.l.b16 %v24
  %v78 = vunpack.c.h.b16 %v24
  %v79 = vunpack.c.l.b16 %v25
  %v80 = vunpack.c.h.b16 %v25
  %v81 = vunpack.c.l.b16 %v26
  %v82 = vunpack.c.h.b16 %v26
  %v83 = vunpack.c.l.b16 %v27
  %v84 = vunpack.c.h.b16 %v27
  %v85 = vunpack.c.l.b16 %v28
  %v86 = vunpack.c.h.b16 %v28
  %v87 = vunpack.c.l.b16 %v29
  %v88 = vunpack.c.h.b16 %v29
  %v89 = vunpack.c.l.b16 %v30
  %v90 = vunpack.c.h.b16 %v30
  %v91 = vunpack.c.l.b16 %v31
  %v92 = vunpack.c.h.b16 %v31
  %v93 = vunpack.c.l.b16 %v32
  %v94 = vunpack.c.h.b16 %v32
  %v95 = vunpack.c.l.b16 %v33
  %v96 = vunpack.c.h.b16 %v33
  %v97 = vunpack.c.l.b16 %v34
  %v98 = vunpack.c.h.b16 %v34
  %v99 = vunpack.c.l.b16 %v35
  %v100 = vunpack.c.h.b16 %v35
  %v101 = vunpack.c.l.b16 %v36
  %v102 = vunpack.c.h.b16 %v36
  %v103 = vpack.c.b16 %v73, %v71
  %v104 = vpack.c.b16 %v74, %v72
  %v105 = vpack.c.b16 %v77, %v75
  %v106 = vpack.c.b16 %v78, %v76
  %v107 = vpack.c.b16 %v81, %v79
  %v108 = vpack.c.b16 %v82, %v80
  %v109 = vpack.c.b16 %v85, %v83
  %v110 = vpack.c.b16 %v86, %v84
  %v111 = vpack.c.b16 %v89, %v87
  %v112 = vpack.c.b16 %v90, %v88
  %v113 = vpack.c.b16 %v93, %v91
  %v114 = vpack.c.b16 %v94, %v92
  %v115 = vpack.c.b16 %v97, %v95
  %v116 = vpack.c.b16 %v98, %v96
  %v117 = vpack.c.b16 %v101, %v99
  %v118 = vpack.c.b16 %v102, %v100
  %v145 = vunpack.c.l.b16 %v37
  %v146 = vunpack.c.l.b16 %v38
  %v147 = vunpack.c.l.b16 %v39
  %v148 = vunpack.c.l.b16 %v40
  %v149 = vunpack.c.l.b16 %v41
  %v150 = vunpack.c.l.b16 %v42
  %v151 = vunpack.c.l.b16 %v43
  %v152 = vunpack.c.l.b16 %v44
  %v153 = vunpack.c.l.b16 %v45
  %v154 = vunpack.c.l.b16 %v46
  %v155 = vunpack.c.l.b16 %v47
  %v156 = vunpack.c.l.b16 %v48
  %v157 = vunpack.c.l.b16 %v49
  %v158 = vunpack.c.l.b16 %v50
  %v159 = vunpack.c.l.b16 %v51
  %v160 = vunpack.c.l.b16 %v52
  %v161 = vunpack.c.l.b16 %v53
  %v162 = vunpack.c.l.b16 %v54
  %v163 = vpack.c.b16 %v146, %v145
  %v164 = vpack.c.b16 %v148, %v147
  %v165 = vpack.c.b16 %v150, %v149
  %v166 = vpack.c.b16 %v152, %v151
  %v167 = vpack.c.b16 %v154, %v153
  %v168 = vpack.c.b16 %v156, %v155
  %v169 = vpack.c.b16 %v158, %v157
  %v170 = vpack.c.b16 %v160, %v159
  %v171 = vpack.c.b16 %v162, %v161
  %vm181 = vcmask 130048
  %v183 = vsel %vm181, %v104, 0
  %v186 = vsel %vm181, %v106, 0
  %v189 = vsel %vm181, %v108, 0
  %v192 = vsel %vm181, %v110, 0
  %v195 = vsel %vm181, %v112, 0
  %v198 = vsel %vm181, %v114, 0
  %v201 = vsel %vm181, %v116, 0
  %v204 = vsel %vm181, %v118, 0
  %206 = vmatpush.bf16.msra.mxu0 %v170
  %207 = vmatpush.bf16.msra.mxu0 %v169
  %208 = vmatpush.bf16.msra.mxu0 %v168
  %209 = vmatpush.bf16.msra.mxu0 %v167
  %210 = vmatpush.bf16.msra.mxu0 %v166
  %211 = vmatpush.bf16.msra.mxu0 %v165
  %212 = vmatpush.bf16.msra.mxu0 %v164
  %213 = vmatpush.bf16.msra.mxu0 %v163
  %214 = vmatmul.bf16.gmra.mxu0 %v103
  %v215 = vpop.f32.mrf.mxu0
  %v216 = vadd.f32 0.0, %v215
  %v217 = vpop.f32.mrf.mxu0
  %v218 = vadd.f32 0.0, %v217
  %219 = vmatmul.bf16.gmra.mxu0 %v105
  %v220 = vpop.f32.mrf.mxu0
  %v221 = vadd.f32 0.0, %v220
  %v222 = vpop.f32.mrf.mxu0
  %v223 = vadd.f32 0.0, %v222
  %224 = vmatmul.bf16.gmra.mxu0 %v107
  %v225 = vpop.f32.mrf.mxu0
  %v226 = vadd.f32 0.0, %v225
  %v227 = vpop.f32.mrf.mxu0
  %v228 = vadd.f32 0.0, %v227
  %229 = vmatmul.bf16.gmra.mxu0 %v109
  %v230 = vpop.f32.mrf.mxu0
  %v231 = vadd.f32 0.0, %v230
  %v232 = vpop.f32.mrf.mxu0
  %v233 = vadd.f32 0.0, %v232
  %234 = vmatmul.bf16.gmra.mxu0 %v111
  %v235 = vpop.f32.mrf.mxu0
  %v236 = vadd.f32 0.0, %v235
  %v237 = vpop.f32.mrf.mxu0
  %v238 = vadd.f32 0.0, %v237
  %239 = vmatmul.bf16.gmra.mxu0 %v113
  %v240 = vpop.f32.mrf.mxu0
  %v241 = vadd.f32 0.0, %v240
  %v242 = vpop.f32.mrf.mxu0
  %v243 = vadd.f32 0.0, %v242
  %244 = vmatmul.bf16.gmra.mxu0 %v115
  %v245 = vpop.f32.mrf.mxu0
  %v246 = vadd.f32 0.0, %v245
  %v247 = vpop.f32.mrf.mxu0
  %v248 = vadd.f32 0.0, %v247
  %249 = vmatmul.bf16.gmra.mxu0 %v117
  %v250 = vpop.f32.mrf.mxu0
  %v251 = vadd.f32 0.0, %v250
  %v252 = vpop.f32.mrf.mxu0
  %v253 = vadd.f32 0.0, %v252
  %254 = vdwg.mxu0
  %255 = vmatpush.bf16.msra.mxu0 0
  %256 = vmatpush.bf16.msra.mxu0 0
  %257 = vmatpush.bf16.msra.mxu0 0
  %258 = vmatpush.bf16.msra.mxu0 0
  %259 = vmatpush.bf16.msra.mxu0 0
  %260 = vmatpush.bf16.msra.mxu0 0
  %261 = vmatpush.bf16.msra.mxu0 0
  %262 = vmatpush.bf16.msra.mxu0 %v171
  %263 = vmatmul.bf16.gmra.mxu0 %v183
  %v264 = vpop.f32.mrf.mxu0
  %v265 = vadd.f32 %v216, %v264
  %v266 = vpop.f32.mrf.mxu0
  %v267 = vadd.f32 %v218, %v266
  %268 = vmatmul.bf16.gmra.mxu0 %v186
  %v269 = vpop.f32.mrf.mxu0
  %v270 = vadd.f32 %v221, %v269
  %v271 = vpop.f32.mrf.mxu0
  %v272 = vadd.f32 %v223, %v271
  %273 = vmatmul.bf16.gmra.mxu0 %v189
  %v274 = vpop.f32.mrf.mxu0
  %v275 = vadd.f32 %v226, %v274
  %v276 = vpop.f32.mrf.mxu0
  %v277 = vadd.f32 %v228, %v276
  %278 = vmatmul.bf16.gmra.mxu0 %v192
  %v279 = vpop.f32.mrf.mxu0
  %v280 = vadd.f32 %v231, %v279
  %v281 = vpop.f32.mrf.mxu0
  %v282 = vadd.f32 %v233, %v281
  %283 = vmatmul.bf16.gmra.mxu0 %v195
  %v284 = vpop.f32.mrf.mxu0
  %v285 = vadd.f32 %v236, %v284
  %v286 = vpop.f32.mrf.mxu0
  %v287 = vadd.f32 %v238, %v286
  %288 = vmatmul.bf16.gmra.mxu0 %v198
  %v289 = vpop.f32.mrf.mxu0
  %v290 = vadd.f32 %v241, %v289
  %v291 = vpop.f32.mrf.mxu0
  %v292 = vadd.f32 %v243, %v291
  %293 = vmatmul.bf16.gmra.mxu0 %v201
  %v294 = vpop.f32.mrf.mxu0
  %v295 = vadd.f32 %v246, %v294
  %v296 = vpop.f32.mrf.mxu0
  %v297 = vadd.f32 %v248, %v296
  %298 = vmatmul.bf16.gmra.mxu0 %v204
  %v299 = vpop.f32.mrf.mxu0
  %v300 = vadd.f32 %v251, %v299
  %v301 = vpop.f32.mrf.mxu0
  %v302 = vadd.f32 %v253, %v301
  %303 = vdwg.mxu0
  %v304 = vadd.f32 %v265, %v267
  %v305 = vadd.f32 %v304, %v270
  %v306 = vadd.f32 %v305, %v272
  %v307 = vadd.f32 %v306, %v275
  %v308 = vadd.f32 %v307, %v277
  %v309 = vadd.f32 %v308, %v280
  %v310 = vadd.f32 %v309, %v282
  %v311 = vadd.f32 %v310, %v285
  %v312 = vadd.f32 %v311, %v287
  %v313 = vadd.f32 %v312, %v290
  %v314 = vadd.f32 %v313, %v292
  %v315 = vadd.f32 %v314, %v295
  %v316 = vadd.f32 %v315, %v297
  %v317 = vadd.f32 %v316, %v300
  %v318 = vadd.f32 %v317, %v302
  %v319 = vrot.slane %v318, 4
  %v320 = vadd.f32 %v318, %v319
  %v321 = vrot.slane %v320, 2
  %v322 = vadd.f32 %v320, %v321
  %v323 = vrot.slane %v322, 1
  %v324 = vadd.f32 %v322, %v323
  %v325 = vmul.f32 %v324, 0.0078125
  %v326 = vlaneseq
  %v327 = vshrl.u32 %v326, 7
  %v328 = vadd.s32 %v327, 8
  %v329 = vadd.s32 %v327, 16
  %v330 = vadd.s32 %v327, 24
  %v331 = vadd.s32 %v327, 32
  %v332 = vadd.s32 %v327, 40
  %v333 = vadd.s32 %v327, 48
  %v334 = vadd.s32 %v327, 56
  %v335 = vadd.s32 %v327, 64
  %v336 = vadd.s32 %v327, 72
  %v337 = vadd.s32 %v327, 80
  %v338 = vadd.s32 %v327, 88
  %v339 = vadd.s32 %v327, 96
  %v340 = vadd.s32 %v327, 104
  %v341 = vadd.s32 %v327, 112
  %v342 = vadd.s32 %v327, 120
  %vm343 = vcmp.lt.s32.totalorder %v327, 128
  %vm344 = vcmp.lt.s32.totalorder %v328, 128
  %vm345 = vcmp.lt.s32.totalorder %v329, 128
  %vm346 = vcmp.lt.s32.totalorder %v330, 128
  %vm347 = vcmp.lt.s32.totalorder %v331, 128
  %vm348 = vcmp.lt.s32.totalorder %v332, 128
  %vm349 = vcmp.lt.s32.totalorder %v333, 128
  %vm350 = vcmp.lt.s32.totalorder %v334, 128
  %vm351 = vcmp.lt.s32.totalorder %v335, 128
  %vm352 = vcmp.lt.s32.totalorder %v336, 128
  %vm353 = vcmp.lt.s32.totalorder %v337, 128
  %vm354 = vcmp.lt.s32.totalorder %v338, 128
  %vm355 = vcmp.lt.s32.totalorder %v339, 128
  %vm356 = vcmp.lt.s32.totalorder %v340, 128
  %vm357 = vcmp.lt.s32.totalorder %v341, 128
  %vm358 = vcmp.lt.s32.totalorder %v342, 128
  %v359 = vsub.f32 %v265, %v325
  %v360 = vsub.f32 %v267, %v325
  %v361 = vsub.f32 %v270, %v325
  %v362 = vsub.f32 %v272, %v325
  %v363 = vsub.f32 %v275, %v325
  %v364 = vsub.f32 %v277, %v325
  %v365 = vsub.f32 %v280, %v325
  %v366 = vsub.f32 %v282, %v325
  %v367 = vsub.f32 %v285, %v325
  %v368 = vsub.f32 %v287, %v325
  %v369 = vsub.f32 %v290, %v325
  %v370 = vsub.f32 %v292, %v325
  %v371 = vsub.f32 %v295, %v325
  %v372 = vsub.f32 %v297, %v325
  %v373 = vsub.f32 %v300, %v325
  %v374 = vsub.f32 %v302, %v325
  %v375 = vsel %vm343, %v359, 0.0
  %v376 = vsel %vm344, %v360, 0.0
  %v377 = vsel %vm345, %v361, 0.0
  %v378 = vsel %vm346, %v362, 0.0
  %v379 = vsel %vm347, %v363, 0.0
  %v380 = vsel %vm348, %v364, 0.0
  %v381 = vsel %vm349, %v365, 0.0
  %v382 = vsel %vm350, %v366, 0.0
  %v383 = vsel %vm351, %v367, 0.0
  %v384 = vsel %vm352, %v368, 0.0
  %v385 = vsel %vm353, %v369, 0.0
  %v386 = vsel %vm354, %v370, 0.0
  %v387 = vsel %vm355, %v371, 0.0
  %v388 = vsel %vm356, %v372, 0.0
  %v389 = vsel %vm357, %v373, 0.0
  %v390 = vsel %vm358, %v374, 0.0
  %v391 = vmul.f32 %v375, %v375
  %v392 = vmul.f32 %v376, %v376
  %v393 = vmul.f32 %v377, %v377
  %v394 = vmul.f32 %v378, %v378
  %v395 = vmul.f32 %v379, %v379
  %v396 = vmul.f32 %v380, %v380
  %v397 = vmul.f32 %v381, %v381
  %v398 = vmul.f32 %v382, %v382
  %v399 = vmul.f32 %v383, %v383
  %v400 = vmul.f32 %v384, %v384
  %v401 = vmul.f32 %v385, %v385
  %v402 = vmul.f32 %v386, %v386
  %v403 = vmul.f32 %v387, %v387
  %v404 = vmul.f32 %v388, %v388
  %v405 = vmul.f32 %v389, %v389
  %v406 = vmul.f32 %v390, %v390
  %v407 = vadd.f32 %v391, %v392
  %v408 = vadd.f32 %v407, %v393
  %v409 = vadd.f32 %v408, %v394
  %v410 = vadd.f32 %v409, %v395
  %v411 = vadd.f32 %v410, %v396
  %v412 = vadd.f32 %v411, %v397
  %v413 = vadd.f32 %v412, %v398
  %v414 = vadd.f32 %v413, %v399
  %v415 = vadd.f32 %v414, %v400
  %v416 = vadd.f32 %v415, %v401
  %v417 = vadd.f32 %v416, %v402
  %v418 = vadd.f32 %v417, %v403
  %v419 = vadd.f32 %v418, %v404
  %v420 = vadd.f32 %v419, %v405
  %v421 = vadd.f32 %v420, %v406
  %v422 = vrot.slane %v421, 4
  %v423 = vadd.f32 %v421, %v422
  %v424 = vrot.slane %v423, 2
  %v425 = vadd.f32 %v423, %v424
  %v426 = vrot.slane %v425, 1
  %v427 = vadd.f32 %v425, %v426
  %v428 = vmul.f32 %v427, 0.0078125
  %v429 = vadd.f32 %v428, 1e-05
  %v430 = vrsqrt.pop %v429
  %v431 = vmul.f32 %v430, %v429
  %v432 = vmul.f32 %v431, %v430
  %v433 = vmul.f32 0.5, %v432
  %v434 = vsub.f32 1.5, %v433
  %v435 = vmul.f32 %v430, %v434
  %vm436 = vweird.f32 %v429
  %vm437 = vweird.f32 %v430
  %vm438 = vmor %vm436, %vm437
  %v439 = vsel %vm438, %v430, %v435
  %v440 = vld [vmem:[%s4] sm:$0x1]
  %v441 = vld [vmem:[%s2] sm:$0x1]
  %vm442 = vcmp.gt.f32.partialorder %v440, 0.0
  %v443 = vsel %vm442, %v439, 1.0
  %v444 = vmul.f32 %v441, %v443
  %v445 = vld [vmem:[%s3] sm:$0x1]
  %v446 = vsel %vm442, %v325, 0.0
  %v447 = vmul.f32 %v446, %v444
  %v448 = vsub.f32 %v445, %v447
  %v450 = vperm.slane %v444, 0
  %v452 = vmul.f32 %v265, %v450
  %v453 = vmul.f32 %v267, %v450
  %v454 = vmul.f32 %v270, %v450
  %v455 = vmul.f32 %v272, %v450
  %v456 = vmul.f32 %v275, %v450
  %v457 = vmul.f32 %v277, %v450
  %v458 = vmul.f32 %v280, %v450
  %v459 = vmul.f32 %v282, %v450
  %v460 = vmul.f32 %v285, %v450
  %v461 = vmul.f32 %v287, %v450
  %v462 = vmul.f32 %v290, %v450
  %v463 = vmul.f32 %v292, %v450
  %v464 = vmul.f32 %v295, %v450
  %v465 = vmul.f32 %v297, %v450
  %v466 = vmul.f32 %v300, %v450
  %v467 = vmul.f32 %v302, %v450
  %v469 = vperm.slane %v448, 0
  %v471 = vadd.f32 %v452, %v469
  %v472 = vadd.f32 %v453, %v469
  %v473 = vadd.f32 %v454, %v469
  %v474 = vadd.f32 %v455, %v469
  %v475 = vadd.f32 %v456, %v469
  %v476 = vadd.f32 %v457, %v469
  %v477 = vadd.f32 %v458, %v469
  %v478 = vadd.f32 %v459, %v469
  %v479 = vadd.f32 %v460, %v469
  %v480 = vadd.f32 %v461, %v469
  %v481 = vadd.f32 %v462, %v469
  %v482 = vadd.f32 %v463, %v469
  %v483 = vadd.f32 %v464, %v469
  %v484 = vadd.f32 %v465, %v469
  %v485 = vadd.f32 %v466, %v469
  %v486 = vadd.f32 %v467, %v469
  %v487 = vmax.f32 %v471, 0.0
  %v488 = vmax.f32 %v472, 0.0
  %v489 = vmax.f32 %v473, 0.0
  %v490 = vmax.f32 %v474, 0.0
  %v491 = vmax.f32 %v475, 0.0
  %v492 = vmax.f32 %v476, 0.0
  %v493 = vmax.f32 %v477, 0.0
  %v494 = vmax.f32 %v478, 0.0
  %v495 = vmax.f32 %v479, 0.0
  %v496 = vmax.f32 %v480, 0.0
  %v497 = vmax.f32 %v481, 0.0
  %v498 = vmax.f32 %v482, 0.0
  %v499 = vmax.f32 %v483, 0.0
  %v500 = vmax.f32 %v484, 0.0
  %v501 = vmax.f32 %v485, 0.0
  %v502 = vmax.f32 %v486, 0.0
  %v503 = vsel %vm442, 1, 0
  %v504 = vperm.slane %v503, 0
  %vm505 = vcmp.eq.s32.totalorder %v504, 1
  %v506 = vsel %vm505, %v487, %v471
  %v507 = vsel %vm505, %v488, %v472
  %v508 = vsel %vm505, %v489, %v473
  %v509 = vsel %vm505, %v490, %v474
  %v510 = vsel %vm505, %v491, %v475
  %v511 = vsel %vm505, %v492, %v476
  %v512 = vsel %vm505, %v493, %v477
  %v513 = vsel %vm505, %v494, %v478
  %v514 = vsel %vm505, %v495, %v479
  %v515 = vsel %vm505, %v496, %v480
  %v516 = vsel %vm505, %v497, %v481
  %v517 = vsel %vm505, %v498, %v482
  %v518 = vsel %vm505, %v499, %v483
  %v519 = vsel %vm505, %v500, %v484
  %v520 = vsel %vm505, %v501, %v485
  %v521 = vsel %vm505, %v502, %v486
  %v522 = vpack.c.bf16 %v506, %v506
  %v523 = vpack.c.bf16 %v507, %v507
  %v524 = vpack.c.bf16 %v508, %v508
  %v525 = vpack.c.bf16 %v509, %v509
  %v526 = vpack.c.bf16 %v510, %v510
  %v527 = vpack.c.bf16 %v511, %v511
  %v528 = vpack.c.bf16 %v512, %v512
  %v529 = vpack.c.bf16 %v513, %v513
  %v530 = vpack.c.bf16 %v514, %v514
  %v531 = vpack.c.bf16 %v515, %v515
  %v532 = vpack.c.bf16 %v516, %v516
  %v533 = vpack.c.bf16 %v517, %v517
  %v534 = vpack.c.bf16 %v518, %v518
  %v535 = vpack.c.bf16 %v519, %v519
  %v536 = vpack.c.bf16 %v520, %v520
  %v537 = vpack.c.bf16 %v521, %v521
  %538 = vst [vmem:[%s5] sm:$0xf] %v522
  %539 = vst [vmem:[%s5 + $0x4] sm:$0xf] %v523
  %540 = vst [vmem:[%s5 + $0x8] sm:$0xf] %v524
  %541 = vst [vmem:[%s5 + $0xc] sm:$0xf] %v525
  %542 = vst [vmem:[%s5 + $0x10] sm:$0xf] %v526
  %543 = vst [vmem:[%s5 + $0x14] sm:$0xf] %v527
  %544 = vst [vmem:[%s5 + $0x18] sm:$0xf] %v528
  %545 = vst [vmem:[%s5 + $0x1c] sm:$0xf] %v529
  %546 = vst [vmem:[%s5 + $0x20] sm:$0xf] %v530
  %547 = vst [vmem:[%s5 + $0x24] sm:$0xf] %v531
  %548 = vst [vmem:[%s5 + $0x28] sm:$0xf] %v532
  %549 = vst [vmem:[%s5 + $0x2c] sm:$0xf] %v533
  %550 = vst [vmem:[%s5 + $0x30] sm:$0xf] %v534
  %551 = vst [vmem:[%s5 + $0x34] sm:$0xf] %v535
  %552 = vst [vmem:[%s5 + $0x38] sm:$0xf] %v536
  %553 = vst [vmem:[%s5 + $0x3c] sm:$0xf] %v537
  // Predicated region
  $region22: #{unet_forward.17} parent=0 // pred_check
    _
  $region23: #{unet_forward.17} parent=0 // pred_check_branch
    %555 = sbr.rel (0) target = $region25
  $region24: #{unet_forward.17} parent=0 // pred_region
    _
  $region25: #{unet_forward.17} parent=0 // pred_fallthru
    _
  // Predicated region
  $region26: #{unet_forward.17} parent=0 // pred_check
    _
  $region27: #{unet_forward.17} parent=0 // pred_check_branch
    %557 = sbr.rel (0) target = $region29
  $region28: #{unet_forward.17} parent=0 // pred_region
    _
  $region29: #{unet_forward.17} parent=0 // pred_fallthru
    _

// kernel: unet_forward.18
$region0: #{unet_forward.18}
  #allocation0 [shape = 'u32[]', space=smem, size = 0x4, offset = 0x4, fixed_abs, tag = 'smem constant byte address 0x4 - core index']
  #allocation1 [shape = 'u32[72,128]{1,0:T(1,128)}', space=vmem, size = 0x9000, scoped, tag = 'internal scratch']
  %s0 = inlined_call_operand.vmem [shape: bf16[128,144], index: 0, kind: input, shape index: {}]
  %s1 = inlined_call_operand.vmem [shape: bf16[144,128], index: 1, kind: input, shape index: {}]
  %s2 = inlined_call_operand.vmem [shape: f32[1,128], index: 2, kind: input, shape index: {}]
  %s3 = inlined_call_operand.vmem [shape: f32[1,128], index: 3, kind: input, shape index: {}]
  %s4 = inlined_call_operand.vmem [shape: f32[1,128], index: 4, kind: input, shape index: {}]
  %s5 = inlined_call_operand.vmem [shape: bf16[128,128], index: 5, kind: input, shape index: {}]
  %s6 = inlined_call_operand.vmem [shape: bf16[128,128], index: 6, kind: output, shape index: {}]
  %s7 = sld [smem:[#allocation0]]
  $region34: #{unet_forward.18} parent=0
    _
  %s9 = ssub.s32 1, %s7
  %s10 = scalar_select 0, %s9, %s7
  // Predicated region
  $region2: #{unet_forward.18} parent=0 // pred_check
    _
  $region3: #{unet_forward.18} parent=0 // pred_check_branch
    %12 = sbr.rel (0) target = $region5
  $region4: #{unet_forward.18} parent=0 // pred_region
    _
  $region5: #{unet_forward.18} parent=0 // pred_fallthru
    _
  // Predicated region
  $region6: #{unet_forward.18} parent=0 // pred_check
    _
  $region7: #{unet_forward.18} parent=0 // pred_check_branch
    %14 = sbr.rel (0) target = $region9
  $region8: #{unet_forward.18} parent=0 // pred_region
    _
  $region9: #{unet_forward.18} parent=0 // pred_fallthru
    _
  // Predicated region
  $region10: #{unet_forward.18} parent=0 // pred_check
    _
  $region11: #{unet_forward.18} parent=0 // pred_check_branch
    %16 = sbr.rel (0) target = $region13
  $region12: #{unet_forward.18} parent=0 // pred_region
    _
  $region13: #{unet_forward.18} parent=0 // pred_fallthru
    _
  // Predicated region
  $region14: #{unet_forward.18} parent=0 // pred_check
    _
  $region15: #{unet_forward.18} parent=0 // pred_check_branch
    %18 = sbr.rel (0) target = $region17
  $region16: #{unet_forward.18} parent=0 // pred_region
    _
  $region17: #{unet_forward.18} parent=0 // pred_fallthru
    _
  // Predicated region
  $region18: #{unet_forward.18} parent=0 // pred_check
    _
  $region19: #{unet_forward.18} parent=0 // pred_check_branch
    %20 = sbr.rel (0) target = $region21
  $region20: #{unet_forward.18} parent=0 // pred_region
    _
  $region21: #{unet_forward.18} parent=0 // pred_fallthru
    _
  // Predicated region
  $region22: #{unet_forward.18} parent=0 // pred_check
    _
  $region23: #{unet_forward.18} parent=0 // pred_check_branch
    %22 = sbr.rel (0) target = $region25
  $region24: #{unet_forward.18} parent=0 // pred_region
    _
  $region25: #{unet_forward.18} parent=0 // pred_fallthru
    _
  %v24 = vld [vmem:[%s0] sm:$0xff]
  %v25 = vld [vmem:[%s0 + $0x8] sm:$0xff]
  %v26 = vld [vmem:[%s0 + $0x10] sm:$0xff]
  %v27 = vld [vmem:[%s0 + $0x18] sm:$0xff]
  %v28 = vld [vmem:[%s0 + $0x20] sm:$0xff]
  %v29 = vld [vmem:[%s0 + $0x28] sm:$0xff]
  %v30 = vld [vmem:[%s0 + $0x30] sm:$0xff]
  %v31 = vld [vmem:[%s0 + $0x38] sm:$0xff]
  %v32 = vld [vmem:[%s0 + $0x40] sm:$0xff]
  %v33 = vld [vmem:[%s0 + $0x48] sm:$0xff]
  %v34 = vld [vmem:[%s0 + $0x50] sm:$0xff]
  %v35 = vld [vmem:[%s0 + $0x58] sm:$0xff]
  %v36 = vld [vmem:[%s0 + $0x60] sm:$0xff]
  %v37 = vld [vmem:[%s0 + $0x68] sm:$0xff]
  %v38 = vld [vmem:[%s0 + $0x70] sm:$0xff]
  %v39 = vld [vmem:[%s0 + $0x78] sm:$0xff]
  %v40 = vld [vmem:[%s1] sm:$0xf]
  %v41 = vld [vmem:[%s1 + $0x4] sm:$0xf]
  %v42 = vld [vmem:[%s1 + $0x8] sm:$0xf]
  %v43 = vld [vmem:[%s1 + $0xc] sm:$0xf]
  %v44 = vld [vmem:[%s1 + $0x10] sm:$0xf]
  %v45 = vld [vmem:[%s1 + $0x14] sm:$0xf]
  %v46 = vld [vmem:[%s1 + $0x18] sm:$0xf]
  %v47 = vld [vmem:[%s1 + $0x1c] sm:$0xf]
  %v48 = vld [vmem:[%s1 + $0x20] sm:$0xf]
  %v49 = vld [vmem:[%s1 + $0x24] sm:$0xf]
  %v50 = vld [vmem:[%s1 + $0x28] sm:$0xf]
  %v51 = vld [vmem:[%s1 + $0x2c] sm:$0xf]
  %v52 = vld [vmem:[%s1 + $0x30] sm:$0xf]
  %v53 = vld [vmem:[%s1 + $0x34] sm:$0xf]
  %v54 = vld [vmem:[%s1 + $0x38] sm:$0xf]
  %v55 = vld [vmem:[%s1 + $0x3c] sm:$0xf]
  %v56 = vld [vmem:[%s1 + $0x40] sm:$0xf]
  %v57 = vld [vmem:[%s1 + $0x44] sm:$0xf]
  %v74 = vunpack.c.l.b16 %v24
  %v75 = vunpack.c.h.b16 %v24
  %v76 = vunpack.c.l.b16 %v25
  %v77 = vunpack.c.h.b16 %v25
  %v78 = vunpack.c.l.b16 %v26
  %v79 = vunpack.c.h.b16 %v26
  %v80 = vunpack.c.l.b16 %v27
  %v81 = vunpack.c.h.b16 %v27
  %v82 = vunpack.c.l.b16 %v28
  %v83 = vunpack.c.h.b16 %v28
  %v84 = vunpack.c.l.b16 %v29
  %v85 = vunpack.c.h.b16 %v29
  %v86 = vunpack.c.l.b16 %v30
  %v87 = vunpack.c.h.b16 %v30
  %v88 = vunpack.c.l.b16 %v31
  %v89 = vunpack.c.h.b16 %v31
  %v90 = vunpack.c.l.b16 %v32
  %v91 = vunpack.c.h.b16 %v32
  %v92 = vunpack.c.l.b16 %v33
  %v93 = vunpack.c.h.b16 %v33
  %v94 = vunpack.c.l.b16 %v34
  %v95 = vunpack.c.h.b16 %v34
  %v96 = vunpack.c.l.b16 %v35
  %v97 = vunpack.c.h.b16 %v35
  %v98 = vunpack.c.l.b16 %v36
  %v99 = vunpack.c.h.b16 %v36
  %v100 = vunpack.c.l.b16 %v37
  %v101 = vunpack.c.h.b16 %v37
  %v102 = vunpack.c.l.b16 %v38
  %v103 = vunpack.c.h.b16 %v38
  %v104 = vunpack.c.l.b16 %v39
  %v105 = vunpack.c.h.b16 %v39
  %v106 = vpack.c.b16 %v76, %v74
  %v107 = vpack.c.b16 %v77, %v75
  %v108 = vpack.c.b16 %v80, %v78
  %v109 = vpack.c.b16 %v81, %v79
  %v110 = vpack.c.b16 %v84, %v82
  %v111 = vpack.c.b16 %v85, %v83
  %v112 = vpack.c.b16 %v88, %v86
  %v113 = vpack.c.b16 %v89, %v87
  %v114 = vpack.c.b16 %v92, %v90
  %v115 = vpack.c.b16 %v93, %v91
  %v116 = vpack.c.b16 %v96, %v94
  %v117 = vpack.c.b16 %v97, %v95
  %v118 = vpack.c.b16 %v100, %v98
  %v119 = vpack.c.b16 %v101, %v99
  %v120 = vpack.c.b16 %v104, %v102
  %v121 = vpack.c.b16 %v105, %v103
  %v148 = vunpack.c.l.b16 %v40
  %v149 = vunpack.c.l.b16 %v41
  %v150 = vunpack.c.l.b16 %v42
  %v151 = vunpack.c.l.b16 %v43
  %v152 = vunpack.c.l.b16 %v44
  %v153 = vunpack.c.l.b16 %v45
  %v154 = vunpack.c.l.b16 %v46
  %v155 = vunpack.c.l.b16 %v47
  %v156 = vunpack.c.l.b16 %v48
  %v157 = vunpack.c.l.b16 %v49
  %v158 = vunpack.c.l.b16 %v50
  %v159 = vunpack.c.l.b16 %v51
  %v160 = vunpack.c.l.b16 %v52
  %v161 = vunpack.c.l.b16 %v53
  %v162 = vunpack.c.l.b16 %v54
  %v163 = vunpack.c.l.b16 %v55
  %v164 = vunpack.c.l.b16 %v56
  %v165 = vunpack.c.l.b16 %v57
  %v166 = vpack.c.b16 %v149, %v148
  %v167 = vpack.c.b16 %v151, %v150
  %v168 = vpack.c.b16 %v153, %v152
  %v169 = vpack.c.b16 %v155, %v154
  %v170 = vpack.c.b16 %v157, %v156
  %v171 = vpack.c.b16 %v159, %v158
  %v172 = vpack.c.b16 %v161, %v160
  %v173 = vpack.c.b16 %v163, %v162
  %v174 = vpack.c.b16 %v165, %v164
  %vm184 = vcmask 130048
  %v186 = vsel %vm184, %v107, 0
  %v189 = vsel %vm184, %v109, 0
  %v192 = vsel %vm184, %v111, 0
  %v195 = vsel %vm184, %v113, 0
  %v198 = vsel %vm184, %v115, 0
  %v201 = vsel %vm184, %v117, 0
  %v204 = vsel %vm184, %v119, 0
  %v207 = vsel %vm184, %v121, 0
  %209 = vmatpush.bf16.msra.mxu0 %v173
  %210 = vmatpush.bf16.msra.mxu0 %v172
  %211 = vmatpush.bf16.msra.mxu0 %v171
  %212 = vmatpush.bf16.msra.mxu0 %v170
  %213 = vmatpush.bf16.msra.mxu0 %v169
  %214 = vmatpush.bf16.msra.mxu0 %v168
  %215 = vmatpush.bf16.msra.mxu0 %v167
  %216 = vmatpush.bf16.msra.mxu0 %v166
  %217 = vmatmul.bf16.gmra.mxu0 %v106
  %v218 = vpop.f32.mrf.mxu0
  %v219 = vadd.f32 0.0, %v218
  %v220 = vpop.f32.mrf.mxu0
  %v221 = vadd.f32 0.0, %v220
  %222 = vmatmul.bf16.gmra.mxu0 %v108
  %v223 = vpop.f32.mrf.mxu0
  %v224 = vadd.f32 0.0, %v223
  %v225 = vpop.f32.mrf.mxu0
  %v226 = vadd.f32 0.0, %v225
  %227 = vmatmul.bf16.gmra.mxu0 %v110
  %v228 = vpop.f32.mrf.mxu0
  %v229 = vadd.f32 0.0, %v228
  %v230 = vpop.f32.mrf.mxu0
  %v231 = vadd.f32 0.0, %v230
  %232 = vmatmul.bf16.gmra.mxu0 %v112
  %v233 = vpop.f32.mrf.mxu0
  %v234 = vadd.f32 0.0, %v233
  %v235 = vpop.f32.mrf.mxu0
  %v236 = vadd.f32 0.0, %v235
  %237 = vmatmul.bf16.gmra.mxu0 %v114
  %v238 = vpop.f32.mrf.mxu0
  %v239 = vadd.f32 0.0, %v238
  %v240 = vpop.f32.mrf.mxu0
  %v241 = vadd.f32 0.0, %v240
  %242 = vmatmul.bf16.gmra.mxu0 %v116
  %v243 = vpop.f32.mrf.mxu0
  %v244 = vadd.f32 0.0, %v243
  %v245 = vpop.f32.mrf.mxu0
  %v246 = vadd.f32 0.0, %v245
  %247 = vmatmul.bf16.gmra.mxu0 %v118
  %v248 = vpop.f32.mrf.mxu0
  %v249 = vadd.f32 0.0, %v248
  %v250 = vpop.f32.mrf.mxu0
  %v251 = vadd.f32 0.0, %v250
  %252 = vmatmul.bf16.gmra.mxu0 %v120
  %v253 = vpop.f32.mrf.mxu0
  %v254 = vadd.f32 0.0, %v253
  %v255 = vpop.f32.mrf.mxu0
  %v256 = vadd.f32 0.0, %v255
  %257 = vdwg.mxu0
  %258 = vmatpush.bf16.msra.mxu0 0
  %259 = vmatpush.bf16.msra.mxu0 0
  %260 = vmatpush.bf16.msra.mxu0 0
  %261 = vmatpush.bf16.msra.mxu0 0
  %262 = vmatpush.bf16.msra.mxu0 0
  %263 = vmatpush.bf16.msra.mxu0 0
  %264 = vmatpush.bf16.msra.mxu0 0
  %265 = vmatpush.bf16.msra.mxu0 %v174
  %266 = vmatmul.bf16.gmra.mxu0 %v186
  %v267 = vpop.f32.mrf.mxu0
  %v268 = vadd.f32 %v219, %v267
  %v269 = vpop.f32.mrf.mxu0
  %v270 = vadd.f32 %v221, %v269
  %271 = vmatmul.bf16.gmra.mxu0 %v189
  %v272 = vpop.f32.mrf.mxu0
  %v273 = vadd.f32 %v224, %v272
  %v274 = vpop.f32.mrf.mxu0
  %v275 = vadd.f32 %v226, %v274
  %276 = vmatmul.bf16.gmra.mxu0 %v192
  %v277 = vpop.f32.mrf.mxu0
  %v278 = vadd.f32 %v229, %v277
  %v279 = vpop.f32.mrf.mxu0
  %v280 = vadd.f32 %v231, %v279
  %281 = vmatmul.bf16.gmra.mxu0 %v195
  %v282 = vpop.f32.mrf.mxu0
  %v283 = vadd.f32 %v234, %v282
  %v284 = vpop.f32.mrf.mxu0
  %v285 = vadd.f32 %v236, %v284
  %286 = vmatmul.bf16.gmra.mxu0 %v198
  %v287 = vpop.f32.mrf.mxu0
  %v288 = vadd.f32 %v239, %v287
  %v289 = vpop.f32.mrf.mxu0
  %v290 = vadd.f32 %v241, %v289
  %291 = vmatmul.bf16.gmra.mxu0 %v201
  %v292 = vpop.f32.mrf.mxu0
  %v293 = vadd.f32 %v244, %v292
  %v294 = vpop.f32.mrf.mxu0
  %v295 = vadd.f32 %v246, %v294
  %296 = vmatmul.bf16.gmra.mxu0 %v204
  %v297 = vpop.f32.mrf.mxu0
  %v298 = vadd.f32 %v249, %v297
  %v299 = vpop.f32.mrf.mxu0
  %v300 = vadd.f32 %v251, %v299
  %301 = vmatmul.bf16.gmra.mxu0 %v207
  %v302 = vpop.f32.mrf.mxu0
  %v303 = vadd.f32 %v254, %v302
  %v304 = vpop.f32.mrf.mxu0
  %v305 = vadd.f32 %v256, %v304
  %306 = vdwg.mxu0
  %v307 = vadd.f32 %v268, %v270
  %v308 = vadd.f32 %v307, %v273
  %v309 = vadd.f32 %v308, %v275
  %v310 = vadd.f32 %v309, %v278
  %v311 = vadd.f32 %v310, %v280
  %v312 = vadd.f32 %v311, %v283
  %v313 = vadd.f32 %v312, %v285
  %v314 = vadd.f32 %v313, %v288
  %v315 = vadd.f32 %v314, %v290
  %v316 = vadd.f32 %v315, %v293
  %v317 = vadd.f32 %v316, %v295
  %v318 = vadd.f32 %v317, %v298
  %v319 = vadd.f32 %v318, %v300
  %v320 = vadd.f32 %v319, %v303
  %v321 = vadd.f32 %v320, %v305
  %v322 = vrot.slane %v321, 4
  %v323 = vadd.f32 %v321, %v322
  %v324 = vrot.slane %v323, 2
  %v325 = vadd.f32 %v323, %v324
  %v326 = vrot.slane %v325, 1
  %v327 = vadd.f32 %v325, %v326
  %v328 = vmul.f32 %v327, 0.0078125
  %v329 = vlaneseq
  %v330 = vshrl.u32 %v329, 7
  %v331 = vadd.s32 %v330, 8
  %v332 = vadd.s32 %v330, 16
  %v333 = vadd.s32 %v330, 24
  %v334 = vadd.s32 %v330, 32
  %v335 = vadd.s32 %v330, 40
  %v336 = vadd.s32 %v330, 48
  %v337 = vadd.s32 %v330, 56
  %v338 = vadd.s32 %v330, 64
  %v339 = vadd.s32 %v330, 72
  %v340 = vadd.s32 %v330, 80
  %v341 = vadd.s32 %v330, 88
  %v342 = vadd.s32 %v330, 96
  %v343 = vadd.s32 %v330, 104
  %v344 = vadd.s32 %v330, 112
  %v345 = vadd.s32 %v330, 120
  %vm346 = vcmp.lt.s32.totalorder %v330, 128
  %vm347 = vcmp.lt.s32.totalorder %v331, 128
  %vm348 = vcmp.lt.s32.totalorder %v332, 128
  %vm349 = vcmp.lt.s32.totalorder %v333, 128
  %vm350 = vcmp.lt.s32.totalorder %v334, 128
  %vm351 = vcmp.lt.s32.totalorder %v335, 128
  %vm352 = vcmp.lt.s32.totalorder %v336, 128
  %vm353 = vcmp.lt.s32.totalorder %v337, 128
  %vm354 = vcmp.lt.s32.totalorder %v338, 128
  %vm355 = vcmp.lt.s32.totalorder %v339, 128
  %vm356 = vcmp.lt.s32.totalorder %v340, 128
  %vm357 = vcmp.lt.s32.totalorder %v341, 128
  %vm358 = vcmp.lt.s32.totalorder %v342, 128
  %vm359 = vcmp.lt.s32.totalorder %v343, 128
  %vm360 = vcmp.lt.s32.totalorder %v344, 128
  %vm361 = vcmp.lt.s32.totalorder %v345, 128
  %v362 = vsub.f32 %v268, %v328
  %v363 = vsub.f32 %v270, %v328
  %v364 = vsub.f32 %v273, %v328
  %v365 = vsub.f32 %v275, %v328
  %v366 = vsub.f32 %v278, %v328
  %v367 = vsub.f32 %v280, %v328
  %v368 = vsub.f32 %v283, %v328
  %v369 = vsub.f32 %v285, %v328
  %v370 = vsub.f32 %v288, %v328
  %v371 = vsub.f32 %v290, %v328
  %v372 = vsub.f32 %v293, %v328
  %v373 = vsub.f32 %v295, %v328
  %v374 = vsub.f32 %v298, %v328
  %v375 = vsub.f32 %v300, %v328
  %v376 = vsub.f32 %v303, %v328
  %v377 = vsub.f32 %v305, %v328
  %v378 = vsel %vm346, %v362, 0.0
  %v379 = vsel %vm347, %v363, 0.0
  %v380 = vsel %vm348, %v364, 0.0
  %v381 = vsel %vm349, %v365, 0.0
  %v382 = vsel %vm350, %v366, 0.0
  %v383 = vsel %vm351, %v367, 0.0
  %v384 = vsel %vm352, %v368, 0.0
  %v385 = vsel %vm353, %v369, 0.0
  %v386 = vsel %vm354, %v370, 0.0
  %v387 = vsel %vm355, %v371, 0.0
  %v388 = vsel %vm356, %v372, 0.0
  %v389 = vsel %vm357, %v373, 0.0
  %v390 = vsel %vm358, %v374, 0.0
  %v391 = vsel %vm359, %v375, 0.0
  %v392 = vsel %vm360, %v376, 0.0
  %v393 = vsel %vm361, %v377, 0.0
  %v394 = vmul.f32 %v378, %v378
  %v395 = vmul.f32 %v379, %v379
  %v396 = vmul.f32 %v380, %v380
  %v397 = vmul.f32 %v381, %v381
  %v398 = vmul.f32 %v382, %v382
  %v399 = vmul.f32 %v383, %v383
  %v400 = vmul.f32 %v384, %v384
  %v401 = vmul.f32 %v385, %v385
  %v402 = vmul.f32 %v386, %v386
  %v403 = vmul.f32 %v387, %v387
  %v404 = vmul.f32 %v388, %v388
  %v405 = vmul.f32 %v389, %v389
  %v406 = vmul.f32 %v390, %v390
  %v407 = vmul.f32 %v391, %v391
  %v408 = vmul.f32 %v392, %v392
  %v409 = vmul.f32 %v393, %v393
  %v410 = vadd.f32 %v394, %v395
  %v411 = vadd.f32 %v410, %v396
  %v412 = vadd.f32 %v411, %v397
  %v413 = vadd.f32 %v412, %v398
  %v414 = vadd.f32 %v413, %v399
  %v415 = vadd.f32 %v414, %v400
  %v416 = vadd.f32 %v415, %v401
  %v417 = vadd.f32 %v416, %v402
  %v418 = vadd.f32 %v417, %v403
  %v419 = vadd.f32 %v418, %v404
  %v420 = vadd.f32 %v419, %v405
  %v421 = vadd.f32 %v420, %v406
  %v422 = vadd.f32 %v421, %v407
  %v423 = vadd.f32 %v422, %v408
  %v424 = vadd.f32 %v423, %v409
  %v425 = vrot.slane %v424, 4
  %v426 = vadd.f32 %v424, %v425
  %v427 = vrot.slane %v426, 2
  %v428 = vadd.f32 %v426, %v427
  %v429 = vrot.slane %v428, 1
  %v430 = vadd.f32 %v428, %v429
  %v431 = vmul.f32 %v430, 0.0078125
  %v432 = vadd.f32 %v431, 1e-05
  %v433 = vrsqrt.pop %v432
  %v434 = vmul.f32 %v433, %v432
  %v435 = vmul.f32 %v434, %v433
  %v436 = vmul.f32 0.5, %v435
  %v437 = vsub.f32 1.5, %v436
  %v438 = vmul.f32 %v433, %v437
  %vm439 = vweird.f32 %v432
  %vm440 = vweird.f32 %v433
  %vm441 = vmor %vm439, %vm440
  %v442 = vsel %vm441, %v433, %v438
  %v443 = vld [vmem:[%s4] sm:$0x1]
  %v444 = vld [vmem:[%s2] sm:$0x1]
  %vm445 = vcmp.gt.f32.partialorder %v443, 0.0
  %v446 = vsel %vm445, %v442, 1.0
  %v447 = vmul.f32 %v444, %v446
  %v448 = vld [vmem:[%s3] sm:$0x1]
  %v449 = vsel %vm445, %v328, 0.0
  %v450 = vmul.f32 %v449, %v447
  %v451 = vsub.f32 %v448, %v450
  %v453 = vperm.slane %v447, 0
  %v455 = vmul.f32 %v268, %v453
  %v456 = vmul.f32 %v270, %v453
  %v457 = vmul.f32 %v273, %v453
  %v458 = vmul.f32 %v275, %v453
  %v459 = vmul.f32 %v278, %v453
  %v460 = vmul.f32 %v280, %v453
  %v461 = vmul.f32 %v283, %v453
  %v462 = vmul.f32 %v285, %v453
  %v463 = vmul.f32 %v288, %v453
  %v464 = vmul.f32 %v290, %v453
  %v465 = vmul.f32 %v293, %v453
  %v466 = vmul.f32 %v295, %v453
  %v467 = vmul.f32 %v298, %v453
  %v468 = vmul.f32 %v300, %v453
  %v469 = vmul.f32 %v303, %v453
  %v470 = vmul.f32 %v305, %v453
  %v472 = vperm.slane %v451, 0
  %v474 = vadd.f32 %v455, %v472
  %v475 = vadd.f32 %v456, %v472
  %v476 = vadd.f32 %v457, %v472
  %v477 = vadd.f32 %v458, %v472
  %v478 = vadd.f32 %v459, %v472
  %v479 = vadd.f32 %v460, %v472
  %v480 = vadd.f32 %v461, %v472
  %v481 = vadd.f32 %v462, %v472
  %v482 = vadd.f32 %v463, %v472
  %v483 = vadd.f32 %v464, %v472
  %v484 = vadd.f32 %v465, %v472
  %v485 = vadd.f32 %v466, %v472
  %v486 = vadd.f32 %v467, %v472
  %v487 = vadd.f32 %v468, %v472
  %v488 = vadd.f32 %v469, %v472
  %v489 = vadd.f32 %v470, %v472
  %v490 = vld [vmem:[%s5] sm:$0xf]
  %v491 = vld [vmem:[%s5 + $0x4] sm:$0xf]
  %v492 = vld [vmem:[%s5 + $0x8] sm:$0xf]
  %v493 = vld [vmem:[%s5 + $0xc] sm:$0xf]
  %v494 = vld [vmem:[%s5 + $0x10] sm:$0xf]
  %v495 = vld [vmem:[%s5 + $0x14] sm:$0xf]
  %v496 = vld [vmem:[%s5 + $0x18] sm:$0xf]
  %v497 = vld [vmem:[%s5 + $0x1c] sm:$0xf]
  %v498 = vld [vmem:[%s5 + $0x20] sm:$0xf]
  %v499 = vld [vmem:[%s5 + $0x24] sm:$0xf]
  %v500 = vld [vmem:[%s5 + $0x28] sm:$0xf]
  %v501 = vld [vmem:[%s5 + $0x2c] sm:$0xf]
  %v502 = vld [vmem:[%s5 + $0x30] sm:$0xf]
  %v503 = vld [vmem:[%s5 + $0x34] sm:$0xf]
  %v504 = vld [vmem:[%s5 + $0x38] sm:$0xf]
  %v505 = vld [vmem:[%s5 + $0x3c] sm:$0xf]
  %v506 = vunpack.c.l.bf16 %v490
  %v507 = vunpack.c.l.bf16 %v491
  %v508 = vunpack.c.l.bf16 %v492
  %v509 = vunpack.c.l.bf16 %v493
  %v510 = vunpack.c.l.bf16 %v494
  %v511 = vunpack.c.l.bf16 %v495
  %v512 = vunpack.c.l.bf16 %v496
  %v513 = vunpack.c.l.bf16 %v497
  %v514 = vunpack.c.l.bf16 %v498
  %v515 = vunpack.c.l.bf16 %v499
  %v516 = vunpack.c.l.bf16 %v500
  %v517 = vunpack.c.l.bf16 %v501
  %v518 = vunpack.c.l.bf16 %v502
  %v519 = vunpack.c.l.bf16 %v503
  %v520 = vunpack.c.l.bf16 %v504
  %v521 = vunpack.c.l.bf16 %v505
  %v522 = vadd.f32 %v474, %v506
  %v523 = vadd.f32 %v475, %v507
  %v524 = vadd.f32 %v476, %v508
  %v525 = vadd.f32 %v477, %v509
  %v526 = vadd.f32 %v478, %v510
  %v527 = vadd.f32 %v479, %v511
  %v528 = vadd.f32 %v480, %v512
  %v529 = vadd.f32 %v481, %v513
  %v530 = vadd.f32 %v482, %v514
  %v531 = vadd.f32 %v483, %v515
  %v532 = vadd.f32 %v484, %v516
  %v533 = vadd.f32 %v485, %v517
  %v534 = vadd.f32 %v486, %v518
  %v535 = vadd.f32 %v487, %v519
  %v536 = vadd.f32 %v488, %v520
  %v537 = vadd.f32 %v489, %v521
  %v538 = vmax.f32 %v522, 0.0
  %v539 = vmax.f32 %v523, 0.0
  %v540 = vmax.f32 %v524, 0.0
  %v541 = vmax.f32 %v525, 0.0
  %v542 = vmax.f32 %v526, 0.0
  %v543 = vmax.f32 %v527, 0.0
  %v544 = vmax.f32 %v528, 0.0
  %v545 = vmax.f32 %v529, 0.0
  %v546 = vmax.f32 %v530, 0.0
  %v547 = vmax.f32 %v531, 0.0
  %v548 = vmax.f32 %v532, 0.0
  %v549 = vmax.f32 %v533, 0.0
  %v550 = vmax.f32 %v534, 0.0
  %v551 = vmax.f32 %v535, 0.0
  %v552 = vmax.f32 %v536, 0.0
  %v553 = vmax.f32 %v537, 0.0
  %v554 = vsel %vm445, 1, 0
  %v555 = vperm.slane %v554, 0
  %vm556 = vcmp.eq.s32.totalorder %v555, 1
  %v557 = vsel %vm556, %v538, %v522
  %v558 = vsel %vm556, %v539, %v523
  %v559 = vsel %vm556, %v540, %v524
  %v560 = vsel %vm556, %v541, %v525
  %v561 = vsel %vm556, %v542, %v526
  %v562 = vsel %vm556, %v543, %v527
  %v563 = vsel %vm556, %v544, %v528
  %v564 = vsel %vm556, %v545, %v529
  %v565 = vsel %vm556, %v546, %v530
  %v566 = vsel %vm556, %v547, %v531
  %v567 = vsel %vm556, %v548, %v532
  %v568 = vsel %vm556, %v549, %v533
  %v569 = vsel %vm556, %v550, %v534
  %v570 = vsel %vm556, %v551, %v535
  %v571 = vsel %vm556, %v552, %v536
  %v572 = vsel %vm556, %v553, %v537
  %v573 = vpack.c.bf16 %v557, %v557
  %v574 = vpack.c.bf16 %v558, %v558
  %v575 = vpack.c.bf16 %v559, %v559
  %v576 = vpack.c.bf16 %v560, %v560
  %v577 = vpack.c.bf16 %v561, %v561
  %v578 = vpack.c.bf16 %v562, %v562
  %v579 = vpack.c.bf16 %v563, %v563
  %v580 = vpack.c.bf16 %v564, %v564
  %v581 = vpack.c.bf16 %v565, %v565
  %v582 = vpack.c.bf16 %v566, %v566
  %v583 = vpack.c.bf16 %v567, %v567
  %v584 = vpack.c.bf16 %v568, %v568
  %v585 = vpack.c.bf16 %v569, %v569
  %v586 = vpack.c.bf16 %v570, %v570
  %v587 = vpack.c.bf16 %v571, %v571
  %v588 = vpack.c.bf16 %v572, %v572
  %589 = vst [vmem:[%s6] sm:$0xf] %v573
  %590 = vst [vmem:[%s6 + $0x4] sm:$0xf] %v574
  %591 = vst [vmem:[%s6 + $0x8] sm:$0xf] %v575
  %592 = vst [vmem:[%s6 + $0xc] sm:$0xf] %v576
  %593 = vst [vmem:[%s6 + $0x10] sm:$0xf] %v577
  %594 = vst [vmem:[%s6 + $0x14] sm:$0xf] %v578
  %595 = vst [vmem:[%s6 + $0x18] sm:$0xf] %v579
  %596 = vst [vmem:[%s6 + $0x1c] sm:$0xf] %v580
  %597 = vst [vmem:[%s6 + $0x20] sm:$0xf] %v581
  %598 = vst [vmem:[%s6 + $0x24] sm:$0xf] %v582
  %599 = vst [vmem:[%s6 + $0x28] sm:$0xf] %v583
  %600 = vst [vmem:[%s6 + $0x2c] sm:$0xf] %v584
  %601 = vst [vmem:[%s6 + $0x30] sm:$0xf] %v585
  %602 = vst [vmem:[%s6 + $0x34] sm:$0xf] %v586
  %603 = vst [vmem:[%s6 + $0x38] sm:$0xf] %v587
  %604 = vst [vmem:[%s6 + $0x3c] sm:$0xf] %v588
  // Predicated region
  $region26: #{unet_forward.18} parent=0 // pred_check
    _
  $region27: #{unet_forward.18} parent=0 // pred_check_branch
    %606 = sbr.rel (0) target = $region29
  $region28: #{unet_forward.18} parent=0 // pred_region
    _
  $region29: #{unet_forward.18} parent=0 // pred_fallthru
    _
  // Predicated region
  $region30: #{unet_forward.18} parent=0 // pred_check
    _
  $region31: #{unet_forward.18} parent=0 // pred_check_branch
    %608 = sbr.rel (0) target = $region33
  $region32: #{unet_forward.18} parent=0 // pred_region
    _
  $region33: #{unet_forward.18} parent=0 // pred_fallthru
    _

// kernel: unet_forward.19
$region0: #{unet_forward.19}
  #allocation0 [shape = 'u32[]', space=smem, size = 0x4, offset = 0x4, fixed_abs, tag = 'smem constant byte address 0x4 - core index']
  #allocation1 [shape = 'u32[72,128]{1,0:T(1,128)}', space=vmem, size = 0x9000, scoped, tag = 'internal scratch']
  %s0 = inlined_call_operand.vmem [shape: bf16[32,144], index: 0, kind: input, shape index: {}]
  %s1 = inlined_call_operand.vmem [shape: bf16[144,128], index: 1, kind: input, shape index: {}]
  %s2 = inlined_call_operand.vmem [shape: f32[1,128], index: 2, kind: input, shape index: {}]
  %s3 = inlined_call_operand.vmem [shape: f32[1,128], index: 3, kind: input, shape index: {}]
  %s4 = inlined_call_operand.vmem [shape: f32[1,128], index: 4, kind: input, shape index: {}]
  %s5 = inlined_call_operand.vmem [shape: bf16[32,128], index: 5, kind: output, shape index: {}]
  %s6 = sld [smem:[#allocation0]]
  $region30: #{unet_forward.19} parent=0
    _
  %s8 = ssub.s32 1, %s6
  %s9 = scalar_select 0, %s8, %s6
  // Predicated region
  $region2: #{unet_forward.19} parent=0 // pred_check
    _
  $region3: #{unet_forward.19} parent=0 // pred_check_branch
    %11 = sbr.rel (0) target = $region5
  $region4: #{unet_forward.19} parent=0 // pred_region
    _
  $region5: #{unet_forward.19} parent=0 // pred_fallthru
    _
  // Predicated region
  $region6: #{unet_forward.19} parent=0 // pred_check
    _
  $region7: #{unet_forward.19} parent=0 // pred_check_branch
    %13 = sbr.rel (0) target = $region9
  $region8: #{unet_forward.19} parent=0 // pred_region
    _
  $region9: #{unet_forward.19} parent=0 // pred_fallthru
    _
  // Predicated region
  $region10: #{unet_forward.19} parent=0 // pred_check
    _
  $region11: #{unet_forward.19} parent=0 // pred_check_branch
    %15 = sbr.rel (0) target = $region13
  $region12: #{unet_forward.19} parent=0 // pred_region
    _
  $region13: #{unet_forward.19} parent=0 // pred_fallthru
    _
  // Predicated region
  $region14: #{unet_forward.19} parent=0 // pred_check
    _
  $region15: #{unet_forward.19} parent=0 // pred_check_branch
    %17 = sbr.rel (0) target = $region17
  $region16: #{unet_forward.19} parent=0 // pred_region
    _
  $region17: #{unet_forward.19} parent=0 // pred_fallthru
    _
  // Predicated region
  $region18: #{unet_forward.19} parent=0 // pred_check
    _
  $region19: #{unet_forward.19} parent=0 // pred_check_branch
    %19 = sbr.rel (0) target = $region21
  $region20: #{unet_forward.19} parent=0 // pred_region
    _
  $region21: #{unet_forward.19} parent=0 // pred_fallthru
    _
  %v21 = vld [vmem:[%s0] sm:$0xff]
  %v22 = vld [vmem:[%s0 + $0x8] sm:$0xff]
  %v23 = vld [vmem:[%s0 + $0x10] sm:$0xff]
  %v24 = vld [vmem:[%s0 + $0x18] sm:$0xff]
  %v25 = vld [vmem:[%s1] sm:$0xf]
  %v26 = vld [vmem:[%s1 + $0x4] sm:$0xf]
  %v27 = vld [vmem:[%s1 + $0x8] sm:$0xf]
  %v28 = vld [vmem:[%s1 + $0xc] sm:$0xf]
  %v29 = vld [vmem:[%s1 + $0x10] sm:$0xf]
  %v30 = vld [vmem:[%s1 + $0x14] sm:$0xf]
  %v31 = vld [vmem:[%s1 + $0x18] sm:$0xf]
  %v32 = vld [vmem:[%s1 + $0x1c] sm:$0xf]
  %v33 = vld [vmem:[%s1 + $0x20] sm:$0xf]
  %v34 = vld [vmem:[%s1 + $0x24] sm:$0xf]
  %v35 = vld [vmem:[%s1 + $0x28] sm:$0xf]
  %v36 = vld [vmem:[%s1 + $0x2c] sm:$0xf]
  %v37 = vld [vmem:[%s1 + $0x30] sm:$0xf]
  %v38 = vld [vmem:[%s1 + $0x34] sm:$0xf]
  %v39 = vld [vmem:[%s1 + $0x38] sm:$0xf]
  %v40 = vld [vmem:[%s1 + $0x3c] sm:$0xf]
  %v41 = vld [vmem:[%s1 + $0x40] sm:$0xf]
  %v42 = vld [vmem:[%s1 + $0x44] sm:$0xf]
  %v47 = vunpack.c.l.b16 %v21
  %v48 = vunpack.c.h.b16 %v21
  %v49 = vunpack.c.l.b16 %v22
  %v50 = vunpack.c.h.b16 %v22
  %v51 = vunpack.c.l.b16 %v23
  %v52 = vunpack.c.h.b16 %v23
  %v53 = vunpack.c.l.b16 %v24
  %v54 = vunpack.c.h.b16 %v24
  %v55 = vpack.c.b16 %v49, %v47
  %v56 = vpack.c.b16 %v50, %v48
  %v57 = vpack.c.b16 %v53, %v51
  %v58 = vpack.c.b16 %v54, %v52
  %v79 = vunpack.c.l.b16 %v25
  %v80 = vunpack.c.l.b16 %v26
  %v81 = vunpack.c.l.b16 %v27
  %v82 = vunpack.c.l.b16 %v28
  %v83 = vunpack.c.l.b16 %v29
  %v84 = vunpack.c.l.b16 %v30
  %v85 = vunpack.c.l.b16 %v31
  %v86 = vunpack.c.l.b16 %v32
  %v87 = vunpack.c.l.b16 %v33
  %v88 = vunpack.c.l.b16 %v34
  %v89 = vunpack.c.l.b16 %v35
  %v90 = vunpack.c.l.b16 %v36
  %v91 = vunpack.c.l.b16 %v37
  %v92 = vunpack.c.l.b16 %v38
  %v93 = vunpack.c.l.b16 %v39
  %v94 = vunpack.c.l.b16 %v40
  %v95 = vunpack.c.l.b16 %v41
  %v96 = vunpack.c.l.b16 %v42
  %v97 = vpack.c.b16 %v80, %v79
  %v98 = vpack.c.b16 %v82, %v81
  %v99 = vpack.c.b16 %v84, %v83
  %v100 = vpack.c.b16 %v86, %v85
  %v101 = vpack.c.b16 %v88, %v87
  %v102 = vpack.c.b16 %v90, %v89
  %v103 = vpack.c.b16 %v92, %v91
  %v104 = vpack.c.b16 %v94, %v93
  %v105 = vpack.c.b16 %v96, %v95
  %vm115 = vcmask 130048
  %v117 = vsel %vm115, %v56, 0
  %v120 = vsel %vm115, %v58, 0
  %122 = vmatpush.bf16.msra.mxu0 %v104
  %123 = vmatpush.bf16.msra.mxu0 %v103
  %124 = vmatpush.bf16.msra.mxu0 %v102
  %125 = vmatpush.bf16.msra.mxu0 %v101
  %126 = vmatpush.bf16.msra.mxu0 %v100
  %127 = vmatpush.bf16.msra.mxu0 %v99
  %128 = vmatpush.bf16.msra.mxu0 %v98
  %129 = vmatpush.bf16.msra.mxu0 %v97
  %130 = vmatmul.bf16.gmra.mxu0 %v55
  %v131 = vpop.f32.mrf.mxu0
  %v132 = vadd.f32 0.0, %v131
  %v133 = vpop.f32.mrf.mxu0
  %v134 = vadd.f32 0.0, %v133
  %135 = vmatmul.bf16.gmra.mxu0 %v57
  %v136 = vpop.f32.mrf.mxu0
  %v137 = vadd.f32 0.0, %v136
  %v138 = vpop.f32.mrf.mxu0
  %v139 = vadd.f32 0.0, %v138
  %140 = vdwg.mxu0
  %141 = vmatpush.bf16.msra.mxu0 0
  %142 = vmatpush.bf16.msra.mxu0 0
  %143 = vmatpush.bf16.msra.mxu0 0
  %144 = vmatpush.bf16.msra.mxu0 0
  %145 = vmatpush.bf16.msra.mxu0 0
  %146 = vmatpush.bf16.msra.mxu0 0
  %147 = vmatpush.bf16.msra.mxu0 0
  %148 = vmatpush.bf16.msra.mxu0 %v105
  %149 = vmatmul.bf16.gmra.mxu0 %v117
  %v150 = vpop.f32.mrf.mxu0
  %v151 = vadd.f32 %v132, %v150
  %v152 = vpop.f32.mrf.mxu0
  %v153 = vadd.f32 %v134, %v152
  %154 = vmatmul.bf16.gmra.mxu0 %v120
  %v155 = vpop.f32.mrf.mxu0
  %v156 = vadd.f32 %v137, %v155
  %v157 = vpop.f32.mrf.mxu0
  %v158 = vadd.f32 %v139, %v157
  %159 = vdwg.mxu0
  %v160 = vadd.f32 %v151, %v153
  %v161 = vadd.f32 %v160, %v156
  %v162 = vadd.f32 %v161, %v158
  %v163 = vrot.slane %v162, 4
  %v164 = vadd.f32 %v162, %v163
  %v165 = vrot.slane %v164, 2
  %v166 = vadd.f32 %v164, %v165
  %v167 = vrot.slane %v166, 1
  %v168 = vadd.f32 %v166, %v167
  %v169 = vmul.f32 %v168, 0.03125
  %v170 = vlaneseq
  %v171 = vshrl.u32 %v170, 7
  %v172 = vadd.s32 %v171, 8
  %v173 = vadd.s32 %v171, 16
  %v174 = vadd.s32 %v171, 24
  %vm175 = vcmp.lt.s32.totalorder %v171, 32
  %vm176 = vcmp.lt.s32.totalorder %v172, 32
  %vm177 = vcmp.lt.s32.totalorder %v173, 32
  %vm178 = vcmp.lt.s32.totalorder %v174, 32
  %v179 = vsub.f32 %v151, %v169
  %v180 = vsub.f32 %v153, %v169
  %v181 = vsub.f32 %v156, %v169
  %v182 = vsub.f32 %v158, %v169
  %v183 = vsel %vm175, %v179, 0.0
  %v184 = vsel %vm176, %v180, 0.0
  %v185 = vsel %vm177, %v181, 0.0
  %v186 = vsel %vm178, %v182, 0.0
  %v187 = vmul.f32 %v183, %v183
  %v188 = vmul.f32 %v184, %v184
  %v189 = vmul.f32 %v185, %v185
  %v190 = vmul.f32 %v186, %v186
  %v191 = vadd.f32 %v187, %v188
  %v192 = vadd.f32 %v191, %v189
  %v193 = vadd.f32 %v192, %v190
  %v194 = vrot.slane %v193, 4
  %v195 = vadd.f32 %v193, %v194
  %v196 = vrot.slane %v195, 2
  %v197 = vadd.f32 %v195, %v196
  %v198 = vrot.slane %v197, 1
  %v199 = vadd.f32 %v197, %v198
  %v200 = vmul.f32 %v199, 0.03125
  %v201 = vadd.f32 %v200, 1e-05
  %v202 = vrsqrt.pop %v201
  %v203 = vmul.f32 %v202, %v201
  %v204 = vmul.f32 %v203, %v202
  %v205 = vmul.f32 0.5, %v204
  %v206 = vsub.f32 1.5, %v205
  %v207 = vmul.f32 %v202, %v206
  %vm208 = vweird.f32 %v201
  %vm209 = vweird.f32 %v202
  %vm210 = vmor %vm208, %vm209
  %v211 = vsel %vm210, %v202, %v207
  %v212 = vld [vmem:[%s4] sm:$0x1]
  %v213 = vld [vmem:[%s2] sm:$0x1]
  %vm214 = vcmp.gt.f32.partialorder %v212, 0.0
  %v215 = vsel %vm214, %v211, 1.0
  %v216 = vmul.f32 %v213, %v215
  %v217 = vld [vmem:[%s3] sm:$0x1]
  %v218 = vsel %vm214, %v169, 0.0
  %v219 = vmul.f32 %v218, %v216
  %v220 = vsub.f32 %v217, %v219
  %v222 = vperm.slane %v216, 0
  %v224 = vmul.f32 %v151, %v222
  %v225 = vmul.f32 %v153, %v222
  %v226 = vmul.f32 %v156, %v222
  %v227 = vmul.f32 %v158, %v222
  %v229 = vperm.slane %v220, 0
  %v231 = vadd.f32 %v224, %v229
  %v232 = vadd.f32 %v225, %v229
  %v233 = vadd.f32 %v226, %v229
  %v234 = vadd.f32 %v227, %v229
  %v235 = vmax.f32 %v231, 0.0
  %v236 = vmax.f32 %v232, 0.0
  %v237 = vmax.f32 %v233, 0.0
  %v238 = vmax.f32 %v234, 0.0
  %v239 = vsel %vm214, 1, 0
  %v240 = vperm.slane %v239, 0
  %vm241 = vcmp.eq.s32.totalorder %v240, 1
  %v242 = vsel %vm241, %v235, %v231
  %v243 = vsel %vm241, %v236, %v232
  %v244 = vsel %vm241, %v237, %v233
  %v245 = vsel %vm241, %v238, %v234
  %v246 = vpack.c.bf16 %v242, %v242
  %v247 = vpack.c.bf16 %v243, %v243
  %v248 = vpack.c.bf16 %v244, %v244
  %v249 = vpack.c.bf16 %v245, %v245
  %250 = vst [vmem:[%s5] sm:$0xf] %v246
  %251 = vst [vmem:[%s5 + $0x4] sm:$0xf] %v247
  %252 = vst [vmem:[%s5 + $0x8] sm:$0xf] %v248
  %253 = vst [vmem:[%s5 + $0xc] sm:$0xf] %v249
  // Predicated region
  $region22: #{unet_forward.19} parent=0 // pred_check
    _
  $region23: #{unet_forward.19} parent=0 // pred_check_branch
    %255 = sbr.rel (0) target = $region25
  $region24: #{unet_forward.19} parent=0 // pred_region
    _
  $region25: #{unet_forward.19} parent=0 // pred_fallthru
    _
  // Predicated region
  $region26: #{unet_forward.19} parent=0 // pred_check
    _
  $region27: #{unet_forward.19} parent=0 // pred_check_branch
    %257 = sbr.rel (0) target = $region29
  $region28: #{unet_forward.19} parent=0 // pred_region
    _
  $region29: #{unet_forward.19} parent=0 // pred_fallthru
    _

// kernel: unet_forward.20
$region0: #{unet_forward.20}
  #allocation0 [shape = 'u32[]', space=smem, size = 0x4, offset = 0x4, fixed_abs, tag = 'smem constant byte address 0x4 - core index']
  #allocation1 [shape = 'u32[72,128]{1,0:T(1,128)}', space=vmem, size = 0x9000, scoped, tag = 'internal scratch']
  %s0 = inlined_call_operand.vmem [shape: bf16[32,288], index: 0, kind: input, shape index: {}]
  %s1 = inlined_call_operand.vmem [shape: bf16[288,128], index: 1, kind: input, shape index: {}]
  %s2 = inlined_call_operand.vmem [shape: f32[1,128], index: 2, kind: input, shape index: {}]
  %s3 = inlined_call_operand.vmem [shape: f32[1,128], index: 3, kind: input, shape index: {}]
  %s4 = inlined_call_operand.vmem [shape: f32[1,128], index: 4, kind: input, shape index: {}]
  %s5 = inlined_call_operand.vmem [shape: bf16[32,128], index: 5, kind: output, shape index: {}]
  %s6 = sld [smem:[#allocation0]]
  $region30: #{unet_forward.20} parent=0
    _
  %s8 = ssub.s32 1, %s6
  %s9 = scalar_select 0, %s8, %s6
  // Predicated region
  $region2: #{unet_forward.20} parent=0 // pred_check
    _
  $region3: #{unet_forward.20} parent=0 // pred_check_branch
    %11 = sbr.rel (0) target = $region5
  $region4: #{unet_forward.20} parent=0 // pred_region
    _
  $region5: #{unet_forward.20} parent=0 // pred_fallthru
    _
  // Predicated region
  $region6: #{unet_forward.20} parent=0 // pred_check
    _
  $region7: #{unet_forward.20} parent=0 // pred_check_branch
    %13 = sbr.rel (0) target = $region9
  $region8: #{unet_forward.20} parent=0 // pred_region
    _
  $region9: #{unet_forward.20} parent=0 // pred_fallthru
    _
  // Predicated region
  $region10: #{unet_forward.20} parent=0 // pred_check
    _
  $region11: #{unet_forward.20} parent=0 // pred_check_branch
    %15 = sbr.rel (0) target = $region13
  $region12: #{unet_forward.20} parent=0 // pred_region
    _
  $region13: #{unet_forward.20} parent=0 // pred_fallthru
    _
  // Predicated region
  $region14: #{unet_forward.20} parent=0 // pred_check
    _
  $region15: #{unet_forward.20} parent=0 // pred_check_branch
    %17 = sbr.rel (0) target = $region17
  $region16: #{unet_forward.20} parent=0 // pred_region
    _
  $region17: #{unet_forward.20} parent=0 // pred_fallthru
    _
  // Predicated region
  $region18: #{unet_forward.20} parent=0 // pred_check
    _
  $region19: #{unet_forward.20} parent=0 // pred_check_branch
    %19 = sbr.rel (0) target = $region21
  $region20: #{unet_forward.20} parent=0 // pred_region
    _
  $region21: #{unet_forward.20} parent=0 // pred_fallthru
    _
  %v21 = vld [vmem:[%s0] sm:$0xff]
  %v22 = vld [vmem:[%s0 + $0x8] sm:$0xf]
  %v23 = vld [vmem:[%s0 + $0xc] sm:$0xff]
  %v24 = vld [vmem:[%s0 + $0x14] sm:$0xf]
  %v25 = vld [vmem:[%s0 + $0x18] sm:$0xff]
  %v26 = vld [vmem:[%s0 + $0x20] sm:$0xf]
  %v27 = vld [vmem:[%s0 + $0x24] sm:$0xff]
  %v28 = vld [vmem:[%s0 + $0x2c] sm:$0xf]
  %v29 = vld [vmem:[%s1] sm:$0xf]
  %v30 = vld [vmem:[%s1 + $0x4] sm:$0xf]
  %v31 = vld [vmem:[%s1 + $0x8] sm:$0xf]
  %v32 = vld [vmem:[%s1 + $0xc] sm:$0xf]
  %v33 = vld [vmem:[%s1 + $0x10] sm:$0xf]
  %v34 = vld [vmem:[%s1 + $0x14] sm:$0xf]
  %v35 = vld [vmem:[%s1 + $0x18] sm:$0xf]
  %v36 = vld [vmem:[%s1 + $0x1c] sm:$0xf]
  %v37 = vld [vmem:[%s1 + $0x20] sm:$0xf]
  %v38 = vld [vmem:[%s1 + $0x24] sm:$0xf]
  %v39 = vld [vmem:[%s1 + $0x28] sm:$0xf]
  %v40 = vld [vmem:[%s1 + $0x2c] sm:$0xf]
  %v41 = vld [vmem:[%s1 + $0x30] sm:$0xf]
  %v42 = vld [vmem:[%s1 + $0x34] sm:$0xf]
  %v43 = vld [vmem:[%s1 + $0x38] sm:$0xf]
  %v44 = vld [vmem:[%s1 + $0x3c] sm:$0xf]
  %v45 = vld [vmem:[%s1 + $0x40] sm:$0xf]
  %v46 = vld [vmem:[%s1 + $0x44] sm:$0xf]
  %v47 = vld [vmem:[%s1 + $0x48] sm:$0xf]
  %v48 = vld [vmem:[%s1 + $0x4c] sm:$0xf]
  %v49 = vld [vmem:[%s1 + $0x50] sm:$0xf]
  %v50 = vld [vmem:[%s1 + $0x54] sm:$0xf]
  %v51 = vld [vmem:[%s1 + $0x58] sm:$0xf]
  %v52 = vld [vmem:[%s1 + $0x5c] sm:$0xf]
  %v53 = vld [vmem:[%s1 + $0x60] sm:$0xf]
  %v54 = vld [vmem:[%s1 + $0x64] sm:$0xf]
  %v55 = vld [vmem:[%s1 + $0x68] sm:$0xf]
  %v56 = vld [vmem:[%s1 + $0x6c] sm:$0xf]
  %v57 = vld [vmem:[%s1 + $0x70] sm:$0xf]
  %v58 = vld [vmem:[%s1 + $0x74] sm:$0xf]
  %v59 = vld [vmem:[%s1 + $0x78] sm:$0xf]
  %v60 = vld [vmem:[%s1 + $0x7c] sm:$0xf]
  %v61 = vld [vmem:[%s1 + $0x80] sm:$0xf]
  %v62 = vld [vmem:[%s1 + $0x84] sm:$0xf]
  %v63 = vld [vmem:[%s1 + $0x88] sm:$0xf]
  %v64 = vld [vmem:[%s1 + $0x8c] sm:$0xf]
  %v73 = vunpack.c.l.b16 %v21
  %v74 = vunpack.c.h.b16 %v21
  %v75 = vunpack.c.l.b16 %v22
  %v76 = vunpack.c.l.b16 %v23
  %v77 = vunpack.c.h.b16 %v23
  %v78 = vunpack.c.l.b16 %v24
  %v79 = vunpack.c.l.b16 %v25
  %v80 = vunpack.c.h.b16 %v25
  %v81 = vunpack.c.l.b16 %v26
  %v82 = vunpack.c.l.b16 %v27
  %v83 = vunpack.c.h.b16 %v27
  %v84 = vunpack.c.l.b16 %v28
  %v85 = vpack.c.b16 %v76, %v73
  %v86 = vpack.c.b16 %v77, %v74
  %v87 = vpack.c.b16 %v78, %v75
  %v88 = vpack.c.b16 %v82, %v79
  %v89 = vpack.c.b16 %v83, %v80
  %v90 = vpack.c.b16 %v84, %v81
  %v131 = vunpack.c.l.b16 %v29
  %v132 = vunpack.c.l.b16 %v30
  %v133 = vunpack.c.l.b16 %v31
  %v134 = vunpack.c.l.b16 %v32
  %v135 = vunpack.c.l.b16 %v33
  %v136 = vunpack.c.l.b16 %v34
  %v137 = vunpack.c.l.b16 %v35
  %v138 = vunpack.c.l.b16 %v36
  %v139 = vunpack.c.l.b16 %v37
  %v140 = vunpack.c.l.b16 %v38
  %v141 = vunpack.c.l.b16 %v39
  %v142 = vunpack.c.l.b16 %v40
  %v143 = vunpack.c.l.b16 %v41
  %v144 = vunpack.c.l.b16 %v42
  %v145 = vunpack.c.l.b16 %v43
  %v146 = vunpack.c.l.b16 %v44
  %v147 = vunpack.c.l.b16 %v45
  %v148 = vunpack.c.l.b16 %v46
  %v149 = vunpack.c.l.b16 %v47
  %v150 = vunpack.c.l.b16 %v48
  %v151 = vunpack.c.l.b16 %v49
  %v152 = vunpack.c.l.b16 %v50
  %v153 = vunpack.c.l.b16 %v51
  %v154 = vunpack.c.l.b16 %v52
  %v155 = vunpack.c.l.b16 %v53
  %v156 = vunpack.c.l.b16 %v54
  %v157 = vunpack.c.l.b16 %v55
  %v158 = vunpack.c.l.b16 %v56
  %v159 = vunpack.c.l.b16 %v57
  %v160 = vunpack.c.l.b16 %v58
  %v161 = vunpack.c.l.b16 %v59
  %v162 = vunpack.c.l.b16 %v60
  %v163 = vunpack.c.l.b16 %v61
  %v164 = vunpack.c.l.b16 %v62
  %v165 = vunpack.c.l.b16 %v63
  %v166 = vunpack.c.l.b16 %v64
  %v167 = vpack.c.b16 %v132, %v131
  %v168 = vpack.c.b16 %v134, %v133
  %v169 = vpack.c.b16 %v136, %v135
  %v170 = vpack.c.b16 %v138, %v137
  %v171 = vpack.c.b16 %v140, %v139
  %v172 = vpack.c.b16 %v142, %v141
  %v173 = vpack.c.b16 %v144, %v143
  %v174 = vpack.c.b16 %v146, %v145
  %v175 = vpack.c.b16 %v148, %v147
  %v176 = vpack.c.b16 %v150, %v149
  %v177 = vpack.c.b16 %v152, %v151
  %v178 = vpack.c.b16 %v154, %v153
  %v179 = vpack.c.b16 %v156, %v155
  %v180 = vpack.c.b16 %v158, %v157
  %v181 = vpack.c.b16 %v160, %v159
  %v182 = vpack.c.b16 %v162, %v161
  %v183 = vpack.c.b16 %v164, %v163
  %v184 = vpack.c.b16 %v166, %v165
  %vm203 = vcmask 261120
  %v205 = vsel %vm203, %v87, 0
  %v208 = vsel %vm203, %v90, 0
  %210 = vmatpush.bf16.msra.mxu0 %v174
  %211 = vmatpush.bf16.msra.mxu0 %v173
  %212 = vmatpush.bf16.msra.mxu0 %v172
  %213 = vmatpush.bf16.msra.mxu0 %v171
  %214 = vmatpush.bf16.msra.mxu0 %v170
  %215 = vmatpush.bf16.msra.mxu0 %v169
  %216 = vmatpush.bf16.msra.mxu0 %v168
  %217 = vmatpush.bf16.msra.mxu0 %v167
  %218 = vmatmul.bf16.gmra.mxu0 %v85
  %v219 = vpop.f32.mrf.mxu0
  %v220 = vadd.f32 0.0, %v219
  %v221 = vpop.f32.mrf.mxu0
  %v222 = vadd.f32 0.0, %v221
  %223 = vmatmul.bf16.gmra.mxu0 %v88
  %v224 = vpop.f32.mrf.mxu0
  %v225 = vadd.f32 0.0, %v224
  %v226 = vpop.f32.mrf.mxu0
  %v227 = vadd.f32 0.0, %v226
  %228 = vdwg.mxu0
  %229 = vmatpush.bf16.msra.mxu0 %v182
  %230 = vmatpush.bf16.msra.mxu0 %v181
  %231 = vmatpush.bf16.msra.mxu0 %v180
  %232 = vmatpush.bf16.msra.mxu0 %v179
  %233 = vmatpush.bf16.msra.mxu0 %v178
  %234 = vmatpush.bf16.msra.mxu0 %v177
  %235 = vmatpush.bf16.msra.mxu0 %v176
  %236 = vmatpush.bf16.msra.mxu0 %v175
  %237 = vmatmul.bf16.gmra.mxu0 %v86
  %v238 = vpop.f32.mrf.mxu0
  %v239 = vadd.f32 %v220, %v238
  %v240 = vpop.f32.mrf.mxu0
  %v241 = vadd.f32 %v222, %v240
  %242 = vmatmul.bf16.gmra.mxu0 %v89
  %v243 = vpop.f32.mrf.mxu0
  %v244 = vadd.f32 %v225, %v243
  %v245 = vpop.f32.mrf.mxu0
  %v246 = vadd.f32 %v227, %v245
  %247 = vdwg.mxu0
  %248 = vmatpush.bf16.msra.mxu0 0
  %249 = vmatpush.bf16.msra.mxu0 0
  %250 = vmatpush.bf16.msra.mxu0 0
  %251 = vmatpush.bf16.msra.mxu0 0
  %252 = vmatpush.bf16.msra.mxu0 0
  %253 = vmatpush.bf16.msra.mxu0 0
  %254 = vmatpush.bf16.msra.mxu0 %v184
  %255 = vmatpush.bf16.msra.mxu0 %v183
  %256 = vmatmul.bf16.gmra.mxu0 %v205
  %v257 = vpop.f32.mrf.mxu0
  %v258 = vadd.f32 %v239, %v257
  %v259 = vpop.f32.mrf.mxu0
  %v260 = vadd.f32 %v241, %v259
  %261 = vmatmul.bf16.gmra.mxu0 %v208
  %v262 = vpop.f32.mrf.mxu0
  %v263 = vadd.f32 %v244, %v262
  %v264 = vpop.f32.mrf.mxu0
  %v265 = vadd.f32 %v246, %v264
  %266 = vdwg.mxu0
  %v267 = vadd.f32 %v258, %v260
  %v268 = vadd.f32 %v267, %v263
  %v269 = vadd.f32 %v268, %v265
  %v270 = vrot.slane %v269, 4
  %v271 = vadd.f32 %v269, %v270
  %v272 = vrot.slane %v271, 2
  %v273 = vadd.f32 %v271, %v272
  %v274 = vrot.slane %v273, 1
  %v275 = vadd.f32 %v273, %v274
  %v276 = vmul.f32 %v275, 0.03125
  %v277 = vlaneseq
  %v278 = vshrl.u32 %v277, 7
  %v279 = vadd.s32 %v278, 8
  %v280 = vadd.s32 %v278, 16
  %v281 = vadd.s32 %v278, 24
  %vm282 = vcmp.lt.s32.totalorder %v278, 32
  %vm283 = vcmp.lt.s32.totalorder %v279, 32
  %vm284 = vcmp.lt.s32.totalorder %v280, 32
  %vm285 = vcmp.lt.s32.totalorder %v281, 32
  %v286 = vsub.f32 %v258, %v276
  %v287 = vsub.f32 %v260, %v276
  %v288 = vsub.f32 %v263, %v276
  %v289 = vsub.f32 %v265, %v276
  %v290 = vsel %vm282, %v286, 0.0
  %v291 = vsel %vm283, %v287, 0.0
  %v292 = vsel %vm284, %v288, 0.0
  %v293 = vsel %vm285, %v289, 0.0
  %v294 = vmul.f32 %v290, %v290
  %v295 = vmul.f32 %v291, %v291
  %v296 = vmul.f32 %v292, %v292
  %v297 = vmul.f32 %v293, %v293
  %v298 = vadd.f32 %v294, %v295
  %v299 = vadd.f32 %v298, %v296
  %v300 = vadd.f32 %v299, %v297
  %v301 = vrot.slane %v300, 4
  %v302 = vadd.f32 %v300, %v301
  %v303 = vrot.slane %v302, 2
  %v304 = vadd.f32 %v302, %v303
  %v305 = vrot.slane %v304, 1
  %v306 = vadd.f32 %v304, %v305
  %v307 = vmul.f32 %v306, 0.03125
  %v308 = vadd.f32 %v307, 1e-05
  %v309 = vrsqrt.pop %v308
  %v310 = vmul.f32 %v309, %v308
  %v311 = vmul.f32 %v310, %v309
  %v312 = vmul.f32 0.5, %v311
  %v313 = vsub.f32 1.5, %v312
  %v314 = vmul.f32 %v309, %v313
  %vm315 = vweird.f32 %v308
  %vm316 = vweird.f32 %v309
  %vm317 = vmor %vm315, %vm316
  %v318 = vsel %vm317, %v309, %v314
  %v319 = vld [vmem:[%s4] sm:$0x1]
  %v320 = vld [vmem:[%s2] sm:$0x1]
  %vm321 = vcmp.gt.f32.partialorder %v319, 0.0
  %v322 = vsel %vm321, %v318, 1.0
  %v323 = vmul.f32 %v320, %v322
  %v324 = vld [vmem:[%s3] sm:$0x1]
  %v325 = vsel %vm321, %v276, 0.0
  %v326 = vmul.f32 %v325, %v323
  %v327 = vsub.f32 %v324, %v326
  %v329 = vperm.slane %v323, 0
  %v331 = vmul.f32 %v258, %v329
  %v332 = vmul.f32 %v260, %v329
  %v333 = vmul.f32 %v263, %v329
  %v334 = vmul.f32 %v265, %v329
  %v336 = vperm.slane %v327, 0
  %v338 = vadd.f32 %v331, %v336
  %v339 = vadd.f32 %v332, %v336
  %v340 = vadd.f32 %v333, %v336
  %v341 = vadd.f32 %v334, %v336
  %v342 = vmax.f32 %v338, 0.0
  %v343 = vmax.f32 %v339, 0.0
  %v344 = vmax.f32 %v340, 0.0
  %v345 = vmax.f32 %v341, 0.0
  %v346 = vsel %vm321, 1, 0
  %v347 = vperm.slane %v346, 0
  %vm348 = vcmp.eq.s32.totalorder %v347, 1
  %v349 = vsel %vm348, %v342, %v338
  %v350 = vsel %vm348, %v343, %v339
  %v351 = vsel %vm348, %v344, %v340
  %v352 = vsel %vm348, %v345, %v341
  %v353 = vpack.c.bf16 %v349, %v349
  %v354 = vpack.c.bf16 %v350, %v350
  %v355 = vpack.c.bf16 %v351, %v351
  %v356 = vpack.c.bf16 %v352, %v352
  %357 = vst [vmem:[%s5] sm:$0xf] %v353
  %358 = vst [vmem:[%s5 + $0x4] sm:$0xf] %v354
  %359 = vst [vmem:[%s5 + $0x8] sm:$0xf] %v355
  %360 = vst [vmem:[%s5 + $0xc] sm:$0xf] %v356
  // Predicated region
  $region22: #{unet_forward.20} parent=0 // pred_check
    _
  $region23: #{unet_forward.20} parent=0 // pred_check_branch
    %362 = sbr.rel (0) target = $region25
  $region24: #{unet_forward.20} parent=0 // pred_region
    _
  $region25: #{unet_forward.20} parent=0 // pred_fallthru
    _
  // Predicated region
  $region26: #{unet_forward.20} parent=0 // pred_check
    _
  $region27: #{unet_forward.20} parent=0 // pred_check_branch
    %364 = sbr.rel (0) target = $region29
  $region28: #{unet_forward.20} parent=0 // pred_region
    _
  $region29: #{unet_forward.20} parent=0 // pred_fallthru
    _

// kernel: unet_forward.21
$region0: #{unet_forward.21}
  #allocation0 [shape = 'u32[]', space=smem, size = 0x4, offset = 0x4, fixed_abs, tag = 'smem constant byte address 0x4 - core index']
  #allocation1 [shape = 'u32[72,128]{1,0:T(1,128)}', space=vmem, size = 0x9000, scoped, tag = 'internal scratch']
  %s0 = inlined_call_operand.vmem [shape: bf16[32,288], index: 0, kind: input, shape index: {}]
  %s1 = inlined_call_operand.vmem [shape: bf16[288,128], index: 1, kind: input, shape index: {}]
  %s2 = inlined_call_operand.vmem [shape: f32[1,128], index: 2, kind: input, shape index: {}]
  %s3 = inlined_call_operand.vmem [shape: f32[1,128], index: 3, kind: input, shape index: {}]
  %s4 = inlined_call_operand.vmem [shape: f32[1,128], index: 4, kind: input, shape index: {}]
  %s5 = inlined_call_operand.vmem [shape: bf16[32,128], index: 5, kind: input, shape index: {}]
  %s6 = inlined_call_operand.vmem [shape: bf16[32,128], index: 6, kind: output, shape index: {}]
  %s7 = sld [smem:[#allocation0]]
  $region34: #{unet_forward.21} parent=0
    _
  %s9 = ssub.s32 1, %s7
  %s10 = scalar_select 0, %s9, %s7
  // Predicated region
  $region2: #{unet_forward.21} parent=0 // pred_check
    _
  $region3: #{unet_forward.21} parent=0 // pred_check_branch
    %12 = sbr.rel (0) target = $region5
  $region4: #{unet_forward.21} parent=0 // pred_region
    _
  $region5: #{unet_forward.21} parent=0 // pred_fallthru
    _
  // Predicated region
  $region6: #{unet_forward.21} parent=0 // pred_check
    _
  $region7: #{unet_forward.21} parent=0 // pred_check_branch
    %14 = sbr.rel (0) target = $region9
  $region8: #{unet_forward.21} parent=0 // pred_region
    _
  $region9: #{unet_forward.21} parent=0 // pred_fallthru
    _
  // Predicated region
  $region10: #{unet_forward.21} parent=0 // pred_check
    _
  $region11: #{unet_forward.21} parent=0 // pred_check_branch
    %16 = sbr.rel (0) target = $region13
  $region12: #{unet_forward.21} parent=0 // pred_region
    _
  $region13: #{unet_forward.21} parent=0 // pred_fallthru
    _
  // Predicated region
  $region14: #{unet_forward.21} parent=0 // pred_check
    _
  $region15: #{unet_forward.21} parent=0 // pred_check_branch
    %18 = sbr.rel (0) target = $region17
  $region16: #{unet_forward.21} parent=0 // pred_region
    _
  $region17: #{unet_forward.21} parent=0 // pred_fallthru
    _
  // Predicated region
  $region18: #{unet_forward.21} parent=0 // pred_check
    _
  $region19: #{unet_forward.21} parent=0 // pred_check_branch
    %20 = sbr.rel (0) target = $region21
  $region20: #{unet_forward.21} parent=0 // pred_region
    _
  $region21: #{unet_forward.21} parent=0 // pred_fallthru
    _
  // Predicated region
  $region22: #{unet_forward.21} parent=0 // pred_check
    _
  $region23: #{unet_forward.21} parent=0 // pred_check_branch
    %22 = sbr.rel (0) target = $region25
  $region24: #{unet_forward.21} parent=0 // pred_region
    _
  $region25: #{unet_forward.21} parent=0 // pred_fallthru
    _
  %v24 = vld [vmem:[%s0] sm:$0xff]
  %v25 = vld [vmem:[%s0 + $0x8] sm:$0xf]
  %v26 = vld [vmem:[%s0 + $0xc] sm:$0xff]
  %v27 = vld [vmem:[%s0 + $0x14] sm:$0xf]
  %v28 = vld [vmem:[%s0 + $0x18] sm:$0xff]
  %v29 = vld [vmem:[%s0 + $0x20] sm:$0xf]
  %v30 = vld [vmem:[%s0 + $0x24] sm:$0xff]
  %v31 = vld [vmem:[%s0 + $0x2c] sm:$0xf]
  %v32 = vld [vmem:[%s1] sm:$0xf]
  %v33 = vld [vmem:[%s1 + $0x4] sm:$0xf]
  %v34 = vld [vmem:[%s1 + $0x8] sm:$0xf]
  %v35 = vld [vmem:[%s1 + $0xc] sm:$0xf]
  %v36 = vld [vmem:[%s1 + $0x10] sm:$0xf]
  %v37 = vld [vmem:[%s1 + $0x14] sm:$0xf]
  %v38 = vld [vmem:[%s1 + $0x18] sm:$0xf]
  %v39 = vld [vmem:[%s1 + $0x1c] sm:$0xf]
  %v40 = vld [vmem:[%s1 + $0x20] sm:$0xf]
  %v41 = vld [vmem:[%s1 + $0x24] sm:$0xf]
  %v42 = vld [vmem:[%s1 + $0x28] sm:$0xf]
  %v43 = vld [vmem:[%s1 + $0x2c] sm:$0xf]
  %v44 = vld [vmem:[%s1 + $0x30] sm:$0xf]
  %v45 = vld [vmem:[%s1 + $0x34] sm:$0xf]
  %v46 = vld [vmem:[%s1 + $0x38] sm:$0xf]
  %v47 = vld [vmem:[%s1 + $0x3c] sm:$0xf]
  %v48 = vld [vmem:[%s1 + $0x40] sm:$0xf]
  %v49 = vld [vmem:[%s1 + $0x44] sm:$0xf]
  %v50 = vld [vmem:[%s1 + $0x48] sm:$0xf]
  %v51 = vld [vmem:[%s1 + $0x4c] sm:$0xf]
  %v52 = vld [vmem:[%s1 + $0x50] sm:$0xf]
  %v53 = vld [vmem:[%s1 + $0x54] sm:$0xf]
  %v54 = vld [vmem:[%s1 + $0x58] sm:$0xf]
  %v55 = vld [vmem:[%s1 + $0x5c] sm:$0xf]
  %v56 = vld [vmem:[%s1 + $0x60] sm:$0xf]
  %v57 = vld [vmem:[%s1 + $0x64] sm:$0xf]
  %v58 = vld [vmem:[%s1 + $0x68] sm:$0xf]
  %v59 = vld [vmem:[%s1 + $0x6c] sm:$0xf]
  %v60 = vld [vmem:[%s1 + $0x70] sm:$0xf]
  %v61 = vld [vmem:[%s1 + $0x74] sm:$0xf]
  %v62 = vld [vmem:[%s1 + $0x78] sm:$0xf]
  %v63 = vld [vmem:[%s1 + $0x7c] sm:$0xf]
  %v64 = vld [vmem:[%s1 + $0x80] sm:$0xf]
  %v65 = vld [vmem:[%s1 + $0x84] sm:$0xf]
  %v66 = vld [vmem:[%s1 + $0x88] sm:$0xf]
  %v67 = vld [vmem:[%s1 + $0x8c] sm:$0xf]
  %v76 = vunpack.c.l.b16 %v24
  %v77 = vunpack.c.h.b16 %v24
  %v78 = vunpack.c.l.b16 %v25
  %v79 = vunpack.c.l.b16 %v26
  %v80 = vunpack.c.h.b16 %v26
  %v81 = vunpack.c.l.b16 %v27
  %v82 = vunpack.c.l.b16 %v28
  %v83 = vunpack.c.h.b16 %v28
  %v84 = vunpack.c.l.b16 %v29
  %v85 = vunpack.c.l.b16 %v30
  %v86 = vunpack.c.h.b16 %v30
  %v87 = vunpack.c.l.b16 %v31
  %v88 = vpack.c.b16 %v79, %v76
  %v89 = vpack.c.b16 %v80, %v77
  %v90 = vpack.c.b16 %v81, %v78
  %v91 = vpack.c.b16 %v85, %v82
  %v92 = vpack.c.b16 %v86, %v83
  %v93 = vpack.c.b16 %v87, %v84
  %v134 = vunpack.c.l.b16 %v32
  %v135 = vunpack.c.l.b16 %v33
  %v136 = vunpack.c.l.b16 %v34
  %v137 = vunpack.c.l.b16 %v35
  %v138 = vunpack.c.l.b16 %v36
  %v139 = vunpack.c.l.b16 %v37
  %v140 = vunpack.c.l.b16 %v38
  %v141 = vunpack.c.l.b16 %v39
  %v142 = vunpack.c.l.b16 %v40
  %v143 = vunpack.c.l.b16 %v41
  %v144 = vunpack.c.l.b16 %v42
  %v145 = vunpack.c.l.b16 %v43
  %v146 = vunpack.c.l.b16 %v44
  %v147 = vunpack.c.l.b16 %v45
  %v148 = vunpack.c.l.b16 %v46
  %v149 = vunpack.c.l.b16 %v47
  %v150 = vunpack.c.l.b16 %v48
  %v151 = vunpack.c.l.b16 %v49
  %v152 = vunpack.c.l.b16 %v50
  %v153 = vunpack.c.l.b16 %v51
  %v154 = vunpack.c.l.b16 %v52
  %v155 = vunpack.c.l.b16 %v53
  %v156 = vunpack.c.l.b16 %v54
  %v157 = vunpack.c.l.b16 %v55
  %v158 = vunpack.c.l.b16 %v56
  %v159 = vunpack.c.l.b16 %v57
  %v160 = vunpack.c.l.b16 %v58
  %v161 = vunpack.c.l.b16 %v59
  %v162 = vunpack.c.l.b16 %v60
  %v163 = vunpack.c.l.b16 %v61
  %v164 = vunpack.c.l.b16 %v62
  %v165 = vunpack.c.l.b16 %v63
  %v166 = vunpack.c.l.b16 %v64
  %v167 = vunpack.c.l.b16 %v65
  %v168 = vunpack.c.l.b16 %v66
  %v169 = vunpack.c.l.b16 %v67
  %v170 = vpack.c.b16 %v135, %v134
  %v171 = vpack.c.b16 %v137, %v136
  %v172 = vpack.c.b16 %v139, %v138
  %v173 = vpack.c.b16 %v141, %v140
  %v174 = vpack.c.b16 %v143, %v142
  %v175 = vpack.c.b16 %v145, %v144
  %v176 = vpack.c.b16 %v147, %v146
  %v177 = vpack.c.b16 %v149, %v148
  %v178 = vpack.c.b16 %v151, %v150
  %v179 = vpack.c.b16 %v153, %v152
  %v180 = vpack.c.b16 %v155, %v154
  %v181 = vpack.c.b16 %v157, %v156
  %v182 = vpack.c.b16 %v159, %v158
  %v183 = vpack.c.b16 %v161, %v160
  %v184 = vpack.c.b16 %v163, %v162
  %v185 = vpack.c.b16 %v165, %v164
  %v186 = vpack.c.b16 %v167, %v166
  %v187 = vpack.c.b16 %v169, %v168
  %vm206 = vcmask 261120
  %v208 = vsel %vm206, %v90, 0
  %v211 = vsel %vm206, %v93, 0
  %213 = vmatpush.bf16.msra.mxu0 %v177
  %214 = vmatpush.bf16.msra.mxu0 %v176
  %215 = vmatpush.bf16.msra.mxu0 %v175
  %216 = vmatpush.bf16.msra.mxu0 %v174
  %217 = vmatpush.bf16.msra.mxu0 %v173
  %218 = vmatpush.bf16.msra.mxu0 %v172
  %219 = vmatpush.bf16.msra.mxu0 %v171
  %220 = vmatpush.bf16.msra.mxu0 %v170
  %221 = vmatmul.bf16.gmra.mxu0 %v88
  %v222 = vpop.f32.mrf.mxu0
  %v223 = vadd.f32 0.0, %v222
  %v224 = vpop.f32.mrf.mxu0
  %v225 = vadd.f32 0.0, %v224
  %226 = vmatmul.bf16.gmra.mxu0 %v91
  %v227 = vpop.f32.mrf.mxu0
  %v228 = vadd.f32 0.0, %v227
  %v229 = vpop.f32.mrf.mxu0
  %v230 = vadd.f32 0.0, %v229
  %231 = vdwg.mxu0
  %232 = vmatpush.bf16.msra.mxu0 %v185
  %233 = vmatpush.bf16.msra.mxu0 %v184
  %234 = vmatpush.bf16.msra.mxu0 %v183
  %235 = vmatpush.bf16.msra.mxu0 %v182
  %236 = vmatpush.bf16.msra.mxu0 %v181
  %237 = vmatpush.bf16.msra.mxu0 %v180
  %238 = vmatpush.bf16.msra.mxu0 %v179
  %239 = vmatpush.bf16.msra.mxu0 %v178
  %240 = vmatmul.bf16.gmra.mxu0 %v89
  %v241 = vpop.f32.mrf.mxu0
  %v242 = vadd.f32 %v223, %v241
  %v243 = vpop.f32.mrf.mxu0
  %v244 = vadd.f32 %v225, %v243
  %245 = vmatmul.bf16.gmra.mxu0 %v92
  %v246 = vpop.f32.mrf.mxu0
  %v247 = vadd.f32 %v228, %v246
  %v248 = vpop.f32.mrf.mxu0
  %v249 = vadd.f32 %v230, %v248
  %250 = vdwg.mxu0
  %251 = vmatpush.bf16.msra.mxu0 0
  %252 = vmatpush.bf16.msra.mxu0 0
  %253 = vmatpush.bf16.msra.mxu0 0
  %254 = vmatpush.bf16.msra.mxu0 0
  %255 = vmatpush.bf16.msra.mxu0 0
  %256 = vmatpush.bf16.msra.mxu0 0
  %257 = vmatpush.bf16.msra.mxu0 %v187
  %258 = vmatpush.bf16.msra.mxu0 %v186
  %259 = vmatmul.bf16.gmra.mxu0 %v208
  %v260 = vpop.f32.mrf.mxu0
  %v261 = vadd.f32 %v242, %v260
  %v262 = vpop.f32.mrf.mxu0
  %v263 = vadd.f32 %v244, %v262
  %264 = vmatmul.bf16.gmra.mxu0 %v211
  %v265 = vpop.f32.mrf.mxu0
  %v266 = vadd.f32 %v247, %v265
  %v267 = vpop.f32.mrf.mxu0
  %v268 = vadd.f32 %v249, %v267
  %269 = vdwg.mxu0
  %v270 = vadd.f32 %v261, %v263
  %v271 = vadd.f32 %v270, %v266
  %v272 = vadd.f32 %v271, %v268
  %v273 = vrot.slane %v272, 4
  %v274 = vadd.f32 %v272, %v273
  %v275 = vrot.slane %v274, 2
  %v276 = vadd.f32 %v274, %v275
  %v277 = vrot.slane %v276, 1
  %v278 = vadd.f32 %v276, %v277
  %v279 = vmul.f32 %v278, 0.03125
  %v280 = vlaneseq
  %v281 = vshrl.u32 %v280, 7
  %v282 = vadd.s32 %v281, 8
  %v283 = vadd.s32 %v281, 16
  %v284 = vadd.s32 %v281, 24
  %vm285 = vcmp.lt.s32.totalorder %v281, 32
  %vm286 = vcmp.lt.s32.totalorder %v282, 32
  %vm287 = vcmp.lt.s32.totalorder %v283, 32
  %vm288 = vcmp.lt.s32.totalorder %v284, 32
  %v289 = vsub.f32 %v261, %v279
  %v290 = vsub.f32 %v263, %v279
  %v291 = vsub.f32 %v266, %v279
  %v292 = vsub.f32 %v268, %v279
  %v293 = vsel %vm285, %v289, 0.0
  %v294 = vsel %vm286, %v290, 0.0
  %v295 = vsel %vm287, %v291, 0.0
  %v296 = vsel %vm288, %v292, 0.0
  %v297 = vmul.f32 %v293, %v293
  %v298 = vmul.f32 %v294, %v294
  %v299 = vmul.f32 %v295, %v295
  %v300 = vmul.f32 %v296, %v296
  %v301 = vadd.f32 %v297, %v298
  %v302 = vadd.f32 %v301, %v299
  %v303 = vadd.f32 %v302, %v300
  %v304 = vrot.slane %v303, 4
  %v305 = vadd.f32 %v303, %v304
  %v306 = vrot.slane %v305, 2
  %v307 = vadd.f32 %v305, %v306
  %v308 = vrot.slane %v307, 1
  %v309 = vadd.f32 %v307, %v308
  %v310 = vmul.f32 %v309, 0.03125
  %v311 = vadd.f32 %v310, 1e-05
  %v312 = vrsqrt.pop %v311
  %v313 = vmul.f32 %v312, %v311
  %v314 = vmul.f32 %v313, %v312
  %v315 = vmul.f32 0.5, %v314
  %v316 = vsub.f32 1.5, %v315
  %v317 = vmul.f32 %v312, %v316
  %vm318 = vweird.f32 %v311
  %vm319 = vweird.f32 %v312
  %vm320 = vmor %vm318, %vm319
  %v321 = vsel %vm320, %v312, %v317
  %v322 = vld [vmem:[%s4] sm:$0x1]
  %v323 = vld [vmem:[%s2] sm:$0x1]
  %vm324 = vcmp.gt.f32.partialorder %v322, 0.0
  %v325 = vsel %vm324, %v321, 1.0
  %v326 = vmul.f32 %v323, %v325
  %v327 = vld [vmem:[%s3] sm:$0x1]
  %v328 = vsel %vm324, %v279, 0.0
  %v329 = vmul.f32 %v328, %v326
  %v330 = vsub.f32 %v327, %v329
  %v332 = vperm.slane %v326, 0
  %v334 = vmul.f32 %v261, %v332
  %v335 = vmul.f32 %v263, %v332
  %v336 = vmul.f32 %v266, %v332
  %v337 = vmul.f32 %v268, %v332
  %v339 = vperm.slane %v330, 0
  %v341 = vadd.f32 %v334, %v339
  %v342 = vadd.f32 %v335, %v339
  %v343 = vadd.f32 %v336, %v339
  %v344 = vadd.f32 %v337, %v339
  %v345 = vld [vmem:[%s5] sm:$0xf]
  %v346 = vld [vmem:[%s5 + $0x4] sm:$0xf]
  %v347 = vld [vmem:[%s5 + $0x8] sm:$0xf]
  %v348 = vld [vmem:[%s5 + $0xc] sm:$0xf]
  %v349 = vunpack.c.l.bf16 %v345
  %v350 = vunpack.c.l.bf16 %v346
  %v351 = vunpack.c.l.bf16 %v347
  %v352 = vunpack.c.l.bf16 %v348
  %v353 = vadd.f32 %v341, %v349
  %v354 = vadd.f32 %v342, %v350
  %v355 = vadd.f32 %v343, %v351
  %v356 = vadd.f32 %v344, %v352
  %v357 = vmax.f32 %v353, 0.0
  %v358 = vmax.f32 %v354, 0.0
  %v359 = vmax.f32 %v355, 0.0
  %v360 = vmax.f32 %v356, 0.0
  %v361 = vsel %vm324, 1, 0
  %v362 = vperm.slane %v361, 0
  %vm363 = vcmp.eq.s32.totalorder %v362, 1
  %v364 = vsel %vm363, %v357, %v353
  %v365 = vsel %vm363, %v358, %v354
  %v366 = vsel %vm363, %v359, %v355
  %v367 = vsel %vm363, %v360, %v356
  %v368 = vpack.c.bf16 %v364, %v364
  %v369 = vpack.c.bf16 %v365, %v365
  %v370 = vpack.c.bf16 %v366, %v366
  %v371 = vpack.c.bf16 %v367, %v367
  %372 = vst [vmem:[%s6] sm:$0xf] %v368
  %373 = vst [vmem:[%s6 + $0x4] sm:$0xf] %v369
  %374 = vst [vmem:[%s6 + $0x8] sm:$0xf] %v370
  %375 = vst [vmem:[%s6 + $0xc] sm:$0xf] %v371
  // Predicated region
  $region26: #{unet_forward.21} parent=0 // pred_check
    _
  $region27: #{unet_forward.21} parent=0 // pred_check_branch
    %377 = sbr.rel (0) target = $region29
  $region28: #{unet_forward.21} parent=0 // pred_region
    _
  $region29: #{unet_forward.21} parent=0 // pred_fallthru
    _
  // Predicated region
  $region30: #{unet_forward.21} parent=0 // pred_check
    _
  $region31: #{unet_forward.21} parent=0 // pred_check_branch
    %379 = sbr.rel (0) target = $region33
  $region32: #{unet_forward.21} parent=0 // pred_region
    _
  $region33: #{unet_forward.21} parent=0 // pred_fallthru
    _

// kernel: unet_forward.22
$region0: #{unet_forward.22}
  #allocation0 [shape = 'u32[]', space=smem, size = 0x4, offset = 0x4, fixed_abs, tag = 'smem constant byte address 0x4 - core index']
  #allocation1 [shape = 'u32[72,128]{1,0:T(1,128)}', space=vmem, size = 0x9000, scoped, tag = 'internal scratch']
  %s0 = inlined_call_operand.vmem [shape: bf16[16,288], index: 0, kind: input, shape index: {}]
  %s1 = inlined_call_operand.vmem [shape: bf16[288,128], index: 1, kind: input, shape index: {}]
  %s2 = inlined_call_operand.vmem [shape: f32[1,128], index: 2, kind: input, shape index: {}]
  %s3 = inlined_call_operand.vmem [shape: f32[1,128], index: 3, kind: input, shape index: {}]
  %s4 = inlined_call_operand.vmem [shape: f32[1,128], index: 4, kind: input, shape index: {}]
  %s5 = inlined_call_operand.vmem [shape: bf16[16,128], index: 5, kind: output, shape index: {}]
  %s6 = sld [smem:[#allocation0]]
  $region30: #{unet_forward.22} parent=0
    _
  %s8 = ssub.s32 1, %s6
  %s9 = scalar_select 0, %s8, %s6
  // Predicated region
  $region2: #{unet_forward.22} parent=0 // pred_check
    _
  $region3: #{unet_forward.22} parent=0 // pred_check_branch
    %11 = sbr.rel (0) target = $region5
  $region4: #{unet_forward.22} parent=0 // pred_region
    _
  $region5: #{unet_forward.22} parent=0 // pred_fallthru
    _
  // Predicated region
  $region6: #{unet_forward.22} parent=0 // pred_check
    _
  $region7: #{unet_forward.22} parent=0 // pred_check_branch
    %13 = sbr.rel (0) target = $region9
  $region8: #{unet_forward.22} parent=0 // pred_region
    _
  $region9: #{unet_forward.22} parent=0 // pred_fallthru
    _
  // Predicated region
  $region10: #{unet_forward.22} parent=0 // pred_check
    _
  $region11: #{unet_forward.22} parent=0 // pred_check_branch
    %15 = sbr.rel (0) target = $region13
  $region12: #{unet_forward.22} parent=0 // pred_region
    _
  $region13: #{unet_forward.22} parent=0 // pred_fallthru
    _
  // Predicated region
  $region14: #{unet_forward.22} parent=0 // pred_check
    _
  $region15: #{unet_forward.22} parent=0 // pred_check_branch
    %17 = sbr.rel (0) target = $region17
  $region16: #{unet_forward.22} parent=0 // pred_region
    _
  $region17: #{unet_forward.22} parent=0 // pred_fallthru
    _
  // Predicated region
  $region18: #{unet_forward.22} parent=0 // pred_check
    _
  $region19: #{unet_forward.22} parent=0 // pred_check_branch
    %19 = sbr.rel (0) target = $region21
  $region20: #{unet_forward.22} parent=0 // pred_region
    _
  $region21: #{unet_forward.22} parent=0 // pred_fallthru
    _
  %v21 = vld [vmem:[%s0] sm:$0xff]
  %v22 = vld [vmem:[%s0 + $0x8] sm:$0xf]
  %v23 = vld [vmem:[%s0 + $0xc] sm:$0xff]
  %v24 = vld [vmem:[%s0 + $0x14] sm:$0xf]
  %v25 = vld [vmem:[%s1] sm:$0xf]
  %v26 = vld [vmem:[%s1 + $0x4] sm:$0xf]
  %v27 = vld [vmem:[%s1 + $0x8] sm:$0xf]
  %v28 = vld [vmem:[%s1 + $0xc] sm:$0xf]
  %v29 = vld [vmem:[%s1 + $0x10] sm:$0xf]
  %v30 = vld [vmem:[%s1 + $0x14] sm:$0xf]
  %v31 = vld [vmem:[%s1 + $0x18] sm:$0xf]
  %v32 = vld [vmem:[%s1 + $0x1c] sm:$0xf]
  %v33 = vld [vmem:[%s1 + $0x20] sm:$0xf]
  %v34 = vld [vmem:[%s1 + $0x24] sm:$0xf]
  %v35 = vld [vmem:[%s1 + $0x28] sm:$0xf]
  %v36 = vld [vmem:[%s1 + $0x2c] sm:$0xf]
  %v37 = vld [vmem:[%s1 + $0x30] sm:$0xf]
  %v38 = vld [vmem:[%s1 + $0x34] sm:$0xf]
  %v39 = vld [vmem:[%s1 + $0x38] sm:$0xf]
  %v40 = vld [vmem:[%s1 + $0x3c] sm:$0xf]
  %v41 = vld [vmem:[%s1 + $0x40] sm:$0xf]
  %v42 = vld [vmem:[%s1 + $0x44] sm:$0xf]
  %v43 = vld [vmem:[%s1 + $0x48] sm:$0xf]
  %v44 = vld [vmem:[%s1 + $0x4c] sm:$0xf]
  %v45 = vld [vmem:[%s1 + $0x50] sm:$0xf]
  %v46 = vld [vmem:[%s1 + $0x54] sm:$0xf]
  %v47 = vld [vmem:[%s1 + $0x58] sm:$0xf]
  %v48 = vld [vmem:[%s1 + $0x5c] sm:$0xf]
  %v49 = vld [vmem:[%s1 + $0x60] sm:$0xf]
  %v50 = vld [vmem:[%s1 + $0x64] sm:$0xf]
  %v51 = vld [vmem:[%s1 + $0x68] sm:$0xf]
  %v52 = vld [vmem:[%s1 + $0x6c] sm:$0xf]
  %v53 = vld [vmem:[%s1 + $0x70] sm:$0xf]
  %v54 = vld [vmem:[%s1 + $0x74] sm:$0xf]
  %v55 = vld [vmem:[%s1 + $0x78] sm:$0xf]
  %v56 = vld [vmem:[%s1 + $0x7c] sm:$0xf]
  %v57 = vld [vmem:[%s1 + $0x80] sm:$0xf]
  %v58 = vld [vmem:[%s1 + $0x84] sm:$0xf]
  %v59 = vld [vmem:[%s1 + $0x88] sm:$0xf]
  %v60 = vld [vmem:[%s1 + $0x8c] sm:$0xf]
  %v65 = vunpack.c.l.b16 %v21
  %v66 = vunpack.c.h.b16 %v21
  %v67 = vunpack.c.l.b16 %v22
  %v68 = vunpack.c.l.b16 %v23
  %v69 = vunpack.c.h.b16 %v23
  %v70 = vunpack.c.l.b16 %v24
  %v71 = vpack.c.b16 %v68, %v65
  %v72 = vpack.c.b16 %v69, %v66
  %v73 = vpack.c.b16 %v70, %v67
  %v112 = vunpack.c.l.b16 %v25
  %v113 = vunpack.c.l.b16 %v26
  %v114 = vunpack.c.l.b16 %v27
  %v115 = vunpack.c.l.b16 %v28
  %v116 = vunpack.c.l.b16 %v29
  %v117 = vunpack.c.l.b16 %v30
  %v118 = vunpack.c.l.b16 %v31
  %v119 = vunpack.c.l.b16 %v32
  %v120 = vunpack.c.l.b16 %v33
  %v121 = vunpack.c.l.b16 %v34
  %v122 = vunpack.c.l.b16 %v35
  %v123 = vunpack.c.l.b16 %v36
  %v124 = vunpack.c.l.b16 %v37
  %v125 = vunpack.c.l.b16 %v38
  %v126 = vunpack.c.l.b16 %v39
  %v127 = vunpack.c.l.b16 %v40
  %v128 = vunpack.c.l.b16 %v41
  %v129 = vunpack.c.l.b16 %v42
  %v130 = vunpack.c.l.b16 %v43
  %v131 = vunpack.c.l.b16 %v44
  %v132 = vunpack.c.l.b16 %v45
  %v133 = vunpack.c.l.b16 %v46
  %v134 = vunpack.c.l.b16 %v47
  %v135 = vunpack.c.l.b16 %v48
  %v136 = vunpack.c.l.b16 %v49
  %v137 = vunpack.c.l.b16 %v50
  %v138 = vunpack.c.l.b16 %v51
  %v139 = vunpack.c.l.b16 %v52
  %v140 = vunpack.c.l.b16 %v53
  %v141 = vunpack.c.l.b16 %v54
  %v142 = vunpack.c.l.b16 %v55
  %v143 = vunpack.c.l.b16 %v56
  %v144 = vunpack.c.l.b16 %v57
  %v145 = vunpack.c.l.b16 %v58
  %v146 = vunpack.c.l.b16 %v59
  %v147 = vunpack.c.l.b16 %v60
  %v148 = vpack.c.b16 %v113, %v112
  %v149 = vpack.c.b16 %v115, %v114
  %v150 = vpack.c.b16 %v117, %v116
  %v151 = vpack.c.b16 %v119, %v118
  %v152 = vpack.c.b16 %v121, %v120
  %v153 = vpack.c.b16 %v123, %v122
  %v154 = vpack.c.b16 %v125, %v124
  %v155 = vpack.c.b16 %v127, %v126
  %v156 = vpack.c.b16 %v129, %v128
  %v157 = vpack.c.b16 %v131, %v130
  %v158 = vpack.c.b16 %v133, %v132
  %v159 = vpack.c.b16 %v135, %v134
  %v160 = vpack.c.b16 %v137, %v136
  %v161 = vpack.c.b16 %v139, %v138
  %v162 = vpack.c.b16 %v141, %v140
  %v163 = vpack.c.b16 %v143, %v142
  %v164 = vpack.c.b16 %v145, %v144
  %v165 = vpack.c.b16 %v147, %v146
  %vm184 = vcmask 261120
  %v186 = vsel %vm184, %v73, 0
  %188 = vmatpush.bf16.msra.mxu0 %v155
  %189 = vmatpush.bf16.msra.mxu0 %v154
  %190 = vmatpush.bf16.msra.mxu0 %v153
  %191 = vmatpush.bf16.msra.mxu0 %v152
  %192 = vmatpush.bf16.msra.mxu0 %v151
  %193 = vmatpush.bf16.msra.mxu0 %v150
  %194 = vmatpush.bf16.msra.mxu0 %v149
  %195 = vmatpush.bf16.msra.mxu0 %v148
  %196 = vmatmul.bf16.gmra.mxu0 %v71
  %v197 = vpop.f32.mrf.mxu0
  %v198 = vadd.f32 0.0, %v197
  %v199 = vpop.f32.mrf.mxu0
  %v200 = vadd.f32 0.0, %v199
  %201 = vdwg.mxu0
  %202 = vmatpush.bf16.msra.mxu0 %v163
  %203 = vmatpush.bf16.msra.mxu0 %v162
  %204 = vmatpush.bf16.msra.mxu0 %v161
  %205 = vmatpush.bf16.msra.mxu0 %v160
  %206 = vmatpush.bf16.msra.mxu0 %v159
  %207 = vmatpush.bf16.msra.mxu0 %v158
  %208 = vmatpush.bf16.msra.mxu0 %v157
  %209 = vmatpush.bf16.msra.mxu0 %v156
  %210 = vmatmul.bf16.gmra.mxu0 %v72
  %v211 = vpop.f32.mrf.mxu0
  %v212 = vadd.f32 %v198, %v211
  %v213 = vpop.f32.mrf.mxu0
  %v214 = vadd.f32 %v200, %v213
  %215 = vdwg.mxu0
  %216 = vmatpush.bf16.msra.mxu0 0
  %217 = vmatpush.bf16.msra.mxu0 0
  %218 = vmatpush.bf16.msra.mxu0 0
  %219 = vmatpush.bf16.msra.mxu0 0
  %220 = vmatpush.bf16.msra.mxu0 0
  %221 = vmatpush.bf16.msra.mxu0 0
  %222 = vmatpush.bf16.msra.mxu0 %v165
  %223 = vmatpush.bf16.msra.mxu0 %v164
  %224 = vmatmul.bf16.gmra.mxu0 %v186
  %v225 = vpop.f32.mrf.mxu0
  %v226 = vadd.f32 %v212, %v225
  %v227 = vpop.f32.mrf.mxu0
  %v228 = vadd.f32 %v214, %v227
  %229 = vdwg.mxu0
  %v230 = vadd.f32 %v226, %v228
  %v231 = vrot.slane %v230, 4
  %v232 = vadd.f32 %v230, %v231
  %v233 = vrot.slane %v232, 2
  %v234 = vadd.f32 %v232, %v233
  %v235 = vrot.slane %v234, 1
  %v236 = vadd.f32 %v234, %v235
  %v237 = vmul.f32 %v236, 0.125
  %v238 = vlaneseq
  %v239 = vshrl.u32 %v238, 7
  %v240 = vadd.s32 %v239, 8
  %vm241 = vcmp.lt.s32.totalorder %v239, 8
  %vm242 = vcmp.lt.s32.totalorder %v240, 8
  %v243 = vsub.f32 %v226, %v237
  %v244 = vsub.f32 %v228, %v237
  %v245 = vsel %vm241, %v243, 0.0
  %v246 = vsel %vm242, %v244, 0.0
  %v247 = vmul.f32 %v245, %v245
  %v248 = vmul.f32 %v246, %v246
  %v249 = vadd.f32 %v247, %v248
  %v250 = vrot.slane %v249, 4
  %v251 = vadd.f32 %v249, %v250
  %v252 = vrot.slane %v251, 2
  %v253 = vadd.f32 %v251, %v252
  %v254 = vrot.slane %v253, 1
  %v255 = vadd.f32 %v253, %v254
  %v256 = vmul.f32 %v255, 0.125
  %v257 = vadd.f32 %v256, 1e-05
  %v258 = vrsqrt.pop %v257
  %v259 = vmul.f32 %v258, %v257
  %v260 = vmul.f32 %v259, %v258
  %v261 = vmul.f32 0.5, %v260
  %v262 = vsub.f32 1.5, %v261
  %v263 = vmul.f32 %v258, %v262
  %vm264 = vweird.f32 %v257
  %vm265 = vweird.f32 %v258
  %vm266 = vmor %vm264, %vm265
  %v267 = vsel %vm266, %v258, %v263
  %v268 = vld [vmem:[%s4] sm:$0x1]
  %v269 = vld [vmem:[%s2] sm:$0x1]
  %vm270 = vcmp.gt.f32.partialorder %v268, 0.0
  %v271 = vsel %vm270, %v267, 1.0
  %v272 = vmul.f32 %v269, %v271
  %v273 = vld [vmem:[%s3] sm:$0x1]
  %v274 = vsel %vm270, %v237, 0.0
  %v275 = vmul.f32 %v274, %v272
  %v276 = vsub.f32 %v273, %v275
  %v278 = vperm.slane %v272, 0
  %v280 = vmul.f32 %v226, %v278
  %v281 = vmul.f32 %v228, %v278
  %v283 = vperm.slane %v276, 0
  %v285 = vadd.f32 %v280, %v283
  %v286 = vadd.f32 %v281, %v283
  %v287 = vmax.f32 %v285, 0.0
  %v288 = vmax.f32 %v286, 0.0
  %v289 = vsel %vm270, 1, 0
  %v290 = vperm.slane %v289, 0
  %vm291 = vcmp.eq.s32.totalorder %v290, 1
  %v292 = vsel %vm291, %v287, %v285
  %v293 = vsel %vm291, %v288, %v286
  %v294 = vpack.c.bf16 %v292, %v292
  %v295 = vpack.c.bf16 %v293, %v293
  %296 = vst [vmem:[%s5] sm:$0xf] %v294
  %297 = vst [vmem:[%s5 + $0x4] sm:$0xf] %v295
  // Predicated region
  $region22: #{unet_forward.22} parent=0 // pred_check
    _
  $region23: #{unet_forward.22} parent=0 // pred_check_branch
    %299 = sbr.rel (0) target = $region25
  $region24: #{unet_forward.22} parent=0 // pred_region
    _
  $region25: #{unet_forward.22} parent=0 // pred_fallthru
    _
  // Predicated region
  $region26: #{unet_forward.22} parent=0 // pred_check
    _
  $region27: #{unet_forward.22} parent=0 // pred_check_branch
    %301 = sbr.rel (0) target = $region29
  $region28: #{unet_forward.22} parent=0 // pred_region
    _
  $region29: #{unet_forward.22} parent=0 // pred_fallthru
    _

// kernel: unet_forward.23
$region0: #{unet_forward.23}
  #allocation0 [shape = 'u32[]', space=smem, size = 0x4, offset = 0x4, fixed_abs, tag = 'smem constant byte address 0x4 - core index']
  #allocation1 [shape = 'u32[72,128]{1,0:T(1,128)}', space=vmem, size = 0x9000, scoped, tag = 'internal scratch']
  %s0 = inlined_call_operand.vmem [shape: bf16[16,576], index: 0, kind: input, shape index: {}]
  %s1 = inlined_call_operand.vmem [shape: bf16[576,128], index: 1, kind: input, shape index: {}]
  %s2 = inlined_call_operand.vmem [shape: f32[1,128], index: 2, kind: input, shape index: {}]
  %s3 = inlined_call_operand.vmem [shape: f32[1,128], index: 3, kind: input, shape index: {}]
  %s4 = inlined_call_operand.vmem [shape: f32[1,128], index: 4, kind: input, shape index: {}]
  %s5 = inlined_call_operand.vmem [shape: bf16[16,128], index: 5, kind: output, shape index: {}]
  %s6 = sld [smem:[#allocation0]]
  $region30: #{unet_forward.23} parent=0
    _
  %s8 = ssub.s32 1, %s6
  %s9 = scalar_select 0, %s8, %s6
  // Predicated region
  $region2: #{unet_forward.23} parent=0 // pred_check
    _
  $region3: #{unet_forward.23} parent=0 // pred_check_branch
    %11 = sbr.rel (0) target = $region5
  $region4: #{unet_forward.23} parent=0 // pred_region
    _
  $region5: #{unet_forward.23} parent=0 // pred_fallthru
    _
  // Predicated region
  $region6: #{unet_forward.23} parent=0 // pred_check
    _
  $region7: #{unet_forward.23} parent=0 // pred_check_branch
    %13 = sbr.rel (0) target = $region9
  $region8: #{unet_forward.23} parent=0 // pred_region
    _
  $region9: #{unet_forward.23} parent=0 // pred_fallthru
    _
  // Predicated region
  $region10: #{unet_forward.23} parent=0 // pred_check
    _
  $region11: #{unet_forward.23} parent=0 // pred_check_branch
    %15 = sbr.rel (0) target = $region13
  $region12: #{unet_forward.23} parent=0 // pred_region
    _
  $region13: #{unet_forward.23} parent=0 // pred_fallthru
    _
  // Predicated region
  $region14: #{unet_forward.23} parent=0 // pred_check
    _
  $region15: #{unet_forward.23} parent=0 // pred_check_branch
    %17 = sbr.rel (0) target = $region17
  $region16: #{unet_forward.23} parent=0 // pred_region
    _
  $region17: #{unet_forward.23} parent=0 // pred_fallthru
    _
  // Predicated region
  $region18: #{unet_forward.23} parent=0 // pred_check
    _
  $region19: #{unet_forward.23} parent=0 // pred_check_branch
    %19 = sbr.rel (0) target = $region21
  $region20: #{unet_forward.23} parent=0 // pred_region
    _
  $region21: #{unet_forward.23} parent=0 // pred_fallthru
    _
  %v21 = vld [vmem:[%s0] sm:$0xff]
  %v22 = vld [vmem:[%s0 + $0x8] sm:$0xff]
  %v23 = vld [vmem:[%s0 + $0x10] sm:$0xf]
  %v24 = vld [vmem:[%s0 + $0x14] sm:$0xff]
  %v25 = vld [vmem:[%s0 + $0x1c] sm:$0xff]
  %v26 = vld [vmem:[%s0 + $0x24] sm:$0xf]
  %v27 = vld [vmem:[%s1] sm:$0xf]
  %v28 = vld [vmem:[%s1 + $0x4] sm:$0xf]
  %v29 = vld [vmem:[%s1 + $0x8] sm:$0xf]
  %v30 = vld [vmem:[%s1 + $0xc] sm:$0xf]
  %v31 = vld [vmem:[%s1 + $0x10] sm:$0xf]
  %v32 = vld [vmem:[%s1 + $0x14] sm:$0xf]
  %v33 = vld [vmem:[%s1 + $0x18] sm:$0xf]
  %v34 = vld [vmem:[%s1 + $0x1c] sm:$0xf]
  %v35 = vld [vmem:[%s1 + $0x20] sm:$0xf]
  %v36 = vld [vmem:[%s1 + $0x24] sm:$0xf]
  %v37 = vld [vmem:[%s1 + $0x28] sm:$0xf]
  %v38 = vld [vmem:[%s1 + $0x2c] sm:$0xf]
  %v39 = vld [vmem:[%s1 + $0x30] sm:$0xf]
  %v40 = vld [vmem:[%s1 + $0x34] sm:$0xf]
  %v41 = vld [vmem:[%s1 + $0x38] sm:$0xf]
  %v42 = vld [vmem:[%s1 + $0x3c] sm:$0xf]
  %v43 = vld [vmem:[%s1 + $0x40] sm:$0xf]
  %v44 = vld [vmem:[%s1 + $0x44] sm:$0xf]
  %v45 = vld [vmem:[%s1 + $0x48] sm:$0xf]
  %v46 = vld [vmem:[%s1 + $0x4c] sm:$0xf]
  %v47 = vld [vmem:[%s1 + $0x50] sm:$0xf]
  %v48 = vld [vmem:[%s1 + $0x54] sm:$0xf]
  %v49 = vld [vmem:[%s1 + $0x58] sm:$0xf]
  %v50 = vld [vmem:[%s1 + $0x5c] sm:$0xf]
  %v51 = vld [vmem:[%s1 + $0x60] sm:$0xf]
  %v52 = vld [vmem:[%s1 + $0x64] sm:$0xf]
  %v53 = vld [vmem:[%s1 + $0x68] sm:$0xf]
  %v54 = vld [vmem:[%s1 + $0x6c] sm:$0xf]
  %v55 = vld [vmem:[%s1 + $0x70] sm:$0xf]
  %v56 = vld [vmem:[%s1 + $0x74] sm:$0xf]
  %v57 = vld [vmem:[%s1 + $0x78] sm:$0xf]
  %v58 = vld [vmem:[%s1 + $0x7c] sm:$0xf]
  %v59 = vld [vmem:[%s1 + $0x80] sm:$0xf]
  %v60 = vld [vmem:[%s1 + $0x84] sm:$0xf]
  %v61 = vld [vmem:[%s1 + $0x88] sm:$0xf]
  %v62 = vld [vmem:[%s1 + $0x8c] sm:$0xf]
  %v63 = vld [vmem:[%s1 + $0x90] sm:$0xf]
  %v64 = vld [vmem:[%s1 + $0x94] sm:$0xf]
  %v65 = vld [vmem:[%s1 + $0x98] sm:$0xf]
  %v66 = vld [vmem:[%s1 + $0x9c] sm:$0xf]
  %v67 = vld [vmem:[%s1 + $0xa0] sm:$0xf]
  %v68 = vld [vmem:[%s1 + $0xa4] sm:$0xf]
  %v69 = vld [vmem:[%s1 + $0xa8] sm:$0xf]
  %v70 = vld [vmem:[%s1 + $0xac] sm:$0xf]
  %v71 = vld [vmem:[%s1 + $0xb0] sm:$0xf]
  %v72 = vld [vmem:[%s1 + $0xb4] sm:$0xf]
  %v73 = vld [vmem:[%s1 + $0xb8] sm:$0xf]
  %v74 = vld [vmem:[%s1 + $0xbc] sm:$0xf]
  %v75 = vld [vmem:[%s1 + $0xc0] sm:$0xf]
  %v76 = vld [vmem:[%s1 + $0xc4] sm:$0xf]
  %v77 = vld [vmem:[%s1 + $0xc8] sm:$0xf]
  %v78 = vld [vmem:[%s1 + $0xcc] sm:$0xf]
  %v79 = vld [vmem:[%s1 + $0xd0] sm:$0xf]
  %v80 = vld [vmem:[%s1 + $0xd4] sm:$0xf]
  %v81 = vld [vmem:[%s1 + $0xd8] sm:$0xf]
  %v82 = vld [vmem:[%s1 + $0xdc] sm:$0xf]
  %v83 = vld [vmem:[%s1 + $0xe0] sm:$0xf]
  %v84 = vld [vmem:[%s1 + $0xe4] sm:$0xf]
  %v85 = vld [vmem:[%s1 + $0xe8] sm:$0xf]
  %v86 = vld [vmem:[%s1 + $0xec] sm:$0xf]
  %v87 = vld [vmem:[%s1 + $0xf0] sm:$0xf]
  %v88 = vld [vmem:[%s1 + $0xf4] sm:$0xf]
  %v89 = vld [vmem:[%s1 + $0xf8] sm:$0xf]
  %v90 = vld [vmem:[%s1 + $0xfc] sm:$0xf]
  %v91 = vld [vmem:[%s1 + $0x100] sm:$0xf]
  %v92 = vld [vmem:[%s1 + $0x104] sm:$0xf]
  %v93 = vld [vmem:[%s1 + $0x108] sm:$0xf]
  %v94 = vld [vmem:[%s1 + $0x10c] sm:$0xf]
  %v95 = vld [vmem:[%s1 + $0x110] sm:$0xf]
  %v96 = vld [vmem:[%s1 + $0x114] sm:$0xf]
  %v97 = vld [vmem:[%s1 + $0x118] sm:$0xf]
  %v98 = vld [vmem:[%s1 + $0x11c] sm:$0xf]
  %v105 = vunpack.c.l.b16 %v21
  %v106 = vunpack.c.h.b16 %v21
  %v107 = vunpack.c.l.b16 %v22
  %v108 = vunpack.c.h.b16 %v22
  %v109 = vunpack.c.l.b16 %v23
  %v110 = vunpack.c.l.b16 %v24
  %v111 = vunpack.c.h.b16 %v24
  %v112 = vunpack.c.l.b16 %v25
  %v113 = vunpack.c.h.b16 %v25
  %v114 = vunpack.c.l.b16 %v26
  %v115 = vpack.c.b16 %v110, %v105
  %v116 = vpack.c.b16 %v111, %v106
  %v117 = vpack.c.b16 %v112, %v107
  %v118 = vpack.c.b16 %v113, %v108
  %v119 = vpack.c.b16 %v114, %v109
  %v196 = vunpack.c.l.b16 %v27
  %v197 = vunpack.c.l.b16 %v28
  %v198 = vunpack.c.l.b16 %v29
  %v199 = vunpack.c.l.b16 %v30
  %v200 = vunpack.c.l.b16 %v31
  %v201 = vunpack.c.l.b16 %v32
  %v202 = vunpack.c.l.b16 %v33
  %v203 = vunpack.c.l.b16 %v34
  %v204 = vunpack.c.l.b16 %v35
  %v205 = vunpack.c.l.b16 %v36
  %v206 = vunpack.c.l.b16 %v37
  %v207 = vunpack.c.l.b16 %v38
  %v208 = vunpack.c.l.b16 %v39
  %v209 = vunpack.c.l.b16 %v40
  %v210 = vunpack.c.l.b16 %v41
  %v211 = vunpack.c.l.b16 %v42
  %v212 = vunpack.c.l.b16 %v43
  %v213 = vunpack.c.l.b16 %v44
  %v214 = vunpack.c.l.b16 %v45
  %v215 = vunpack.c.l.b16 %v46
  %v216 = vunpack.c.l.b16 %v47
  %v217 = vunpack.c.l.b16 %v48
  %v218 = vunpack.c.l.b16 %v49
  %v219 = vunpack.c.l.b16 %v50
  %v220 = vunpack.c.l.b16 %v51
  %v221 = vunpack.c.l.b16 %v52
  %v222 = vunpack.c.l.b16 %v53
  %v223 = vunpack.c.l.b16 %v54
  %v224 = vunpack.c.l.b16 %v55
  %v225 = vunpack.c.l.b16 %v56
  %v226 = vunpack.c.l.b16 %v57
  %v227 = vunpack.c.l.b16 %v58
  %v228 = vunpack.c.l.b16 %v59
  %v229 = vunpack.c.l.b16 %v60
  %v230 = vunpack.c.l.b16 %v61
  %v231 = vunpack.c.l.b16 %v62
  %v232 = vunpack.c.l.b16 %v63
  %v233 = vunpack.c.l.b16 %v64
  %v234 = vunpack.c.l.b16 %v65
  %v235 = vunpack.c.l.b16 %v66
  %v236 = vunpack.c.l.b16 %v67
  %v237 = vunpack.c.l.b16 %v68
  %v238 = vunpack.c.l.b16 %v69
  %v239 = vunpack.c.l.b16 %v70
  %v240 = vunpack.c.l.b16 %v71
  %v241 = vunpack.c.l.b16 %v72
  %v242 = vunpack.c.l.b16 %v73
  %v243 = vunpack.c.l.b16 %v74
  %v244 = vunpack.c.l.b16 %v75
  %v245 = vunpack.c.l.b16 %v76
  %v246 = vunpack.c.l.b16 %v77
  %v247 = vunpack.c.l.b16 %v78
  %v248 = vunpack.c.l.b16 %v79
  %v249 = vunpack.c.l.b16 %v80
  %v250 = vunpack.c.l.b16 %v81
  %v251 = vunpack.c.l.b16 %v82
  %v252 = vunpack.c.l.b16 %v83
  %v253 = vunpack.c.l.b16 %v84
  %v254 = vunpack.c.l.b16 %v85
  %v255 = vunpack.c.l.b16 %v86
  %v256 = vunpack.c.l.b16 %v87
  %v257 = vunpack.c.l.b16 %v88
  %v258 = vunpack.c.l.b16 %v89
  %v259 = vunpack.c.l.b16 %v90
  %v260 = vunpack.c.l.b16 %v91
  %v261 = vunpack.c.l.b16 %v92
  %v262 = vunpack.c.l.b16 %v93
  %v263 = vunpack.c.l.b16 %v94
  %v264 = vunpack.c.l.b16 %v95
  %v265 = vunpack.c.l.b16 %v96
  %v266 = vunpack.c.l.b16 %v97
  %v267 = vunpack.c.l.b16 %v98
  %v268 = vpack.c.b16 %v197, %v196
  %v269 = vpack.c.b16 %v199, %v198
  %v270 = vpack.c.b16 %v201, %v200
  %v271 = vpack.c.b16 %v203, %v202
  %v272 = vpack.c.b16 %v205, %v204
  %v273 = vpack.c.b16 %v207, %v206
  %v274 = vpack.c.b16 %v209, %v208
  %v275 = vpack.c.b16 %v211, %v210
  %v276 = vpack.c.b16 %v213, %v212
  %v277 = vpack.c.b16 %v215, %v214
  %v278 = vpack.c.b16 %v217, %v216
  %v279 = vpack.c.b16 %v219, %v218
  %v280 = vpack.c.b16 %v221, %v220
  %v281 = vpack.c.b16 %v223, %v222
  %v282 = vpack.c.b16 %v225, %v224
  %v283 = vpack.c.b16 %v227, %v226
  %v284 = vpack.c.b16 %v229, %v228
  %v285 = vpack.c.b16 %v231, %v230
  %v286 = vpack.c.b16 %v233, %v232
  %v287 = vpack.c.b16 %v235, %v234
  %v288 = vpack.c.b16 %v237, %v236
  %v289 = vpack.c.b16 %v239, %v238
  %v290 = vpack.c.b16 %v241, %v240
  %v291 = vpack.c.b16 %v243, %v242
  %v292 = vpack.c.b16 %v245, %v244
  %v293 = vpack.c.b16 %v247, %v246
  %v294 = vpack.c.b16 %v249, %v248
  %v295 = vpack.c.b16 %v251, %v250
  %v296 = vpack.c.b16 %v253, %v252
  %v297 = vpack.c.b16 %v255, %v254
  %v298 = vpack.c.b16 %v257, %v256
  %v299 = vpack.c.b16 %v259, %v258
  %v300 = vpack.c.b16 %v261, %v260
  %v301 = vpack.c.b16 %v263, %v262
  %v302 = vpack.c.b16 %v265, %v264
  %v303 = vpack.c.b16 %v267, %v266
  %vm340 = vcmask 523264
  %v342 = vsel %vm340, %v119, 0
  %344 = vmatpush.bf16.msra.mxu0 %v275
  %345 = vmatpush.bf16.msra.mxu0 %v274
  %346 = vmatpush.bf16.msra.mxu0 %v273
  %347 = vmatpush.bf16.msra.mxu0 %v272
  %348 = vmatpush.bf16.msra.mxu0 %v271
  %349 = vmatpush.bf16.msra.mxu0 %v270
  %350 = vmatpush.bf16.msra.mxu0 %v269
  %351 = vmatpush.bf16.msra.mxu0 %v268
  %352 = vmatmul.bf16.gmra.mxu0 %v115
  %v353 = vpop.f32.mrf.mxu0
  %v354 = vadd.f32 0.0, %v353
  %v355 = vpop.f32.mrf.mxu0
  %v356 = vadd.f32 0.0, %v355
  %357 = vdwg.mxu0
  %358 = vmatpush.bf16.msra.mxu0 %v283
  %359 = vmatpush.bf16.msra.mxu0 %v282
  %360 = vmatpush.bf16.msra.mxu0 %v281
  %361 = vmatpush.bf16.msra.mxu0 %v280
  %362 = vmatpush.bf16.msra.mxu0 %v279
  %363 = vmatpush.bf16.msra.mxu0 %v278
  %364 = vmatpush.bf16.msra.mxu0 %v277
  %365 = vmatpush.bf16.msra.mxu0 %v276
  %366 = vmatmul.bf16.gmra.mxu0 %v116
  %v367 = vpop.f32.mrf.mxu0
  %v368 = vadd.f32 %v354, %v367
  %v369 = vpop.f32.mrf.mxu0
  %v370 = vadd.f32 %v356, %v369
  %371 = vdwg.mxu0
  %372 = vmatpush.bf16.msra.mxu0 %v291
  %373 = vmatpush.bf16.msra.mxu0 %v290
  %374 = vmatpush.bf16.msra.mxu0 %v289
  %375 = vmatpush.bf16.msra.mxu0 %v288
  %376 = vmatpush.bf16.msra.mxu0 %v287
  %377 = vmatpush.bf16.msra.mxu0 %v286
  %378 = vmatpush.bf16.msra.mxu0 %v285
  %379 = vmatpush.bf16.msra.mxu0 %v284
  %380 = vmatmul.bf16.gmra.mxu0 %v117
  %v381 = vpop.f32.mrf.mxu0
  %v382 = vadd.f32 %v368, %v381
  %v383 = vpop.f32.mrf.mxu0
  %v384 = vadd.f32 %v370, %v383
  %385 = vdwg.mxu0
  %386 = vmatpush.bf16.msra.mxu0 %v299
  %387 = vmatpush.bf16.msra.mxu0 %v298
  %388 = vmatpush.bf16.msra.mxu0 %v297
  %389 = vmatpush.bf16.msra.mxu0 %v296
  %390 = vmatpush.bf16.msra.mxu0 %v295
  %391 = vmatpush.bf16.msra.mxu0 %v294
  %392 = vmatpush.bf16.msra.mxu0 %v293
  %393 = vmatpush.bf16.msra.mxu0 %v292
  %394 = vmatmul.bf16.gmra.mxu0 %v118
  %v395 = vpop.f32.mrf.mxu0
  %v396 = vadd.f32 %v382, %v395
  %v397 = vpop.f32.mrf.mxu0
  %v398 = vadd.f32 %v384, %v397
  %399 = vdwg.mxu0
  %400 = vmatpush.bf16.msra.mxu0 0
  %401 = vmatpush.bf16.msra.mxu0 0
  %402 = vmatpush.bf16.msra.mxu0 0
  %403 = vmatpush.bf16.msra.mxu0 0
  %404 = vmatpush.bf16.msra.mxu0 %v303
  %405 = vmatpush.bf16.msra.mxu0 %v302
  %406 = vmatpush.bf16.msra.mxu0 %v301
  %407 = vmatpush.bf16.msra.mxu0 %v300
  %408 = vmatmul.bf16.gmra.mxu0 %v342
  %v409 = vpop.f32.mrf.mxu0
  %v410 = vadd.f32 %v396, %v409
  %v411 = vpop.f32.mrf.mxu0
  %v412 = vadd.f32 %v398, %v411
  %413 = vdwg.mxu0
  %v414 = vadd.f32 %v410, %v412
  %v415 = vrot.slane %v414, 4
  %v416 = vadd.f32 %v414, %v415
  %v417 = vrot.slane %v416, 2
  %v418 = vadd.f32 %v416, %v417
  %v419 = vrot.slane %v418, 1
  %v420 = vadd.f32 %v418, %v419
  %v421 = vmul.f32 %v420, 0.125
  %v422 = vlaneseq
  %v423 = vshrl.u32 %v422, 7
  %v424 = vadd.s32 %v423, 8
  %vm425 = vcmp.lt.s32.totalorder %v423, 8
  %vm426 = vcmp.lt.s32.totalorder %v424, 8
  %v427 = vsub.f32 %v410, %v421
  %v428 = vsub.f32 %v412, %v421
  %v429 = vsel %vm425, %v427, 0.0
  %v430 = vsel %vm426, %v428, 0.0
  %v431 = vmul.f32 %v429, %v429
  %v432 = vmul.f32 %v430, %v430
  %v433 = vadd.f32 %v431, %v432
  %v434 = vrot.slane %v433, 4
  %v435 = vadd.f32 %v433, %v434
  %v436 = vrot.slane %v435, 2
  %v437 = vadd.f32 %v435, %v436
  %v438 = vrot.slane %v437, 1
  %v439 = vadd.f32 %v437, %v438
  %v440 = vmul.f32 %v439, 0.125
  %v441 = vadd.f32 %v440, 1e-05
  %v442 = vrsqrt.pop %v441
  %v443 = vmul.f32 %v442, %v441
  %v444 = vmul.f32 %v443, %v442
  %v445 = vmul.f32 0.5, %v444
  %v446 = vsub.f32 1.5, %v445
  %v447 = vmul.f32 %v442, %v446
  %vm448 = vweird.f32 %v441
  %vm449 = vweird.f32 %v442
  %vm450 = vmor %vm448, %vm449
  %v451 = vsel %vm450, %v442, %v447
  %v452 = vld [vmem:[%s4] sm:$0x1]
  %v453 = vld [vmem:[%s2] sm:$0x1]
  %vm454 = vcmp.gt.f32.partialorder %v452, 0.0
  %v455 = vsel %vm454, %v451, 1.0
  %v456 = vmul.f32 %v453, %v455
  %v457 = vld [vmem:[%s3] sm:$0x1]
  %v458 = vsel %vm454, %v421, 0.0
  %v459 = vmul.f32 %v458, %v456
  %v460 = vsub.f32 %v457, %v459
  %v462 = vperm.slane %v456, 0
  %v464 = vmul.f32 %v410, %v462
  %v465 = vmul.f32 %v412, %v462
  %v467 = vperm.slane %v460, 0
  %v469 = vadd.f32 %v464, %v467
  %v470 = vadd.f32 %v465, %v467
  %v471 = vmax.f32 %v469, 0.0
  %v472 = vmax.f32 %v470, 0.0
  %v473 = vsel %vm454, 1, 0
  %v474 = vperm.slane %v473, 0
  %vm475 = vcmp.eq.s32.totalorder %v474, 1
  %v476 = vsel %vm475, %v471, %v469
  %v477 = vsel %vm475, %v472, %v470
  %v478 = vpack.c.bf16 %v476, %v476
  %v479 = vpack.c.bf16 %v477, %v477
  %480 = vst [vmem:[%s5] sm:$0xf] %v478
  %481 = vst [vmem:[%s5 + $0x4] sm:$0xf] %v479
  // Predicated region
  $region22: #{unet_forward.23} parent=0 // pred_check
    _
  $region23: #{unet_forward.23} parent=0 // pred_check_branch
    %483 = sbr.rel (0) target = $region25
  $region24: #{unet_forward.23} parent=0 // pred_region
    _
  $region25: #{unet_forward.23} parent=0 // pred_fallthru
    _
  // Predicated region
  $region26: #{unet_forward.23} parent=0 // pred_check
    _
  $region27: #{unet_forward.23} parent=0 // pred_check_branch
    %485 = sbr.rel (0) target = $region29
  $region28: #{unet_forward.23} parent=0 // pred_region
    _
  $region29: #{unet_forward.23} parent=0 // pred_fallthru
    _

// kernel: unet_forward.24
$region0: #{unet_forward.24}
  #allocation0 [shape = 'u32[]', space=smem, size = 0x4, offset = 0x4, fixed_abs, tag = 'smem constant byte address 0x4 - core index']
  #allocation1 [shape = 'u32[72,128]{1,0:T(1,128)}', space=vmem, size = 0x9000, scoped, tag = 'internal scratch']
  %s0 = inlined_call_operand.vmem [shape: bf16[16,576], index: 0, kind: input, shape index: {}]
  %s1 = inlined_call_operand.vmem [shape: bf16[576,128], index: 1, kind: input, shape index: {}]
  %s2 = inlined_call_operand.vmem [shape: f32[1,128], index: 2, kind: input, shape index: {}]
  %s3 = inlined_call_operand.vmem [shape: f32[1,128], index: 3, kind: input, shape index: {}]
  %s4 = inlined_call_operand.vmem [shape: f32[1,128], index: 4, kind: input, shape index: {}]
  %s5 = inlined_call_operand.vmem [shape: bf16[16,128], index: 5, kind: input, shape index: {}]
  %s6 = inlined_call_operand.vmem [shape: bf16[16,128], index: 6, kind: output, shape index: {}]
  %s7 = sld [smem:[#allocation0]]
  $region34: #{unet_forward.24} parent=0
    _
  %s9 = ssub.s32 1, %s7
  %s10 = scalar_select 0, %s9, %s7
  // Predicated region
  $region2: #{unet_forward.24} parent=0 // pred_check
    _
  $region3: #{unet_forward.24} parent=0 // pred_check_branch
    %12 = sbr.rel (0) target = $region5
  $region4: #{unet_forward.24} parent=0 // pred_region
    _
  $region5: #{unet_forward.24} parent=0 // pred_fallthru
    _
  // Predicated region
  $region6: #{unet_forward.24} parent=0 // pred_check
    _
  $region7: #{unet_forward.24} parent=0 // pred_check_branch
    %14 = sbr.rel (0) target = $region9
  $region8: #{unet_forward.24} parent=0 // pred_region
    _
  $region9: #{unet_forward.24} parent=0 // pred_fallthru
    _
  // Predicated region
  $region10: #{unet_forward.24} parent=0 // pred_check
    _
  $region11: #{unet_forward.24} parent=0 // pred_check_branch
    %16 = sbr.rel (0) target = $region13
  $region12: #{unet_forward.24} parent=0 // pred_region
    _
  $region13: #{unet_forward.24} parent=0 // pred_fallthru
    _
  // Predicated region
  $region14: #{unet_forward.24} parent=0 // pred_check
    _
  $region15: #{unet_forward.24} parent=0 // pred_check_branch
    %18 = sbr.rel (0) target = $region17
  $region16: #{unet_forward.24} parent=0 // pred_region
    _
  $region17: #{unet_forward.24} parent=0 // pred_fallthru
    _
  // Predicated region
  $region18: #{unet_forward.24} parent=0 // pred_check
    _
  $region19: #{unet_forward.24} parent=0 // pred_check_branch
    %20 = sbr.rel (0) target = $region21
  $region20: #{unet_forward.24} parent=0 // pred_region
    _
  $region21: #{unet_forward.24} parent=0 // pred_fallthru
    _
  // Predicated region
  $region22: #{unet_forward.24} parent=0 // pred_check
    _
  $region23: #{unet_forward.24} parent=0 // pred_check_branch
    %22 = sbr.rel (0) target = $region25
  $region24: #{unet_forward.24} parent=0 // pred_region
    _
  $region25: #{unet_forward.24} parent=0 // pred_fallthru
    _
  %v24 = vld [vmem:[%s0] sm:$0xff]
  %v25 = vld [vmem:[%s0 + $0x8] sm:$0xff]
  %v26 = vld [vmem:[%s0 + $0x10] sm:$0xf]
  %v27 = vld [vmem:[%s0 + $0x14] sm:$0xff]
  %v28 = vld [vmem:[%s0 + $0x1c] sm:$0xff]
  %v29 = vld [vmem:[%s0 + $0x24] sm:$0xf]
  %v30 = vld [vmem:[%s1] sm:$0xf]
  %v31 = vld [vmem:[%s1 + $0x4] sm:$0xf]
  %v32 = vld [vmem:[%s1 + $0x8] sm:$0xf]
  %v33 = vld [vmem:[%s1 + $0xc] sm:$0xf]
  %v34 = vld [vmem:[%s1 + $0x10] sm:$0xf]
  %v35 = vld [vmem:[%s1 + $0x14] sm:$0xf]
  %v36 = vld [vmem:[%s1 + $0x18] sm:$0xf]
  %v37 = vld [vmem:[%s1 + $0x1c] sm:$0xf]
  %v38 = vld [vmem:[%s1 + $0x20] sm:$0xf]
  %v39 = vld [vmem:[%s1 + $0x24] sm:$0xf]
  %v40 = vld [vmem:[%s1 + $0x28] sm:$0xf]
  %v41 = vld [vmem:[%s1 + $0x2c] sm:$0xf]
  %v42 = vld [vmem:[%s1 + $0x30] sm:$0xf]
  %v43 = vld [vmem:[%s1 + $0x34] sm:$0xf]
  %v44 = vld [vmem:[%s1 + $0x38] sm:$0xf]
  %v45 = vld [vmem:[%s1 + $0x3c] sm:$0xf]
  %v46 = vld [vmem:[%s1 + $0x40] sm:$0xf]
  %v47 = vld [vmem:[%s1 + $0x44] sm:$0xf]
  %v48 = vld [vmem:[%s1 + $0x48] sm:$0xf]
  %v49 = vld [vmem:[%s1 + $0x4c] sm:$0xf]
  %v50 = vld [vmem:[%s1 + $0x50] sm:$0xf]
  %v51 = vld [vmem:[%s1 + $0x54] sm:$0xf]
  %v52 = vld [vmem:[%s1 + $0x58] sm:$0xf]
  %v53 = vld [vmem:[%s1 + $0x5c] sm:$0xf]
  %v54 = vld [vmem:[%s1 + $0x60] sm:$0xf]
  %v55 = vld [vmem:[%s1 + $0x64] sm:$0xf]
  %v56 = vld [vmem:[%s1 + $0x68] sm:$0xf]
  %v57 = vld [vmem:[%s1 + $0x6c] sm:$0xf]
  %v58 = vld [vmem:[%s1 + $0x70] sm:$0xf]
  %v59 = vld [vmem:[%s1 + $0x74] sm:$0xf]
  %v60 = vld [vmem:[%s1 + $0x78] sm:$0xf]
  %v61 = vld [vmem:[%s1 + $0x7c] sm:$0xf]
  %v62 = vld [vmem:[%s1 + $0x80] sm:$0xf]
  %v63 = vld [vmem:[%s1 + $0x84] sm:$0xf]
  %v64 = vld [vmem:[%s1 + $0x88] sm:$0xf]
  %v65 = vld [vmem:[%s1 + $0x8c] sm:$0xf]
  %v66 = vld [vmem:[%s1 + $0x90] sm:$0xf]
  %v67 = vld [vmem:[%s1 + $0x94] sm:$0xf]
  %v68 = vld [vmem:[%s1 + $0x98] sm:$0xf]
  %v69 = vld [vmem:[%s1 + $0x9c] sm:$0xf]
  %v70 = vld [vmem:[%s1 + $0xa0] sm:$0xf]
  %v71 = vld [vmem:[%s1 + $0xa4] sm:$0xf]
  %v72 = vld [vmem:[%s1 + $0xa8] sm:$0xf]
  %v73 = vld [vmem:[%s1 + $0xac] sm:$0xf]
  %v74 = vld [vmem:[%s1 + $0xb0] sm:$0xf]
  %v75 = vld [vmem:[%s1 + $0xb4] sm:$0xf]
  %v76 = vld [vmem:[%s1 + $0xb8] sm:$0xf]
  %v77 = vld [vmem:[%s1 + $0xbc] sm:$0xf]
  %v78 = vld [vmem:[%s1 + $0xc0] sm:$0xf]
  %v79 = vld [vmem:[%s1 + $0xc4] sm:$0xf]
  %v80 = vld [vmem:[%s1 + $0xc8] sm:$0xf]
  %v81 = vld [vmem:[%s1 + $0xcc] sm:$0xf]
  %v82 = vld [vmem:[%s1 + $0xd0] sm:$0xf]
  %v83 = vld [vmem:[%s1 + $0xd4] sm:$0xf]
  %v84 = vld [vmem:[%s1 + $0xd8] sm:$0xf]
  %v85 = vld [vmem:[%s1 + $0xdc] sm:$0xf]
  %v86 = vld [vmem:[%s1 + $0xe0] sm:$0xf]
  %v87 = vld [vmem:[%s1 + $0xe4] sm:$0xf]
  %v88 = vld [vmem:[%s1 + $0xe8] sm:$0xf]
  %v89 = vld [vmem:[%s1 + $0xec] sm:$0xf]
  %v90 = vld [vmem:[%s1 + $0xf0] sm:$0xf]
  %v91 = vld [vmem:[%s1 + $0xf4] sm:$0xf]
  %v92 = vld [vmem:[%s1 + $0xf8] sm:$0xf]
  %v93 = vld [vmem:[%s1 + $0xfc] sm:$0xf]
  %v94 = vld [vmem:[%s1 + $0x100] sm:$0xf]
  %v95 = vld [vmem:[%s1 + $0x104] sm:$0xf]
  %v96 = vld [vmem:[%s1 + $0x108] sm:$0xf]
  %v97 = vld [vmem:[%s1 + $0x10c] sm:$0xf]
  %v98 = vld [vmem:[%s1 + $0x110] sm:$0xf]
  %v99 = vld [vmem:[%s1 + $0x114] sm:$0xf]
  %v100 = vld [vmem:[%s1 + $0x118] sm:$0xf]
  %v101 = vld [vmem:[%s1 + $0x11c] sm:$0xf]
  %v108 = vunpack.c.l.b16 %v24
  %v109 = vunpack.c.h.b16 %v24
  %v110 = vunpack.c.l.b16 %v25
  %v111 = vunpack.c.h.b16 %v25
  %v112 = vunpack.c.l.b16 %v26
  %v113 = vunpack.c.l.b16 %v27
  %v114 = vunpack.c.h.b16 %v27
  %v115 = vunpack.c.l.b16 %v28
  %v116 = vunpack.c.h.b16 %v28
  %v117 = vunpack.c.l.b16 %v29
  %v118 = vpack.c.b16 %v113, %v108
  %v119 = vpack.c.b16 %v114, %v109
  %v120 = vpack.c.b16 %v115, %v110
  %v121 = vpack.c.b16 %v116, %v111
  %v122 = vpack.c.b16 %v117, %v112
  %v199 = vunpack.c.l.b16 %v30
  %v200 = vunpack.c.l.b16 %v31
  %v201 = vunpack.c.l.b16 %v32
  %v202 = vunpack.c.l.b16 %v33
  %v203 = vunpack.c.l.b16 %v34
  %v204 = vunpack.c.l.b16 %v35
  %v205 = vunpack.c.l.b16 %v36
  %v206 = vunpack.c.l.b16 %v37
  %v207 = vunpack.c.l.b16 %v38
  %v208 = vunpack.c.l.b16 %v39
  %v209 = vunpack.c.l.b16 %v40
  %v210 = vunpack.c.l.b16 %v41
  %v211 = vunpack.c.l.b16 %v42
  %v212 = vunpack.c.l.b16 %v43
  %v213 = vunpack.c.l.b16 %v44
  %v214 = vunpack.c.l.b16 %v45
  %v215 = vunpack.c.l.b16 %v46
  %v216 = vunpack.c.l.b16 %v47
  %v217 = vunpack.c.l.b16 %v48
  %v218 = vunpack.c.l.b16 %v49
  %v219 = vunpack.c.l.b16 %v50
  %v220 = vunpack.c.l.b16 %v51
  %v221 = vunpack.c.l.b16 %v52
  %v222 = vunpack.c.l.b16 %v53
  %v223 = vunpack.c.l.b16 %v54
  %v224 = vunpack.c.l.b16 %v55
  %v225 = vunpack.c.l.b16 %v56
  %v226 = vunpack.c.l.b16 %v57
  %v227 = vunpack.c.l.b16 %v58
  %v228 = vunpack.c.l.b16 %v59
  %v229 = vunpack.c.l.b16 %v60
  %v230 = vunpack.c.l.b16 %v61
  %v231 = vunpack.c.l.b16 %v62
  %v232 = vunpack.c.l.b16 %v63
  %v233 = vunpack.c.l.b16 %v64
  %v234 = vunpack.c.l.b16 %v65
  %v235 = vunpack.c.l.b16 %v66
  %v236 = vunpack.c.l.b16 %v67
  %v237 = vunpack.c.l.b16 %v68
  %v238 = vunpack.c.l.b16 %v69
  %v239 = vunpack.c.l.b16 %v70
  %v240 = vunpack.c.l.b16 %v71
  %v241 = vunpack.c.l.b16 %v72
  %v242 = vunpack.c.l.b16 %v73
  %v243 = vunpack.c.l.b16 %v74
  %v244 = vunpack.c.l.b16 %v75
  %v245 = vunpack.c.l.b16 %v76
  %v246 = vunpack.c.l.b16 %v77
  %v247 = vunpack.c.l.b16 %v78
  %v248 = vunpack.c.l.b16 %v79
  %v249 = vunpack.c.l.b16 %v80
  %v250 = vunpack.c.l.b16 %v81
  %v251 = vunpack.c.l.b16 %v82
  %v252 = vunpack.c.l.b16 %v83
  %v253 = vunpack.c.l.b16 %v84
  %v254 = vunpack.c.l.b16 %v85
  %v255 = vunpack.c.l.b16 %v86
  %v256 = vunpack.c.l.b16 %v87
  %v257 = vunpack.c.l.b16 %v88
  %v258 = vunpack.c.l.b16 %v89
  %v259 = vunpack.c.l.b16 %v90
  %v260 = vunpack.c.l.b16 %v91
  %v261 = vunpack.c.l.b16 %v92
  %v262 = vunpack.c.l.b16 %v93
  %v263 = vunpack.c.l.b16 %v94
  %v264 = vunpack.c.l.b16 %v95
  %v265 = vunpack.c.l.b16 %v96
  %v266 = vunpack.c.l.b16 %v97
  %v267 = vunpack.c.l.b16 %v98
  %v268 = vunpack.c.l.b16 %v99
  %v269 = vunpack.c.l.b16 %v100
  %v270 = vunpack.c.l.b16 %v101
  %v271 = vpack.c.b16 %v200, %v199
  %v272 = vpack.c.b16 %v202, %v201
  %v273 = vpack.c.b16 %v204, %v203
  %v274 = vpack.c.b16 %v206, %v205
  %v275 = vpack.c.b16 %v208, %v207
  %v276 = vpack.c.b16 %v210, %v209
  %v277 = vpack.c.b16 %v212, %v211
  %v278 = vpack.c.b16 %v214, %v213
  %v279 = vpack.c.b16 %v216, %v215
  %v280 = vpack.c.b16 %v218, %v217
  %v281 = vpack.c.b16 %v220, %v219
  %v282 = vpack.c.b16 %v222, %v221
  %v283 = vpack.c.b16 %v224, %v223
  %v284 = vpack.c.b16 %v226, %v225
  %v285 = vpack.c.b16 %v228, %v227
  %v286 = vpack.c.b16 %v230, %v229
  %v287 = vpack.c.b16 %v232, %v231
  %v288 = vpack.c.b16 %v234, %v233
  %v289 = vpack.c.b16 %v236, %v235
  %v290 = vpack.c.b16 %v238, %v237
  %v291 = vpack.c.b16 %v240, %v239
  %v292 = vpack.c.b16 %v242, %v241
  %v293 = vpack.c.b16 %v244, %v243
  %v294 = vpack.c.b16 %v246, %v245
  %v295 = vpack.c.b16 %v248, %v247
  %v296 = vpack.c.b16 %v250, %v249
  %v297 = vpack.c.b16 %v252, %v251
  %v298 = vpack.c.b16 %v254, %v253
  %v299 = vpack.c.b16 %v256, %v255
  %v300 = vpack.c.b16 %v258, %v257
  %v301 = vpack.c.b16 %v260, %v259
  %v302 = vpack.c.b16 %v262, %v261
  %v303 = vpack.c.b16 %v264, %v263
  %v304 = vpack.c.b16 %v266, %v265
  %v305 = vpack.c.b16 %v268, %v267
  %v306 = vpack.c.b16 %v270, %v269
  %vm343 = vcmask 523264
  %v345 = vsel %vm343, %v122, 0
  %347 = vmatpush.bf16.msra.mxu0 %v278
  %348 = vmatpush.bf16.msra.mxu0 %v277
  %349 = vmatpush.bf16.msra.mxu0 %v276
  %350 = vmatpush.bf16.msra.mxu0 %v275
  %351 = vmatpush.bf16.msra.mxu0 %v274
  %352 = vmatpush.bf16.msra.mxu0 %v273
  %353 = vmatpush.bf16.msra.mxu0 %v272
  %354 = vmatpush.bf16.msra.mxu0 %v271
  %355 = vmatmul.bf16.gmra.mxu0 %v118
  %v356 = vpop.f32.mrf.mxu0
  %v357 = vadd.f32 0.0, %v356
  %v358 = vpop.f32.mrf.mxu0
  %v359 = vadd.f32 0.0, %v358
  %360 = vdwg.mxu0
  %361 = vmatpush.bf16.msra.mxu0 %v286
  %362 = vmatpush.bf16.msra.mxu0 %v285
  %363 = vmatpush.bf16.msra.mxu0 %v284
  %364 = vmatpush.bf16.msra.mxu0 %v283
  %365 = vmatpush.bf16.msra.mxu0 %v282
  %366 = vmatpush.bf16.msra.mxu0 %v281
  %367 = vmatpush.bf16.msra.mxu0 %v280
  %368 = vmatpush.bf16.msra.mxu0 %v279
  %369 = vmatmul.bf16.gmra.mxu0 %v119
  %v370 = vpop.f32.mrf.mxu0
  %v371 = vadd.f32 %v357, %v370
  %v372 = vpop.f32.mrf.mxu0
  %v373 = vadd.f32 %v359, %v372
  %374 = vdwg.mxu0
  %375 = vmatpush.bf16.msra.mxu0 %v294
  %376 = vmatpush.bf16.msra.mxu0 %v293
  %377 = vmatpush.bf16.msra.mxu0 %v292
  %378 = vmatpush.bf16.msra.mxu0 %v291
  %379 = vmatpush.bf16.msra.mxu0 %v290
  %380 = vmatpush.bf16.msra.mxu0 %v289
  %381 = vmatpush.bf16.msra.mxu0 %v288
  %382 = vmatpush.bf16.msra.mxu0 %v287
  %383 = vmatmul.bf16.gmra.mxu0 %v120
  %v384 = vpop.f32.mrf.mxu0
  %v385 = vadd.f32 %v371, %v384
  %v386 = vpop.f32.mrf.mxu0
  %v387 = vadd.f32 %v373, %v386
  %388 = vdwg.mxu0
  %389 = vmatpush.bf16.msra.mxu0 %v302
  %390 = vmatpush.bf16.msra.mxu0 %v301
  %391 = vmatpush.bf16.msra.mxu0 %v300
  %392 = vmatpush.bf16.msra.mxu0 %v299
  %393 = vmatpush.bf16.msra.mxu0 %v298
  %394 = vmatpush.bf16.msra.mxu0 %v297
  %395 = vmatpush.bf16.msra.mxu0 %v296
  %396 = vmatpush.bf16.msra.mxu0 %v295
  %397 = vmatmul.bf16.gmra.mxu0 %v121
  %v398 = vpop.f32.mrf.mxu0
  %v399 = vadd.f32 %v385, %v398
  %v400 = vpop.f32.mrf.mxu0
  %v401 = vadd.f32 %v387, %v400
  %402 = vdwg.mxu0
  %403 = vmatpush.bf16.msra.mxu0 0
  %404 = vmatpush.bf16.msra.mxu0 0
  %405 = vmatpush.bf16.msra.mxu0 0
  %406 = vmatpush.bf16.msra.mxu0 0
  %407 = vmatpush.bf16.msra.mxu0 %v306
  %408 = vmatpush.bf16.msra.mxu0 %v305
  %409 = vmatpush.bf16.msra.mxu0 %v304
  %410 = vmatpush.bf16.msra.mxu0 %v303
  %411 = vmatmul.bf16.gmra.mxu0 %v345
  %v412 = vpop.f32.mrf.mxu0
  %v413 = vadd.f32 %v399, %v412
  %v414 = vpop.f32.mrf.mxu0
  %v415 = vadd.f32 %v401, %v414
  %416 = vdwg.mxu0
  %v417 = vadd.f32 %v413, %v415
  %v418 = vrot.slane %v417, 4
  %v419 = vadd.f32 %v417, %v418
  %v420 = vrot.slane %v419, 2
  %v421 = vadd.f32 %v419, %v420
  %v422 = vrot.slane %v421, 1
  %v423 = vadd.f32 %v421, %v422
  %v424 = vmul.f32 %v423, 0.125
  %v425 = vlaneseq
  %v426 = vshrl.u32 %v425, 7
  %v427 = vadd.s32 %v426, 8
  %vm428 = vcmp.lt.s32.totalorder %v426, 8
  %vm429 = vcmp.lt.s32.totalorder %v427, 8
  %v430 = vsub.f32 %v413, %v424
  %v431 = vsub.f32 %v415, %v424
  %v432 = vsel %vm428, %v430, 0.0
  %v433 = vsel %vm429, %v431, 0.0
  %v434 = vmul.f32 %v432, %v432
  %v435 = vmul.f32 %v433, %v433
  %v436 = vadd.f32 %v434, %v435
  %v437 = vrot.slane %v436, 4
  %v438 = vadd.f32 %v436, %v437
  %v439 = vrot.slane %v438, 2
  %v440 = vadd.f32 %v438, %v439
  %v441 = vrot.slane %v440, 1
  %v442 = vadd.f32 %v440, %v441
  %v443 = vmul.f32 %v442, 0.125
  %v444 = vadd.f32 %v443, 1e-05
  %v445 = vrsqrt.pop %v444
  %v446 = vmul.f32 %v445, %v444
  %v447 = vmul.f32 %v446, %v445
  %v448 = vmul.f32 0.5, %v447
  %v449 = vsub.f32 1.5, %v448
  %v450 = vmul.f32 %v445, %v449
  %vm451 = vweird.f32 %v444
  %vm452 = vweird.f32 %v445
  %vm453 = vmor %vm451, %vm452
  %v454 = vsel %vm453, %v445, %v450
  %v455 = vld [vmem:[%s4] sm:$0x1]
  %v456 = vld [vmem:[%s2] sm:$0x1]
  %vm457 = vcmp.gt.f32.partialorder %v455, 0.0
  %v458 = vsel %vm457, %v454, 1.0
  %v459 = vmul.f32 %v456, %v458
  %v460 = vld [vmem:[%s3] sm:$0x1]
  %v461 = vsel %vm457, %v424, 0.0
  %v462 = vmul.f32 %v461, %v459
  %v463 = vsub.f32 %v460, %v462
  %v465 = vperm.slane %v459, 0
  %v467 = vmul.f32 %v413, %v465
  %v468 = vmul.f32 %v415, %v465
  %v470 = vperm.slane %v463, 0
  %v472 = vadd.f32 %v467, %v470
  %v473 = vadd.f32 %v468, %v470
  %v474 = vld [vmem:[%s5] sm:$0xf]
  %v475 = vld [vmem:[%s5 + $0x4] sm:$0xf]
  %v476 = vunpack.c.l.bf16 %v474
  %v477 = vunpack.c.l.bf16 %v475
  %v478 = vadd.f32 %v472, %v476
  %v479 = vadd.f32 %v473, %v477
  %v480 = vmax.f32 %v478, 0.0
  %v481 = vmax.f32 %v479, 0.0
  %v482 = vsel %vm457, 1, 0
  %v483 = vperm.slane %v482, 0
  %vm484 = vcmp.eq.s32.totalorder %v483, 1
  %v485 = vsel %vm484, %v480, %v478
  %v486 = vsel %vm484, %v481, %v479
  %v487 = vpack.c.bf16 %v485, %v485
  %v488 = vpack.c.bf16 %v486, %v486
  %489 = vst [vmem:[%s6] sm:$0xf] %v487
  %490 = vst [vmem:[%s6 + $0x4] sm:$0xf] %v488
  // Predicated region
  $region26: #{unet_forward.24} parent=0 // pred_check
    _
  $region27: #{unet_forward.24} parent=0 // pred_check_branch
    %492 = sbr.rel (0) target = $region29
  $region28: #{unet_forward.24} parent=0 // pred_region
    _
  $region29: #{unet_forward.24} parent=0 // pred_fallthru
    _
  // Predicated region
  $region30: #{unet_forward.24} parent=0 // pred_check
    _
  $region31: #{unet_forward.24} parent=0 // pred_check_branch
    %494 = sbr.rel (0) target = $region33
  $region32: #{unet_forward.24} parent=0 // pred_region
    _
  $region33: #{unet_forward.24} parent=0 // pred_fallthru
    _

// kernel: unet_forward.25
$region0: #{unet_forward.25}
  #allocation0 [shape = 'u32[]', space=smem, size = 0x4, offset = 0x4, fixed_abs, tag = 'smem constant byte address 0x4 - core index']
  #allocation1 [shape = 'u32[72,128]{1,0:T(1,128)}', space=vmem, size = 0x9000, scoped, tag = 'internal scratch']
  %s0 = inlined_call_operand.vmem [shape: bf16[16,576], index: 0, kind: input, shape index: {}]
  %s1 = inlined_call_operand.vmem [shape: bf16[576,256], index: 1, kind: input, shape index: {}]
  %s2 = inlined_call_operand.vmem [shape: f32[1,256], index: 2, kind: input, shape index: {}]
  %s3 = inlined_call_operand.vmem [shape: f32[1,256], index: 3, kind: input, shape index: {}]
  %s4 = inlined_call_operand.vmem [shape: f32[1,256], index: 4, kind: input, shape index: {}]
  %s5 = inlined_call_operand.vmem [shape: bf16[16,256], index: 5, kind: output, shape index: {}]
  %s6 = sld [smem:[#allocation0]]
  $region30: #{unet_forward.25} parent=0
    _
  %s8 = ssub.s32 1, %s6
  %s9 = scalar_select 0, %s8, %s6
  // Predicated region
  $region2: #{unet_forward.25} parent=0 // pred_check
    _
  $region3: #{unet_forward.25} parent=0 // pred_check_branch
    %11 = sbr.rel (0) target = $region5
  $region4: #{unet_forward.25} parent=0 // pred_region
    _
  $region5: #{unet_forward.25} parent=0 // pred_fallthru
    _
  // Predicated region
  $region6: #{unet_forward.25} parent=0 // pred_check
    _
  $region7: #{unet_forward.25} parent=0 // pred_check_branch
    %13 = sbr.rel (0) target = $region9
  $region8: #{unet_forward.25} parent=0 // pred_region
    _
  $region9: #{unet_forward.25} parent=0 // pred_fallthru
    _
  // Predicated region
  $region10: #{unet_forward.25} parent=0 // pred_check
    _
  $region11: #{unet_forward.25} parent=0 // pred_check_branch
    %15 = sbr.rel (0) target = $region13
  $region12: #{unet_forward.25} parent=0 // pred_region
    _
  $region13: #{unet_forward.25} parent=0 // pred_fallthru
    _
  // Predicated region
  $region14: #{unet_forward.25} parent=0 // pred_check
    _
  $region15: #{unet_forward.25} parent=0 // pred_check_branch
    %17 = sbr.rel (0) target = $region17
  $region16: #{unet_forward.25} parent=0 // pred_region
    _
  $region17: #{unet_forward.25} parent=0 // pred_fallthru
    _
  // Predicated region
  $region18: #{unet_forward.25} parent=0 // pred_check
    _
  $region19: #{unet_forward.25} parent=0 // pred_check_branch
    %19 = sbr.rel (0) target = $region21
  $region20: #{unet_forward.25} parent=0 // pred_region
    _
  $region21: #{unet_forward.25} parent=0 // pred_fallthru
    _
  %v21 = vld [vmem:[%s0] sm:$0xff]
  %v22 = vld [vmem:[%s0 + $0x8] sm:$0xff]
  %v23 = vld [vmem:[%s0 + $0x10] sm:$0xf]
  %v24 = vld [vmem:[%s0 + $0x14] sm:$0xff]
  %v25 = vld [vmem:[%s0 + $0x1c] sm:$0xff]
  %v26 = vld [vmem:[%s0 + $0x24] sm:$0xf]
  %v27 = vld [vmem:[%s1] sm:$0xff]
  %v28 = vld [vmem:[%s1 + $0x8] sm:$0xff]
  %v29 = vld [vmem:[%s1 + $0x10] sm:$0xff]
  %v30 = vld [vmem:[%s1 + $0x18] sm:$0xff]
  %v31 = vld [vmem:[%s1 + $0x20] sm:$0xff]
  %v32 = vld [vmem:[%s1 + $0x28] sm:$0xff]
  %v33 = vld [vmem:[%s1 + $0x30] sm:$0xff]
  %v34 = vld [vmem:[%s1 + $0x38] sm:$0xff]
  %v35 = vld [vmem:[%s1 + $0x40] sm:$0xff]
  %v36 = vld [vmem:[%s1 + $0x48] sm:$0xff]
  %v37 = vld [vmem:[%s1 + $0x50] sm:$0xff]
  %v38 = vld [vmem:[%s1 + $0x58] sm:$0xff]
  %v39 = vld [vmem:[%s1 + $0x60] sm:$0xff]
  %v40 = vld [vmem:[%s1 + $0x68] sm:$0xff]
  %v41 = vld [vmem:[%s1 + $0x70] sm:$0xff]
  %v42 = vld [vmem:[%s1 + $0x78] sm:$0xff]
  %v43 = vld [vmem:[%s1 + $0x80] sm:$0xff]
  %v44 = vld [vmem:[%s1 + $0x88] sm:$0xff]
  %v45 = vld [vmem:[%s1 + $0x90] sm:$0xff]
  %v46 = vld [vmem:[%s1 + $0x98] sm:$0xff]
  %v47 = vld [vmem:[%s1 + $0xa0] sm:$0xff]
  %v48 = vld [vmem:[%s1 + $0xa8] sm:$0xff]
  %v49 = vld [vmem:[%s1 + $0xb0] sm:$0xff]
  %v50 = vld [vmem:[%s1 + $0xb8] sm:$0xff]
  %v51 = vld [vmem:[%s1 + $0xc0] sm:$0xff]
  %v52 = vld [vmem:[%s1 + $0xc8] sm:$0xff]
  %v53 = vld [vmem:[%s1 + $0xd0] sm:$0xff]
  %v54 = vld [vmem:[%s1 + $0xd8] sm:$0xff]
  %v55 = vld [vmem:[%s1 + $0xe0] sm:$0xff]
  %v56 = vld [vmem:[%s1 + $0xe8] sm:$0xff]
  %v57 = vld [vmem:[%s1 + $0xf0] sm:$0xff]
  %v58 = vld [vmem:[%s1 + $0xf8] sm:$0xff]
  %v59 = vld [vmem:[%s1 + $0x100] sm:$0xff]
  %v60 = vld [vmem:[%s1 + $0x108] sm:$0xff]
  %v61 = vld [vmem:[%s1 + $0x110] sm:$0xff]
  %v62 = vld [vmem:[%s1 + $0x118] sm:$0xff]
  %v63 = vld [vmem:[%s1 + $0x120] sm:$0xff]
  %v64 = vld [vmem:[%s1 + $0x128] sm:$0xff]
  %v65 = vld [vmem:[%s1 + $0x130] sm:$0xff]
  %v66 = vld [vmem:[%s1 + $0x138] sm:$0xff]
  %v67 = vld [vmem:[%s1 + $0x140] sm:$0xff]
  %v68 = vld [vmem:[%s1 + $0x148] sm:$0xff]
  %v69 = vld [vmem:[%s1 + $0x150] sm:$0xff]
  %v70 = vld [vmem:[%s1 + $0x158] sm:$0xff]
  %v71 = vld [vmem:[%s1 + $0x160] sm:$0xff]
  %v72 = vld [vmem:[%s1 + $0x168] sm:$0xff]
  %v73 = vld [vmem:[%s1 + $0x170] sm:$0xff]
  %v74 = vld [vmem:[%s1 + $0x178] sm:$0xff]
  %v75 = vld [vmem:[%s1 + $0x180] sm:$0xff]
  %v76 = vld [vmem:[%s1 + $0x188] sm:$0xff]
  %v77 = vld [vmem:[%s1 + $0x190] sm:$0xff]
  %v78 = vld [vmem:[%s1 + $0x198] sm:$0xff]
  %v79 = vld [vmem:[%s1 + $0x1a0] sm:$0xff]
  %v80 = vld [vmem:[%s1 + $0x1a8] sm:$0xff]
  %v81 = vld [vmem:[%s1 + $0x1b0] sm:$0xff]
  %v82 = vld [vmem:[%s1 + $0x1b8] sm:$0xff]
  %v83 = vld [vmem:[%s1 + $0x1c0] sm:$0xff]
  %v84 = vld [vmem:[%s1 + $0x1c8] sm:$0xff]
  %v85 = vld [vmem:[%s1 + $0x1d0] sm:$0xff]
  %v86 = vld [vmem:[%s1 + $0x1d8] sm:$0xff]
  %v87 = vld [vmem:[%s1 + $0x1e0] sm:$0xff]
  %v88 = vld [vmem:[%s1 + $0x1e8] sm:$0xff]
  %v89 = vld [vmem:[%s1 + $0x1f0] sm:$0xff]
  %v90 = vld [vmem:[%s1 + $0x1f8] sm:$0xff]
  %v91 = vld [vmem:[%s1 + $0x200] sm:$0xff]
  %v92 = vld [vmem:[%s1 + $0x208] sm:$0xff]
  %v93 = vld [vmem:[%s1 + $0x210] sm:$0xff]
  %v94 = vld [vmem:[%s1 + $0x218] sm:$0xff]
  %v95 = vld [vmem:[%s1 + $0x220] sm:$0xff]
  %v96 = vld [vmem:[%s1 + $0x228] sm:$0xff]
  %v97 = vld [vmem:[%s1 + $0x230] sm:$0xff]
  %v98 = vld [vmem:[%s1 + $0x238] sm:$0xff]
  %v105 = vunpack.c.l.b16 %v21
  %v106 = vunpack.c.h.b16 %v21
  %v107 = vunpack.c.l.b16 %v22
  %v108 = vunpack.c.h.b16 %v22
  %v109 = vunpack.c.l.b16 %v23
  %v110 = vunpack.c.l.b16 %v24
  %v111 = vunpack.c.h.b16 %v24
  %v112 = vunpack.c.l.b16 %v25
  %v113 = vunpack.c.h.b16 %v25
  %v114 = vunpack.c.l.b16 %v26
  %v115 = vpack.c.b16 %v110, %v105
  %v116 = vpack.c.b16 %v111, %v106
  %v117 = vpack.c.b16 %v112, %v107
  %v118 = vpack.c.b16 %v113, %v108
  %v119 = vpack.c.b16 %v114, %v109
  %v196 = vunpack.c.l.b16 %v27
  %v197 = vunpack.c.h.b16 %v27
  %v198 = vunpack.c.l.b16 %v28
  %v199 = vunpack.c.h.b16 %v28
  %v200 = vunpack.c.l.b16 %v29
  %v201 = vunpack.c.h.b16 %v29
  %v202 = vunpack.c.l.b16 %v30
  %v203 = vunpack.c.h.b16 %v30
  %v204 = vunpack.c.l.b16 %v31
  %v205 = vunpack.c.h.b16 %v31
  %v206 = vunpack.c.l.b16 %v32
  %v207 = vunpack.c.h.b16 %v32
  %v208 = vunpack.c.l.b16 %v33
  %v209 = vunpack.c.h.b16 %v33
  %v210 = vunpack.c.l.b16 %v34
  %v211 = vunpack.c.h.b16 %v34
  %v212 = vunpack.c.l.b16 %v35
  %v213 = vunpack.c.h.b16 %v35
  %v214 = vunpack.c.l.b16 %v36
  %v215 = vunpack.c.h.b16 %v36
  %v216 = vunpack.c.l.b16 %v37
  %v217 = vunpack.c.h.b16 %v37
  %v218 = vunpack.c.l.b16 %v38
  %v219 = vunpack.c.h.b16 %v38
  %v220 = vunpack.c.l.b16 %v39
  %v221 = vunpack.c.h.b16 %v39
  %v222 = vunpack.c.l.b16 %v40
  %v223 = vunpack.c.h.b16 %v40
  %v224 = vunpack.c.l.b16 %v41
  %v225 = vunpack.c.h.b16 %v41
  %v226 = vunpack.c.l.b16 %v42
  %v227 = vunpack.c.h.b16 %v42
  %v228 = vunpack.c.l.b16 %v43
  %v229 = vunpack.c.h.b16 %v43
  %v230 = vunpack.c.l.b16 %v44
  %v231 = vunpack.c.h.b16 %v44
  %v232 = vunpack.c.l.b16 %v45
  %v233 = vunpack.c.h.b16 %v45
  %v234 = vunpack.c.l.b16 %v46
  %v235 = vunpack.c.h.b16 %v46
  %v236 = vunpack.c.l.b16 %v47
  %v237 = vunpack.c.h.b16 %v47
  %v238 = vunpack.c.l.b16 %v48
  %v239 = vunpack.c.h.b16 %v48
  %v240 = vunpack.c.l.b16 %v49
  %v241 = vunpack.c.h.b16 %v49
  %v242 = vunpack.c.l.b16 %v50
  %v243 = vunpack.c.h.b16 %v50
  %v244 = vunpack.c.l.b16 %v51
  %v245 = vunpack.c.h.b16 %v51
  %v246 = vunpack.c.l.b16 %v52
  %v247 = vunpack.c.h.b16 %v52
  %v248 = vunpack.c.l.b16 %v53
  %v249 = vunpack.c.h.b16 %v53
  %v250 = vunpack.c.l.b16 %v54
  %v251 = vunpack.c.h.b16 %v54
  %v252 = vunpack.c.l.b16 %v55
  %v253 = vunpack.c.h.b16 %v55
  %v254 = vunpack.c.l.b16 %v56
  %v255 = vunpack.c.h.b16 %v56
  %v256 = vunpack.c.l.b16 %v57
  %v257 = vunpack.c.h.b16 %v57
  %v258 = vunpack.c.l.b16 %v58
  %v259 = vunpack.c.h.b16 %v58
  %v260 = vunpack.c.l.b16 %v59
  %v261 = vunpack.c.h.b16 %v59
  %v262 = vunpack.c.l.b16 %v60
  %v263 = vunpack.c.h.b16 %v60
  %v264 = vunpack.c.l.b16 %v61
  %v265 = vunpack.c.h.b16 %v61
  %v266 = vunpack.c.l.b16 %v62
  %v267 = vunpack.c.h.b16 %v62
  %v268 = vunpack.c.l.b16 %v63
  %v269 = vunpack.c.h.b16 %v63
  %v270 = vunpack.c.l.b16 %v64
  %v271 = vunpack.c.h.b16 %v64
  %v272 = vunpack.c.l.b16 %v65
  %v273 = vunpack.c.h.b16 %v65
  %v274 = vunpack.c.l.b16 %v66
  %v275 = vunpack.c.h.b16 %v66
  %v276 = vunpack.c.l.b16 %v67
  %v277 = vunpack.c.h.b16 %v67
  %v278 = vunpack.c.l.b16 %v68
  %v279 = vunpack.c.h.b16 %v68
  %v280 = vunpack.c.l.b16 %v69
  %v281 = vunpack.c.h.b16 %v69
  %v282 = vunpack.c.l.b16 %v70
  %v283 = vunpack.c.h.b16 %v70
  %v284 = vunpack.c.l.b16 %v71
  %v285 = vunpack.c.h.b16 %v71
  %v286 = vunpack.c.l.b16 %v72
  %v287 = vunpack.c.h.b16 %v72
  %v288 = vunpack.c.l.b16 %v73
  %v289 = vunpack.c.h.b16 %v73
  %v290 = vunpack.c.l.b16 %v74
  %v291 = vunpack.c.h.b16 %v74
  %v292 = vunpack.c.l.b16 %v75
  %v293 = vunpack.c.h.b16 %v75
  %v294 = vunpack.c.l.b16 %v76
  %v295 = vunpack.c.h.b16 %v76
  %v296 = vunpack.c.l.b16 %v77
  %v297 = vunpack.c.h.b16 %v77
  %v298 = vunpack.c.l.b16 %v78
  %v299 = vunpack.c.h.b16 %v78
  %v300 = vunpack.c.l.b16 %v79
  %v301 = vunpack.c.h.b16 %v79
  %v302 = vunpack.c.l.b16 %v80
  %v303 = vunpack.c.h.b16 %v80
  %v304 = vunpack.c.l.b16 %v81
  %v305 = vunpack.c.h.b16 %v81
  %v306 = vunpack.c.l.b16 %v82
  %v307 = vunpack.c.h.b16 %v82
  %v308 = vunpack.c.l.b16 %v83
  %v309 = vunpack.c.h.b16 %v83
  %v310 = vunpack.c.l.b16 %v84
  %v311 = vunpack.c.h.b16 %v84
  %v312 = vunpack.c.l.b16 %v85
  %v313 = vunpack.c.h.b16 %v85
  %v314 = vunpack.c.l.b16 %v86
  %v315 = vunpack.c.h.b16 %v86
  %v316 = vunpack.c.l.b16 %v87
  %v317 = vunpack.c.h.b16 %v87
  %v318 = vunpack.c.l.b16 %v88
  %v319 = vunpack.c.h.b16 %v88
  %v320 = vunpack.c.l.b16 %v89
  %v321 = vunpack.c.h.b16 %v89
  %v322 = vunpack.c.l.b16 %v90
  %v323 = vunpack.c.h.b16 %v90
  %v324 = vunpack.c.l.b16 %v91
  %v325 = vunpack.c.h.b16 %v91
  %v326 = vunpack.c.l.b16 %v92
  %v327 = vunpack.c.h.b16 %v92
  %v328 = vunpack.c.l.b16 %v93
  %v329 = vunpack.c.h.b16 %v93
  %v330 = vunpack.c.l.b16 %v94
  %v331 = vunpack.c.h.b16 %v94
  %v332 = vunpack.c.l.b16 %v95
  %v333 = vunpack.c.h.b16 %v95
  %v334 = vunpack.c.l.b16 %v96
  %v335 = vunpack.c.h.b16 %v96
  %v336 = vunpack.c.l.b16 %v97
  %v337 = vunpack.c.h.b16 %v97
  %v338 = vunpack.c.l.b16 %v98
  %v339 = vunpack.c.h.b16 %v98
  %v340 = vpack.c.b16 %v198, %v196
  %v341 = vpack.c.b16 %v199, %v197
  %v342 = vpack.c.b16 %v202, %v200
  %v343 = vpack.c.b16 %v203, %v201
  %v344 = vpack.c.b16 %v206, %v204
  %v345 = vpack.c.b16 %v207, %v205
  %v346 = vpack.c.b16 %v210, %v208
  %v347 = vpack.c.b16 %v211, %v209
  %v348 = vpack.c.b16 %v214, %v212
  %v349 = vpack.c.b16 %v215, %v213
  %v350 = vpack.c.b16 %v218, %v216
  %v351 = vpack.c.b16 %v219, %v217
  %v352 = vpack.c.b16 %v222, %v220
  %v353 = vpack.c.b16 %v223, %v221
  %v354 = vpack.c.b16 %v226, %v224
  %v355 = vpack.c.b16 %v227, %v225
  %v356 = vpack.c.b16 %v230, %v228
  %v357 = vpack.c.b16 %v231, %v229
  %v358 = vpack.c.b16 %v234, %v232
  %v359 = vpack.c.b16 %v235, %v233
  %v360 = vpack.c.b16 %v238, %v236
  %v361 = vpack.c.b16 %v239, %v237
  %v362 = vpack.c.b16 %v242, %v240
  %v363 = vpack.c.b16 %v243, %v241
  %v364 = vpack.c.b16 %v246, %v244
  %v365 = vpack.c.b16 %v247, %v245
  %v366 = vpack.c.b16 %v250, %v248
  %v367 = vpack.c.b16 %v251, %v249
  %v368 = vpack.c.b16 %v254, %v252
  %v369 = vpack.c.b16 %v255, %v253
  %v370 = vpack.c.b16 %v258, %v256
  %v371 = vpack.c.b16 %v259, %v257
  %v372 = vpack.c.b16 %v262, %v260
  %v373 = vpack.c.b16 %v263, %v261
  %v374 = vpack.c.b16 %v266, %v264
  %v375 = vpack.c.b16 %v267, %v265
  %v376 = vpack.c.b16 %v270, %v268
  %v377 = vpack.c.b16 %v271, %v269
  %v378 = vpack.c.b16 %v274, %v272
  %v379 = vpack.c.b16 %v275, %v273
  %v380 = vpack.c.b16 %v278, %v276
  %v381 = vpack.c.b16 %v279, %v277
  %v382 = vpack.c.b16 %v282, %v280
  %v383 = vpack.c.b16 %v283, %v281
  %v384 = vpack.c.b16 %v286, %v284
  %v385 = vpack.c.b16 %v287, %v285
  %v386 = vpack.c.b16 %v290, %v288
  %v387 = vpack.c.b16 %v291, %v289
  %v388 = vpack.c.b16 %v294, %v292
  %v389 = vpack.c.b16 %v295, %v293
  %v390 = vpack.c.b16 %v298, %v296
  %v391 = vpack.c.b16 %v299, %v297
  %v392 = vpack.c.b16 %v302, %v300
  %v393 = vpack.c.b16 %v303, %v301
  %v394 = vpack.c.b16 %v306, %v304
  %v395 = vpack.c.b16 %v307, %v305
  %v396 = vpack.c.b16 %v310, %v308
  %v397 = vpack.c.b16 %v311, %v309
  %v398 = vpack.c.b16 %v314, %v312
  %v399 = vpack.c.b16 %v315, %v313
  %v400 = vpack.c.b16 %v318, %v316
  %v401 = vpack.c.b16 %v319, %v317
  %v402 = vpack.c.b16 %v322, %v320
  %v403 = vpack.c.b16 %v323, %v321
  %v404 = vpack.c.b16 %v326, %v324
  %v405 = vpack.c.b16 %v327, %v325
  %v406 = vpack.c.b16 %v330, %v328
  %v407 = vpack.c.b16 %v331, %v329
  %v408 = vpack.c.b16 %v334, %v332
  %v409 = vpack.c.b16 %v335, %v333
  %v410 = vpack.c.b16 %v338, %v336
  %v411 = vpack.c.b16 %v339, %v337
  %vm484 = vcmask 523264
  %v486 = vsel %vm484, %v119, 0
  %488 = vmatpush.bf16.msra.mxu0 %v354
  %489 = vmatpush.bf16.msra.mxu0 %v352
  %490 = vmatpush.bf16.msra.mxu0 %v350
  %491 = vmatpush.bf16.msra.mxu0 %v348
  %492 = vmatpush.bf16.msra.mxu0 %v346
  %493 = vmatpush.bf16.msra.mxu0 %v344
  %494 = vmatpush.bf16.msra.mxu0 %v342
  %495 = vmatpush.bf16.msra.mxu0 %v340
  %496 = vmatmul.bf16.gmra.mxu0 %v115
  %v497 = vpop.f32.mrf.mxu0
  %v498 = vadd.f32 0.0, %v497
  %v499 = vpop.f32.mrf.mxu0
  %v500 = vadd.f32 0.0, %v499
  %501 = vdwg.mxu0
  %502 = vmatpush.bf16.msra.mxu0 %v370
  %503 = vmatpush.bf16.msra.mxu0 %v368
  %504 = vmatpush.bf16.msra.mxu0 %v366
  %505 = vmatpush.bf16.msra.mxu0 %v364
  %506 = vmatpush.bf16.msra.mxu0 %v362
  %507 = vmatpush.bf16.msra.mxu0 %v360
  %508 = vmatpush.bf16.msra.mxu0 %v358
  %509 = vmatpush.bf16.msra.mxu0 %v356
  %510 = vmatmul.bf16.gmra.mxu0 %v116
  %v511 = vpop.f32.mrf.mxu0
  %v512 = vadd.f32 %v498, %v511
  %v513 = vpop.f32.mrf.mxu0
  %v514 = vadd.f32 %v500, %v513
  %515 = vdwg.mxu0
  %516 = vmatpush.bf16.msra.mxu0 %v386
  %517 = vmatpush.bf16.msra.mxu0 %v384
  %518 = vmatpush.bf16.msra.mxu0 %v382
  %519 = vmatpush.bf16.msra.mxu0 %v380
  %520 = vmatpush.bf16.msra.mxu0 %v378
  %521 = vmatpush.bf16.msra.mxu0 %v376
  %522 = vmatpush.bf16.msra.mxu0 %v374
  %523 = vmatpush.bf16.msra.mxu0 %v372
  %524 = vmatmul.bf16.gmra.mxu0 %v117
  %v525 = vpop.f32.mrf.mxu0
  %v526 = vadd.f32 %v512, %v525
  %v527 = vpop.f32.mrf.mxu0
  %v528 = vadd.f32 %v514, %v527
  %529 = vdwg.mxu0
  %530 = vmatpush.bf16.msra.mxu0 %v402
  %531 = vmatpush.bf16.msra.mxu0 %v400
  %532 = vmatpush.bf16.msra.mxu0 %v398
  %533 = vmatpush.bf16.msra.mxu0 %v396
  %534 = vmatpush.bf16.msra.mxu0 %v394
  %535 = vmatpush.bf16.msra.mxu0 %v392
  %536 = vmatpush.bf16.msra.mxu0 %v390
  %537 = vmatpush.bf16.msra.mxu0 %v388
  %538 = vmatmul.bf16.gmra.mxu0 %v118
  %v539 = vpop.f32.mrf.mxu0
  %v540 = vadd.f32 %v526, %v539
  %v541 = vpop.f32.mrf.mxu0
  %v542 = vadd.f32 %v528, %v541
  %543 = vdwg.mxu0
  %544 = vmatpush.bf16.msra.mxu0 0
  %545 = vmatpush.bf16.msra.mxu0 0
  %546 = vmatpush.bf16.msra.mxu0 0
  %547 = vmatpush.bf16.msra.mxu0 0
  %548 = vmatpush.bf16.msra.mxu0 %v410
  %549 = vmatpush.bf16.msra.mxu0 %v408
  %550 = vmatpush.bf16.msra.mxu0 %v406
  %551 = vmatpush.bf16.msra.mxu0 %v404
  %552 = vmatmul.bf16.gmra.mxu0 %v486
  %v553 = vpop.f32.mrf.mxu0
  %v554 = vadd.f32 %v540, %v553
  %v555 = vpop.f32.mrf.mxu0
  %v556 = vadd.f32 %v542, %v555
  %557 = vdwg.mxu0
  %558 = vmatpush.bf16.msra.mxu0 %v355
  %559 = vmatpush.bf16.msra.mxu0 %v353
  %560 = vmatpush.bf16.msra.mxu0 %v351
  %561 = vmatpush.bf16.msra.mxu0 %v349
  %562 = vmatpush.bf16.msra.mxu0 %v347
  %563 = vmatpush.bf16.msra.mxu0 %v345
  %564 = vmatpush.bf16.msra.mxu0 %v343
  %565 = vmatpush.bf16.msra.mxu0 %v341
  %566 = vmatmul.bf16.gmra.mxu0 %v115
  %v567 = vpop.f32.mrf.mxu0
  %v568 = vadd.f32 0.0, %v567
  %v569 = vpop.f32.mrf.mxu0
  %v570 = vadd.f32 0.0, %v569
  %571 = vdwg.mxu0
  %572 = vmatpush.bf16.msra.mxu0 %v371
  %573 = vmatpush.bf16.msra.mxu0 %v369
  %574 = vmatpush.bf16.msra.mxu0 %v367
  %575 = vmatpush.bf16.msra.mxu0 %v365
  %576 = vmatpush.bf16.msra.mxu0 %v363
  %577 = vmatpush.bf16.msra.mxu0 %v361
  %578 = vmatpush.bf16.msra.mxu0 %v359
  %579 = vmatpush.bf16.msra.mxu0 %v357
  %580 = vmatmul.bf16.gmra.mxu0 %v116
  %v581 = vpop.f32.mrf.mxu0
  %v582 = vadd.f32 %v568, %v581
  %v583 = vpop.f32.mrf.mxu0
  %v584 = vadd.f32 %v570, %v583
  %585 = vdwg.mxu0
  %586 = vmatpush.bf16.msra.mxu0 %v387
  %587 = vmatpush.bf16.msra.mxu0 %v385
  %588 = vmatpush.bf16.msra.mxu0 %v383
  %589 = vmatpush.bf16.msra.mxu0 %v381
  %590 = vmatpush.bf16.msra.mxu0 %v379
  %591 = vmatpush.bf16.msra.mxu0 %v377
  %592 = vmatpush.bf16.msra.mxu0 %v375
  %593 = vmatpush.bf16.msra.mxu0 %v373
  %594 = vmatmul.bf16.gmra.mxu0 %v117
  %v595 = vpop.f32.mrf.mxu0
  %v596 = vadd.f32 %v582, %v595
  %v597 = vpop.f32.mrf.mxu0
  %v598 = vadd.f32 %v584, %v597
  %599 = vdwg.mxu0
  %600 = vmatpush.bf16.msra.mxu0 %v403
  %601 = vmatpush.bf16.msra.mxu0 %v401
  %602 = vmatpush.bf16.msra.mxu0 %v399
  %603 = vmatpush.bf16.msra.mxu0 %v397
  %604 = vmatpush.bf16.msra.mxu0 %v395
  %605 = vmatpush.bf16.msra.mxu0 %v393
  %606 = vmatpush.bf16.msra.mxu0 %v391
  %607 = vmatpush.bf16.msra.mxu0 %v389
  %608 = vmatmul.bf16.gmra.mxu0 %v118
  %v609 = vpop.f32.mrf.mxu0
  %v610 = vadd.f32 %v596, %v609
  %v611 = vpop.f32.mrf.mxu0
  %v612 = vadd.f32 %v598, %v611
  %613 = vdwg.mxu0
  %614 = vmatpush.bf16.msra.mxu0 0
  %615 = vmatpush.bf16.msra.mxu0 0
  %616 = vmatpush.bf16.msra.mxu0 0
  %617 = vmatpush.bf16.msra.mxu0 0
  %618 = vmatpush.bf16.msra.mxu0 %v411
  %619 = vmatpush.bf16.msra.mxu0 %v409
  %620 = vmatpush.bf16.msra.mxu0 %v407
  %621 = vmatpush.bf16.msra.mxu0 %v405
  %622 = vmatmul.bf16.gmra.mxu0 %v486
  %v623 = vpop.f32.mrf.mxu0
  %v624 = vadd.f32 %v610, %v623
  %v625 = vpop.f32.mrf.mxu0
  %v626 = vadd.f32 %v612, %v625
  %627 = vdwg.mxu0
  %v628 = vadd.f32 %v554, %v556
  %v629 = vrot.slane %v628, 4
  %v630 = vadd.f32 %v628, %v629
  %v631 = vrot.slane %v630, 2
  %v632 = vadd.f32 %v630, %v631
  %v633 = vrot.slane %v632, 1
  %v634 = vadd.f32 %v632, %v633
  %v635 = vadd.f32 %v624, %v626
  %v636 = vrot.slane %v635, 4
  %v637 = vadd.f32 %v635, %v636
  %v638 = vrot.slane %v637, 2
  %v639 = vadd.f32 %v637, %v638
  %v640 = vrot.slane %v639, 1
  %v641 = vadd.f32 %v639, %v640
  %v642 = vmul.f32 %v634, 0.5
  %v643 = vmul.f32 %v641, 0.5
  %v644 = vlaneseq
  %v645 = vshrl.u32 %v644, 7
  %v646 = vadd.s32 %v645, 8
  %vm647 = vcmp.lt.s32.totalorder %v645, 2
  %vm648 = vcmp.lt.s32.totalorder %v646, 2
  %v649 = vsub.f32 %v554, %v642
  %v650 = vsub.f32 %v624, %v643
  %v651 = vsub.f32 %v556, %v642
  %v652 = vsub.f32 %v626, %v643
  %v653 = vsel %vm647, %v649, 0.0
  %v654 = vsel %vm647, %v650, 0.0
  %v655 = vsel %vm648, %v651, 0.0
  %v656 = vsel %vm648, %v652, 0.0
  %v657 = vmul.f32 %v653, %v653
  %v658 = vmul.f32 %v654, %v654
  %v659 = vmul.f32 %v655, %v655
  %v660 = vmul.f32 %v656, %v656
  %v661 = vadd.f32 %v657, %v659
  %v662 = vrot.slane %v661, 4
  %v663 = vadd.f32 %v661, %v662
  %v664 = vrot.slane %v663, 2
  %v665 = vadd.f32 %v663, %v664
  %v666 = vrot.slane %v665, 1
  %v667 = vadd.f32 %v665, %v666
  %v668 = vadd.f32 %v658, %v660
  %v669 = vrot.slane %v668, 4
  %v670 = vadd.f32 %v668, %v669
  %v671 = vrot.slane %v670, 2
  %v672 = vadd.f32 %v670, %v671
  %v673 = vrot.slane %v672, 1
  %v674 = vadd.f32 %v672, %v673
  %v675 = vmul.f32 %v667, 0.5
  %v676 = vmul.f32 %v674, 0.5
  %v677 = vadd.f32 %v675, 1e-05
  %v678 = vadd.f32 %v676, 1e-05
  %v679 = vrsqrt.pop %v677
  %v680 = vmul.f32 %v679, %v677
  %v681 = vmul.f32 %v680, %v679
  %v682 = vmul.f32 0.5, %v681
  %v683 = vsub.f32 1.5, %v682
  %v684 = vmul.f32 %v679, %v683
  %vm685 = vweird.f32 %v677
  %vm686 = vweird.f32 %v679
  %vm687 = vmor %vm685, %vm686
  %v688 = vsel %vm687, %v679, %v684
  %v689 = vrsqrt.pop %v678
  %v690 = vmul.f32 %v689, %v678
  %v691 = vmul.f32 %v690, %v689
  %v692 = vmul.f32 0.5, %v691
  %v693 = vsub.f32 1.5, %v692
  %v694 = vmul.f32 %v689, %v693
  %vm695 = vweird.f32 %v678
  %vm696 = vweird.f32 %v689
  %vm697 = vmor %vm695, %vm696
  %v698 = vsel %vm697, %v689, %v694
  %v699 = vld [vmem:[%s4] sm:$0x3]
  %v700 = vld [vmem:[%s2] sm:$0x3]
  %vm701 = vcmp.gt.f32.partialorder %v699, 0.0
  %v704 = vrot.slane %v698, 7
  %vm705 = vcmask 1040384
  %v706 = vsel %vm705, %v688, %v704
  %v708 = vsel %vm701, %v706, 1.0
  %v709 = vmul.f32 %v700, %v708
  %v710 = vld [vmem:[%s3] sm:$0x3]
  %v713 = vrot.slane %v643, 7
  %v714 = vsel %vm705, %v642, %v713
  %v716 = vsel %vm701, %v714, 0.0
  %v717 = vmul.f32 %v716, %v709
  %v718 = vsub.f32 %v710, %v717
  %v720 = vperm.slane %v709, 0
  %v721 = vperm.slane %v709, 1
  %v724 = vmul.f32 %v554, %v720
  %v725 = vmul.f32 %v624, %v721
  %v726 = vmul.f32 %v556, %v720
  %v727 = vmul.f32 %v626, %v721
  %v729 = vperm.slane %v718, 0
  %v730 = vperm.slane %v718, 1
  %v733 = vadd.f32 %v724, %v729
  %v734 = vadd.f32 %v725, %v730
  %v735 = vadd.f32 %v726, %v729
  %v736 = vadd.f32 %v727, %v730
  %v737 = vmax.f32 %v733, 0.0
  %v738 = vmax.f32 %v734, 0.0
  %v739 = vmax.f32 %v735, 0.0
  %v740 = vmax.f32 %v736, 0.0
  %v741 = vsel %vm701, 1, 0
  %v742 = vperm.slane %v741, 0
  %v743 = vperm.slane %v741, 1
  %vm744 = vcmp.eq.s32.totalorder %v742, 1
  %vm745 = vcmp.eq.s32.totalorder %v743, 1
  %v746 = vsel %vm744, %v737, %v733
  %v747 = vsel %vm745, %v738, %v734
  %v748 = vsel %vm744, %v739, %v735
  %v749 = vsel %vm745, %v740, %v736
  %v750 = vpack.c.bf16 %v747, %v746
  %v751 = vpack.c.bf16 %v749, %v748
  %752 = vst [vmem:[%s5] sm:$0xff] %v750
  %753 = vst [vmem:[%s5 + $0x8] sm:$0xff] %v751
  // Predicated region
  $region22: #{unet_forward.25} parent=0 // pred_check
    _
  $region23: #{unet_forward.25} parent=0 // pred_check_branch
    %755 = sbr.rel (0) target = $region25
  $region24: #{unet_forward.25} parent=0 // pred_region
    _
  $region25: #{unet_forward.25} parent=0 // pred_fallthru
    _
  // Predicated region
  $region26: #{unet_forward.25} parent=0 // pred_check
    _
  $region27: #{unet_forward.25} parent=0 // pred_check_branch
    %757 = sbr.rel (0) target = $region29
  $region28: #{unet_forward.25} parent=0 // pred_region
    _
  $region29: #{unet_forward.25} parent=0 // pred_fallthru
    _

// kernel: tile.23
$region0: #{tile.23}
  #allocation0 [shape = 's32[1]{0}', space=sflag, size = 0x4, scoped, tag = 'scoped memory for tile.23']
  %s0 = inlined_call_operand.vmem [shape: f32[128], index: 0, kind: input, shape index: {}]
  %s1 = inlined_call_operand.vmem [shape: f32[4,128], index: 1, kind: output, shape index: {}]
  // Predicated region
  $region2: #{tile.23} parent=0 // pred_check
    _
  $region3: #{tile.23} parent=0 // pred_check_branch
    %3 = sbr.rel (0) target = $region5
  $region4: #{tile.23} parent=0 // pred_region
    _
  $region5: #{tile.23} parent=0 // pred_fallthru
    _
  %v4 = vld [vmem:[%s0] ss:$0 sm:$0xff]
  %5 = vst [vmem:[%s1] sm:$0xf] %v4

// kernel: unet_forward.26
$region0: #{unet_forward.26}
  #allocation0 [shape = 'u32[]', space=smem, size = 0x4, offset = 0x4, fixed_abs, tag = 'smem constant byte address 0x4 - core index']
  #allocation1 [shape = 'u32[72,128]{1,0:T(1,128)}', space=vmem, size = 0x9000, scoped, tag = 'internal scratch']
  %s0 = inlined_call_operand.vmem [shape: bf16[16,1152], index: 0, kind: input, shape index: {}]
  %s1 = inlined_call_operand.vmem [shape: bf16[1152,128], index: 1, kind: input, shape index: {}]
  %s2 = inlined_call_operand.vmem [shape: f32[1,128], index: 2, kind: input, shape index: {}]
  %s3 = inlined_call_operand.vmem [shape: f32[1,128], index: 3, kind: input, shape index: {}]
  %s4 = inlined_call_operand.vmem [shape: f32[1,128], index: 4, kind: input, shape index: {}]
  %s5 = inlined_call_operand.vmem [shape: bf16[16,128], index: 5, kind: output, shape index: {}]
  %s6 = sld [smem:[#allocation0]]
  $region30: #{unet_forward.26} parent=0
    _
  %s8 = ssub.s32 1, %s6
  %s9 = scalar_select 0, %s8, %s6
  // Predicated region
  $region2: #{unet_forward.26} parent=0 // pred_check
    _
  $region3: #{unet_forward.26} parent=0 // pred_check_branch
    %11 = sbr.rel (0) target = $region5
  $region4: #{unet_forward.26} parent=0 // pred_region
    _
  $region5: #{unet_forward.26} parent=0 // pred_fallthru
    _
  // Predicated region
  $region6: #{unet_forward.26} parent=0 // pred_check
    _
  $region7: #{unet_forward.26} parent=0 // pred_check_branch
    %13 = sbr.rel (0) target = $region9
  $region8: #{unet_forward.26} parent=0 // pred_region
    _
  $region9: #{unet_forward.26} parent=0 // pred_fallthru
    _
  // Predicated region
  $region10: #{unet_forward.26} parent=0 // pred_check
    _
  $region11: #{unet_forward.26} parent=0 // pred_check_branch
    %15 = sbr.rel (0) target = $region13
  $region12: #{unet_forward.26} parent=0 // pred_region
    _
  $region13: #{unet_forward.26} parent=0 // pred_fallthru
    _
  // Predicated region
  $region14: #{unet_forward.26} parent=0 // pred_check
    _
  $region15: #{unet_forward.26} parent=0 // pred_check_branch
    %17 = sbr.rel (0) target = $region17
  $region16: #{unet_forward.26} parent=0 // pred_region
    _
  $region17: #{unet_forward.26} parent=0 // pred_fallthru
    _
  // Predicated region
  $region18: #{unet_forward.26} parent=0 // pred_check
    _
  $region19: #{unet_forward.26} parent=0 // pred_check_branch
    %19 = sbr.rel (0) target = $region21
  $region20: #{unet_forward.26} parent=0 // pred_region
    _
  $region21: #{unet_forward.26} parent=0 // pred_fallthru
    _
  %v20 = vld [vmem:[%s0] sm:$0xff]
  %v21 = vld [vmem:[%s0 + $0x8] sm:$0xff]
  %v22 = vld [vmem:[%s0 + $0x10] sm:$0xff]
  %v23 = vld [vmem:[%s0 + $0x18] sm:$0xff]
  %v24 = vld [vmem:[%s0 + $0x20] sm:$0xf]
  %v25 = vld [vmem:[%s0 + $0x24] sm:$0xff]
  %v26 = vld [vmem:[%s0 + $0x2c] sm:$0xff]
  %v27 = vld [vmem:[%s0 + $0x34] sm:$0xff]
  %v28 = vld [vmem:[%s0 + $0x3c] sm:$0xff]
  %v29 = vld [vmem:[%s0 + $0x44] sm:$0xf]
  %v30 = vld [vmem:[%s1] sm:$0xf]
  %v31 = vld [vmem:[%s1 + $0x4] sm:$0xf]
  %v32 = vld [vmem:[%s1 + $0x8] sm:$0xf]
  %v33 = vld [vmem:[%s1 + $0xc] sm:$0xf]
  %v34 = vld [vmem:[%s1 + $0x10] sm:$0xf]
  %v35 = vld [vmem:[%s1 + $0x14] sm:$0xf]
  %v36 = vld [vmem:[%s1 + $0x18] sm:$0xf]
  %v37 = vld [vmem:[%s1 + $0x1c] sm:$0xf]
  %v38 = vld [vmem:[%s1 + $0x20] sm:$0xf]
  %v39 = vld [vmem:[%s1 + $0x24] sm:$0xf]
  %v40 = vld [vmem:[%s1 + $0x28] sm:$0xf]
  %v41 = vld [vmem:[%s1 + $0x2c] sm:$0xf]
  %v42 = vld [vmem:[%s1 + $0x30] sm:$0xf]
  %v43 = vld [vmem:[%s1 + $0x34] sm:$0xf]
  %v44 = vld [vmem:[%s1 + $0x38] sm:$0xf]
  %v45 = vld [vmem:[%s1 + $0x3c] sm:$0xf]
  %v46 = vld [vmem:[%s1 + $0x40] sm:$0xf]
  %v47 = vld [vmem:[%s1 + $0x44] sm:$0xf]
  %v48 = vld [vmem:[%s1 + $0x48] sm:$0xf]
  %v49 = vld [vmem:[%s1 + $0x4c] sm:$0xf]
  %v50 = vld [vmem:[%s1 + $0x50] sm:$0xf]
  %v51 = vld [vmem:[%s1 + $0x54] sm:$0xf]
  %v52 = vld [vmem:[%s1 + $0x58] sm:$0xf]
  %v53 = vld [vmem:[%s1 + $0x5c] sm:$0xf]
  %v54 = vld [vmem:[%s1 + $0x60] sm:$0xf]
  %v55 = vld [vmem:[%s1 + $0x64] sm:$0xf]
  %v56 = vld [vmem:[%s1 + $0x68] sm:$0xf]
  %v57 = vld [vmem:[%s1 + $0x6c] sm:$0xf]
  %v58 = vld [vmem:[%s1 + $0x70] sm:$0xf]
  %v59 = vld [vmem:[%s1 + $0x74] sm:$0xf]
  %v60 = vld [vmem:[%s1 + $0x78] sm:$0xf]
  %v61 = vld [vmem:[%s1 + $0x7c] sm:$0xf]
  %v62 = vld [vmem:[%s1 + $0x80] sm:$0xf]
  %v63 = vld [vmem:[%s1 + $0x84] sm:$0xf]
  %v64 = vld [vmem:[%s1 + $0x88] sm:$0xf]
  %v65 = vld [vmem:[%s1 + $0x8c] sm:$0xf]
  %v66 = vld [vmem:[%s1 + $0x90] sm:$0xf]
  %v67 = vld [vmem:[%s1 + $0x94] sm:$0xf]
  %v68 = vld [vmem:[%s1 + $0x98] sm:$0xf]
  %v69 = vld [vmem:[%s1 + $0x9c] sm:$0xf]
  %v70 = vld [vmem:[%s1 + $0xa0] sm:$0xf]
  %v71 = vld [vmem:[%s1 + $0xa4] sm:$0xf]
  %v72 = vld [vmem:[%s1 + $0xa8] sm:$0xf]
  %v73 = vld [vmem:[%s1 + $0xac] sm:$0xf]
  %v74 = vld [vmem:[%s1 + $0xb0] sm:$0xf]
  %v75 = vld [vmem:[%s1 + $0xb4] sm:$0xf]
  %v76 = vld [vmem:[%s1 + $0xb8] sm:$0xf]
  %v77 = vld [vmem:[%s1 + $0xbc] sm:$0xf]
  %v78 = vld [vmem:[%s1 + $0xc0] sm:$0xf]
  %v79 = vld [vmem:[%s1 + $0xc4] sm:$0xf]
  %v80 = vld [vmem:[%s1 + $0xc8] sm:$0xf]
  %v81 = vld [vmem:[%s1 + $0xcc] sm:$0xf]
  %v82 = vld [vmem:[%s1 + $0xd0] sm:$0xf]
  %v83 = vld [vmem:[%s1 + $0xd4] sm:$0xf]
  %v84 = vld [vmem:[%s1 + $0xd8] sm:$0xf]
  %v85 = vld [vmem:[%s1 + $0xdc] sm:$0xf]
  %v86 = vld [vmem:[%s1 + $0xe0] sm:$0xf]
  %v87 = vld [vmem:[%s1 + $0xe4] sm:$0xf]
  %v88 = vld [vmem:[%s1 + $0xe8] sm:$0xf]
  %v89 = vld [vmem:[%s1 + $0xec] sm:$0xf]
  %v90 = vld [vmem:[%s1 + $0xf0] sm:$0xf]
  %v91 = vld [vmem:[%s1 + $0xf4] sm:$0xf]
  %v92 = vld [vmem:[%s1 + $0xf8] sm:$0xf]
  %v93 = vld [vmem:[%s1 + $0xfc] sm:$0xf]
  %v94 = vld [vmem:[%s1 + $0x100] sm:$0xf]
  %v95 = vld [vmem:[%s1 + $0x104] sm:$0xf]
  %v96 = vld [vmem:[%s1 + $0x108] sm:$0xf]
  %v97 = vld [vmem:[%s1 + $0x10c] sm:$0xf]
  %v98 = vld [vmem:[%s1 + $0x110] sm:$0xf]
  %v99 = vld [vmem:[%s1 + $0x114] sm:$0xf]
  %v100 = vld [vmem:[%s1 + $0x118] sm:$0xf]
  %v101 = vld [vmem:[%s1 + $0x11c] sm:$0xf]
  %v102 = vld [vmem:[%s1 + $0x120] sm:$0xf]
  %v103 = vld [vmem:[%s1 + $0x124] sm:$0xf]
  %v104 = vld [vmem:[%s1 + $0x128] sm:$0xf]
  %v105 = vld [vmem:[%s1 + $0x12c] sm:$0xf]
  %v106 = vld [vmem:[%s1 + $0x130] sm:$0xf]
  %v107 = vld [vmem:[%s1 + $0x134] sm:$0xf]
  %v108 = vld [vmem:[%s1 + $0x138] sm:$0xf]
  %v109 = vld [vmem:[%s1 + $0x13c] sm:$0xf]
  %v110 = vld [vmem:[%s1 + $0x140] sm:$0xf]
  %v111 = vld [vmem:[%s1 + $0x144] sm:$0xf]
  %v112 = vld [vmem:[%s1 + $0x148] sm:$0xf]
  %v113 = vld [vmem:[%s1 + $0x14c] sm:$0xf]
  %v114 = vld [vmem:[%s1 + $0x150] sm:$0xf]
  %v115 = vld [vmem:[%s1 + $0x154] sm:$0xf]
  %v116 = vld [vmem:[%s1 + $0x158] sm:$0xf]
  %v117 = vld [vmem:[%s1 + $0x15c] sm:$0xf]
  %v118 = vld [vmem:[%s1 + $0x160] sm:$0xf]
  %v119 = vld [vmem:[%s1 + $0x164] sm:$0xf]
  %v120 = vld [vmem:[%s1 + $0x168] sm:$0xf]
  %v121 = vld [vmem:[%s1 + $0x16c] sm:$0xf]
  %v122 = vld [vmem:[%s1 + $0x170] sm:$0xf]
  %v123 = vld [vmem:[%s1 + $0x174] sm:$0xf]
  %v124 = vld [vmem:[%s1 + $0x178] sm:$0xf]
  %v125 = vld [vmem:[%s1 + $0x17c] sm:$0xf]
  %v126 = vld [vmem:[%s1 + $0x180] sm:$0xf]
  %v127 = vld [vmem:[%s1 + $0x184] sm:$0xf]
  %v128 = vld [vmem:[%s1 + $0x188] sm:$0xf]
  %v129 = vld [vmem:[%s1 + $0x18c] sm:$0xf]
  %v130 = vld [vmem:[%s1 + $0x190] sm:$0xf]
  %v131 = vld [vmem:[%s1 + $0x194] sm:$0xf]
  %v132 = vld [vmem:[%s1 + $0x198] sm:$0xf]
  %v133 = vld [vmem:[%s1 + $0x19c] sm:$0xf]
  %v134 = vld [vmem:[%s1 + $0x1a0] sm:$0xf]
  %v135 = vld [vmem:[%s1 + $0x1a4] sm:$0xf]
  %v136 = vld [vmem:[%s1 + $0x1a8] sm:$0xf]
  %v137 = vld [vmem:[%s1 + $0x1ac] sm:$0xf]
  %v138 = vld [vmem:[%s1 + $0x1b0] sm:$0xf]
  %v139 = vld [vmem:[%s1 + $0x1b4] sm:$0xf]
  %v140 = vld [vmem:[%s1 + $0x1b8] sm:$0xf]
  %v141 = vld [vmem:[%s1 + $0x1bc] sm:$0xf]
  %v142 = vld [vmem:[%s1 + $0x1c0] sm:$0xf]
  %v143 = vld [vmem:[%s1 + $0x1c4] sm:$0xf]
  %v144 = vld [vmem:[%s1 + $0x1c8] sm:$0xf]
  %v145 = vld [vmem:[%s1 + $0x1cc] sm:$0xf]
  %v146 = vld [vmem:[%s1 + $0x1d0] sm:$0xf]
  %v147 = vld [vmem:[%s1 + $0x1d4] sm:$0xf]
  %v148 = vld [vmem:[%s1 + $0x1d8] sm:$0xf]
  %v149 = vld [vmem:[%s1 + $0x1dc] sm:$0xf]
  %v150 = vld [vmem:[%s1 + $0x1e0] sm:$0xf]
  %v151 = vld [vmem:[%s1 + $0x1e4] sm:$0xf]
  %v152 = vld [vmem:[%s1 + $0x1e8] sm:$0xf]
  %v153 = vld [vmem:[%s1 + $0x1ec] sm:$0xf]
  %v154 = vld [vmem:[%s1 + $0x1f0] sm:$0xf]
  %v155 = vld [vmem:[%s1 + $0x1f4] sm:$0xf]
  %v156 = vld [vmem:[%s1 + $0x1f8] sm:$0xf]
  %v157 = vld [vmem:[%s1 + $0x1fc] sm:$0xf]
  %v158 = vld [vmem:[%s1 + $0x200] sm:$0xf]
  %v159 = vld [vmem:[%s1 + $0x204] sm:$0xf]
  %v160 = vld [vmem:[%s1 + $0x208] sm:$0xf]
  %v161 = vld [vmem:[%s1 + $0x20c] sm:$0xf]
  %v162 = vld [vmem:[%s1 + $0x210] sm:$0xf]
  %v163 = vld [vmem:[%s1 + $0x214] sm:$0xf]
  %v164 = vld [vmem:[%s1 + $0x218] sm:$0xf]
  %v165 = vld [vmem:[%s1 + $0x21c] sm:$0xf]
  %v166 = vld [vmem:[%s1 + $0x220] sm:$0xf]
  %v167 = vld [vmem:[%s1 + $0x224] sm:$0xf]
  %v168 = vld [vmem:[%s1 + $0x228] sm:$0xf]
  %v169 = vld [vmem:[%s1 + $0x22c] sm:$0xf]
  %v170 = vld [vmem:[%s1 + $0x230] sm:$0xf]
  %v171 = vld [vmem:[%s1 + $0x234] sm:$0xf]
  %v172 = vld [vmem:[%s1 + $0x238] sm:$0xf]
  %v173 = vld [vmem:[%s1 + $0x23c] sm:$0xf]
  %v184 = vunpack.c.l.b16 %v20
  %v185 = vunpack.c.h.b16 %v20
  %v186 = vunpack.c.l.b16 %v21
  %v187 = vunpack.c.h.b16 %v21
  %v188 = vunpack.c.l.b16 %v22
  %v189 = vunpack.c.h.b16 %v22
  %v190 = vunpack.c.l.b16 %v23
  %v191 = vunpack.c.h.b16 %v23
  %v192 = vunpack.c.l.b16 %v24
  %v193 = vunpack.c.l.b16 %v25
  %v194 = vunpack.c.h.b16 %v25
  %v195 = vunpack.c.l.b16 %v26
  %v196 = vunpack.c.h.b16 %v26
  %v197 = vunpack.c.l.b16 %v27
  %v198 = vunpack.c.h.b16 %v27
  %v199 = vunpack.c.l.b16 %v28
  %v200 = vunpack.c.h.b16 %v28
  %v201 = vunpack.c.l.b16 %v29
  %v202 = vpack.c.b16 %v193, %v184
  %v203 = vpack.c.b16 %v194, %v185
  %v204 = vpack.c.b16 %v195, %v186
  %v205 = vpack.c.b16 %v196, %v187
  %v206 = vpack.c.b16 %v197, %v188
  %v207 = vpack.c.b16 %v198, %v189
  %v208 = vpack.c.b16 %v199, %v190
  %v209 = vpack.c.b16 %v200, %v191
  %v210 = vpack.c.b16 %v201, %v192
  %v364 = vunpack.c.l.b16 %v30
  %v365 = vunpack.c.l.b16 %v31
  %v366 = vunpack.c.l.b16 %v32
  %v367 = vunpack.c.l.b16 %v33
  %v368 = vunpack.c.l.b16 %v34
  %v369 = vunpack.c.l.b16 %v35
  %v370 = vunpack.c.l.b16 %v36
  %v371 = vunpack.c.l.b16 %v37
  %v372 = vunpack.c.l.b16 %v38
  %v373 = vunpack.c.l.b16 %v39
  %v374 = vunpack.c.l.b16 %v40
  %v375 = vunpack.c.l.b16 %v41
  %v376 = vunpack.c.l.b16 %v42
  %v377 = vunpack.c.l.b16 %v43
  %v378 = vunpack.c.l.b16 %v44
  %v379 = vunpack.c.l.b16 %v45
  %v380 = vunpack.c.l.b16 %v46
  %v381 = vunpack.c.l.b16 %v47
  %v382 = vunpack.c.l.b16 %v48
  %v383 = vunpack.c.l.b16 %v49
  %v384 = vunpack.c.l.b16 %v50
  %v385 = vunpack.c.l.b16 %v51
  %v386 = vunpack.c.l.b16 %v52
  %v387 = vunpack.c.l.b16 %v53
  %v388 = vunpack.c.l.b16 %v54
  %v389 = vunpack.c.l.b16 %v55
  %v390 = vunpack.c.l.b16 %v56
  %v391 = vunpack.c.l.b16 %v57
  %v392 = vunpack.c.l.b16 %v58
  %v393 = vunpack.c.l.b16 %v59
  %v394 = vunpack.c.l.b16 %v60
  %v395 = vunpack.c.l.b16 %v61
  %v396 = vunpack.c.l.b16 %v62
  %v397 = vunpack.c.l.b16 %v63
  %v398 = vunpack.c.l.b16 %v64
  %v399 = vunpack.c.l.b16 %v65
  %v400 = vunpack.c.l.b16 %v66
  %v401 = vunpack.c.l.b16 %v67
  %v402 = vunpack.c.l.b16 %v68
  %v403 = vunpack.c.l.b16 %v69
  %v404 = vunpack.c.l.b16 %v70
  %v405 = vunpack.c.l.b16 %v71
  %v406 = vunpack.c.l.b16 %v72
  %v407 = vunpack.c.l.b16 %v73
  %v408 = vunpack.c.l.b16 %v74
  %v409 = vunpack.c.l.b16 %v75
  %v410 = vunpack.c.l.b16 %v76
  %v411 = vunpack.c.l.b16 %v77
  %v412 = vunpack.c.l.b16 %v78
  %v413 = vunpack.c.l.b16 %v79
  %v414 = vunpack.c.l.b16 %v80
  %v415 = vunpack.c.l.b16 %v81
  %v416 = vunpack.c.l.b16 %v82
  %v417 = vunpack.c.l.b16 %v83
  %v418 = vunpack.c.l.b16 %v84
  %v419 = vunpack.c.l.b16 %v85
  %v420 = vunpack.c.l.b16 %v86
  %v421 = vunpack.c.l.b16 %v87
  %v422 = vunpack.c.l.b16 %v88
  %v423 = vunpack.c.l.b16 %v89
  %v424 = vunpack.c.l.b16 %v90
  %v425 = vunpack.c.l.b16 %v91
  %v426 = vunpack.c.l.b16 %v92
  %v427 = vunpack.c.l.b16 %v93
  %v428 = vunpack.c.l.b16 %v94
  %v429 = vunpack.c.l.b16 %v95
  %v430 = vunpack.c.l.b16 %v96
  %v431 = vunpack.c.l.b16 %v97
  %v432 = vunpack.c.l.b16 %v98
  %v433 = vunpack.c.l.b16 %v99
  %v434 = vunpack.c.l.b16 %v100
  %v435 = vunpack.c.l.b16 %v101
  %v436 = vunpack.c.l.b16 %v102
  %v437 = vunpack.c.l.b16 %v103
  %v438 = vunpack.c.l.b16 %v104
  %v439 = vunpack.c.l.b16 %v105
  %v440 = vunpack.c.l.b16 %v106
  %v441 = vunpack.c.l.b16 %v107
  %v442 = vunpack.c.l.b16 %v108
  %v443 = vunpack.c.l.b16 %v109
  %v444 = vunpack.c.l.b16 %v110
  %v445 = vunpack.c.l.b16 %v111
  %v446 = vunpack.c.l.b16 %v112
  %v447 = vunpack.c.l.b16 %v113
  %v448 = vunpack.c.l.b16 %v114
  %v449 = vunpack.c.l.b16 %v115
  %v450 = vunpack.c.l.b16 %v116
  %v451 = vunpack.c.l.b16 %v117
  %v452 = vunpack.c.l.b16 %v118
  %v453 = vunpack.c.l.b16 %v119
  %v454 = vunpack.c.l.b16 %v120
  %v455 = vunpack.c.l.b16 %v121
  %v456 = vunpack.c.l.b16 %v122
  %v457 = vunpack.c.l.b16 %v123
  %v458 = vunpack.c.l.b16 %v124
  %v459 = vunpack.c.l.b16 %v125
  %v460 = vunpack.c.l.b16 %v126
  %v461 = vunpack.c.l.b16 %v127
  %v462 = vunpack.c.l.b16 %v128
  %v463 = vunpack.c.l.b16 %v129
  %v464 = vunpack.c.l.b16 %v130
  %v465 = vunpack.c.l.b16 %v131
  %v466 = vunpack.c.l.b16 %v132
  %v467 = vunpack.c.l.b16 %v133
  %v468 = vunpack.c.l.b16 %v134
  %v469 = vunpack.c.l.b16 %v135
  %v470 = vunpack.c.l.b16 %v136
  %v471 = vunpack.c.l.b16 %v137
  %v472 = vunpack.c.l.b16 %v138
  %v473 = vunpack.c.l.b16 %v139
  %v474 = vunpack.c.l.b16 %v140
  %v475 = vunpack.c.l.b16 %v141
  %v476 = vunpack.c.l.b16 %v142
  %v477 = vunpack.c.l.b16 %v143
  %v478 = vunpack.c.l.b16 %v144
  %v479 = vunpack.c.l.b16 %v145
  %v480 = vunpack.c.l.b16 %v146
  %v481 = vunpack.c.l.b16 %v147
  %v482 = vunpack.c.l.b16 %v148
  %v483 = vunpack.c.l.b16 %v149
  %v484 = vunpack.c.l.b16 %v150
  %v485 = vunpack.c.l.b16 %v151
  %v486 = vunpack.c.l.b16 %v152
  %v487 = vunpack.c.l.b16 %v153
  %v488 = vunpack.c.l.b16 %v154
  %v489 = vunpack.c.l.b16 %v155
  %v490 = vunpack.c.l.b16 %v156
  %v491 = vunpack.c.l.b16 %v157
  %v492 = vunpack.c.l.b16 %v158
  %v493 = vunpack.c.l.b16 %v159
  %v494 = vunpack.c.l.b16 %v160
  %v495 = vunpack.c.l.b16 %v161
  %v496 = vunpack.c.l.b16 %v162
  %v497 = vunpack.c.l.b16 %v163
  %v498 = vunpack.c.l.b16 %v164
  %v499 = vunpack.c.l.b16 %v165
  %v500 = vunpack.c.l.b16 %v166
  %v501 = vunpack.c.l.b16 %v167
  %v502 = vunpack.c.l.b16 %v168
  %v503 = vunpack.c.l.b16 %v169
  %v504 = vunpack.c.l.b16 %v170
  %v505 = vunpack.c.l.b16 %v171
  %v506 = vunpack.c.l.b16 %v172
  %v507 = vunpack.c.l.b16 %v173
  %v508 = vpack.c.b16 %v365, %v364
  %v509 = vpack.c.b16 %v367, %v366
  %v510 = vpack.c.b16 %v369, %v368
  %v511 = vpack.c.b16 %v371, %v370
  %v512 = vpack.c.b16 %v373, %v372
  %v513 = vpack.c.b16 %v375, %v374
  %v514 = vpack.c.b16 %v377, %v376
  %v515 = vpack.c.b16 %v379, %v378
  %v516 = vpack.c.b16 %v381, %v380
  %v517 = vpack.c.b16 %v383, %v382
  %v518 = vpack.c.b16 %v385, %v384
  %v519 = vpack.c.b16 %v387, %v386
  %v520 = vpack.c.b16 %v389, %v388
  %v521 = vpack.c.b16 %v391, %v390
  %v522 = vpack.c.b16 %v393, %v392
  %v523 = vpack.c.b16 %v395, %v394
  %v524 = vpack.c.b16 %v397, %v396
  %v525 = vpack.c.b16 %v399, %v398
  %v526 = vpack.c.b16 %v401, %v400
  %v527 = vpack.c.b16 %v403, %v402
  %v528 = vpack.c.b16 %v405, %v404
  %v529 = vpack.c.b16 %v407, %v406
  %v530 = vpack.c.b16 %v409, %v408
  %v531 = vpack.c.b16 %v411, %v410
  %v532 = vpack.c.b16 %v413, %v412
  %v533 = vpack.c.b16 %v415, %v414
  %v534 = vpack.c.b16 %v417, %v416
  %v535 = vpack.c.b16 %v419, %v418
  %v536 = vpack.c.b16 %v421, %v420
  %v537 = vpack.c.b16 %v423, %v422
  %v538 = vpack.c.b16 %v425, %v424
  %v539 = vpack.c.b16 %v427, %v426
  %v540 = vpack.c.b16 %v429, %v428
  %v541 = vpack.c.b16 %v431, %v430
  %v542 = vpack.c.b16 %v433, %v432
  %v543 = vpack.c.b16 %v435, %v434
  %v544 = vpack.c.b16 %v437, %v436
  %v545 = vpack.c.b16 %v439, %v438
  %v546 = vpack.c.b16 %v441, %v440
  %v547 = vpack.c.b16 %v443, %v442
  %v548 = vpack.c.b16 %v445, %v444
  %v549 = vpack.c.b16 %v447, %v446
  %v550 = vpack.c.b16 %v449, %v448
  %v551 = vpack.c.b16 %v451, %v450
  %v552 = vpack.c.b16 %v453, %v452
  %v553 = vpack.c.b16 %v455, %v454
  %v554 = vpack.c.b16 %v457, %v456
  %v555 = vpack.c.b16 %v459, %v458
  %v556 = vpack.c.b16 %v461, %v460
  %v557 = vpack.c.b16 %v463, %v462
  %v558 = vpack.c.b16 %v465, %v464
  %v559 = vpack.c.b16 %v467, %v466
  %v560 = vpack.c.b16 %v469, %v468
  %v561 = vpack.c.b16 %v471, %v470
  %v562 = vpack.c.b16 %v473, %v472
  %v563 = vpack.c.b16 %v475, %v474
  %v564 = vpack.c.b16 %v477, %v476
  %v565 = vpack.c.b16 %v479, %v478
  %v566 = vpack.c.b16 %v481, %v480
  %v567 = vpack.c.b16 %v483, %v482
  %v568 = vpack.c.b16 %v485, %v484
  %v569 = vpack.c.b16 %v487, %v486
  %v570 = vpack.c.b16 %v489, %v488
  %v571 = vpack.c.b16 %v491, %v490
  %v572 = vpack.c.b16 %v493, %v492
  %v573 = vpack.c.b16 %v495, %v494
  %v574 = vpack.c.b16 %v497, %v496
  %v575 = vpack.c.b16 %v499, %v498
  %v576 = vpack.c.b16 %v501, %v500
  %v577 = vpack.c.b16 %v503, %v502
  %v578 = vpack.c.b16 %v505, %v504
  %v579 = vpack.c.b16 %v507, %v506
  %652 = vmatpush.bf16.msra.mxu0 %v515
  %653 = vmatpush.bf16.msra.mxu0 %v514
  %654 = vmatpush.bf16.msra.mxu0 %v513
  %655 = vmatpush.bf16.msra.mxu0 %v512
  %656 = vmatpush.bf16.msra.mxu0 %v511
  %657 = vmatpush.bf16.msra.mxu0 %v510
  %658 = vmatpush.bf16.msra.mxu0 %v509
  %659 = vmatpush.bf16.msra.mxu0 %v508
  %660 = vmatmul.bf16.gmra.mxu0 %v202
  %v661 = vpop.f32.mrf.mxu0
  %v662 = vadd.f32 0.0, %v661
  %v663 = vpop.f32.mrf.mxu0
  %v664 = vadd.f32 0.0, %v663
  %665 = vdwg.mxu0
  %666 = vmatpush.bf16.msra.mxu0 %v523
  %667 = vmatpush.bf16.msra.mxu0 %v522
  %668 = vmatpush.bf16.msra.mxu0 %v521
  %669 = vmatpush.bf16.msra.mxu0 %v520
  %670 = vmatpush.bf16.msra.mxu0 %v519
  %671 = vmatpush.bf16.msra.mxu0 %v518
  %672 = vmatpush.bf16.msra.mxu0 %v517
  %673 = vmatpush.bf16.msra.mxu0 %v516
  %674 = vmatmul.bf16.gmra.mxu0 %v203
  %v675 = vpop.f32.mrf.mxu0
  %v676 = vadd.f32 %v662, %v675
  %v677 = vpop.f32.mrf.mxu0
  %v678 = vadd.f32 %v664, %v677
  %679 = vdwg.mxu0
  %680 = vmatpush.bf16.msra.mxu0 %v531
  %681 = vmatpush.bf16.msra.mxu0 %v530
  %682 = vmatpush.bf16.msra.mxu0 %v529
  %683 = vmatpush.bf16.msra.mxu0 %v528
  %684 = vmatpush.bf16.msra.mxu0 %v527
  %685 = vmatpush.bf16.msra.mxu0 %v526
  %686 = vmatpush.bf16.msra.mxu0 %v525
  %687 = vmatpush.bf16.msra.mxu0 %v524
  %688 = vmatmul.bf16.gmra.mxu0 %v204
  %v689 = vpop.f32.mrf.mxu0
  %v690 = vadd.f32 %v676, %v689
  %v691 = vpop.f32.mrf.mxu0
  %v692 = vadd.f32 %v678, %v691
  %693 = vdwg.mxu0
  %694 = vmatpush.bf16.msra.mxu0 %v539
  %695 = vmatpush.bf16.msra.mxu0 %v538
  %696 = vmatpush.bf16.msra.mxu0 %v537
  %697 = vmatpush.bf16.msra.mxu0 %v536
  %698 = vmatpush.bf16.msra.mxu0 %v535
  %699 = vmatpush.bf16.msra.mxu0 %v534
  %700 = vmatpush.bf16.msra.mxu0 %v533
  %701 = vmatpush.bf16.msra.mxu0 %v532
  %702 = vmatmul.bf16.gmra.mxu0 %v205
  %v703 = vpop.f32.mrf.mxu0
  %v704 = vadd.f32 %v690, %v703
  %v705 = vpop.f32.mrf.mxu0
  %v706 = vadd.f32 %v692, %v705
  %707 = vdwg.mxu0
  %708 = vmatpush.bf16.msra.mxu0 %v547
  %709 = vmatpush.bf16.msra.mxu0 %v546
  %710 = vmatpush.bf16.msra.mxu0 %v545
  %711 = vmatpush.bf16.msra.mxu0 %v544
  %712 = vmatpush.bf16.msra.mxu0 %v543
  %713 = vmatpush.bf16.msra.mxu0 %v542
  %714 = vmatpush.bf16.msra.mxu0 %v541
  %715 = vmatpush.bf16.msra.mxu0 %v540
  %716 = vmatmul.bf16.gmra.mxu0 %v206
  %v717 = vpop.f32.mrf.mxu0
  %v718 = vadd.f32 %v704, %v717
  %v719 = vpop.f32.mrf.mxu0
  %v720 = vadd.f32 %v706, %v719
  %721 = vdwg.mxu0
  %722 = vmatpush.bf16.msra.mxu0 %v555
  %723 = vmatpush.bf16.msra.mxu0 %v554
  %724 = vmatpush.bf16.msra.mxu0 %v553
  %725 = vmatpush.bf16.msra.mxu0 %v552
  %726 = vmatpush.bf16.msra.mxu0 %v551
  %727 = vmatpush.bf16.msra.mxu0 %v550
  %728 = vmatpush.bf16.msra.mxu0 %v549
  %729 = vmatpush.bf16.msra.mxu0 %v548
  %730 = vmatmul.bf16.gmra.mxu0 %v207
  %v731 = vpop.f32.mrf.mxu0
  %v732 = vadd.f32 %v718, %v731
  %v733 = vpop.f32.mrf.mxu0
  %v734 = vadd.f32 %v720, %v733
  %735 = vdwg.mxu0
  %736 = vmatpush.bf16.msra.mxu0 %v563
  %737 = vmatpush.bf16.msra.mxu0 %v562
  %738 = vmatpush.bf16.msra.mxu0 %v561
  %739 = vmatpush.bf16.msra.mxu0 %v560
  %740 = vmatpush.bf16.msra.mxu0 %v559
  %741 = vmatpush.bf16.msra.mxu0 %v558
  %742 = vmatpush.bf16.msra.mxu0 %v557
  %743 = vmatpush.bf16.msra.mxu0 %v556
  %744 = vmatmul.bf16.gmra.mxu0 %v208
  %v745 = vpop.f32.mrf.mxu0
  %v746 = vadd.f32 %v732, %v745
  %v747 = vpop.f32.mrf.mxu0
  %v748 = vadd.f32 %v734, %v747
  %749 = vdwg.mxu0
  %750 = vmatpush.bf16.msra.mxu0 %v571
  %751 = vmatpush.bf16.msra.mxu0 %v570
  %752 = vmatpush.bf16.msra.mxu0 %v569
  %753 = vmatpush.bf16.msra.mxu0 %v568
  %754 = vmatpush.bf16.msra.mxu0 %v567
  %755 = vmatpush.bf16.msra.mxu0 %v566
  %756 = vmatpush.bf16.msra.mxu0 %v565
  %757 = vmatpush.bf16.msra.mxu0 %v564
  %758 = vmatmul.bf16.gmra.mxu0 %v209
  %v759 = vpop.f32.mrf.mxu0
  %v760 = vadd.f32 %v746, %v759
  %v761 = vpop.f32.mrf.mxu0
  %v762 = vadd.f32 %v748, %v761
  %763 = vdwg.mxu0
  %764 = vmatpush.bf16.msra.mxu0 %v579
  %765 = vmatpush.bf16.msra.mxu0 %v578
  %766 = vmatpush.bf16.msra.mxu0 %v577
  %767 = vmatpush.bf16.msra.mxu0 %v576
  %768 = vmatpush.bf16.msra.mxu0 %v575
  %769 = vmatpush.bf16.msra.mxu0 %v574
  %770 = vmatpush.bf16.msra.mxu0 %v573
  %771 = vmatpush.bf16.msra.mxu0 %v572
  %772 = vmatmul.bf16.gmra.mxu0 %v210
  %v773 = vpop.f32.mrf.mxu0
  %v774 = vadd.f32 %v760, %v773
  %v775 = vpop.f32.mrf.mxu0
  %v776 = vadd.f32 %v762, %v775
  %777 = vdwg.mxu0
  %v778 = vadd.f32 %v774, %v776
  %v779 = vrot.slane %v778, 4
  %v780 = vadd.f32 %v778, %v779
  %v781 = vrot.slane %v780, 2
  %v782 = vadd.f32 %v780, %v781
  %v783 = vrot.slane %v782, 1
  %v784 = vadd.f32 %v782, %v783
  %v785 = vmul.f32 %v784, 0.5
  %v786 = vlaneseq
  %v787 = vshrl.u32 %v786, 7
  %v788 = vadd.s32 %v787, 8
  %vm789 = vcmp.lt.s32.totalorder %v787, 2
  %vm790 = vcmp.lt.s32.totalorder %v788, 2
  %v791 = vsub.f32 %v774, %v785
  %v792 = vsub.f32 %v776, %v785
  %v793 = vsel %vm789, %v791, 0.0
  %v794 = vsel %vm790, %v792, 0.0
  %v795 = vmul.f32 %v793, %v793
  %v796 = vmul.f32 %v794, %v794
  %v797 = vadd.f32 %v795, %v796
  %v798 = vrot.slane %v797, 4
  %v799 = vadd.f32 %v797, %v798
  %v800 = vrot.slane %v799, 2
  %v801 = vadd.f32 %v799, %v800
  %v802 = vrot.slane %v801, 1
  %v803 = vadd.f32 %v801, %v802
  %v804 = vmul.f32 %v803, 0.5
  %v805 = vadd.f32 %v804, 1e-05
  %v806 = vrsqrt.pop %v805
  %v807 = vmul.f32 %v806, %v805
  %v808 = vmul.f32 %v807, %v806
  %v809 = vmul.f32 0.5, %v808
  %v810 = vsub.f32 1.5, %v809
  %v811 = vmul.f32 %v806, %v810
  %vm812 = vweird.f32 %v805
  %vm813 = vweird.f32 %v806
  %vm814 = vmor %vm812, %vm813
  %v815 = vsel %vm814, %v806, %v811
  %v816 = vld [vmem:[%s4] sm:$0x1]
  %v817 = vld [vmem:[%s2] sm:$0x1]
  %vm818 = vcmp.gt.f32.partialorder %v816, 0.0
  %v819 = vsel %vm818, %v815, 1.0
  %v820 = vmul.f32 %v817, %v819
  %v821 = vld [vmem:[%s3] sm:$0x1]
  %v822 = vsel %vm818, %v785, 0.0
  %v823 = vmul.f32 %v822, %v820
  %v824 = vsub.f32 %v821, %v823
  %v826 = vperm.slane %v820, 0
  %v828 = vmul.f32 %v774, %v826
  %v829 = vmul.f32 %v776, %v826
  %v831 = vperm.slane %v824, 0
  %v833 = vadd.f32 %v828, %v831
  %v834 = vadd.f32 %v829, %v831
  %v835 = vmax.f32 %v833, 0.0
  %v836 = vmax.f32 %v834, 0.0
  %v837 = vsel %vm818, 1, 0
  %v838 = vperm.slane %v837, 0
  %vm839 = vcmp.eq.s32.totalorder %v838, 1
  %v840 = vsel %vm839, %v835, %v833
  %v841 = vsel %vm839, %v836, %v834
  %v842 = vpack.c.bf16 %v840, %v840
  %v843 = vpack.c.bf16 %v841, %v841
  %844 = vst [vmem:[%s5] sm:$0xf] %v842
  %845 = vst [vmem:[%s5 + $0x4] sm:$0xf] %v843
  // Predicated region
  $region22: #{unet_forward.26} parent=0 // pred_check
    _
  $region23: #{unet_forward.26} parent=0 // pred_check_branch
    %847 = sbr.rel (0) target = $region25
  $region24: #{unet_forward.26} parent=0 // pred_region
    _
  $region25: #{unet_forward.26} parent=0 // pred_fallthru
    _
  // Predicated region
  $region26: #{unet_forward.26} parent=0 // pred_check
    _
  $region27: #{unet_forward.26} parent=0 // pred_check_branch
    %849 = sbr.rel (0) target = $region29
  $region28: #{unet_forward.26} parent=0 // pred_region
    _
  $region29: #{unet_forward.26} parent=0 // pred_fallthru
    _

// kernel: unet_forward.27
$region0: #{unet_forward.27}
  #allocation0 [shape = 'u32[]', space=smem, size = 0x4, offset = 0x4, fixed_abs, tag = 'smem constant byte address 0x4 - core index']
  #allocation1 [shape = 'u32[72,128]{1,0:T(1,128)}', space=vmem, size = 0x9000, scoped, tag = 'internal scratch']
  %s0 = inlined_call_operand.vmem [shape: bf16[16,1152], index: 0, kind: input, shape index: {}]
  %s1 = inlined_call_operand.vmem [shape: bf16[1152,128], index: 1, kind: input, shape index: {}]
  %s2 = inlined_call_operand.vmem [shape: f32[1,128], index: 2, kind: input, shape index: {}]
  %s3 = inlined_call_operand.vmem [shape: f32[1,128], index: 3, kind: input, shape index: {}]
  %s4 = inlined_call_operand.vmem [shape: f32[1,128], index: 4, kind: input, shape index: {}]
  %s5 = inlined_call_operand.vmem [shape: bf16[16,128], index: 5, kind: input, shape index: {}]
  %s6 = inlined_call_operand.vmem [shape: bf16[16,128], index: 6, kind: output, shape index: {}]
  %s7 = sld [smem:[#allocation0]]
  $region34: #{unet_forward.27} parent=0
    _
  %s9 = ssub.s32 1, %s7
  %s10 = scalar_select 0, %s9, %s7
  // Predicated region
  $region2: #{unet_forward.27} parent=0 // pred_check
    _
  $region3: #{unet_forward.27} parent=0 // pred_check_branch
    %12 = sbr.rel (0) target = $region5
  $region4: #{unet_forward.27} parent=0 // pred_region
    _
  $region5: #{unet_forward.27} parent=0 // pred_fallthru
    _
  // Predicated region
  $region6: #{unet_forward.27} parent=0 // pred_check
    _
  $region7: #{unet_forward.27} parent=0 // pred_check_branch
    %14 = sbr.rel (0) target = $region9
  $region8: #{unet_forward.27} parent=0 // pred_region
    _
  $region9: #{unet_forward.27} parent=0 // pred_fallthru
    _
  // Predicated region
  $region10: #{unet_forward.27} parent=0 // pred_check
    _
  $region11: #{unet_forward.27} parent=0 // pred_check_branch
    %16 = sbr.rel (0) target = $region13
  $region12: #{unet_forward.27} parent=0 // pred_region
    _
  $region13: #{unet_forward.27} parent=0 // pred_fallthru
    _
  // Predicated region
  $region14: #{unet_forward.27} parent=0 // pred_check
    _
  $region15: #{unet_forward.27} parent=0 // pred_check_branch
    %18 = sbr.rel (0) target = $region17
  $region16: #{unet_forward.27} parent=0 // pred_region
    _
  $region17: #{unet_forward.27} parent=0 // pred_fallthru
    _
  // Predicated region
  $region18: #{unet_forward.27} parent=0 // pred_check
    _
  $region19: #{unet_forward.27} parent=0 // pred_check_branch
    %20 = sbr.rel (0) target = $region21
  $region20: #{unet_forward.27} parent=0 // pred_region
    _
  $region21: #{unet_forward.27} parent=0 // pred_fallthru
    _
  // Predicated region
  $region22: #{unet_forward.27} parent=0 // pred_check
    _
  $region23: #{unet_forward.27} parent=0 // pred_check_branch
    %22 = sbr.rel (0) target = $region25
  $region24: #{unet_forward.27} parent=0 // pred_region
    _
  $region25: #{unet_forward.27} parent=0 // pred_fallthru
    _
  %v23 = vld [vmem:[%s0] sm:$0xff]
  %v24 = vld [vmem:[%s0 + $0x8] sm:$0xff]
  %v25 = vld [vmem:[%s0 + $0x10] sm:$0xff]
  %v26 = vld [vmem:[%s0 + $0x18] sm:$0xff]
  %v27 = vld [vmem:[%s0 + $0x20] sm:$0xf]
  %v28 = vld [vmem:[%s0 + $0x24] sm:$0xff]
  %v29 = vld [vmem:[%s0 + $0x2c] sm:$0xff]
  %v30 = vld [vmem:[%s0 + $0x34] sm:$0xff]
  %v31 = vld [vmem:[%s0 + $0x3c] sm:$0xff]
  %v32 = vld [vmem:[%s0 + $0x44] sm:$0xf]
  %v33 = vld [vmem:[%s1] sm:$0xf]
  %v34 = vld [vmem:[%s1 + $0x4] sm:$0xf]
  %v35 = vld [vmem:[%s1 + $0x8] sm:$0xf]
  %v36 = vld [vmem:[%s1 + $0xc] sm:$0xf]
  %v37 = vld [vmem:[%s1 + $0x10] sm:$0xf]
  %v38 = vld [vmem:[%s1 + $0x14] sm:$0xf]
  %v39 = vld [vmem:[%s1 + $0x18] sm:$0xf]
  %v40 = vld [vmem:[%s1 + $0x1c] sm:$0xf]
  %v41 = vld [vmem:[%s1 + $0x20] sm:$0xf]
  %v42 = vld [vmem:[%s1 + $0x24] sm:$0xf]
  %v43 = vld [vmem:[%s1 + $0x28] sm:$0xf]
  %v44 = vld [vmem:[%s1 + $0x2c] sm:$0xf]
  %v45 = vld [vmem:[%s1 + $0x30] sm:$0xf]
  %v46 = vld [vmem:[%s1 + $0x34] sm:$0xf]
  %v47 = vld [vmem:[%s1 + $0x38] sm:$0xf]
  %v48 = vld [vmem:[%s1 + $0x3c] sm:$0xf]
  %v49 = vld [vmem:[%s1 + $0x40] sm:$0xf]
  %v50 = vld [vmem:[%s1 + $0x44] sm:$0xf]
  %v51 = vld [vmem:[%s1 + $0x48] sm:$0xf]
  %v52 = vld [vmem:[%s1 + $0x4c] sm:$0xf]
  %v53 = vld [vmem:[%s1 + $0x50] sm:$0xf]
  %v54 = vld [vmem:[%s1 + $0x54] sm:$0xf]
  %v55 = vld [vmem:[%s1 + $0x58] sm:$0xf]
  %v56 = vld [vmem:[%s1 + $0x5c] sm:$0xf]
  %v57 = vld [vmem:[%s1 + $0x60] sm:$0xf]
  %v58 = vld [vmem:[%s1 + $0x64] sm:$0xf]
  %v59 = vld [vmem:[%s1 + $0x68] sm:$0xf]
  %v60 = vld [vmem:[%s1 + $0x6c] sm:$0xf]
  %v61 = vld [vmem:[%s1 + $0x70] sm:$0xf]
  %v62 = vld [vmem:[%s1 + $0x74] sm:$0xf]
  %v63 = vld [vmem:[%s1 + $0x78] sm:$0xf]
  %v64 = vld [vmem:[%s1 + $0x7c] sm:$0xf]
  %v65 = vld [vmem:[%s1 + $0x80] sm:$0xf]
  %v66 = vld [vmem:[%s1 + $0x84] sm:$0xf]
  %v67 = vld [vmem:[%s1 + $0x88] sm:$0xf]
  %v68 = vld [vmem:[%s1 + $0x8c] sm:$0xf]
  %v69 = vld [vmem:[%s1 + $0x90] sm:$0xf]
  %v70 = vld [vmem:[%s1 + $0x94] sm:$0xf]
  %v71 = vld [vmem:[%s1 + $0x98] sm:$0xf]
  %v72 = vld [vmem:[%s1 + $0x9c] sm:$0xf]
  %v73 = vld [vmem:[%s1 + $0xa0] sm:$0xf]
  %v74 = vld [vmem:[%s1 + $0xa4] sm:$0xf]
  %v75 = vld [vmem:[%s1 + $0xa8] sm:$0xf]
  %v76 = vld [vmem:[%s1 + $0xac] sm:$0xf]
  %v77 = vld [vmem:[%s1 + $0xb0] sm:$0xf]
  %v78 = vld [vmem:[%s1 + $0xb4] sm:$0xf]
  %v79 = vld [vmem:[%s1 + $0xb8] sm:$0xf]
  %v80 = vld [vmem:[%s1 + $0xbc] sm:$0xf]
  %v81 = vld [vmem:[%s1 + $0xc0] sm:$0xf]
  %v82 = vld [vmem:[%s1 + $0xc4] sm:$0xf]
  %v83 = vld [vmem:[%s1 + $0xc8] sm:$0xf]
  %v84 = vld [vmem:[%s1 + $0xcc] sm:$0xf]
  %v85 = vld [vmem:[%s1 + $0xd0] sm:$0xf]
  %v86 = vld [vmem:[%s1 + $0xd4] sm:$0xf]
  %v87 = vld [vmem:[%s1 + $0xd8] sm:$0xf]
  %v88 = vld [vmem:[%s1 + $0xdc] sm:$0xf]
  %v89 = vld [vmem:[%s1 + $0xe0] sm:$0xf]
  %v90 = vld [vmem:[%s1 + $0xe4] sm:$0xf]
  %v91 = vld [vmem:[%s1 + $0xe8] sm:$0xf]
  %v92 = vld [vmem:[%s1 + $0xec] sm:$0xf]
  %v93 = vld [vmem:[%s1 + $0xf0] sm:$0xf]
  %v94 = vld [vmem:[%s1 + $0xf4] sm:$0xf]
  %v95 = vld [vmem:[%s1 + $0xf8] sm:$0xf]
  %v96 = vld [vmem:[%s1 + $0xfc] sm:$0xf]
  %v97 = vld [vmem:[%s1 + $0x100] sm:$0xf]
  %v98 = vld [vmem:[%s1 + $0x104] sm:$0xf]
  %v99 = vld [vmem:[%s1 + $0x108] sm:$0xf]
  %v100 = vld [vmem:[%s1 + $0x10c] sm:$0xf]
  %v101 = vld [vmem:[%s1 + $0x110] sm:$0xf]
  %v102 = vld [vmem:[%s1 + $0x114] sm:$0xf]
  %v103 = vld [vmem:[%s1 + $0x118] sm:$0xf]
  %v104 = vld [vmem:[%s1 + $0x11c] sm:$0xf]
  %v105 = vld [vmem:[%s1 + $0x120] sm:$0xf]
  %v106 = vld [vmem:[%s1 + $0x124] sm:$0xf]
  %v107 = vld [vmem:[%s1 + $0x128] sm:$0xf]
  %v108 = vld [vmem:[%s1 + $0x12c] sm:$0xf]
  %v109 = vld [vmem:[%s1 + $0x130] sm:$0xf]
  %v110 = vld [vmem:[%s1 + $0x134] sm:$0xf]
  %v111 = vld [vmem:[%s1 + $0x138] sm:$0xf]
  %v112 = vld [vmem:[%s1 + $0x13c] sm:$0xf]
  %v113 = vld [vmem:[%s1 + $0x140] sm:$0xf]
  %v114 = vld [vmem:[%s1 + $0x144] sm:$0xf]
  %v115 = vld [vmem:[%s1 + $0x148] sm:$0xf]
  %v116 = vld [vmem:[%s1 + $0x14c] sm:$0xf]
  %v117 = vld [vmem:[%s1 + $0x150] sm:$0xf]
  %v118 = vld [vmem:[%s1 + $0x154] sm:$0xf]
  %v119 = vld [vmem:[%s1 + $0x158] sm:$0xf]
  %v120 = vld [vmem:[%s1 + $0x15c] sm:$0xf]
  %v121 = vld [vmem:[%s1 + $0x160] sm:$0xf]
  %v122 = vld [vmem:[%s1 + $0x164] sm:$0xf]
  %v123 = vld [vmem:[%s1 + $0x168] sm:$0xf]
  %v124 = vld [vmem:[%s1 + $0x16c] sm:$0xf]
  %v125 = vld [vmem:[%s1 + $0x170] sm:$0xf]
  %v126 = vld [vmem:[%s1 + $0x174] sm:$0xf]
  %v127 = vld [vmem:[%s1 + $0x178] sm:$0xf]
  %v128 = vld [vmem:[%s1 + $0x17c] sm:$0xf]
  %v129 = vld [vmem:[%s1 + $0x180] sm:$0xf]
  %v130 = vld [vmem:[%s1 + $0x184] sm:$0xf]
  %v131 = vld [vmem:[%s1 + $0x188] sm:$0xf]
  %v132 = vld [vmem:[%s1 + $0x18c] sm:$0xf]
  %v133 = vld [vmem:[%s1 + $0x190] sm:$0xf]
  %v134 = vld [vmem:[%s1 + $0x194] sm:$0xf]
  %v135 = vld [vmem:[%s1 + $0x198] sm:$0xf]
  %v136 = vld [vmem:[%s1 + $0x19c] sm:$0xf]
  %v137 = vld [vmem:[%s1 + $0x1a0] sm:$0xf]
  %v138 = vld [vmem:[%s1 + $0x1a4] sm:$0xf]
  %v139 = vld [vmem:[%s1 + $0x1a8] sm:$0xf]
  %v140 = vld [vmem:[%s1 + $0x1ac] sm:$0xf]
  %v141 = vld [vmem:[%s1 + $0x1b0] sm:$0xf]
  %v142 = vld [vmem:[%s1 + $0x1b4] sm:$0xf]
  %v143 = vld [vmem:[%s1 + $0x1b8] sm:$0xf]
  %v144 = vld [vmem:[%s1 + $0x1bc] sm:$0xf]
  %v145 = vld [vmem:[%s1 + $0x1c0] sm:$0xf]
  %v146 = vld [vmem:[%s1 + $0x1c4] sm:$0xf]
  %v147 = vld [vmem:[%s1 + $0x1c8] sm:$0xf]
  %v148 = vld [vmem:[%s1 + $0x1cc] sm:$0xf]
  %v149 = vld [vmem:[%s1 + $0x1d0] sm:$0xf]
  %v150 = vld [vmem:[%s1 + $0x1d4] sm:$0xf]
  %v151 = vld [vmem:[%s1 + $0x1d8] sm:$0xf]
  %v152 = vld [vmem:[%s1 + $0x1dc] sm:$0xf]
  %v153 = vld [vmem:[%s1 + $0x1e0] sm:$0xf]
  %v154 = vld [vmem:[%s1 + $0x1e4] sm:$0xf]
  %v155 = vld [vmem:[%s1 + $0x1e8] sm:$0xf]
  %v156 = vld [vmem:[%s1 + $0x1ec] sm:$0xf]
  %v157 = vld [vmem:[%s1 + $0x1f0] sm:$0xf]
  %v158 = vld [vmem:[%s1 + $0x1f4] sm:$0xf]
  %v159 = vld [vmem:[%s1 + $0x1f8] sm:$0xf]
  %v160 = vld [vmem:[%s1 + $0x1fc] sm:$0xf]
  %v161 = vld [vmem:[%s1 + $0x200] sm:$0xf]
  %v162 = vld [vmem:[%s1 + $0x204] sm:$0xf]
  %v163 = vld [vmem:[%s1 + $0x208] sm:$0xf]
  %v164 = vld [vmem:[%s1 + $0x20c] sm:$0xf]
  %v165 = vld [vmem:[%s1 + $0x210] sm:$0xf]
  %v166 = vld [vmem:[%s1 + $0x214] sm:$0xf]
  %v167 = vld [vmem:[%s1 + $0x218] sm:$0xf]
  %v168 = vld [vmem:[%s1 + $0x21c] sm:$0xf]
  %v169 = vld [vmem:[%s1 + $0x220] sm:$0xf]
  %v170 = vld [vmem:[%s1 + $0x224] sm:$0xf]
  %v171 = vld [vmem:[%s1 + $0x228] sm:$0xf]
  %v172 = vld [vmem:[%s1 + $0x22c] sm:$0xf]
  %v173 = vld [vmem:[%s1 + $0x230] sm:$0xf]
  %v174 = vld [vmem:[%s1 + $0x234] sm:$0xf]
  %v175 = vld [vmem:[%s1 + $0x238] sm:$0xf]
  %v176 = vld [vmem:[%s1 + $0x23c] sm:$0xf]
  %v187 = vunpack.c.l.b16 %v23
  %v188 = vunpack.c.h.b16 %v23
  %v189 = vunpack.c.l.b16 %v24
  %v190 = vunpack.c.h.b16 %v24
  %v191 = vunpack.c.l.b16 %v25
  %v192 = vunpack.c.h.b16 %v25
  %v193 = vunpack.c.l.b16 %v26
  %v194 = vunpack.c.h.b16 %v26
  %v195 = vunpack.c.l.b16 %v27
  %v196 = vunpack.c.l.b16 %v28
  %v197 = vunpack.c.h.b16 %v28
  %v198 = vunpack.c.l.b16 %v29
  %v199 = vunpack.c.h.b16 %v29
  %v200 = vunpack.c.l.b16 %v30
  %v201 = vunpack.c.h.b16 %v30
  %v202 = vunpack.c.l.b16 %v31
  %v203 = vunpack.c.h.b16 %v31
  %v204 = vunpack.c.l.b16 %v32
  %v205 = vpack.c.b16 %v196, %v187
  %v206 = vpack.c.b16 %v197, %v188
  %v207 = vpack.c.b16 %v198, %v189
  %v208 = vpack.c.b16 %v199, %v190
  %v209 = vpack.c.b16 %v200, %v191
  %v210 = vpack.c.b16 %v201, %v192
  %v211 = vpack.c.b16 %v202, %v193
  %v212 = vpack.c.b16 %v203, %v194
  %v213 = vpack.c.b16 %v204, %v195
  %v367 = vunpack.c.l.b16 %v33
  %v368 = vunpack.c.l.b16 %v34
  %v369 = vunpack.c.l.b16 %v35
  %v370 = vunpack.c.l.b16 %v36
  %v371 = vunpack.c.l.b16 %v37
  %v372 = vunpack.c.l.b16 %v38
  %v373 = vunpack.c.l.b16 %v39
  %v374 = vunpack.c.l.b16 %v40
  %v375 = vunpack.c.l.b16 %v41
  %v376 = vunpack.c.l.b16 %v42
  %v377 = vunpack.c.l.b16 %v43
  %v378 = vunpack.c.l.b16 %v44
  %v379 = vunpack.c.l.b16 %v45
  %v380 = vunpack.c.l.b16 %v46
  %v381 = vunpack.c.l.b16 %v47
  %v382 = vunpack.c.l.b16 %v48
  %v383 = vunpack.c.l.b16 %v49
  %v384 = vunpack.c.l.b16 %v50
  %v385 = vunpack.c.l.b16 %v51
  %v386 = vunpack.c.l.b16 %v52
  %v387 = vunpack.c.l.b16 %v53
  %v388 = vunpack.c.l.b16 %v54
  %v389 = vunpack.c.l.b16 %v55
  %v390 = vunpack.c.l.b16 %v56
  %v391 = vunpack.c.l.b16 %v57
  %v392 = vunpack.c.l.b16 %v58
  %v393 = vunpack.c.l.b16 %v59
  %v394 = vunpack.c.l.b16 %v60
  %v395 = vunpack.c.l.b16 %v61
  %v396 = vunpack.c.l.b16 %v62
  %v397 = vunpack.c.l.b16 %v63
  %v398 = vunpack.c.l.b16 %v64
  %v399 = vunpack.c.l.b16 %v65
  %v400 = vunpack.c.l.b16 %v66
  %v401 = vunpack.c.l.b16 %v67
  %v402 = vunpack.c.l.b16 %v68
  %v403 = vunpack.c.l.b16 %v69
  %v404 = vunpack.c.l.b16 %v70
  %v405 = vunpack.c.l.b16 %v71
  %v406 = vunpack.c.l.b16 %v72
  %v407 = vunpack.c.l.b16 %v73
  %v408 = vunpack.c.l.b16 %v74
  %v409 = vunpack.c.l.b16 %v75
  %v410 = vunpack.c.l.b16 %v76
  %v411 = vunpack.c.l.b16 %v77
  %v412 = vunpack.c.l.b16 %v78
  %v413 = vunpack.c.l.b16 %v79
  %v414 = vunpack.c.l.b16 %v80
  %v415 = vunpack.c.l.b16 %v81
  %v416 = vunpack.c.l.b16 %v82
  %v417 = vunpack.c.l.b16 %v83
  %v418 = vunpack.c.l.b16 %v84
  %v419 = vunpack.c.l.b16 %v85
  %v420 = vunpack.c.l.b16 %v86
  %v421 = vunpack.c.l.b16 %v87
  %v422 = vunpack.c.l.b16 %v88
  %v423 = vunpack.c.l.b16 %v89
  %v424 = vunpack.c.l.b16 %v90
  %v425 = vunpack.c.l.b16 %v91
  %v426 = vunpack.c.l.b16 %v92
  %v427 = vunpack.c.l.b16 %v93
  %v428 = vunpack.c.l.b16 %v94
  %v429 = vunpack.c.l.b16 %v95
  %v430 = vunpack.c.l.b16 %v96
  %v431 = vunpack.c.l.b16 %v97
  %v432 = vunpack.c.l.b16 %v98
  %v433 = vunpack.c.l.b16 %v99
  %v434 = vunpack.c.l.b16 %v100
  %v435 = vunpack.c.l.b16 %v101
  %v436 = vunpack.c.l.b16 %v102
  %v437 = vunpack.c.l.b16 %v103
  %v438 = vunpack.c.l.b16 %v104
  %v439 = vunpack.c.l.b16 %v105
  %v440 = vunpack.c.l.b16 %v106
  %v441 = vunpack.c.l.b16 %v107
  %v442 = vunpack.c.l.b16 %v108
  %v443 = vunpack.c.l.b16 %v109
  %v444 = vunpack.c.l.b16 %v110
  %v445 = vunpack.c.l.b16 %v111
  %v446 = vunpack.c.l.b16 %v112
  %v447 = vunpack.c.l.b16 %v113
  %v448 = vunpack.c.l.b16 %v114
  %v449 = vunpack.c.l.b16 %v115
  %v450 = vunpack.c.l.b16 %v116
  %v451 = vunpack.c.l.b16 %v117
  %v452 = vunpack.c.l.b16 %v118
  %v453 = vunpack.c.l.b16 %v119
  %v454 = vunpack.c.l.b16 %v120
  %v455 = vunpack.c.l.b16 %v121
  %v456 = vunpack.c.l.b16 %v122
  %v457 = vunpack.c.l.b16 %v123
  %v458 = vunpack.c.l.b16 %v124
  %v459 = vunpack.c.l.b16 %v125
  %v460 = vunpack.c.l.b16 %v126
  %v461 = vunpack.c.l.b16 %v127
  %v462 = vunpack.c.l.b16 %v128
  %v463 = vunpack.c.l.b16 %v129
  %v464 = vunpack.c.l.b16 %v130
  %v465 = vunpack.c.l.b16 %v131
  %v466 = vunpack.c.l.b16 %v132
  %v467 = vunpack.c.l.b16 %v133
  %v468 = vunpack.c.l.b16 %v134
  %v469 = vunpack.c.l.b16 %v135
  %v470 = vunpack.c.l.b16 %v136
  %v471 = vunpack.c.l.b16 %v137
  %v472 = vunpack.c.l.b16 %v138
  %v473 = vunpack.c.l.b16 %v139
  %v474 = vunpack.c.l.b16 %v140
  %v475 = vunpack.c.l.b16 %v141
  %v476 = vunpack.c.l.b16 %v142
  %v477 = vunpack.c.l.b16 %v143
  %v478 = vunpack.c.l.b16 %v144
  %v479 = vunpack.c.l.b16 %v145
  %v480 = vunpack.c.l.b16 %v146
  %v481 = vunpack.c.l.b16 %v147
  %v482 = vunpack.c.l.b16 %v148
  %v483 = vunpack.c.l.b16 %v149
  %v484 = vunpack.c.l.b16 %v150
  %v485 = vunpack.c.l.b16 %v151
  %v486 = vunpack.c.l.b16 %v152
  %v487 = vunpack.c.l.b16 %v153
  %v488 = vunpack.c.l.b16 %v154
  %v489 = vunpack.c.l.b16 %v155
  %v490 = vunpack.c.l.b16 %v156
  %v491 = vunpack.c.l.b16 %v157
  %v492 = vunpack.c.l.b16 %v158
  %v493 = vunpack.c.l.b16 %v159
  %v494 = vunpack.c.l.b16 %v160
  %v495 = vunpack.c.l.b16 %v161
  %v496 = vunpack.c.l.b16 %v162
  %v497 = vunpack.c.l.b16 %v163
  %v498 = vunpack.c.l.b16 %v164
  %v499 = vunpack.c.l.b16 %v165
  %v500 = vunpack.c.l.b16 %v166
  %v501 = vunpack.c.l.b16 %v167
  %v502 = vunpack.c.l.b16 %v168
  %v503 = vunpack.c.l.b16 %v169
  %v504 = vunpack.c.l.b16 %v170
  %v505 = vunpack.c.l.b16 %v171
  %v506 = vunpack.c.l.b16 %v172
  %v507 = vunpack.c.l.b16 %v173
  %v508 = vunpack.c.l.b16 %v174
  %v509 = vunpack.c.l.b16 %v175
  %v510 = vunpack.c.l.b16 %v176
  %v511 = vpack.c.b16 %v368, %v367
  %v512 = vpack.c.b16 %v370, %v369
  %v513 = vpack.c.b16 %v372, %v371
  %v514 = vpack.c.b16 %v374, %v373
  %v515 = vpack.c.b16 %v376, %v375
  %v516 = vpack.c.b16 %v378, %v377
  %v517 = vpack.c.b16 %v380, %v379
  %v518 = vpack.c.b16 %v382, %v381
  %v519 = vpack.c.b16 %v384, %v383
  %v520 = vpack.c.b16 %v386, %v385
  %v521 = vpack.c.b16 %v388, %v387
  %v522 = vpack.c.b16 %v390, %v389
  %v523 = vpack.c.b16 %v392, %v391
  %v524 = vpack.c.b16 %v394, %v393
  %v525 = vpack.c.b16 %v396, %v395
  %v526 = vpack.c.b16 %v398, %v397
  %v527 = vpack.c.b16 %v400, %v399
  %v528 = vpack.c.b16 %v402, %v401
  %v529 = vpack.c.b16 %v404, %v403
  %v530 = vpack.c.b16 %v406, %v405
  %v531 = vpack.c.b16 %v408, %v407
  %v532 = vpack.c.b16 %v410, %v409
  %v533 = vpack.c.b16 %v412, %v411
  %v534 = vpack.c.b16 %v414, %v413
  %v535 = vpack.c.b16 %v416, %v415
  %v536 = vpack.c.b16 %v418, %v417
  %v537 = vpack.c.b16 %v420, %v419
  %v538 = vpack.c.b16 %v422, %v421
  %v539 = vpack.c.b16 %v424, %v423
  %v540 = vpack.c.b16 %v426, %v425
  %v541 = vpack.c.b16 %v428, %v427
  %v542 = vpack.c.b16 %v430, %v429
  %v543 = vpack.c.b16 %v432, %v431
  %v544 = vpack.c.b16 %v434, %v433
  %v545 = vpack.c.b16 %v436, %v435
  %v546 = vpack.c.b16 %v438, %v437
  %v547 = vpack.c.b16 %v440, %v439
  %v548 = vpack.c.b16 %v442, %v441
  %v549 = vpack.c.b16 %v444, %v443
  %v550 = vpack.c.b16 %v446, %v445
  %v551 = vpack.c.b16 %v448, %v447
  %v552 = vpack.c.b16 %v450, %v449
  %v553 = vpack.c.b16 %v452, %v451
  %v554 = vpack.c.b16 %v454, %v453
  %v555 = vpack.c.b16 %v456, %v455
  %v556 = vpack.c.b16 %v458, %v457
  %v557 = vpack.c.b16 %v460, %v459
  %v558 = vpack.c.b16 %v462, %v461
  %v559 = vpack.c.b16 %v464, %v463
  %v560 = vpack.c.b16 %v466, %v465
  %v561 = vpack.c.b16 %v468, %v467
  %v562 = vpack.c.b16 %v470, %v469
  %v563 = vpack.c.b16 %v472, %v471
  %v564 = vpack.c.b16 %v474, %v473
  %v565 = vpack.c.b16 %v476, %v475
  %v566 = vpack.c.b16 %v478, %v477
  %v567 = vpack.c.b16 %v480, %v479
  %v568 = vpack.c.b16 %v482, %v481
  %v569 = vpack.c.b16 %v484, %v483
  %v570 = vpack.c.b16 %v486, %v485
  %v571 = vpack.c.b16 %v488, %v487
  %v572 = vpack.c.b16 %v490, %v489
  %v573 = vpack.c.b16 %v492, %v491
  %v574 = vpack.c.b16 %v494, %v493
  %v575 = vpack.c.b16 %v496, %v495
  %v576 = vpack.c.b16 %v498, %v497
  %v577 = vpack.c.b16 %v500, %v499
  %v578 = vpack.c.b16 %v502, %v501
  %v579 = vpack.c.b16 %v504, %v503
  %v580 = vpack.c.b16 %v506, %v505
  %v581 = vpack.c.b16 %v508, %v507
  %v582 = vpack.c.b16 %v510, %v509
  %655 = vmatpush.bf16.msra.mxu0 %v518
  %656 = vmatpush.bf16.msra.mxu0 %v517
  %657 = vmatpush.bf16.msra.mxu0 %v516
  %658 = vmatpush.bf16.msra.mxu0 %v515
  %659 = vmatpush.bf16.msra.mxu0 %v514
  %660 = vmatpush.bf16.msra.mxu0 %v513
  %661 = vmatpush.bf16.msra.mxu0 %v512
  %662 = vmatpush.bf16.msra.mxu0 %v511
  %663 = vmatmul.bf16.gmra.mxu0 %v205
  %v664 = vpop.f32.mrf.mxu0
  %v665 = vadd.f32 0.0, %v664
  %v666 = vpop.f32.mrf.mxu0
  %v667 = vadd.f32 0.0, %v666
  %668 = vdwg.mxu0
  %669 = vmatpush.bf16.msra.mxu0 %v526
  %670 = vmatpush.bf16.msra.mxu0 %v525
  %671 = vmatpush.bf16.msra.mxu0 %v524
  %672 = vmatpush.bf16.msra.mxu0 %v523
  %673 = vmatpush.bf16.msra.mxu0 %v522
  %674 = vmatpush.bf16.msra.mxu0 %v521
  %675 = vmatpush.bf16.msra.mxu0 %v520
  %676 = vmatpush.bf16.msra.mxu0 %v519
  %677 = vmatmul.bf16.gmra.mxu0 %v206
  %v678 = vpop.f32.mrf.mxu0
  %v679 = vadd.f32 %v665, %v678
  %v680 = vpop.f32.mrf.mxu0
  %v681 = vadd.f32 %v667, %v680
  %682 = vdwg.mxu0
  %683 = vmatpush.bf16.msra.mxu0 %v534
  %684 = vmatpush.bf16.msra.mxu0 %v533
  %685 = vmatpush.bf16.msra.mxu0 %v532
  %686 = vmatpush.bf16.msra.mxu0 %v531
  %687 = vmatpush.bf16.msra.mxu0 %v530
  %688 = vmatpush.bf16.msra.mxu0 %v529
  %689 = vmatpush.bf16.msra.mxu0 %v528
  %690 = vmatpush.bf16.msra.mxu0 %v527
  %691 = vmatmul.bf16.gmra.mxu0 %v207
  %v692 = vpop.f32.mrf.mxu0
  %v693 = vadd.f32 %v679, %v692
  %v694 = vpop.f32.mrf.mxu0
  %v695 = vadd.f32 %v681, %v694
  %696 = vdwg.mxu0
  %697 = vmatpush.bf16.msra.mxu0 %v542
  %698 = vmatpush.bf16.msra.mxu0 %v541
  %699 = vmatpush.bf16.msra.mxu0 %v540
  %700 = vmatpush.bf16.msra.mxu0 %v539
  %701 = vmatpush.bf16.msra.mxu0 %v538
  %702 = vmatpush.bf16.msra.mxu0 %v537
  %703 = vmatpush.bf16.msra.mxu0 %v536
  %704 = vmatpush.bf16.msra.mxu0 %v535
  %705 = vmatmul.bf16.gmra.mxu0 %v208
  %v706 = vpop.f32.mrf.mxu0
  %v707 = vadd.f32 %v693, %v706
  %v708 = vpop.f32.mrf.mxu0
  %v709 = vadd.f32 %v695, %v708
  %710 = vdwg.mxu0
  %711 = vmatpush.bf16.msra.mxu0 %v550
  %712 = vmatpush.bf16.msra.mxu0 %v549
  %713 = vmatpush.bf16.msra.mxu0 %v548
  %714 = vmatpush.bf16.msra.mxu0 %v547
  %715 = vmatpush.bf16.msra.mxu0 %v546
  %716 = vmatpush.bf16.msra.mxu0 %v545
  %717 = vmatpush.bf16.msra.mxu0 %v544
  %718 = vmatpush.bf16.msra.mxu0 %v543
  %719 = vmatmul.bf16.gmra.mxu0 %v209
  %v720 = vpop.f32.mrf.mxu0
  %v721 = vadd.f32 %v707, %v720
  %v722 = vpop.f32.mrf.mxu0
  %v723 = vadd.f32 %v709, %v722
  %724 = vdwg.mxu0
  %725 = vmatpush.bf16.msra.mxu0 %v558
  %726 = vmatpush.bf16.msra.mxu0 %v557
  %727 = vmatpush.bf16.msra.mxu0 %v556
  %728 = vmatpush.bf16.msra.mxu0 %v555
  %729 = vmatpush.bf16.msra.mxu0 %v554
  %730 = vmatpush.bf16.msra.mxu0 %v553
  %731 = vmatpush.bf16.msra.mxu0 %v552
  %732 = vmatpush.bf16.msra.mxu0 %v551
  %733 = vmatmul.bf16.gmra.mxu0 %v210
  %v734 = vpop.f32.mrf.mxu0
  %v735 = vadd.f32 %v721, %v734
  %v736 = vpop.f32.mrf.mxu0
  %v737 = vadd.f32 %v723, %v736
  %738 = vdwg.mxu0
  %739 = vmatpush.bf16.msra.mxu0 %v566
  %740 = vmatpush.bf16.msra.mxu0 %v565
  %741 = vmatpush.bf16.msra.mxu0 %v564
  %742 = vmatpush.bf16.msra.mxu0 %v563
  %743 = vmatpush.bf16.msra.mxu0 %v562
  %744 = vmatpush.bf16.msra.mxu0 %v561
  %745 = vmatpush.bf16.msra.mxu0 %v560
  %746 = vmatpush.bf16.msra.mxu0 %v559
  %747 = vmatmul.bf16.gmra.mxu0 %v211
  %v748 = vpop.f32.mrf.mxu0
  %v749 = vadd.f32 %v735, %v748
  %v750 = vpop.f32.mrf.mxu0
  %v751 = vadd.f32 %v737, %v750
  %752 = vdwg.mxu0
  %753 = vmatpush.bf16.msra.mxu0 %v574
  %754 = vmatpush.bf16.msra.mxu0 %v573
  %755 = vmatpush.bf16.msra.mxu0 %v572
  %756 = vmatpush.bf16.msra.mxu0 %v571
  %757 = vmatpush.bf16.msra.mxu0 %v570
  %758 = vmatpush.bf16.msra.mxu0 %v569
  %759 = vmatpush.bf16.msra.mxu0 %v568
  %760 = vmatpush.bf16.msra.mxu0 %v567
  %761 = vmatmul.bf16.gmra.mxu0 %v212
  %v762 = vpop.f32.mrf.mxu0
  %v763 = vadd.f32 %v749, %v762
  %v764 = vpop.f32.mrf.mxu0
  %v765 = vadd.f32 %v751, %v764
  %766 = vdwg.mxu0
  %767 = vmatpush.bf16.msra.mxu0 %v582
  %768 = vmatpush.bf16.msra.mxu0 %v581
  %769 = vmatpush.bf16.msra.mxu0 %v580
  %770 = vmatpush.bf16.msra.mxu0 %v579
  %771 = vmatpush.bf16.msra.mxu0 %v578
  %772 = vmatpush.bf16.msra.mxu0 %v577
  %773 = vmatpush.bf16.msra.mxu0 %v576
  %774 = vmatpush.bf16.msra.mxu0 %v575
  %775 = vmatmul.bf16.gmra.mxu0 %v213
  %v776 = vpop.f32.mrf.mxu0
  %v777 = vadd.f32 %v763, %v776
  %v778 = vpop.f32.mrf.mxu0
  %v779 = vadd.f32 %v765, %v778
  %780 = vdwg.mxu0
  %v781 = vadd.f32 %v777, %v779
  %v782 = vrot.slane %v781, 4
  %v783 = vadd.f32 %v781, %v782
  %v784 = vrot.slane %v783, 2
  %v785 = vadd.f32 %v783, %v784
  %v786 = vrot.slane %v785, 1
  %v787 = vadd.f32 %v785, %v786
  %v788 = vmul.f32 %v787, 0.5
  %v789 = vlaneseq
  %v790 = vshrl.u32 %v789, 7
  %v791 = vadd.s32 %v790, 8
  %vm792 = vcmp.lt.s32.totalorder %v790, 2
  %vm793 = vcmp.lt.s32.totalorder %v791, 2
  %v794 = vsub.f32 %v777, %v788
  %v795 = vsub.f32 %v779, %v788
  %v796 = vsel %vm792, %v794, 0.0
  %v797 = vsel %vm793, %v795, 0.0
  %v798 = vmul.f32 %v796, %v796
  %v799 = vmul.f32 %v797, %v797
  %v800 = vadd.f32 %v798, %v799
  %v801 = vrot.slane %v800, 4
  %v802 = vadd.f32 %v800, %v801
  %v803 = vrot.slane %v802, 2
  %v804 = vadd.f32 %v802, %v803
  %v805 = vrot.slane %v804, 1
  %v806 = vadd.f32 %v804, %v805
  %v807 = vmul.f32 %v806, 0.5
  %v808 = vadd.f32 %v807, 1e-05
  %v809 = vrsqrt.pop %v808
  %v810 = vmul.f32 %v809, %v808
  %v811 = vmul.f32 %v810, %v809
  %v812 = vmul.f32 0.5, %v811
  %v813 = vsub.f32 1.5, %v812
  %v814 = vmul.f32 %v809, %v813
  %vm815 = vweird.f32 %v808
  %vm816 = vweird.f32 %v809
  %vm817 = vmor %vm815, %vm816
  %v818 = vsel %vm817, %v809, %v814
  %v819 = vld [vmem:[%s4] sm:$0x1]
  %v820 = vld [vmem:[%s2] sm:$0x1]
  %vm821 = vcmp.gt.f32.partialorder %v819, 0.0
  %v822 = vsel %vm821, %v818, 1.0
  %v823 = vmul.f32 %v820, %v822
  %v824 = vld [vmem:[%s3] sm:$0x1]
  %v825 = vsel %vm821, %v788, 0.0
  %v826 = vmul.f32 %v825, %v823
  %v827 = vsub.f32 %v824, %v826
  %v829 = vperm.slane %v823, 0
  %v831 = vmul.f32 %v777, %v829
  %v832 = vmul.f32 %v779, %v829
  %v834 = vperm.slane %v827, 0
  %v836 = vadd.f32 %v831, %v834
  %v837 = vadd.f32 %v832, %v834
  %v838 = vld [vmem:[%s5] sm:$0xf]
  %v839 = vld [vmem:[%s5 + $0x4] sm:$0xf]
  %v840 = vunpack.c.l.bf16 %v838
  %v841 = vunpack.c.l.bf16 %v839
  %v842 = vadd.f32 %v836, %v840
  %v843 = vadd.f32 %v837, %v841
  %v844 = vmax.f32 %v842, 0.0
  %v845 = vmax.f32 %v843, 0.0
  %v846 = vsel %vm821, 1, 0
  %v847 = vperm.slane %v846, 0
  %vm848 = vcmp.eq.s32.totalorder %v847, 1
  %v849 = vsel %vm848, %v844, %v842
  %v850 = vsel %vm848, %v845, %v843
  %v851 = vpack.c.bf16 %v849, %v849
  %v852 = vpack.c.bf16 %v850, %v850
  %853 = vst [vmem:[%s6] sm:$0xf] %v851
  %854 = vst [vmem:[%s6 + $0x4] sm:$0xf] %v852
  // Predicated region
  $region26: #{unet_forward.27} parent=0 // pred_check
    _
  $region27: #{unet_forward.27} parent=0 // pred_check_branch
    %856 = sbr.rel (0) target = $region29
  $region28: #{unet_forward.27} parent=0 // pred_region
    _
  $region29: #{unet_forward.27} parent=0 // pred_fallthru
    _
  // Predicated region
  $region30: #{unet_forward.27} parent=0 // pred_check
    _
  $region31: #{unet_forward.27} parent=0 // pred_check_branch
    %858 = sbr.rel (0) target = $region33
  $region32: #{unet_forward.27} parent=0 // pred_region
    _
  $region33: #{unet_forward.27} parent=0 // pred_fallthru
    _

// kernel: unet_forward.28
$region0: #{unet_forward.28}
  #allocation0 [shape = 'u32[]', space=smem, size = 0x4, offset = 0x4, fixed_abs, tag = 'smem constant byte address 0x4 - core index']
  #allocation1 [shape = 'u32[72,128]{1,0:T(1,128)}', space=vmem, size = 0x9000, scoped, tag = 'internal scratch']
  %s0 = inlined_call_operand.vmem [shape: bf16[16,512], index: 0, kind: input, shape index: {}]
  %s1 = inlined_call_operand.vmem [shape: bf16[512,512], index: 1, kind: input, shape index: {}]
  %s2 = inlined_call_operand.vmem [shape: f32[1,512], index: 2, kind: input, shape index: {}]
  %s3 = inlined_call_operand.vmem [shape: bf16[16,512], index: 3, kind: output, shape index: {}]
  %s4 = sld [smem:[#allocation0]]
  $region22: #{unet_forward.28} parent=0
    _
  %s6 = ssub.s32 1, %s4
  %s7 = scalar_select 0, %s6, %s4
  // Predicated region
  $region2: #{unet_forward.28} parent=0 // pred_check
    _
  $region3: #{unet_forward.28} parent=0 // pred_check_branch
    %9 = sbr.rel (0) target = $region5
  $region4: #{unet_forward.28} parent=0 // pred_region
    _
  $region5: #{unet_forward.28} parent=0 // pred_fallthru
    _
  // Predicated region
  $region6: #{unet_forward.28} parent=0 // pred_check
    _
  $region7: #{unet_forward.28} parent=0 // pred_check_branch
    %11 = sbr.rel (0) target = $region9
  $region8: #{unet_forward.28} parent=0 // pred_region
    _
  $region9: #{unet_forward.28} parent=0 // pred_fallthru
    _
  // Predicated region
  $region10: #{unet_forward.28} parent=0 // pred_check
    _
  $region11: #{unet_forward.28} parent=0 // pred_check_branch
    %13 = sbr.rel (0) target = $region13
  $region12: #{unet_forward.28} parent=0 // pred_region
    _
  $region13: #{unet_forward.28} parent=0 // pred_fallthru
    _
  %v14 = vld [vmem:[%s0] sm:$0xff]
  %v15 = vld [vmem:[%s0 + $0x8] sm:$0xff]
  %v16 = vld [vmem:[%s0 + $0x10] sm:$0xff]
  %v17 = vld [vmem:[%s0 + $0x18] sm:$0xff]
  %v18 = vld [vmem:[%s1] sm:$0xff]
  %v19 = vld [vmem:[%s1 + $0x8] sm:$0xff]
  %v20 = vld [vmem:[%s1 + $0x10] sm:$0xff]
  %v21 = vld [vmem:[%s1 + $0x18] sm:$0xff]
  %v22 = vld [vmem:[%s1 + $0x20] sm:$0xff]
  %v23 = vld [vmem:[%s1 + $0x28] sm:$0xff]
  %v24 = vld [vmem:[%s1 + $0x30] sm:$0xff]
  %v25 = vld [vmem:[%s1 + $0x38] sm:$0xff]
  %v26 = vld [vmem:[%s1 + $0x40] sm:$0xff]
  %v27 = vld [vmem:[%s1 + $0x48] sm:$0xff]
  %v28 = vld [vmem:[%s1 + $0x50] sm:$0xff]
  %v29 = vld [vmem:[%s1 + $0x58] sm:$0xff]
  %v30 = vld [vmem:[%s1 + $0x60] sm:$0xff]
  %v31 = vld [vmem:[%s1 + $0x68] sm:$0xff]
  %v32 = vld [vmem:[%s1 + $0x70] sm:$0xff]
  %v33 = vld [vmem:[%s1 + $0x78] sm:$0xff]
  %v34 = vld [vmem:[%s1 + $0x80] sm:$0xff]
  %v35 = vld [vmem:[%s1 + $0x88] sm:$0xff]
  %v36 = vld [vmem:[%s1 + $0x90] sm:$0xff]
  %v37 = vld [vmem:[%s1 + $0x98] sm:$0xff]
  %v38 = vld [vmem:[%s1 + $0xa0] sm:$0xff]
  %v39 = vld [vmem:[%s1 + $0xa8] sm:$0xff]
  %v40 = vld [vmem:[%s1 + $0xb0] sm:$0xff]
  %v41 = vld [vmem:[%s1 + $0xb8] sm:$0xff]
  %v42 = vld [vmem:[%s1 + $0xc0] sm:$0xff]
  %v43 = vld [vmem:[%s1 + $0xc8] sm:$0xff]
  %v44 = vld [vmem:[%s1 + $0xd0] sm:$0xff]
  %v45 = vld [vmem:[%s1 + $0xd8] sm:$0xff]
  %v46 = vld [vmem:[%s1 + $0xe0] sm:$0xff]
  %v47 = vld [vmem:[%s1 + $0xe8] sm:$0xff]
  %v48 = vld [vmem:[%s1 + $0xf0] sm:$0xff]
  %v49 = vld [vmem:[%s1 + $0xf8] sm:$0xff]
  %v50 = vld [vmem:[%s1 + $0x100] sm:$0xff]
  %v51 = vld [vmem:[%s1 + $0x108] sm:$0xff]
  %v52 = vld [vmem:[%s1 + $0x110] sm:$0xff]
  %v53 = vld [vmem:[%s1 + $0x118] sm:$0xff]
  %v54 = vld [vmem:[%s1 + $0x120] sm:$0xff]
  %v55 = vld [vmem:[%s1 + $0x128] sm:$0xff]
  %v56 = vld [vmem:[%s1 + $0x130] sm:$0xff]
  %v57 = vld [vmem:[%s1 + $0x138] sm:$0xff]
  %v58 = vld [vmem:[%s1 + $0x140] sm:$0xff]
  %v59 = vld [vmem:[%s1 + $0x148] sm:$0xff]
  %v60 = vld [vmem:[%s1 + $0x150] sm:$0xff]
  %v61 = vld [vmem:[%s1 + $0x158] sm:$0xff]
  %v62 = vld [vmem:[%s1 + $0x160] sm:$0xff]
  %v63 = vld [vmem:[%s1 + $0x168] sm:$0xff]
  %v64 = vld [vmem:[%s1 + $0x170] sm:$0xff]
  %v65 = vld [vmem:[%s1 + $0x178] sm:$0xff]
  %v66 = vld [vmem:[%s1 + $0x180] sm:$0xff]
  %v67 = vld [vmem:[%s1 + $0x188] sm:$0xff]
  %v68 = vld [vmem:[%s1 + $0x190] sm:$0xff]
  %v69 = vld [vmem:[%s1 + $0x198] sm:$0xff]
  %v70 = vld [vmem:[%s1 + $0x1a0] sm:$0xff]
  %v71 = vld [vmem:[%s1 + $0x1a8] sm:$0xff]
  %v72 = vld [vmem:[%s1 + $0x1b0] sm:$0xff]
  %v73 = vld [vmem:[%s1 + $0x1b8] sm:$0xff]
  %v74 = vld [vmem:[%s1 + $0x1c0] sm:$0xff]
  %v75 = vld [vmem:[%s1 + $0x1c8] sm:$0xff]
  %v76 = vld [vmem:[%s1 + $0x1d0] sm:$0xff]
  %v77 = vld [vmem:[%s1 + $0x1d8] sm:$0xff]
  %v78 = vld [vmem:[%s1 + $0x1e0] sm:$0xff]
  %v79 = vld [vmem:[%s1 + $0x1e8] sm:$0xff]
  %v80 = vld [vmem:[%s1 + $0x1f0] sm:$0xff]
  %v81 = vld [vmem:[%s1 + $0x1f8] sm:$0xff]
  %v82 = vld [vmem:[%s1 + $0x200] sm:$0xff]
  %v83 = vld [vmem:[%s1 + $0x208] sm:$0xff]
  %v84 = vld [vmem:[%s1 + $0x210] sm:$0xff]
  %v85 = vld [vmem:[%s1 + $0x218] sm:$0xff]
  %v86 = vld [vmem:[%s1 + $0x220] sm:$0xff]
  %v87 = vld [vmem:[%s1 + $0x228] sm:$0xff]
  %v88 = vld [vmem:[%s1 + $0x230] sm:$0xff]
  %v89 = vld [vmem:[%s1 + $0x238] sm:$0xff]
  %v90 = vld [vmem:[%s1 + $0x240] sm:$0xff]
  %v91 = vld [vmem:[%s1 + $0x248] sm:$0xff]
  %v92 = vld [vmem:[%s1 + $0x250] sm:$0xff]
  %v93 = vld [vmem:[%s1 + $0x258] sm:$0xff]
  %v94 = vld [vmem:[%s1 + $0x260] sm:$0xff]
  %v95 = vld [vmem:[%s1 + $0x268] sm:$0xff]
  %v96 = vld [vmem:[%s1 + $0x270] sm:$0xff]
  %v97 = vld [vmem:[%s1 + $0x278] sm:$0xff]
  %v98 = vld [vmem:[%s1 + $0x280] sm:$0xff]
  %v99 = vld [vmem:[%s1 + $0x288] sm:$0xff]
  %v100 = vld [vmem:[%s1 + $0x290] sm:$0xff]
  %v101 = vld [vmem:[%s1 + $0x298] sm:$0xff]
  %v102 = vld [vmem:[%s1 + $0x2a0] sm:$0xff]
  %v103 = vld [vmem:[%s1 + $0x2a8] sm:$0xff]
  %v104 = vld [vmem:[%s1 + $0x2b0] sm:$0xff]
  %v105 = vld [vmem:[%s1 + $0x2b8] sm:$0xff]
  %v106 = vld [vmem:[%s1 + $0x2c0] sm:$0xff]
  %v107 = vld [vmem:[%s1 + $0x2c8] sm:$0xff]
  %v108 = vld [vmem:[%s1 + $0x2d0] sm:$0xff]
  %v109 = vld [vmem:[%s1 + $0x2d8] sm:$0xff]
  %v110 = vld [vmem:[%s1 + $0x2e0] sm:$0xff]
  %v111 = vld [vmem:[%s1 + $0x2e8] sm:$0xff]
  %v112 = vld [vmem:[%s1 + $0x2f0] sm:$0xff]
  %v113 = vld [vmem:[%s1 + $0x2f8] sm:$0xff]
  %v114 = vld [vmem:[%s1 + $0x300] sm:$0xff]
  %v115 = vld [vmem:[%s1 + $0x308] sm:$0xff]
  %v116 = vld [vmem:[%s1 + $0x310] sm:$0xff]
  %v117 = vld [vmem:[%s1 + $0x318] sm:$0xff]
  %v118 = vld [vmem:[%s1 + $0x320] sm:$0xff]
  %v119 = vld [vmem:[%s1 + $0x328] sm:$0xff]
  %v120 = vld [vmem:[%s1 + $0x330] sm:$0xff]
  %v121 = vld [vmem:[%s1 + $0x338] sm:$0xff]
  %v122 = vld [vmem:[%s1 + $0x340] sm:$0xff]
  %v123 = vld [vmem:[%s1 + $0x348] sm:$0xff]
  %v124 = vld [vmem:[%s1 + $0x350] sm:$0xff]
  %v125 = vld [vmem:[%s1 + $0x358] sm:$0xff]
  %v126 = vld [vmem:[%s1 + $0x360] sm:$0xff]
  %v127 = vld [vmem:[%s1 + $0x368] sm:$0xff]
  %v128 = vld [vmem:[%s1 + $0x370] sm:$0xff]
  %v129 = vld [vmem:[%s1 + $0x378] sm:$0xff]
  %v130 = vld [vmem:[%s1 + $0x380] sm:$0xff]
  %v131 = vld [vmem:[%s1 + $0x388] sm:$0xff]
  %v132 = vld [vmem:[%s1 + $0x390] sm:$0xff]
  %v133 = vld [vmem:[%s1 + $0x398] sm:$0xff]
  %v134 = vld [vmem:[%s1 + $0x3a0] sm:$0xff]
  %v135 = vld [vmem:[%s1 + $0x3a8] sm:$0xff]
  %v136 = vld [vmem:[%s1 + $0x3b0] sm:$0xff]
  %v137 = vld [vmem:[%s1 + $0x3b8] sm:$0xff]
  %v138 = vld [vmem:[%s1 + $0x3c0] sm:$0xff]
  %v139 = vld [vmem:[%s1 + $0x3c8] sm:$0xff]
  %v140 = vld [vmem:[%s1 + $0x3d0] sm:$0xff]
  %v141 = vld [vmem:[%s1 + $0x3d8] sm:$0xff]
  %v142 = vld [vmem:[%s1 + $0x3e0] sm:$0xff]
  %v143 = vld [vmem:[%s1 + $0x3e8] sm:$0xff]
  %v144 = vld [vmem:[%s1 + $0x3f0] sm:$0xff]
  %v145 = vld [vmem:[%s1 + $0x3f8] sm:$0xff]
  %v146 = vld [vmem:[%s2] sm:$0xf]
  %v148 = vperm.slane %v146, 0
  %v149 = vperm.slane %v146, 1
  %v150 = vperm.slane %v146, 2
  %v151 = vperm.slane %v146, 3
  %v160 = vunpack.c.l.b16 %v14
  %v161 = vunpack.c.h.b16 %v14
  %v162 = vunpack.c.l.b16 %v15
  %v163 = vunpack.c.h.b16 %v15
  %v164 = vunpack.c.l.b16 %v16
  %v165 = vunpack.c.h.b16 %v16
  %v166 = vunpack.c.l.b16 %v17
  %v167 = vunpack.c.h.b16 %v17
  %v168 = vpack.c.b16 %v164, %v160
  %v169 = vpack.c.b16 %v165, %v161
  %v170 = vpack.c.b16 %v166, %v162
  %v171 = vpack.c.b16 %v167, %v163
  %v304 = vunpack.c.l.b16 %v18
  %v305 = vunpack.c.h.b16 %v18
  %v306 = vunpack.c.l.b16 %v19
  %v307 = vunpack.c.h.b16 %v19
  %v308 = vunpack.c.l.b16 %v20
  %v309 = vunpack.c.h.b16 %v20
  %v310 = vunpack.c.l.b16 %v21
  %v311 = vunpack.c.h.b16 %v21
  %v312 = vunpack.c.l.b16 %v22
  %v313 = vunpack.c.h.b16 %v22
  %v314 = vunpack.c.l.b16 %v23
  %v315 = vunpack.c.h.b16 %v23
  %v316 = vunpack.c.l.b16 %v24
  %v317 = vunpack.c.h.b16 %v24
  %v318 = vunpack.c.l.b16 %v25
  %v319 = vunpack.c.h.b16 %v25
  %v320 = vunpack.c.l.b16 %v26
  %v321 = vunpack.c.h.b16 %v26
  %v322 = vunpack.c.l.b16 %v27
  %v323 = vunpack.c.h.b16 %v27
  %v324 = vunpack.c.l.b16 %v28
  %v325 = vunpack.c.h.b16 %v28
  %v326 = vunpack.c.l.b16 %v29
  %v327 = vunpack.c.h.b16 %v29
  %v328 = vunpack.c.l.b16 %v30
  %v329 = vunpack.c.h.b16 %v30
  %v330 = vunpack.c.l.b16 %v31
  %v331 = vunpack.c.h.b16 %v31
  %v332 = vunpack.c.l.b16 %v32
  %v333 = vunpack.c.h.b16 %v32
  %v334 = vunpack.c.l.b16 %v33
  %v335 = vunpack.c.h.b16 %v33
  %v336 = vunpack.c.l.b16 %v34
  %v337 = vunpack.c.h.b16 %v34
  %v338 = vunpack.c.l.b16 %v35
  %v339 = vunpack.c.h.b16 %v35
  %v340 = vunpack.c.l.b16 %v36
  %v341 = vunpack.c.h.b16 %v36
  %v342 = vunpack.c.l.b16 %v37
  %v343 = vunpack.c.h.b16 %v37
  %v344 = vunpack.c.l.b16 %v38
  %v345 = vunpack.c.h.b16 %v38
  %v346 = vunpack.c.l.b16 %v39
  %v347 = vunpack.c.h.b16 %v39
  %v348 = vunpack.c.l.b16 %v40
  %v349 = vunpack.c.h.b16 %v40
  %v350 = vunpack.c.l.b16 %v41
  %v351 = vunpack.c.h.b16 %v41
  %v352 = vunpack.c.l.b16 %v42
  %v353 = vunpack.c.h.b16 %v42
  %v354 = vunpack.c.l.b16 %v43
  %v355 = vunpack.c.h.b16 %v43
  %v356 = vunpack.c.l.b16 %v44
  %v357 = vunpack.c.h.b16 %v44
  %v358 = vunpack.c.l.b16 %v45
  %v359 = vunpack.c.h.b16 %v45
  %v360 = vunpack.c.l.b16 %v46
  %v361 = vunpack.c.h.b16 %v46
  %v362 = vunpack.c.l.b16 %v47
  %v363 = vunpack.c.h.b16 %v47
  %v364 = vunpack.c.l.b16 %v48
  %v365 = vunpack.c.h.b16 %v48
  %v366 = vunpack.c.l.b16 %v49
  %v367 = vunpack.c.h.b16 %v49
  %v368 = vunpack.c.l.b16 %v50
  %v369 = vunpack.c.h.b16 %v50
  %v370 = vunpack.c.l.b16 %v51
  %v371 = vunpack.c.h.b16 %v51
  %v372 = vunpack.c.l.b16 %v52
  %v373 = vunpack.c.h.b16 %v52
  %v374 = vunpack.c.l.b16 %v53
  %v375 = vunpack.c.h.b16 %v53
  %v376 = vunpack.c.l.b16 %v54
  %v377 = vunpack.c.h.b16 %v54
  %v378 = vunpack.c.l.b16 %v55
  %v379 = vunpack.c.h.b16 %v55
  %v380 = vunpack.c.l.b16 %v56
  %v381 = vunpack.c.h.b16 %v56
  %v382 = vunpack.c.l.b16 %v57
  %v383 = vunpack.c.h.b16 %v57
  %v384 = vunpack.c.l.b16 %v58
  %v385 = vunpack.c.h.b16 %v58
  %v386 = vunpack.c.l.b16 %v59
  %v387 = vunpack.c.h.b16 %v59
  %v388 = vunpack.c.l.b16 %v60
  %v389 = vunpack.c.h.b16 %v60
  %v390 = vunpack.c.l.b16 %v61
  %v391 = vunpack.c.h.b16 %v61
  %v392 = vunpack.c.l.b16 %v62
  %v393 = vunpack.c.h.b16 %v62
  %v394 = vunpack.c.l.b16 %v63
  %v395 = vunpack.c.h.b16 %v63
  %v396 = vunpack.c.l.b16 %v64
  %v397 = vunpack.c.h.b16 %v64
  %v398 = vunpack.c.l.b16 %v65
  %v399 = vunpack.c.h.b16 %v65
  %v400 = vunpack.c.l.b16 %v66
  %v401 = vunpack.c.h.b16 %v66
  %v402 = vunpack.c.l.b16 %v67
  %v403 = vunpack.c.h.b16 %v67
  %v404 = vunpack.c.l.b16 %v68
  %v405 = vunpack.c.h.b16 %v68
  %v406 = vunpack.c.l.b16 %v69
  %v407 = vunpack.c.h.b16 %v69
  %v408 = vunpack.c.l.b16 %v70
  %v409 = vunpack.c.h.b16 %v70
  %v410 = vunpack.c.l.b16 %v71
  %v411 = vunpack.c.h.b16 %v71
  %v412 = vunpack.c.l.b16 %v72
  %v413 = vunpack.c.h.b16 %v72
  %v414 = vunpack.c.l.b16 %v73
  %v415 = vunpack.c.h.b16 %v73
  %v416 = vunpack.c.l.b16 %v74
  %v417 = vunpack.c.h.b16 %v74
  %v418 = vunpack.c.l.b16 %v75
  %v419 = vunpack.c.h.b16 %v75
  %v420 = vunpack.c.l.b16 %v76
  %v421 = vunpack.c.h.b16 %v76
  %v422 = vunpack.c.l.b16 %v77
  %v423 = vunpack.c.h.b16 %v77
  %v424 = vunpack.c.l.b16 %v78
  %v425 = vunpack.c.h.b16 %v78
  %v426 = vunpack.c.l.b16 %v79
  %v427 = vunpack.c.h.b16 %v79
  %v428 = vunpack.c.l.b16 %v80
  %v429 = vunpack.c.h.b16 %v80
  %v430 = vunpack.c.l.b16 %v81
  %v431 = vunpack.c.h.b16 %v81
  %v432 = vunpack.c.l.b16 %v82
  %v433 = vunpack.c.h.b16 %v82
  %v434 = vunpack.c.l.b16 %v83
  %v435 = vunpack.c.h.b16 %v83
  %v436 = vunpack.c.l.b16 %v84
  %v437 = vunpack.c.h.b16 %v84
  %v438 = vunpack.c.l.b16 %v85
  %v439 = vunpack.c.h.b16 %v85
  %v440 = vunpack.c.l.b16 %v86
  %v441 = vunpack.c.h.b16 %v86
  %v442 = vunpack.c.l.b16 %v87
  %v443 = vunpack.c.h.b16 %v87
  %v444 = vunpack.c.l.b16 %v88
  %v445 = vunpack.c.h.b16 %v88
  %v446 = vunpack.c.l.b16 %v89
  %v447 = vunpack.c.h.b16 %v89
  %v448 = vunpack.c.l.b16 %v90
  %v449 = vunpack.c.h.b16 %v90
  %v450 = vunpack.c.l.b16 %v91
  %v451 = vunpack.c.h.b16 %v91
  %v452 = vunpack.c.l.b16 %v92
  %v453 = vunpack.c.h.b16 %v92
  %v454 = vunpack.c.l.b16 %v93
  %v455 = vunpack.c.h.b16 %v93
  %v456 = vunpack.c.l.b16 %v94
  %v457 = vunpack.c.h.b16 %v94
  %v458 = vunpack.c.l.b16 %v95
  %v459 = vunpack.c.h.b16 %v95
  %v460 = vunpack.c.l.b16 %v96
  %v461 = vunpack.c.h.b16 %v96
  %v462 = vunpack.c.l.b16 %v97
  %v463 = vunpack.c.h.b16 %v97
  %v464 = vunpack.c.l.b16 %v98
  %v465 = vunpack.c.h.b16 %v98
  %v466 = vunpack.c.l.b16 %v99
  %v467 = vunpack.c.h.b16 %v99
  %v468 = vunpack.c.l.b16 %v100
  %v469 = vunpack.c.h.b16 %v100
  %v470 = vunpack.c.l.b16 %v101
  %v471 = vunpack.c.h.b16 %v101
  %v472 = vunpack.c.l.b16 %v102
  %v473 = vunpack.c.h.b16 %v102
  %v474 = vunpack.c.l.b16 %v103
  %v475 = vunpack.c.h.b16 %v103
  %v476 = vunpack.c.l.b16 %v104
  %v477 = vunpack.c.h.b16 %v104
  %v478 = vunpack.c.l.b16 %v105
  %v479 = vunpack.c.h.b16 %v105
  %v480 = vunpack.c.l.b16 %v106
  %v481 = vunpack.c.h.b16 %v106
  %v482 = vunpack.c.l.b16 %v107
  %v483 = vunpack.c.h.b16 %v107
  %v484 = vunpack.c.l.b16 %v108
  %v485 = vunpack.c.h.b16 %v108
  %v486 = vunpack.c.l.b16 %v109
  %v487 = vunpack.c.h.b16 %v109
  %v488 = vunpack.c.l.b16 %v110
  %v489 = vunpack.c.h.b16 %v110
  %v490 = vunpack.c.l.b16 %v111
  %v491 = vunpack.c.h.b16 %v111
  %v492 = vunpack.c.l.b16 %v112
  %v493 = vunpack.c.h.b16 %v112
  %v494 = vunpack.c.l.b16 %v113
  %v495 = vunpack.c.h.b16 %v113
  %v496 = vunpack.c.l.b16 %v114
  %v497 = vunpack.c.h.b16 %v114
  %v498 = vunpack.c.l.b16 %v115
  %v499 = vunpack.c.h.b16 %v115
  %v500 = vunpack.c.l.b16 %v116
  %v501 = vunpack.c.h.b16 %v116
  %v502 = vunpack.c.l.b16 %v117
  %v503 = vunpack.c.h.b16 %v117
  %v504 = vunpack.c.l.b16 %v118
  %v505 = vunpack.c.h.b16 %v118
  %v506 = vunpack.c.l.b16 %v119
  %v507 = vunpack.c.h.b16 %v119
  %v508 = vunpack.c.l.b16 %v120
  %v509 = vunpack.c.h.b16 %v120
  %v510 = vunpack.c.l.b16 %v121
  %v511 = vunpack.c.h.b16 %v121
  %v512 = vunpack.c.l.b16 %v122
  %v513 = vunpack.c.h.b16 %v122
  %v514 = vunpack.c.l.b16 %v123
  %v515 = vunpack.c.h.b16 %v123
  %v516 = vunpack.c.l.b16 %v124
  %v517 = vunpack.c.h.b16 %v124
  %v518 = vunpack.c.l.b16 %v125
  %v519 = vunpack.c.h.b16 %v125
  %v520 = vunpack.c.l.b16 %v126
  %v521 = vunpack.c.h.b16 %v126
  %v522 = vunpack.c.l.b16 %v127
  %v523 = vunpack.c.h.b16 %v127
  %v524 = vunpack.c.l.b16 %v128
  %v525 = vunpack.c.h.b16 %v128
  %v526 = vunpack.c.l.b16 %v129
  %v527 = vunpack.c.h.b16 %v129
  %v528 = vunpack.c.l.b16 %v130
  %v529 = vunpack.c.h.b16 %v130
  %v530 = vunpack.c.l.b16 %v131
  %v531 = vunpack.c.h.b16 %v131
  %v532 = vunpack.c.l.b16 %v132
  %v533 = vunpack.c.h.b16 %v132
  %v534 = vunpack.c.l.b16 %v133
  %v535 = vunpack.c.h.b16 %v133
  %v536 = vunpack.c.l.b16 %v134
  %v537 = vunpack.c.h.b16 %v134
  %v538 = vunpack.c.l.b16 %v135
  %v539 = vunpack.c.h.b16 %v135
  %v540 = vunpack.c.l.b16 %v136
  %v541 = vunpack.c.h.b16 %v136
  %v542 = vunpack.c.l.b16 %v137
  %v543 = vunpack.c.h.b16 %v137
  %v544 = vunpack.c.l.b16 %v138
  %v545 = vunpack.c.h.b16 %v138
  %v546 = vunpack.c.l.b16 %v139
  %v547 = vunpack.c.h.b16 %v139
  %v548 = vunpack.c.l.b16 %v140
  %v549 = vunpack.c.h.b16 %v140
  %v550 = vunpack.c.l.b16 %v141
  %v551 = vunpack.c.h.b16 %v141
  %v552 = vunpack.c.l.b16 %v142
  %v553 = vunpack.c.h.b16 %v142
  %v554 = vunpack.c.l.b16 %v143
  %v555 = vunpack.c.h.b16 %v143
  %v556 = vunpack.c.l.b16 %v144
  %v557 = vunpack.c.h.b16 %v144
  %v558 = vunpack.c.l.b16 %v145
  %v559 = vunpack.c.h.b16 %v145
  %v560 = vpack.c.b16 %v308, %v304
  %v561 = vpack.c.b16 %v309, %v305
  %v562 = vpack.c.b16 %v310, %v306
  %v563 = vpack.c.b16 %v311, %v307
  %v564 = vpack.c.b16 %v316, %v312
  %v565 = vpack.c.b16 %v317, %v313
  %v566 = vpack.c.b16 %v318, %v314
  %v567 = vpack.c.b16 %v319, %v315
  %v568 = vpack.c.b16 %v324, %v320
  %v569 = vpack.c.b16 %v325, %v321
  %v570 = vpack.c.b16 %v326, %v322
  %v571 = vpack.c.b16 %v327, %v323
  %v572 = vpack.c.b16 %v332, %v328
  %v573 = vpack.c.b16 %v333, %v329
  %v574 = vpack.c.b16 %v334, %v330
  %v575 = vpack.c.b16 %v335, %v331
  %v576 = vpack.c.b16 %v340, %v336
  %v577 = vpack.c.b16 %v341, %v337
  %v578 = vpack.c.b16 %v342, %v338
  %v579 = vpack.c.b16 %v343, %v339
  %v580 = vpack.c.b16 %v348, %v344
  %v581 = vpack.c.b16 %v349, %v345
  %v582 = vpack.c.b16 %v350, %v346
  %v583 = vpack.c.b16 %v351, %v347
  %v584 = vpack.c.b16 %v356, %v352
  %v585 = vpack.c.b16 %v357, %v353
  %v586 = vpack.c.b16 %v358, %v354
  %v587 = vpack.c.b16 %v359, %v355
  %v588 = vpack.c.b16 %v364, %v360
  %v589 = vpack.c.b16 %v365, %v361
  %v590 = vpack.c.b16 %v366, %v362
  %v591 = vpack.c.b16 %v367, %v363
  %v592 = vpack.c.b16 %v372, %v368
  %v593 = vpack.c.b16 %v373, %v369
  %v594 = vpack.c.b16 %v374, %v370
  %v595 = vpack.c.b16 %v375, %v371
  %v596 = vpack.c.b16 %v380, %v376
  %v597 = vpack.c.b16 %v381, %v377
  %v598 = vpack.c.b16 %v382, %v378
  %v599 = vpack.c.b16 %v383, %v379
  %v600 = vpack.c.b16 %v388, %v384
  %v601 = vpack.c.b16 %v389, %v385
  %v602 = vpack.c.b16 %v390, %v386
  %v603 = vpack.c.b16 %v391, %v387
  %v604 = vpack.c.b16 %v396, %v392
  %v605 = vpack.c.b16 %v397, %v393
  %v606 = vpack.c.b16 %v398, %v394
  %v607 = vpack.c.b16 %v399, %v395
  %v608 = vpack.c.b16 %v404, %v400
  %v609 = vpack.c.b16 %v405, %v401
  %v610 = vpack.c.b16 %v406, %v402
  %v611 = vpack.c.b16 %v407, %v403
  %v612 = vpack.c.b16 %v412, %v408
  %v613 = vpack.c.b16 %v413, %v409
  %v614 = vpack.c.b16 %v414, %v410
  %v615 = vpack.c.b16 %v415, %v411
  %v616 = vpack.c.b16 %v420, %v416
  %v617 = vpack.c.b16 %v421, %v417
  %v618 = vpack.c.b16 %v422, %v418
  %v619 = vpack.c.b16 %v423, %v419
  %v620 = vpack.c.b16 %v428, %v424
  %v621 = vpack.c.b16 %v429, %v425
  %v622 = vpack.c.b16 %v430, %v426
  %v623 = vpack.c.b16 %v431, %v427
  %v624 = vpack.c.b16 %v436, %v432
  %v625 = vpack.c.b16 %v437, %v433
  %v626 = vpack.c.b16 %v438, %v434
  %v627 = vpack.c.b16 %v439, %v435
  %v628 = vpack.c.b16 %v444, %v440
  %v629 = vpack.c.b16 %v445, %v441
  %v630 = vpack.c.b16 %v446, %v442
  %v631 = vpack.c.b16 %v447, %v443
  %v632 = vpack.c.b16 %v452, %v448
  %v633 = vpack.c.b16 %v453, %v449
  %v634 = vpack.c.b16 %v454, %v450
  %v635 = vpack.c.b16 %v455, %v451
  %v636 = vpack.c.b16 %v460, %v456
  %v637 = vpack.c.b16 %v461, %v457
  %v638 = vpack.c.b16 %v462, %v458
  %v639 = vpack.c.b16 %v463, %v459
  %v640 = vpack.c.b16 %v468, %v464
  %v641 = vpack.c.b16 %v469, %v465
  %v642 = vpack.c.b16 %v470, %v466
  %v643 = vpack.c.b16 %v471, %v467
  %v644 = vpack.c.b16 %v476, %v472
  %v645 = vpack.c.b16 %v477, %v473
  %v646 = vpack.c.b16 %v478, %v474
  %v647 = vpack.c.b16 %v479, %v475
  %v648 = vpack.c.b16 %v484, %v480
  %v649 = vpack.c.b16 %v485, %v481
  %v650 = vpack.c.b16 %v486, %v482
  %v651 = vpack.c.b16 %v487, %v483
  %v652 = vpack.c.b16 %v492, %v488
  %v653 = vpack.c.b16 %v493, %v489
  %v654 = vpack.c.b16 %v494, %v490
  %v655 = vpack.c.b16 %v495, %v491
  %v656 = vpack.c.b16 %v500, %v496
  %v657 = vpack.c.b16 %v501, %v497
  %v658 = vpack.c.b16 %v502, %v498
  %v659 = vpack.c.b16 %v503, %v499
  %v660 = vpack.c.b16 %v508, %v504
  %v661 = vpack.c.b16 %v509, %v505
  %v662 = vpack.c.b16 %v510, %v506
  %v663 = vpack.c.b16 %v511, %v507
  %v664 = vpack.c.b16 %v516, %v512
  %v665 = vpack.c.b16 %v517, %v513
  %v666 = vpack.c.b16 %v518, %v514
  %v667 = vpack.c.b16 %v519, %v515
  %v668 = vpack.c.b16 %v524, %v520
  %v669 = vpack.c.b16 %v525, %v521
  %v670 = vpack.c.b16 %v526, %v522
  %v671 = vpack.c.b16 %v527, %v523
  %v672 = vpack.c.b16 %v532, %v528
  %v673 = vpack.c.b16 %v533, %v529
  %v674 = vpack.c.b16 %v534, %v530
  %v675 = vpack.c.b16 %v535, %v531
  %v676 = vpack.c.b16 %v540, %v536
  %v677 = vpack.c.b16 %v541, %v537
  %v678 = vpack.c.b16 %v542, %v538
  %v679 = vpack.c.b16 %v543, %v539
  %v680 = vpack.c.b16 %v548, %v544
  %v681 = vpack.c.b16 %v549, %v545
  %v682 = vpack.c.b16 %v550, %v546
  %v683 = vpack.c.b16 %v551, %v547
  %v684 = vpack.c.b16 %v556, %v552
  %v685 = vpack.c.b16 %v557, %v553
  %v686 = vpack.c.b16 %v558, %v554
  %v687 = vpack.c.b16 %v559, %v555
  %816 = vmatpush.bf16.msra.mxu0 %v588
  %817 = vmatpush.bf16.msra.mxu0 %v584
  %818 = vmatpush.bf16.msra.mxu0 %v580
  %819 = vmatpush.bf16.msra.mxu0 %v576
  %820 = vmatpush.bf16.msra.mxu0 %v572
  %821 = vmatpush.bf16.msra.mxu0 %v568
  %822 = vmatpush.bf16.msra.mxu0 %v564
  %823 = vmatpush.bf16.msra.mxu0 %v560
  %824 = vmatmul.bf16.gmra.mxu0 %v168
  %v825 = vpop.f32.mrf.mxu0
  %v826 = vadd.f32 %v148, %v825
  %v827 = vpop.f32.mrf.mxu0
  %v828 = vadd.f32 %v148, %v827
  %829 = vdwg.mxu0
  %830 = vmatpush.bf16.msra.mxu0 %v620
  %831 = vmatpush.bf16.msra.mxu0 %v616
  %832 = vmatpush.bf16.msra.mxu0 %v612
  %833 = vmatpush.bf16.msra.mxu0 %v608
  %834 = vmatpush.bf16.msra.mxu0 %v604
  %835 = vmatpush.bf16.msra.mxu0 %v600
  %836 = vmatpush.bf16.msra.mxu0 %v596
  %837 = vmatpush.bf16.msra.mxu0 %v592
  %838 = vmatmul.bf16.gmra.mxu0 %v169
  %v839 = vpop.f32.mrf.mxu0
  %v840 = vadd.f32 %v826, %v839
  %v841 = vpop.f32.mrf.mxu0
  %v842 = vadd.f32 %v828, %v841
  %843 = vdwg.mxu0
  %844 = vmatpush.bf16.msra.mxu0 %v652
  %845 = vmatpush.bf16.msra.mxu0 %v648
  %846 = vmatpush.bf16.msra.mxu0 %v644
  %847 = vmatpush.bf16.msra.mxu0 %v640
  %848 = vmatpush.bf16.msra.mxu0 %v636
  %849 = vmatpush.bf16.msra.mxu0 %v632
  %850 = vmatpush.bf16.msra.mxu0 %v628
  %851 = vmatpush.bf16.msra.mxu0 %v624
  %852 = vmatmul.bf16.gmra.mxu0 %v170
  %v853 = vpop.f32.mrf.mxu0
  %v854 = vadd.f32 %v840, %v853
  %v855 = vpop.f32.mrf.mxu0
  %v856 = vadd.f32 %v842, %v855
  %857 = vdwg.mxu0
  %858 = vmatpush.bf16.msra.mxu0 %v684
  %859 = vmatpush.bf16.msra.mxu0 %v680
  %860 = vmatpush.bf16.msra.mxu0 %v676
  %861 = vmatpush.bf16.msra.mxu0 %v672
  %862 = vmatpush.bf16.msra.mxu0 %v668
  %863 = vmatpush.bf16.msra.mxu0 %v664
  %864 = vmatpush.bf16.msra.mxu0 %v660
  %865 = vmatpush.bf16.msra.mxu0 %v656
  %866 = vmatmul.bf16.gmra.mxu0 %v171
  %v867 = vpop.f32.mrf.mxu0
  %v868 = vadd.f32 %v854, %v867
  %v869 = vpop.f32.mrf.mxu0
  %v870 = vadd.f32 %v856, %v869
  %871 = vdwg.mxu0
  %872 = vmatpush.bf16.msra.mxu0 %v589
  %873 = vmatpush.bf16.msra.mxu0 %v585
  %874 = vmatpush.bf16.msra.mxu0 %v581
  %875 = vmatpush.bf16.msra.mxu0 %v577
  %876 = vmatpush.bf16.msra.mxu0 %v573
  %877 = vmatpush.bf16.msra.mxu0 %v569
  %878 = vmatpush.bf16.msra.mxu0 %v565
  %879 = vmatpush.bf16.msra.mxu0 %v561
  %880 = vmatmul.bf16.gmra.mxu0 %v168
  %v881 = vpop.f32.mrf.mxu0
  %v882 = vadd.f32 %v149, %v881
  %v883 = vpop.f32.mrf.mxu0
  %v884 = vadd.f32 %v149, %v883
  %885 = vdwg.mxu0
  %886 = vmatpush.bf16.msra.mxu0 %v621
  %887 = vmatpush.bf16.msra.mxu0 %v617
  %888 = vmatpush.bf16.msra.mxu0 %v613
  %889 = vmatpush.bf16.msra.mxu0 %v609
  %890 = vmatpush.bf16.msra.mxu0 %v605
  %891 = vmatpush.bf16.msra.mxu0 %v601
  %892 = vmatpush.bf16.msra.mxu0 %v597
  %893 = vmatpush.bf16.msra.mxu0 %v593
  %894 = vmatmul.bf16.gmra.mxu0 %v169
  %v895 = vpop.f32.mrf.mxu0
  %v896 = vadd.f32 %v882, %v895
  %v897 = vpop.f32.mrf.mxu0
  %v898 = vadd.f32 %v884, %v897
  %899 = vdwg.mxu0
  %900 = vmatpush.bf16.msra.mxu0 %v653
  %901 = vmatpush.bf16.msra.mxu0 %v649
  %902 = vmatpush.bf16.msra.mxu0 %v645
  %903 = vmatpush.bf16.msra.mxu0 %v641
  %904 = vmatpush.bf16.msra.mxu0 %v637
  %905 = vmatpush.bf16.msra.mxu0 %v633
  %906 = vmatpush.bf16.msra.mxu0 %v629
  %907 = vmatpush.bf16.msra.mxu0 %v625
  %908 = vmatmul.bf16.gmra.mxu0 %v170
  %v909 = vpop.f32.mrf.mxu0
  %v910 = vadd.f32 %v896, %v909
  %v911 = vpop.f32.mrf.mxu0
  %v912 = vadd.f32 %v898, %v911
  %913 = vdwg.mxu0
  %914 = vmatpush.bf16.msra.mxu0 %v685
  %915 = vmatpush.bf16.msra.mxu0 %v681
  %916 = vmatpush.bf16.msra.mxu0 %v677
  %917 = vmatpush.bf16.msra.mxu0 %v673
  %918 = vmatpush.bf16.msra.mxu0 %v669
  %919 = vmatpush.bf16.msra.mxu0 %v665
  %920 = vmatpush.bf16.msra.mxu0 %v661
  %921 = vmatpush.bf16.msra.mxu0 %v657
  %922 = vmatmul.bf16.gmra.mxu0 %v171
  %v923 = vpop.f32.mrf.mxu0
  %v924 = vadd.f32 %v910, %v923
  %v925 = vpop.f32.mrf.mxu0
  %v926 = vadd.f32 %v912, %v925
  %927 = vdwg.mxu0
  %928 = vmatpush.bf16.msra.mxu0 %v590
  %929 = vmatpush.bf16.msra.mxu0 %v586
  %930 = vmatpush.bf16.msra.mxu0 %v582
  %931 = vmatpush.bf16.msra.mxu0 %v578
  %932 = vmatpush.bf16.msra.mxu0 %v574
  %933 = vmatpush.bf16.msra.mxu0 %v570
  %934 = vmatpush.bf16.msra.mxu0 %v566
  %935 = vmatpush.bf16.msra.mxu0 %v562
  %936 = vmatmul.bf16.gmra.mxu0 %v168
  %v937 = vpop.f32.mrf.mxu0
  %v938 = vadd.f32 %v150, %v937
  %v939 = vpop.f32.mrf.mxu0
  %v940 = vadd.f32 %v150, %v939
  %941 = vdwg.mxu0
  %942 = vmatpush.bf16.msra.mxu0 %v622
  %943 = vmatpush.bf16.msra.mxu0 %v618
  %944 = vmatpush.bf16.msra.mxu0 %v614
  %945 = vmatpush.bf16.msra.mxu0 %v610
  %946 = vmatpush.bf16.msra.mxu0 %v606
  %947 = vmatpush.bf16.msra.mxu0 %v602
  %948 = vmatpush.bf16.msra.mxu0 %v598
  %949 = vmatpush.bf16.msra.mxu0 %v594
  %950 = vmatmul.bf16.gmra.mxu0 %v169
  %v951 = vpop.f32.mrf.mxu0
  %v952 = vadd.f32 %v938, %v951
  %v953 = vpop.f32.mrf.mxu0
  %v954 = vadd.f32 %v940, %v953
  %955 = vdwg.mxu0
  %956 = vmatpush.bf16.msra.mxu0 %v654
  %957 = vmatpush.bf16.msra.mxu0 %v650
  %958 = vmatpush.bf16.msra.mxu0 %v646
  %959 = vmatpush.bf16.msra.mxu0 %v642
  %960 = vmatpush.bf16.msra.mxu0 %v638
  %961 = vmatpush.bf16.msra.mxu0 %v634
  %962 = vmatpush.bf16.msra.mxu0 %v630
  %963 = vmatpush.bf16.msra.mxu0 %v626
  %964 = vmatmul.bf16.gmra.mxu0 %v170
  %v965 = vpop.f32.mrf.mxu0
  %v966 = vadd.f32 %v952, %v965
  %v967 = vpop.f32.mrf.mxu0
  %v968 = vadd.f32 %v954, %v967
  %969 = vdwg.mxu0
  %970 = vmatpush.bf16.msra.mxu0 %v686
  %971 = vmatpush.bf16.msra.mxu0 %v682
  %972 = vmatpush.bf16.msra.mxu0 %v678
  %973 = vmatpush.bf16.msra.mxu0 %v674
  %974 = vmatpush.bf16.msra.mxu0 %v670
  %975 = vmatpush.bf16.msra.mxu0 %v666
  %976 = vmatpush.bf16.msra.mxu0 %v662
  %977 = vmatpush.bf16.msra.mxu0 %v658
  %978 = vmatmul.bf16.gmra.mxu0 %v171
  %v979 = vpop.f32.mrf.mxu0
  %v980 = vadd.f32 %v966, %v979
  %v981 = vpop.f32.mrf.mxu0
  %v982 = vadd.f32 %v968, %v981
  %983 = vdwg.mxu0
  %984 = vmatpush.bf16.msra.mxu0 %v591
  %985 = vmatpush.bf16.msra.mxu0 %v587
  %986 = vmatpush.bf16.msra.mxu0 %v583
  %987 = vmatpush.bf16.msra.mxu0 %v579
  %988 = vmatpush.bf16.msra.mxu0 %v575
  %989 = vmatpush.bf16.msra.mxu0 %v571
  %990 = vmatpush.bf16.msra.mxu0 %v567
  %991 = vmatpush.bf16.msra.mxu0 %v563
  %992 = vmatmul.bf16.gmra.mxu0 %v168
  %v993 = vpop.f32.mrf.mxu0
  %v994 = vadd.f32 %v151, %v993
  %v995 = vpop.f32.mrf.mxu0
  %v996 = vadd.f32 %v151, %v995
  %997 = vdwg.mxu0
  %998 = vmatpush.bf16.msra.mxu0 %v623
  %999 = vmatpush.bf16.msra.mxu0 %v619
  %1000 = vmatpush.bf16.msra.mxu0 %v615
  %1001 = vmatpush.bf16.msra.mxu0 %v611
  %1002 = vmatpush.bf16.msra.mxu0 %v607
  %1003 = vmatpush.bf16.msra.mxu0 %v603
  %1004 = vmatpush.bf16.msra.mxu0 %v599
  %1005 = vmatpush.bf16.msra.mxu0 %v595
  %1006 = vmatmul.bf16.gmra.mxu0 %v169
  %v1007 = vpop.f32.mrf.mxu0
  %v1008 = vadd.f32 %v994, %v1007
  %v1009 = vpop.f32.mrf.mxu0
  %v1010 = vadd.f32 %v996, %v1009
  %1011 = vdwg.mxu0
  %1012 = vmatpush.bf16.msra.mxu0 %v655
  %1013 = vmatpush.bf16.msra.mxu0 %v651
  %1014 = vmatpush.bf16.msra.mxu0 %v647
  %1015 = vmatpush.bf16.msra.mxu0 %v643
  %1016 = vmatpush.bf16.msra.mxu0 %v639
  %1017 = vmatpush.bf16.msra.mxu0 %v635
  %1018 = vmatpush.bf16.msra.mxu0 %v631
  %1019 = vmatpush.bf16.msra.mxu0 %v627
  %1020 = vmatmul.bf16.gmra.mxu0 %v170
  %v1021 = vpop.f32.mrf.mxu0
  %v1022 = vadd.f32 %v1008, %v1021
  %v1023 = vpop.f32.mrf.mxu0
  %v1024 = vadd.f32 %v1010, %v1023
  %1025 = vdwg.mxu0
  %1026 = vmatpush.bf16.msra.mxu0 %v687
  %1027 = vmatpush.bf16.msra.mxu0 %v683
  %1028 = vmatpush.bf16.msra.mxu0 %v679
  %1029 = vmatpush.bf16.msra.mxu0 %v675
  %1030 = vmatpush.bf16.msra.mxu0 %v671
  %1031 = vmatpush.bf16.msra.mxu0 %v667
  %1032 = vmatpush.bf16.msra.mxu0 %v663
  %1033 = vmatpush.bf16.msra.mxu0 %v659
  %1034 = vmatmul.bf16.gmra.mxu0 %v171
  %v1035 = vpop.f32.mrf.mxu0
  %v1036 = vadd.f32 %v1022, %v1035
  %v1037 = vpop.f32.mrf.mxu0
  %v1038 = vadd.f32 %v1024, %v1037
  %1039 = vdwg.mxu0
  %v1040 = vmax.f32 %v868, 0.0
  %v1041 = vmax.f32 %v924, 0.0
  %v1042 = vmax.f32 %v980, 0.0
  %v1043 = vmax.f32 %v1036, 0.0
  %v1044 = vmax.f32 %v870, 0.0
  %v1045 = vmax.f32 %v926, 0.0
  %v1046 = vmax.f32 %v982, 0.0
  %v1047 = vmax.f32 %v1038, 0.0
  %v1048 = vpack.c.bf16 %v1041, %v1040
  %v1049 = vpack.c.bf16 %v1043, %v1042
  %v1050 = vpack.c.bf16 %v1045, %v1044
  %v1051 = vpack.c.bf16 %v1047, %v1046
  %1052 = vst [vmem:[%s3] sm:$0xff] %v1048
  %1053 = vst [vmem:[%s3 + $0x8] sm:$0xff] %v1049
  %1054 = vst [vmem:[%s3 + $0x10] sm:$0xff] %v1050
  %1055 = vst [vmem:[%s3 + $0x18] sm:$0xff] %v1051
  // Predicated region
  $region14: #{unet_forward.28} parent=0 // pred_check
    _
  $region15: #{unet_forward.28} parent=0 // pred_check_branch
    %1057 = sbr.rel (0) target = $region17
  $region16: #{unet_forward.28} parent=0 // pred_region
    _
  $region17: #{unet_forward.28} parent=0 // pred_fallthru
    _
  // Predicated region
  $region18: #{unet_forward.28} parent=0 // pred_check
    _
  $region19: #{unet_forward.28} parent=0 // pred_check_branch
    %1059 = sbr.rel (0) target = $region21
  $region20: #{unet_forward.28} parent=0 // pred_region
    _
  $region21: #{unet_forward.28} parent=0 // pred_fallthru
    _

// kernel: tile.28
$region0: #{tile.28}
  #allocation0 [shape = 's32[1]{0}', space=sflag, size = 0x4, scoped, tag = 'scoped memory for tile.28']
  %s0 = inlined_call_operand.vmem [shape: f32[64], index: 0, kind: input, shape index: {}]
  %s1 = inlined_call_operand.vmem [shape: f32[4,64], index: 1, kind: output, shape index: {}]
  // Predicated region
  $region2: #{tile.28} parent=0 // pred_check
    _
  $region3: #{tile.28} parent=0 // pred_check_branch
    %3 = sbr.rel (0) target = $region5
  $region4: #{tile.28} parent=0 // pred_region
    _
  $region5: #{tile.28} parent=0 // pred_fallthru
    _
  %v4 = vld [vmem:[%s0] ss:$0 sm:$0xff]
  %5 = vst [vmem:[%s1] sm:$0xf] %v4

// kernel: tile.33
$region0: #{tile.33}
  #allocation0 [shape = 's32[1]{0}', space=sflag, size = 0x4, scoped, tag = 'scoped memory for tile.33']
  %s0 = inlined_call_operand.vmem [shape: f32[32], index: 0, kind: input, shape index: {}]
  %s1 = inlined_call_operand.vmem [shape: f32[4,32], index: 1, kind: output, shape index: {}]
  // Predicated region
  $region2: #{tile.33} parent=0 // pred_check
    _
  $region3: #{tile.33} parent=0 // pred_check_branch
    %3 = sbr.rel (0) target = $region5
  $region4: #{tile.33} parent=0 // pred_region
    _
  $region5: #{tile.33} parent=0 // pred_fallthru
    _
  %v4 = vld [vmem:[%s0] ss:$0 sm:$0xff]
  %5 = vst [vmem:[%s1] sm:$0xf] %v4

// kernel: unet_forward.29
$region0: #{unet_forward.29}
  #allocation0 [shape = 'u32[]', space=smem, size = 0x4, offset = 0x4, fixed_abs, tag = 'smem constant byte address 0x4 - core index']
  #allocation1 [shape = 'u32[72,128]{1,0:T(1,128)}', space=vmem, size = 0x9000, scoped, tag = 'internal scratch']
  %s0 = inlined_call_operand.vmem [shape: bf16[16,768], index: 0, kind: input, shape index: {}]
  %s1 = inlined_call_operand.vmem [shape: bf16[768,256], index: 1, kind: input, shape index: {}]
  %s2 = inlined_call_operand.vmem [shape: f32[1,256], index: 2, kind: input, shape index: {}]
  %s3 = inlined_call_operand.vmem [shape: bf16[16,256], index: 3, kind: output, shape index: {}]
  %s4 = sld [smem:[#allocation0]]
  $region22: #{unet_forward.29} parent=0
    _
  %s6 = ssub.s32 1, %s4
  %s7 = scalar_select 0, %s6, %s4
  // Predicated region
  $region2: #{unet_forward.29} parent=0 // pred_check
    _
  $region3: #{unet_forward.29} parent=0 // pred_check_branch
    %9 = sbr.rel (0) target = $region5
  $region4: #{unet_forward.29} parent=0 // pred_region
    _
  $region5: #{unet_forward.29} parent=0 // pred_fallthru
    _
  // Predicated region
  $region6: #{unet_forward.29} parent=0 // pred_check
    _
  $region7: #{unet_forward.29} parent=0 // pred_check_branch
    %11 = sbr.rel (0) target = $region9
  $region8: #{unet_forward.29} parent=0 // pred_region
    _
  $region9: #{unet_forward.29} parent=0 // pred_fallthru
    _
  // Predicated region
  $region10: #{unet_forward.29} parent=0 // pred_check
    _
  $region11: #{unet_forward.29} parent=0 // pred_check_branch
    %13 = sbr.rel (0) target = $region13
  $region12: #{unet_forward.29} parent=0 // pred_region
    _
  $region13: #{unet_forward.29} parent=0 // pred_fallthru
    _
  %v14 = vld [vmem:[%s0] sm:$0xff]
  %v15 = vld [vmem:[%s0 + $0x8] sm:$0xff]
  %v16 = vld [vmem:[%s0 + $0x10] sm:$0xff]
  %v17 = vld [vmem:[%s0 + $0x18] sm:$0xff]
  %v18 = vld [vmem:[%s0 + $0x20] sm:$0xff]
  %v19 = vld [vmem:[%s0 + $0x28] sm:$0xff]
  %v20 = vld [vmem:[%s1] sm:$0xff]
  %v21 = vld [vmem:[%s1 + $0x8] sm:$0xff]
  %v22 = vld [vmem:[%s1 + $0x10] sm:$0xff]
  %v23 = vld [vmem:[%s1 + $0x18] sm:$0xff]
  %v24 = vld [vmem:[%s1 + $0x20] sm:$0xff]
  %v25 = vld [vmem:[%s1 + $0x28] sm:$0xff]
  %v26 = vld [vmem:[%s1 + $0x30] sm:$0xff]
  %v27 = vld [vmem:[%s1 + $0x38] sm:$0xff]
  %v28 = vld [vmem:[%s1 + $0x40] sm:$0xff]
  %v29 = vld [vmem:[%s1 + $0x48] sm:$0xff]
  %v30 = vld [vmem:[%s1 + $0x50] sm:$0xff]
  %v31 = vld [vmem:[%s1 + $0x58] sm:$0xff]
  %v32 = vld [vmem:[%s1 + $0x60] sm:$0xff]
  %v33 = vld [vmem:[%s1 + $0x68] sm:$0xff]
  %v34 = vld [vmem:[%s1 + $0x70] sm:$0xff]
  %v35 = vld [vmem:[%s1 + $0x78] sm:$0xff]
  %v36 = vld [vmem:[%s1 + $0x80] sm:$0xff]
  %v37 = vld [vmem:[%s1 + $0x88] sm:$0xff]
  %v38 = vld [vmem:[%s1 + $0x90] sm:$0xff]
  %v39 = vld [vmem:[%s1 + $0x98] sm:$0xff]
  %v40 = vld [vmem:[%s1 + $0xa0] sm:$0xff]
  %v41 = vld [vmem:[%s1 + $0xa8] sm:$0xff]
  %v42 = vld [vmem:[%s1 + $0xb0] sm:$0xff]
  %v43 = vld [vmem:[%s1 + $0xb8] sm:$0xff]
  %v44 = vld [vmem:[%s1 + $0xc0] sm:$0xff]
  %v45 = vld [vmem:[%s1 + $0xc8] sm:$0xff]
  %v46 = vld [vmem:[%s1 + $0xd0] sm:$0xff]
  %v47 = vld [vmem:[%s1 + $0xd8] sm:$0xff]
  %v48 = vld [vmem:[%s1 + $0xe0] sm:$0xff]
  %v49 = vld [vmem:[%s1 + $0xe8] sm:$0xff]
  %v50 = vld [vmem:[%s1 + $0xf0] sm:$0xff]
  %v51 = vld [vmem:[%s1 + $0xf8] sm:$0xff]
  %v52 = vld [vmem:[%s1 + $0x100] sm:$0xff]
  %v53 = vld [vmem:[%s1 + $0x108] sm:$0xff]
  %v54 = vld [vmem:[%s1 + $0x110] sm:$0xff]
  %v55 = vld [vmem:[%s1 + $0x118] sm:$0xff]
  %v56 = vld [vmem:[%s1 + $0x120] sm:$0xff]
  %v57 = vld [vmem:[%s1 + $0x128] sm:$0xff]
  %v58 = vld [vmem:[%s1 + $0x130] sm:$0xff]
  %v59 = vld [vmem:[%s1 + $0x138] sm:$0xff]
  %v60 = vld [vmem:[%s1 + $0x140] sm:$0xff]
  %v61 = vld [vmem:[%s1 + $0x148] sm:$0xff]
  %v62 = vld [vmem:[%s1 + $0x150] sm:$0xff]
  %v63 = vld [vmem:[%s1 + $0x158] sm:$0xff]
  %v64 = vld [vmem:[%s1 + $0x160] sm:$0xff]
  %v65 = vld [vmem:[%s1 + $0x168] sm:$0xff]
  %v66 = vld [vmem:[%s1 + $0x170] sm:$0xff]
  %v67 = vld [vmem:[%s1 + $0x178] sm:$0xff]
  %v68 = vld [vmem:[%s1 + $0x180] sm:$0xff]
  %v69 = vld [vmem:[%s1 + $0x188] sm:$0xff]
  %v70 = vld [vmem:[%s1 + $0x190] sm:$0xff]
  %v71 = vld [vmem:[%s1 + $0x198] sm:$0xff]
  %v72 = vld [vmem:[%s1 + $0x1a0] sm:$0xff]
  %v73 = vld [vmem:[%s1 + $0x1a8] sm:$0xff]
  %v74 = vld [vmem:[%s1 + $0x1b0] sm:$0xff]
  %v75 = vld [vmem:[%s1 + $0x1b8] sm:$0xff]
  %v76 = vld [vmem:[%s1 + $0x1c0] sm:$0xff]
  %v77 = vld [vmem:[%s1 + $0x1c8] sm:$0xff]
  %v78 = vld [vmem:[%s1 + $0x1d0] sm:$0xff]
  %v79 = vld [vmem:[%s1 + $0x1d8] sm:$0xff]
  %v80 = vld [vmem:[%s1 + $0x1e0] sm:$0xff]
  %v81 = vld [vmem:[%s1 + $0x1e8] sm:$0xff]
  %v82 = vld [vmem:[%s1 + $0x1f0] sm:$0xff]
  %v83 = vld [vmem:[%s1 + $0x1f8] sm:$0xff]
  %v84 = vld [vmem:[%s1 + $0x200] sm:$0xff]
  %v85 = vld [vmem:[%s1 + $0x208] sm:$0xff]
  %v86 = vld [vmem:[%s1 + $0x210] sm:$0xff]
  %v87 = vld [vmem:[%s1 + $0x218] sm:$0xff]
  %v88 = vld [vmem:[%s1 + $0x220] sm:$0xff]
  %v89 = vld [vmem:[%s1 + $0x228] sm:$0xff]
  %v90 = vld [vmem:[%s1 + $0x230] sm:$0xff]
  %v91 = vld [vmem:[%s1 + $0x238] sm:$0xff]
  %v92 = vld [vmem:[%s1 + $0x240] sm:$0xff]
  %v93 = vld [vmem:[%s1 + $0x248] sm:$0xff]
  %v94 = vld [vmem:[%s1 + $0x250] sm:$0xff]
  %v95 = vld [vmem:[%s1 + $0x258] sm:$0xff]
  %v96 = vld [vmem:[%s1 + $0x260] sm:$0xff]
  %v97 = vld [vmem:[%s1 + $0x268] sm:$0xff]
  %v98 = vld [vmem:[%s1 + $0x270] sm:$0xff]
  %v99 = vld [vmem:[%s1 + $0x278] sm:$0xff]
  %v100 = vld [vmem:[%s1 + $0x280] sm:$0xff]
  %v101 = vld [vmem:[%s1 + $0x288] sm:$0xff]
  %v102 = vld [vmem:[%s1 + $0x290] sm:$0xff]
  %v103 = vld [vmem:[%s1 + $0x298] sm:$0xff]
  %v104 = vld [vmem:[%s1 + $0x2a0] sm:$0xff]
  %v105 = vld [vmem:[%s1 + $0x2a8] sm:$0xff]
  %v106 = vld [vmem:[%s1 + $0x2b0] sm:$0xff]
  %v107 = vld [vmem:[%s1 + $0x2b8] sm:$0xff]
  %v108 = vld [vmem:[%s1 + $0x2c0] sm:$0xff]
  %v109 = vld [vmem:[%s1 + $0x2c8] sm:$0xff]
  %v110 = vld [vmem:[%s1 + $0x2d0] sm:$0xff]
  %v111 = vld [vmem:[%s1 + $0x2d8] sm:$0xff]
  %v112 = vld [vmem:[%s1 + $0x2e0] sm:$0xff]
  %v113 = vld [vmem:[%s1 + $0x2e8] sm:$0xff]
  %v114 = vld [vmem:[%s1 + $0x2f0] sm:$0xff]
  %v115 = vld [vmem:[%s1 + $0x2f8] sm:$0xff]
  %v116 = vld [vmem:[%s2] sm:$0x3]
  %v118 = vperm.slane %v116, 0
  %v119 = vperm.slane %v116, 1
  %v128 = vunpack.c.l.b16 %v14
  %v129 = vunpack.c.h.b16 %v14
  %v130 = vunpack.c.l.b16 %v15
  %v131 = vunpack.c.h.b16 %v15
  %v132 = vunpack.c.l.b16 %v16
  %v133 = vunpack.c.h.b16 %v16
  %v134 = vunpack.c.l.b16 %v17
  %v135 = vunpack.c.h.b16 %v17
  %v136 = vunpack.c.l.b16 %v18
  %v137 = vunpack.c.h.b16 %v18
  %v138 = vunpack.c.l.b16 %v19
  %v139 = vunpack.c.h.b16 %v19
  %v140 = vpack.c.b16 %v134, %v128
  %v141 = vpack.c.b16 %v135, %v129
  %v142 = vpack.c.b16 %v136, %v130
  %v143 = vpack.c.b16 %v137, %v131
  %v144 = vpack.c.b16 %v138, %v132
  %v145 = vpack.c.b16 %v139, %v133
  %v248 = vunpack.c.l.b16 %v20
  %v249 = vunpack.c.h.b16 %v20
  %v250 = vunpack.c.l.b16 %v21
  %v251 = vunpack.c.h.b16 %v21
  %v252 = vunpack.c.l.b16 %v22
  %v253 = vunpack.c.h.b16 %v22
  %v254 = vunpack.c.l.b16 %v23
  %v255 = vunpack.c.h.b16 %v23
  %v256 = vunpack.c.l.b16 %v24
  %v257 = vunpack.c.h.b16 %v24
  %v258 = vunpack.c.l.b16 %v25
  %v259 = vunpack.c.h.b16 %v25
  %v260 = vunpack.c.l.b16 %v26
  %v261 = vunpack.c.h.b16 %v26
  %v262 = vunpack.c.l.b16 %v27
  %v263 = vunpack.c.h.b16 %v27
  %v264 = vunpack.c.l.b16 %v28
  %v265 = vunpack.c.h.b16 %v28
  %v266 = vunpack.c.l.b16 %v29
  %v267 = vunpack.c.h.b16 %v29
  %v268 = vunpack.c.l.b16 %v30
  %v269 = vunpack.c.h.b16 %v30
  %v270 = vunpack.c.l.b16 %v31
  %v271 = vunpack.c.h.b16 %v31
  %v272 = vunpack.c.l.b16 %v32
  %v273 = vunpack.c.h.b16 %v32
  %v274 = vunpack.c.l.b16 %v33
  %v275 = vunpack.c.h.b16 %v33
  %v276 = vunpack.c.l.b16 %v34
  %v277 = vunpack.c.h.b16 %v34
  %v278 = vunpack.c.l.b16 %v35
  %v279 = vunpack.c.h.b16 %v35
  %v280 = vunpack.c.l.b16 %v36
  %v281 = vunpack.c.h.b16 %v36
  %v282 = vunpack.c.l.b16 %v37
  %v283 = vunpack.c.h.b16 %v37
  %v284 = vunpack.c.l.b16 %v38
  %v285 = vunpack.c.h.b16 %v38
  %v286 = vunpack.c.l.b16 %v39
  %v287 = vunpack.c.h.b16 %v39
  %v288 = vunpack.c.l.b16 %v40
  %v289 = vunpack.c.h.b16 %v40
  %v290 = vunpack.c.l.b16 %v41
  %v291 = vunpack.c.h.b16 %v41
  %v292 = vunpack.c.l.b16 %v42
  %v293 = vunpack.c.h.b16 %v42
  %v294 = vunpack.c.l.b16 %v43
  %v295 = vunpack.c.h.b16 %v43
  %v296 = vunpack.c.l.b16 %v44
  %v297 = vunpack.c.h.b16 %v44
  %v298 = vunpack.c.l.b16 %v45
  %v299 = vunpack.c.h.b16 %v45
  %v300 = vunpack.c.l.b16 %v46
  %v301 = vunpack.c.h.b16 %v46
  %v302 = vunpack.c.l.b16 %v47
  %v303 = vunpack.c.h.b16 %v47
  %v304 = vunpack.c.l.b16 %v48
  %v305 = vunpack.c.h.b16 %v48
  %v306 = vunpack.c.l.b16 %v49
  %v307 = vunpack.c.h.b16 %v49
  %v308 = vunpack.c.l.b16 %v50
  %v309 = vunpack.c.h.b16 %v50
  %v310 = vunpack.c.l.b16 %v51
  %v311 = vunpack.c.h.b16 %v51
  %v312 = vunpack.c.l.b16 %v52
  %v313 = vunpack.c.h.b16 %v52
  %v314 = vunpack.c.l.b16 %v53
  %v315 = vunpack.c.h.b16 %v53
  %v316 = vunpack.c.l.b16 %v54
  %v317 = vunpack.c.h.b16 %v54
  %v318 = vunpack.c.l.b16 %v55
  %v319 = vunpack.c.h.b16 %v55
  %v320 = vunpack.c.l.b16 %v56
  %v321 = vunpack.c.h.b16 %v56
  %v322 = vunpack.c.l.b16 %v57
  %v323 = vunpack.c.h.b16 %v57
  %v324 = vunpack.c.l.b16 %v58
  %v325 = vunpack.c.h.b16 %v58
  %v326 = vunpack.c.l.b16 %v59
  %v327 = vunpack.c.h.b16 %v59
  %v328 = vunpack.c.l.b16 %v60
  %v329 = vunpack.c.h.b16 %v60
  %v330 = vunpack.c.l.b16 %v61
  %v331 = vunpack.c.h.b16 %v61
  %v332 = vunpack.c.l.b16 %v62
  %v333 = vunpack.c.h.b16 %v62
  %v334 = vunpack.c.l.b16 %v63
  %v335 = vunpack.c.h.b16 %v63
  %v336 = vunpack.c.l.b16 %v64
  %v337 = vunpack.c.h.b16 %v64
  %v338 = vunpack.c.l.b16 %v65
  %v339 = vunpack.c.h.b16 %v65
  %v340 = vunpack.c.l.b16 %v66
  %v341 = vunpack.c.h.b16 %v66
  %v342 = vunpack.c.l.b16 %v67
  %v343 = vunpack.c.h.b16 %v67
  %v344 = vunpack.c.l.b16 %v68
  %v345 = vunpack.c.h.b16 %v68
  %v346 = vunpack.c.l.b16 %v69
  %v347 = vunpack.c.h.b16 %v69
  %v348 = vunpack.c.l.b16 %v70
  %v349 = vunpack.c.h.b16 %v70
  %v350 = vunpack.c.l.b16 %v71
  %v351 = vunpack.c.h.b16 %v71
  %v352 = vunpack.c.l.b16 %v72
  %v353 = vunpack.c.h.b16 %v72
  %v354 = vunpack.c.l.b16 %v73
  %v355 = vunpack.c.h.b16 %v73
  %v356 = vunpack.c.l.b16 %v74
  %v357 = vunpack.c.h.b16 %v74
  %v358 = vunpack.c.l.b16 %v75
  %v359 = vunpack.c.h.b16 %v75
  %v360 = vunpack.c.l.b16 %v76
  %v361 = vunpack.c.h.b16 %v76
  %v362 = vunpack.c.l.b16 %v77
  %v363 = vunpack.c.h.b16 %v77
  %v364 = vunpack.c.l.b16 %v78
  %v365 = vunpack.c.h.b16 %v78
  %v366 = vunpack.c.l.b16 %v79
  %v367 = vunpack.c.h.b16 %v79
  %v368 = vunpack.c.l.b16 %v80
  %v369 = vunpack.c.h.b16 %v80
  %v370 = vunpack.c.l.b16 %v81
  %v371 = vunpack.c.h.b16 %v81
  %v372 = vunpack.c.l.b16 %v82
  %v373 = vunpack.c.h.b16 %v82
  %v374 = vunpack.c.l.b16 %v83
  %v375 = vunpack.c.h.b16 %v83
  %v376 = vunpack.c.l.b16 %v84
  %v377 = vunpack.c.h.b16 %v84
  %v378 = vunpack.c.l.b16 %v85
  %v379 = vunpack.c.h.b16 %v85
  %v380 = vunpack.c.l.b16 %v86
  %v381 = vunpack.c.h.b16 %v86
  %v382 = vunpack.c.l.b16 %v87
  %v383 = vunpack.c.h.b16 %v87
  %v384 = vunpack.c.l.b16 %v88
  %v385 = vunpack.c.h.b16 %v88
  %v386 = vunpack.c.l.b16 %v89
  %v387 = vunpack.c.h.b16 %v89
  %v388 = vunpack.c.l.b16 %v90
  %v389 = vunpack.c.h.b16 %v90
  %v390 = vunpack.c.l.b16 %v91
  %v391 = vunpack.c.h.b16 %v91
  %v392 = vunpack.c.l.b16 %v92
  %v393 = vunpack.c.h.b16 %v92
  %v394 = vunpack.c.l.b16 %v93
  %v395 = vunpack.c.h.b16 %v93
  %v396 = vunpack.c.l.b16 %v94
  %v397 = vunpack.c.h.b16 %v94
  %v398 = vunpack.c.l.b16 %v95
  %v399 = vunpack.c.h.b16 %v95
  %v400 = vunpack.c.l.b16 %v96
  %v401 = vunpack.c.h.b16 %v96
  %v402 = vunpack.c.l.b16 %v97
  %v403 = vunpack.c.h.b16 %v97
  %v404 = vunpack.c.l.b16 %v98
  %v405 = vunpack.c.h.b16 %v98
  %v406 = vunpack.c.l.b16 %v99
  %v407 = vunpack.c.h.b16 %v99
  %v408 = vunpack.c.l.b16 %v100
  %v409 = vunpack.c.h.b16 %v100
  %v410 = vunpack.c.l.b16 %v101
  %v411 = vunpack.c.h.b16 %v101
  %v412 = vunpack.c.l.b16 %v102
  %v413 = vunpack.c.h.b16 %v102
  %v414 = vunpack.c.l.b16 %v103
  %v415 = vunpack.c.h.b16 %v103
  %v416 = vunpack.c.l.b16 %v104
  %v417 = vunpack.c.h.b16 %v104
  %v418 = vunpack.c.l.b16 %v105
  %v419 = vunpack.c.h.b16 %v105
  %v420 = vunpack.c.l.b16 %v106
  %v421 = vunpack.c.h.b16 %v106
  %v422 = vunpack.c.l.b16 %v107
  %v423 = vunpack.c.h.b16 %v107
  %v424 = vunpack.c.l.b16 %v108
  %v425 = vunpack.c.h.b16 %v108
  %v426 = vunpack.c.l.b16 %v109
  %v427 = vunpack.c.h.b16 %v109
  %v428 = vunpack.c.l.b16 %v110
  %v429 = vunpack.c.h.b16 %v110
  %v430 = vunpack.c.l.b16 %v111
  %v431 = vunpack.c.h.b16 %v111
  %v432 = vunpack.c.l.b16 %v112
  %v433 = vunpack.c.h.b16 %v112
  %v434 = vunpack.c.l.b16 %v113
  %v435 = vunpack.c.h.b16 %v113
  %v436 = vunpack.c.l.b16 %v114
  %v437 = vunpack.c.h.b16 %v114
  %v438 = vunpack.c.l.b16 %v115
  %v439 = vunpack.c.h.b16 %v115
  %v440 = vpack.c.b16 %v250, %v248
  %v441 = vpack.c.b16 %v251, %v249
  %v442 = vpack.c.b16 %v254, %v252
  %v443 = vpack.c.b16 %v255, %v253
  %v444 = vpack.c.b16 %v258, %v256
  %v445 = vpack.c.b16 %v259, %v257
  %v446 = vpack.c.b16 %v262, %v260
  %v447 = vpack.c.b16 %v263, %v261
  %v448 = vpack.c.b16 %v266, %v264
  %v449 = vpack.c.b16 %v267, %v265
  %v450 = vpack.c.b16 %v270, %v268
  %v451 = vpack.c.b16 %v271, %v269
  %v452 = vpack.c.b16 %v274, %v272
  %v453 = vpack.c.b16 %v275, %v273
  %v454 = vpack.c.b16 %v278, %v276
  %v455 = vpack.c.b16 %v279, %v277
  %v456 = vpack.c.b16 %v282, %v280
  %v457 = vpack.c.b16 %v283, %v281
  %v458 = vpack.c.b16 %v286, %v284
  %v459 = vpack.c.b16 %v287, %v285
  %v460 = vpack.c.b16 %v290, %v288
  %v461 = vpack.c.b16 %v291, %v289
  %v462 = vpack.c.b16 %v294, %v292
  %v463 = vpack.c.b16 %v295, %v293
  %v464 = vpack.c.b16 %v298, %v296
  %v465 = vpack.c.b16 %v299, %v297
  %v466 = vpack.c.b16 %v302, %v300
  %v467 = vpack.c.b16 %v303, %v301
  %v468 = vpack.c.b16 %v306, %v304
  %v469 = vpack.c.b16 %v307, %v305
  %v470 = vpack.c.b16 %v310, %v308
  %v471 = vpack.c.b16 %v311, %v309
  %v472 = vpack.c.b16 %v314, %v312
  %v473 = vpack.c.b16 %v315, %v313
  %v474 = vpack.c.b16 %v318, %v316
  %v475 = vpack.c.b16 %v319, %v317
  %v476 = vpack.c.b16 %v322, %v320
  %v477 = vpack.c.b16 %v323, %v321
  %v478 = vpack.c.b16 %v326, %v324
  %v479 = vpack.c.b16 %v327, %v325
  %v480 = vpack.c.b16 %v330, %v328
  %v481 = vpack.c.b16 %v331, %v329
  %v482 = vpack.c.b16 %v334, %v332
  %v483 = vpack.c.b16 %v335, %v333
  %v484 = vpack.c.b16 %v338, %v336
  %v485 = vpack.c.b16 %v339, %v337
  %v486 = vpack.c.b16 %v342, %v340
  %v487 = vpack.c.b16 %v343, %v341
  %v488 = vpack.c.b16 %v346, %v344
  %v489 = vpack.c.b16 %v347, %v345
  %v490 = vpack.c.b16 %v350, %v348
  %v491 = vpack.c.b16 %v351, %v349
  %v492 = vpack.c.b16 %v354, %v352
  %v493 = vpack.c.b16 %v355, %v353
  %v494 = vpack.c.b16 %v358, %v356
  %v495 = vpack.c.b16 %v359, %v357
  %v496 = vpack.c.b16 %v362, %v360
  %v497 = vpack.c.b16 %v363, %v361
  %v498 = vpack.c.b16 %v366, %v364
  %v499 = vpack.c.b16 %v367, %v365
  %v500 = vpack.c.b16 %v370, %v368
  %v501 = vpack.c.b16 %v371, %v369
  %v502 = vpack.c.b16 %v374, %v372
  %v503 = vpack.c.b16 %v375, %v373
  %v504 = vpack.c.b16 %v378, %v376
  %v505 = vpack.c.b16 %v379, %v377
  %v506 = vpack.c.b16 %v382, %v380
  %v507 = vpack.c.b16 %v383, %v381
  %v508 = vpack.c.b16 %v386, %v384
  %v509 = vpack.c.b16 %v387, %v385
  %v510 = vpack.c.b16 %v390, %v388
  %v511 = vpack.c.b16 %v391, %v389
  %v512 = vpack.c.b16 %v394, %v392
  %v513 = vpack.c.b16 %v395, %v393
  %v514 = vpack.c.b16 %v398, %v396
  %v515 = vpack.c.b16 %v399, %v397
  %v516 = vpack.c.b16 %v402, %v400
  %v517 = vpack.c.b16 %v403, %v401
  %v518 = vpack.c.b16 %v406, %v404
  %v519 = vpack.c.b16 %v407, %v405
  %v520 = vpack.c.b16 %v410, %v408
  %v521 = vpack.c.b16 %v411, %v409
  %v522 = vpack.c.b16 %v414, %v412
  %v523 = vpack.c.b16 %v415, %v413
  %v524 = vpack.c.b16 %v418, %v416
  %v525 = vpack.c.b16 %v419, %v417
  %v526 = vpack.c.b16 %v422, %v420
  %v527 = vpack.c.b16 %v423, %v421
  %v528 = vpack.c.b16 %v426, %v424
  %v529 = vpack.c.b16 %v427, %v425
  %v530 = vpack.c.b16 %v430, %v428
  %v531 = vpack.c.b16 %v431, %v429
  %v532 = vpack.c.b16 %v434, %v432
  %v533 = vpack.c.b16 %v435, %v433
  %v534 = vpack.c.b16 %v438, %v436
  %v535 = vpack.c.b16 %v439, %v437
  %632 = vmatpush.bf16.msra.mxu0 %v454
  %633 = vmatpush.bf16.msra.mxu0 %v452
  %634 = vmatpush.bf16.msra.mxu0 %v450
  %635 = vmatpush.bf16.msra.mxu0 %v448
  %636 = vmatpush.bf16.msra.mxu0 %v446
  %637 = vmatpush.bf16.msra.mxu0 %v444
  %638 = vmatpush.bf16.msra.mxu0 %v442
  %639 = vmatpush.bf16.msra.mxu0 %v440
  %640 = vmatmul.bf16.gmra.mxu0 %v140
  %v641 = vpop.f32.mrf.mxu0
  %v642 = vadd.f32 %v118, %v641
  %v643 = vpop.f32.mrf.mxu0
  %v644 = vadd.f32 %v118, %v643
  %645 = vdwg.mxu0
  %646 = vmatpush.bf16.msra.mxu0 %v470
  %647 = vmatpush.bf16.msra.mxu0 %v468
  %648 = vmatpush.bf16.msra.mxu0 %v466
  %649 = vmatpush.bf16.msra.mxu0 %v464
  %650 = vmatpush.bf16.msra.mxu0 %v462
  %651 = vmatpush.bf16.msra.mxu0 %v460
  %652 = vmatpush.bf16.msra.mxu0 %v458
  %653 = vmatpush.bf16.msra.mxu0 %v456
  %654 = vmatmul.bf16.gmra.mxu0 %v141
  %v655 = vpop.f32.mrf.mxu0
  %v656 = vadd.f32 %v642, %v655
  %v657 = vpop.f32.mrf.mxu0
  %v658 = vadd.f32 %v644, %v657
  %659 = vdwg.mxu0
  %660 = vmatpush.bf16.msra.mxu0 %v486
  %661 = vmatpush.bf16.msra.mxu0 %v484
  %662 = vmatpush.bf16.msra.mxu0 %v482
  %663 = vmatpush.bf16.msra.mxu0 %v480
  %664 = vmatpush.bf16.msra.mxu0 %v478
  %665 = vmatpush.bf16.msra.mxu0 %v476
  %666 = vmatpush.bf16.msra.mxu0 %v474
  %667 = vmatpush.bf16.msra.mxu0 %v472
  %668 = vmatmul.bf16.gmra.mxu0 %v142
  %v669 = vpop.f32.mrf.mxu0
  %v670 = vadd.f32 %v656, %v669
  %v671 = vpop.f32.mrf.mxu0
  %v672 = vadd.f32 %v658, %v671
  %673 = vdwg.mxu0
  %674 = vmatpush.bf16.msra.mxu0 %v502
  %675 = vmatpush.bf16.msra.mxu0 %v500
  %676 = vmatpush.bf16.msra.mxu0 %v498
  %677 = vmatpush.bf16.msra.mxu0 %v496
  %678 = vmatpush.bf16.msra.mxu0 %v494
  %679 = vmatpush.bf16.msra.mxu0 %v492
  %680 = vmatpush.bf16.msra.mxu0 %v490
  %681 = vmatpush.bf16.msra.mxu0 %v488
  %682 = vmatmul.bf16.gmra.mxu0 %v143
  %v683 = vpop.f32.mrf.mxu0
  %v684 = vadd.f32 %v670, %v683
  %v685 = vpop.f32.mrf.mxu0
  %v686 = vadd.f32 %v672, %v685
  %687 = vdwg.mxu0
  %688 = vmatpush.bf16.msra.mxu0 %v518
  %689 = vmatpush.bf16.msra.mxu0 %v516
  %690 = vmatpush.bf16.msra.mxu0 %v514
  %691 = vmatpush.bf16.msra.mxu0 %v512
  %692 = vmatpush.bf16.msra.mxu0 %v510
  %693 = vmatpush.bf16.msra.mxu0 %v508
  %694 = vmatpush.bf16.msra.mxu0 %v506
  %695 = vmatpush.bf16.msra.mxu0 %v504
  %696 = vmatmul.bf16.gmra.mxu0 %v144
  %v697 = vpop.f32.mrf.mxu0
  %v698 = vadd.f32 %v684, %v697
  %v699 = vpop.f32.mrf.mxu0
  %v700 = vadd.f32 %v686, %v699
  %701 = vdwg.mxu0
  %702 = vmatpush.bf16.msra.mxu0 %v534
  %703 = vmatpush.bf16.msra.mxu0 %v532
  %704 = vmatpush.bf16.msra.mxu0 %v530
  %705 = vmatpush.bf16.msra.mxu0 %v528
  %706 = vmatpush.bf16.msra.mxu0 %v526
  %707 = vmatpush.bf16.msra.mxu0 %v524
  %708 = vmatpush.bf16.msra.mxu0 %v522
  %709 = vmatpush.bf16.msra.mxu0 %v520
  %710 = vmatmul.bf16.gmra.mxu0 %v145
  %v711 = vpop.f32.mrf.mxu0
  %v712 = vadd.f32 %v698, %v711
  %v713 = vpop.f32.mrf.mxu0
  %v714 = vadd.f32 %v700, %v713
  %715 = vdwg.mxu0
  %716 = vmatpush.bf16.msra.mxu0 %v455
  %717 = vmatpush.bf16.msra.mxu0 %v453
  %718 = vmatpush.bf16.msra.mxu0 %v451
  %719 = vmatpush.bf16.msra.mxu0 %v449
  %720 = vmatpush.bf16.msra.mxu0 %v447
  %721 = vmatpush.bf16.msra.mxu0 %v445
  %722 = vmatpush.bf16.msra.mxu0 %v443
  %723 = vmatpush.bf16.msra.mxu0 %v441
  %724 = vmatmul.bf16.gmra.mxu0 %v140
  %v725 = vpop.f32.mrf.mxu0
  %v726 = vadd.f32 %v119, %v725
  %v727 = vpop.f32.mrf.mxu0
  %v728 = vadd.f32 %v119, %v727
  %729 = vdwg.mxu0
  %730 = vmatpush.bf16.msra.mxu0 %v471
  %731 = vmatpush.bf16.msra.mxu0 %v469
  %732 = vmatpush.bf16.msra.mxu0 %v467
  %733 = vmatpush.bf16.msra.mxu0 %v465
  %734 = vmatpush.bf16.msra.mxu0 %v463
  %735 = vmatpush.bf16.msra.mxu0 %v461
  %736 = vmatpush.bf16.msra.mxu0 %v459
  %737 = vmatpush.bf16.msra.mxu0 %v457
  %738 = vmatmul.bf16.gmra.mxu0 %v141
  %v739 = vpop.f32.mrf.mxu0
  %v740 = vadd.f32 %v726, %v739
  %v741 = vpop.f32.mrf.mxu0
  %v742 = vadd.f32 %v728, %v741
  %743 = vdwg.mxu0
  %744 = vmatpush.bf16.msra.mxu0 %v487
  %745 = vmatpush.bf16.msra.mxu0 %v485
  %746 = vmatpush.bf16.msra.mxu0 %v483
  %747 = vmatpush.bf16.msra.mxu0 %v481
  %748 = vmatpush.bf16.msra.mxu0 %v479
  %749 = vmatpush.bf16.msra.mxu0 %v477
  %750 = vmatpush.bf16.msra.mxu0 %v475
  %751 = vmatpush.bf16.msra.mxu0 %v473
  %752 = vmatmul.bf16.gmra.mxu0 %v142
  %v753 = vpop.f32.mrf.mxu0
  %v754 = vadd.f32 %v740, %v753
  %v755 = vpop.f32.mrf.mxu0
  %v756 = vadd.f32 %v742, %v755
  %757 = vdwg.mxu0
  %758 = vmatpush.bf16.msra.mxu0 %v503
  %759 = vmatpush.bf16.msra.mxu0 %v501
  %760 = vmatpush.bf16.msra.mxu0 %v499
  %761 = vmatpush.bf16.msra.mxu0 %v497
  %762 = vmatpush.bf16.msra.mxu0 %v495
  %763 = vmatpush.bf16.msra.mxu0 %v493
  %764 = vmatpush.bf16.msra.mxu0 %v491
  %765 = vmatpush.bf16.msra.mxu0 %v489
  %766 = vmatmul.bf16.gmra.mxu0 %v143
  %v767 = vpop.f32.mrf.mxu0
  %v768 = vadd.f32 %v754, %v767
  %v769 = vpop.f32.mrf.mxu0
  %v770 = vadd.f32 %v756, %v769
  %771 = vdwg.mxu0
  %772 = vmatpush.bf16.msra.mxu0 %v519
  %773 = vmatpush.bf16.msra.mxu0 %v517
  %774 = vmatpush.bf16.msra.mxu0 %v515
  %775 = vmatpush.bf16.msra.mxu0 %v513
  %776 = vmatpush.bf16.msra.mxu0 %v511
  %777 = vmatpush.bf16.msra.mxu0 %v509
  %778 = vmatpush.bf16.msra.mxu0 %v507
  %779 = vmatpush.bf16.msra.mxu0 %v505
  %780 = vmatmul.bf16.gmra.mxu0 %v144
  %v781 = vpop.f32.mrf.mxu0
  %v782 = vadd.f32 %v768, %v781
  %v783 = vpop.f32.mrf.mxu0
  %v784 = vadd.f32 %v770, %v783
  %785 = vdwg.mxu0
  %786 = vmatpush.bf16.msra.mxu0 %v535
  %787 = vmatpush.bf16.msra.mxu0 %v533
  %788 = vmatpush.bf16.msra.mxu0 %v531
  %789 = vmatpush.bf16.msra.mxu0 %v529
  %790 = vmatpush.bf16.msra.mxu0 %v527
  %791 = vmatpush.bf16.msra.mxu0 %v525
  %792 = vmatpush.bf16.msra.mxu0 %v523
  %793 = vmatpush.bf16.msra.mxu0 %v521
  %794 = vmatmul.bf16.gmra.mxu0 %v145
  %v795 = vpop.f32.mrf.mxu0
  %v796 = vadd.f32 %v782, %v795
  %v797 = vpop.f32.mrf.mxu0
  %v798 = vadd.f32 %v784, %v797
  %799 = vdwg.mxu0
  %v800 = vmax.f32 %v712, 0.0
  %v801 = vmax.f32 %v796, 0.0
  %v802 = vmax.f32 %v714, 0.0
  %v803 = vmax.f32 %v798, 0.0
  %v804 = vpack.c.bf16 %v801, %v800
  %v805 = vpack.c.bf16 %v803, %v802
  %806 = vst [vmem:[%s3] sm:$0xff] %v804
  %807 = vst [vmem:[%s3 + $0x8] sm:$0xff] %v805
  // Predicated region
  $region14: #{unet_forward.29} parent=0 // pred_check
    _
  $region15: #{unet_forward.29} parent=0 // pred_check_branch
    %809 = sbr.rel (0) target = $region17
  $region16: #{unet_forward.29} parent=0 // pred_region
    _
  $region17: #{unet_forward.29} parent=0 // pred_fallthru
    _
  // Predicated region
  $region18: #{unet_forward.29} parent=0 // pred_check
    _
  $region19: #{unet_forward.29} parent=0 // pred_check_branch
    %811 = sbr.rel (0) target = $region21
  $region20: #{unet_forward.29} parent=0 // pred_region
    _
  $region21: #{unet_forward.29} parent=0 // pred_fallthru
    _

// kernel: unet_forward.30
$region0: #{unet_forward.30}
  #allocation0 [shape = 'u32[]', space=smem, size = 0x4, offset = 0x4, fixed_abs, tag = 'smem constant byte address 0x4 - core index']
  #allocation1 [shape = 'u32[72,128]{1,0:T(1,128)}', space=vmem, size = 0x9000, scoped, tag = 'internal scratch']
  %s0 = inlined_call_operand.vmem [shape: bf16[32,384], index: 0, kind: input, shape index: {}]
  %s1 = inlined_call_operand.vmem [shape: bf16[384,128], index: 1, kind: input, shape index: {}]
  %s2 = inlined_call_operand.vmem [shape: f32[1,128], index: 2, kind: input, shape index: {}]
  %s3 = inlined_call_operand.vmem [shape: bf16[32,128], index: 3, kind: output, shape index: {}]
  %s4 = sld [smem:[#allocation0]]
  $region45: #{unet_forward.30} parent=0
    _
  %s6 = ssub.s32 1, %s4
  %s7 = scalar_select 0, %s6, %s4
  loop: start=0, step=1, limit=4
  $region2: #{unet_forward.30} parent=0 // loop_pre_header
    _
  $region3: #{unet_forward.30} parent=0 // loop_header
    %s9 = sphi 0, %s13
    %p10 = scmp.ge.s32.totalorder %s9, 4
    %s19 = sphi 0, %s21
    %s22 = sphi 0, %s19
    %s23 = sphi 0, %s22
    %s39 = sphi 0, %s23
    %s43 = sphi 0, %s43
    %s45 = sphi 0, %s43
    %s46 = sphi 0, %s45
    %s60 = sphi 0, %s46
    %s64 = sphi 0, %s64
    %s66 = sphi 0, %s64
    %s67 = sphi 0, %s66
    %s81 = sphi 0, %s67
    %s87 = sphi 0, %s89
    %s90 = sphi 0, %s87
    %s91 = sphi 0, %s90
    %s107 = sphi 0, %s91
  $region4: #{unet_forward.30} parent=0 // loop_header_branch
    %12 = sbr.rel (%p10) target = $region8
  $region5: #{unet_forward.30} parent=0 // loop_body
    %s14 = ssub.s32 %s9, 1
    %s15 = ssub.s32 %s9, 2
    %s16 = sadd.s32 %s9, 1
    %s17 = ssub.s32 %s9, %s16
    %p18 = scmp.eq.s32.totalorder %s17, 0
    %s20 = sadd.s32 %s19, 1
    %s21 = scalar_select %p18, %s19, %s20
    %p24 = pneg %p18
    %p25 = scmp.eq.s32.totalorder %s9, 1
    %p26 = por %p24, %p25
    %p27 = scmp.ne.s32.totalorder %s19, %s22
    %p28 = scmp.eq.s32.totalorder %s9, 0
    %p29 = por %p27, %p28
    %p30 = scmp.ne.s32.totalorder %s19, %s22
    %p31 = scmp.eq.s32.totalorder %s14, 1
    %p32 = por %p30, %p31
    %p33 = scmp.ne.s32.totalorder %s22, %s23
    %p34 = scmp.eq.s32.totalorder %s14, 0
    %p35 = por %p33, %p34
    %p36 = scmp.ne.s32.totalorder %s22, %s23
    %p37 = scmp.eq.s32.totalorder %s15, 1
    %p38 = por %p36, %p37
    %p40 = scmp.ne.s32.totalorder %s23, %s39
    %p41 = scmp.eq.s32.totalorder %s15, 0
    %p42 = por %p40, %p41
    %s44 = sadd.s32 %s43, 1
    %p47 = scmp.eq.s32.totalorder %s9, 1
    %p48 = scmp.ne.s32.totalorder %s43, %s45
    %p49 = scmp.eq.s32.totalorder %s9, 0
    %p50 = por %p48, %p49
    %p51 = scmp.ne.s32.totalorder %s43, %s45
    %p52 = scmp.eq.s32.totalorder %s14, 1
    %p53 = por %p51, %p52
    %p54 = scmp.ne.s32.totalorder %s45, %s46
    %p55 = scmp.eq.s32.totalorder %s14, 0
    %p56 = por %p54, %p55
    %p57 = scmp.ne.s32.totalorder %s45, %s46
    %p58 = scmp.eq.s32.totalorder %s15, 1
    %p59 = por %p57, %p58
    %p61 = scmp.ne.s32.totalorder %s46, %s60
    %p62 = scmp.eq.s32.totalorder %s15, 0
    %p63 = por %p61, %p62
    %s65 = sadd.s32 %s64, 1
    %p68 = scmp.eq.s32.totalorder %s9, 1
    %p69 = scmp.ne.s32.totalorder %s64, %s66
    %p70 = scmp.eq.s32.totalorder %s9, 0
    %p71 = por %p69, %p70
    %p72 = scmp.ne.s32.totalorder %s64, %s66
    %p73 = scmp.eq.s32.totalorder %s14, 1
    %p74 = por %p72, %p73
    %p75 = scmp.ne.s32.totalorder %s66, %s67
    %p76 = scmp.eq.s32.totalorder %s14, 0
    %p77 = por %p75, %p76
    %p78 = scmp.ne.s32.totalorder %s66, %s67
    %p79 = scmp.eq.s32.totalorder %s15, 1
    %p80 = por %p78, %p79
    %p82 = scmp.ne.s32.totalorder %s67, %s81
    %p83 = scmp.eq.s32.totalorder %s15, 0
    %p84 = por %p82, %p83
    %s85 = ssub.s32 %s9, %s16
    %p86 = scmp.eq.s32.totalorder %s85, 0
    %s88 = sadd.s32 %s87, 1
    %s89 = scalar_select %p86, %s87, %s88
    %p92 = pneg %p86
    %p93 = scmp.eq.s32.totalorder %s9, 1
    %p94 = por %p92, %p93
    %p95 = scmp.ne.s32.totalorder %s87, %s90
    %p96 = scmp.eq.s32.totalorder %s9, 0
    %p97 = por %p95, %p96
    %p98 = scmp.ne.s32.totalorder %s87, %s90
    %p99 = scmp.eq.s32.totalorder %s14, 1
    %p100 = por %p98, %p99
    %p101 = scmp.ne.s32.totalorder %s90, %s91
    %p102 = scmp.eq.s32.totalorder %s14, 0
    %p103 = por %p101, %p102
    %p104 = scmp.ne.s32.totalorder %s90, %s91
    %p105 = scmp.eq.s32.totalorder %s15, 1
    %p106 = por %p104, %p105
    %p108 = scmp.ne.s32.totalorder %s91, %s107
    %p109 = scmp.eq.s32.totalorder %s15, 0
    %p110 = por %p108, %p109
    %p111 = scmp.le.s32.totalorder 1, %s9
    %p112 = scmp.lt.s32.totalorder %s9, 3
    %p113 = pnand %p111, %p112
    %p114 = pneg %p113
    // Predicated region
    $region9: #{unet_forward.30} parent=5 // pred_check
      _
    $region10: #{unet_forward.30} parent=5 // pred_check_branch
      %116 = sbr.rel (%p113) target = $region12
    $region11: #{unet_forward.30} parent=5 // pred_region
      %s117 = ssub.s32 %s9, 1
      // Predicated region
      $region13: #{unet_forward.30} parent=11 // pred_check
        %p118 = pneg %p56
      $region14: #{unet_forward.30} parent=11 // pred_check_branch
        %120 = sbr.rel (%p118) target = $region16
      $region15: #{unet_forward.30} parent=11 // pred_region
        _
      $region16: #{unet_forward.30} parent=11 // pred_fallthru
        _
      // Predicated region
      $region17: #{unet_forward.30} parent=11 // pred_check
        %p121 = pneg %p77
      $region18: #{unet_forward.30} parent=11 // pred_check_branch
        %123 = sbr.rel (%p121) target = $region20
      $region19: #{unet_forward.30} parent=11 // pred_region
        _
      $region20: #{unet_forward.30} parent=11 // pred_fallthru
        _
    $region12: #{unet_forward.30} parent=5 // pred_fallthru
      _
    %p124 = scmp.lt.s32.totalorder %s9, 2
    // Predicated region
    $region21: #{unet_forward.30} parent=5 // pred_check
      %p125 = pneg %p124
    $region22: #{unet_forward.30} parent=5 // pred_check_branch
      %127 = sbr.rel (%p125) target = $region24
    $region23: #{unet_forward.30} parent=5 // pred_region
      // Predicated region
      $region25: #{unet_forward.30} parent=23 // pred_check
        %p128 = pneg %p29
      $region26: #{unet_forward.30} parent=23 // pred_check_branch
        %130 = sbr.rel (%p128) target = $region28
      $region27: #{unet_forward.30} parent=23 // pred_region
        %s131 = smul.u32 2, %s9
        %p132 = scmp.lt.s32.totalorder %s131, 3
        %s133 = scalar_select %p132, %s131, 3
        %s134 = smul.addr %s133, 3
        %s135 = smul.addr %s134, 4
        %s136 = scalar_lea.vmem %s0, %s135
        %s137 = smul.u32 2, %s9
      $region28: #{unet_forward.30} parent=23 // pred_fallthru
        _
    $region24: #{unet_forward.30} parent=5 // pred_fallthru
      _
    %p138 = scmp.le.s32.totalorder 1, %s9
    %p139 = scmp.lt.s32.totalorder %s9, 3
    %p140 = pnand %p138, %p139
    %p141 = pneg %p140
    // Predicated region
    $region29: #{unet_forward.30} parent=5 // pred_check
      _
    $region30: #{unet_forward.30} parent=5 // pred_check_branch
      %143 = sbr.rel (%p140) target = $region32
    $region31: #{unet_forward.30} parent=5 // pred_region
      %s144 = ssub.s32 %s9, 1
      %s145 = smul.u32 2, %s14
      %p146 = scmp.lt.s32.totalorder %s145, 3
      %s147 = scalar_select %p146, %s145, 3
      %s148 = smul.addr %s147, 3
      %s149 = smul.addr %s148, 4
      %s150 = scalar_lea.vmem %s0, %s149
      %p151 = pneg %p35
      %p152 = pneg %p32
      %p153 = pneg %p56
      %p154 = pneg %p53
      %p155 = pneg %p77
      %p156 = pneg %p74
      %p157 = pneg %p103
      %p158 = pneg %p100
      %s159 = smul.u32 2, %s14
      %p160 = scmp.lt.s32.totalorder %s159, 3
      %s161 = scalar_select %p160, %s159, 3
      %s162 = smul.addr %s161, 4
      %s163 = scalar_lea.vmem %s3, %s162
      %s164 = smul.u32 2, %s14
      %p165 = scmp.lt.s32.totalorder %s164, 3
      %s166 = scalar_select %p165, %s164, 3
      %s167 = smul.addr %s166, 3
      %s168 = smul.addr %s167, 4
      %s169 = scalar_lea.vmem %s0, %s168
      %s170 = smul.u32 2, %s14
      %s171 = smul.u32 2, %s14
      %p172 = scmp.lt.s32.totalorder %s171, 3
      %s173 = scalar_select %p172, %s171, 3
      %s174 = smul.addr %s173, 4
      %s175 = scalar_lea.vmem %s3, %s174
      %s176 = smul.u32 2, %s14
      %v177 = vld [vmem:[%s169] sm:$0xff]
      %v178 = vld [vmem:[%s169 + $0x8] sm:$0xf]
      %v179 = vld [vmem:[%s169 + $0xc] sm:$0xff]
      %v180 = vld [vmem:[%s169 + $0x14] sm:$0xf]
      %v181 = vld [vmem:[%s1] sm:$0xf]
      %v182 = vld [vmem:[%s1 + $0x4] sm:$0xf]
      %v183 = vld [vmem:[%s1 + $0x8] sm:$0xf]
      %v184 = vld [vmem:[%s1 + $0xc] sm:$0xf]
      %v185 = vld [vmem:[%s1 + $0x10] sm:$0xf]
      %v186 = vld [vmem:[%s1 + $0x14] sm:$0xf]
      %v187 = vld [vmem:[%s1 + $0x18] sm:$0xf]
      %v188 = vld [vmem:[%s1 + $0x1c] sm:$0xf]
      %v189 = vld [vmem:[%s1 + $0x20] sm:$0xf]
      %v190 = vld [vmem:[%s1 + $0x24] sm:$0xf]
      %v191 = vld [vmem:[%s1 + $0x28] sm:$0xf]
      %v192 = vld [vmem:[%s1 + $0x2c] sm:$0xf]
      %v193 = vld [vmem:[%s1 + $0x30] sm:$0xf]
      %v194 = vld [vmem:[%s1 + $0x34] sm:$0xf]
      %v195 = vld [vmem:[%s1 + $0x38] sm:$0xf]
      %v196 = vld [vmem:[%s1 + $0x3c] sm:$0xf]
      %v197 = vld [vmem:[%s1 + $0x40] sm:$0xf]
      %v198 = vld [vmem:[%s1 + $0x44] sm:$0xf]
      %v199 = vld [vmem:[%s1 + $0x48] sm:$0xf]
      %v200 = vld [vmem:[%s1 + $0x4c] sm:$0xf]
      %v201 = vld [vmem:[%s1 + $0x50] sm:$0xf]
      %v202 = vld [vmem:[%s1 + $0x54] sm:$0xf]
      %v203 = vld [vmem:[%s1 + $0x58] sm:$0xf]
      %v204 = vld [vmem:[%s1 + $0x5c] sm:$0xf]
      %v205 = vld [vmem:[%s1 + $0x60] sm:$0xf]
      %v206 = vld [vmem:[%s1 + $0x64] sm:$0xf]
      %v207 = vld [vmem:[%s1 + $0x68] sm:$0xf]
      %v208 = vld [vmem:[%s1 + $0x6c] sm:$0xf]
      %v209 = vld [vmem:[%s1 + $0x70] sm:$0xf]
      %v210 = vld [vmem:[%s1 + $0x74] sm:$0xf]
      %v211 = vld [vmem:[%s1 + $0x78] sm:$0xf]
      %v212 = vld [vmem:[%s1 + $0x7c] sm:$0xf]
      %v213 = vld [vmem:[%s1 + $0x80] sm:$0xf]
      %v214 = vld [vmem:[%s1 + $0x84] sm:$0xf]
      %v215 = vld [vmem:[%s1 + $0x88] sm:$0xf]
      %v216 = vld [vmem:[%s1 + $0x8c] sm:$0xf]
      %v217 = vld [vmem:[%s1 + $0x90] sm:$0xf]
      %v218 = vld [vmem:[%s1 + $0x94] sm:$0xf]
      %v219 = vld [vmem:[%s1 + $0x98] sm:$0xf]
      %v220 = vld [vmem:[%s1 + $0x9c] sm:$0xf]
      %v221 = vld [vmem:[%s1 + $0xa0] sm:$0xf]
      %v222 = vld [vmem:[%s1 + $0xa4] sm:$0xf]
      %v223 = vld [vmem:[%s1 + $0xa8] sm:$0xf]
      %v224 = vld [vmem:[%s1 + $0xac] sm:$0xf]
      %v225 = vld [vmem:[%s1 + $0xb0] sm:$0xf]
      %v226 = vld [vmem:[%s1 + $0xb4] sm:$0xf]
      %v227 = vld [vmem:[%s1 + $0xb8] sm:$0xf]
      %v228 = vld [vmem:[%s1 + $0xbc] sm:$0xf]
      %v229 = vld [vmem:[%s2] sm:$0x1]
      %v231 = vperm.slane %v229, 0
      %v237 = vunpack.c.l.b16 %v177
      %v238 = vunpack.c.h.b16 %v177
      %v239 = vunpack.c.l.b16 %v178
      %v240 = vunpack.c.l.b16 %v179
      %v241 = vunpack.c.h.b16 %v179
      %v242 = vunpack.c.l.b16 %v180
      %v243 = vpack.c.b16 %v240, %v237
      %v244 = vpack.c.b16 %v241, %v238
      %v245 = vpack.c.b16 %v242, %v239
      %v297 = vunpack.c.l.b16 %v181
      %v298 = vunpack.c.l.b16 %v182
      %v299 = vunpack.c.l.b16 %v183
      %v300 = vunpack.c.l.b16 %v184
      %v301 = vunpack.c.l.b16 %v185
      %v302 = vunpack.c.l.b16 %v186
      %v303 = vunpack.c.l.b16 %v187
      %v304 = vunpack.c.l.b16 %v188
      %v305 = vunpack.c.l.b16 %v189
      %v306 = vunpack.c.l.b16 %v190
      %v307 = vunpack.c.l.b16 %v191
      %v308 = vunpack.c.l.b16 %v192
      %v309 = vunpack.c.l.b16 %v193
      %v310 = vunpack.c.l.b16 %v194
      %v311 = vunpack.c.l.b16 %v195
      %v312 = vunpack.c.l.b16 %v196
      %v313 = vunpack.c.l.b16 %v197
      %v314 = vunpack.c.l.b16 %v198
      %v315 = vunpack.c.l.b16 %v199
      %v316 = vunpack.c.l.b16 %v200
      %v317 = vunpack.c.l.b16 %v201
      %v318 = vunpack.c.l.b16 %v202
      %v319 = vunpack.c.l.b16 %v203
      %v320 = vunpack.c.l.b16 %v204
      %v321 = vunpack.c.l.b16 %v205
      %v322 = vunpack.c.l.b16 %v206
      %v323 = vunpack.c.l.b16 %v207
      %v324 = vunpack.c.l.b16 %v208
      %v325 = vunpack.c.l.b16 %v209
      %v326 = vunpack.c.l.b16 %v210
      %v327 = vunpack.c.l.b16 %v211
      %v328 = vunpack.c.l.b16 %v212
      %v329 = vunpack.c.l.b16 %v213
      %v330 = vunpack.c.l.b16 %v214
      %v331 = vunpack.c.l.b16 %v215
      %v332 = vunpack.c.l.b16 %v216
      %v333 = vunpack.c.l.b16 %v217
      %v334 = vunpack.c.l.b16 %v218
      %v335 = vunpack.c.l.b16 %v219
      %v336 = vunpack.c.l.b16 %v220
      %v337 = vunpack.c.l.b16 %v221
      %v338 = vunpack.c.l.b16 %v222
      %v339 = vunpack.c.l.b16 %v223
      %v340 = vunpack.c.l.b16 %v224
      %v341 = vunpack.c.l.b16 %v225
      %v342 = vunpack.c.l.b16 %v226
      %v343 = vunpack.c.l.b16 %v227
      %v344 = vunpack.c.l.b16 %v228
      %v345 = vpack.c.b16 %v298, %v297
      %v346 = vpack.c.b16 %v300, %v299
      %v347 = vpack.c.b16 %v302, %v301
      %v348 = vpack.c.b16 %v304, %v303
      %v349 = vpack.c.b16 %v306, %v305
      %v350 = vpack.c.b16 %v308, %v307
      %v351 = vpack.c.b16 %v310, %v309
      %v352 = vpack.c.b16 %v312, %v311
      %v353 = vpack.c.b16 %v314, %v313
      %v354 = vpack.c.b16 %v316, %v315
      %v355 = vpack.c.b16 %v318, %v317
      %v356 = vpack.c.b16 %v320, %v319
      %v357 = vpack.c.b16 %v322, %v321
      %v358 = vpack.c.b16 %v324, %v323
      %v359 = vpack.c.b16 %v326, %v325
      %v360 = vpack.c.b16 %v328, %v327
      %v361 = vpack.c.b16 %v330, %v329
      %v362 = vpack.c.b16 %v332, %v331
      %v363 = vpack.c.b16 %v334, %v333
      %v364 = vpack.c.b16 %v336, %v335
      %v365 = vpack.c.b16 %v338, %v337
      %v366 = vpack.c.b16 %v340, %v339
      %v367 = vpack.c.b16 %v342, %v341
      %v368 = vpack.c.b16 %v344, %v343
      %393 = vmatpush.bf16.msra.mxu0 %v352
      %394 = vmatpush.bf16.msra.mxu0 %v351
      %395 = vmatpush.bf16.msra.mxu0 %v350
      %396 = vmatpush.bf16.msra.mxu0 %v349
      %397 = vmatpush.bf16.msra.mxu0 %v348
      %398 = vmatpush.bf16.msra.mxu0 %v347
      %399 = vmatpush.bf16.msra.mxu0 %v346
      %400 = vmatpush.bf16.msra.mxu0 %v345
      %401 = vmatmul.bf16.gmra.mxu0 %v243
      %v402 = vpop.f32.mrf.mxu0
      %v403 = vadd.f32 %v231, %v402
      %v404 = vpop.f32.mrf.mxu0
      %v405 = vadd.f32 %v231, %v404
      %406 = vdwg.mxu0
      %407 = vmatpush.bf16.msra.mxu0 %v360
      %408 = vmatpush.bf16.msra.mxu0 %v359
      %409 = vmatpush.bf16.msra.mxu0 %v358
      %410 = vmatpush.bf16.msra.mxu0 %v357
      %411 = vmatpush.bf16.msra.mxu0 %v356
      %412 = vmatpush.bf16.msra.mxu0 %v355
      %413 = vmatpush.bf16.msra.mxu0 %v354
      %414 = vmatpush.bf16.msra.mxu0 %v353
      %415 = vmatmul.bf16.gmra.mxu0 %v244
      %v416 = vpop.f32.mrf.mxu0
      %v417 = vadd.f32 %v403, %v416
      %v418 = vpop.f32.mrf.mxu0
      %v419 = vadd.f32 %v405, %v418
      %420 = vdwg.mxu0
      %421 = vmatpush.bf16.msra.mxu0 %v368
      %422 = vmatpush.bf16.msra.mxu0 %v367
      %423 = vmatpush.bf16.msra.mxu0 %v366
      %424 = vmatpush.bf16.msra.mxu0 %v365
      %425 = vmatpush.bf16.msra.mxu0 %v364
      %426 = vmatpush.bf16.msra.mxu0 %v363
      %427 = vmatpush.bf16.msra.mxu0 %v362
      %428 = vmatpush.bf16.msra.mxu0 %v361
      %429 = vmatmul.bf16.gmra.mxu0 %v245
      %v430 = vpop.f32.mrf.mxu0
      %v431 = vadd.f32 %v417, %v430
      %v432 = vpop.f32.mrf.mxu0
      %v433 = vadd.f32 %v419, %v432
      %434 = vdwg.mxu0
      %v435 = vmax.f32 %v431, 0.0
      %v436 = vmax.f32 %v433, 0.0
      %v437 = vpack.c.bf16 %v435, %v435
      %v438 = vpack.c.bf16 %v436, %v436
      %439 = vst [vmem:[%s175] sm:$0xf] %v437
      %440 = vst [vmem:[%s175 + $0x4] sm:$0xf] %v438
      %s441 = smul.u32 2, %s14
      %p442 = scmp.lt.s32.totalorder %s441, 3
      %s443 = scalar_select %p442, %s441, 3
      %s444 = smul.addr %s443, 4
      %s445 = scalar_lea.vmem %s3, %s444
      // Predicated region
      $region33: #{unet_forward.30} parent=31 // pred_check
        %p446 = pneg %p100
      $region34: #{unet_forward.30} parent=31 // pred_check_branch
        %448 = sbr.rel (%p446) target = $region36
      $region35: #{unet_forward.30} parent=31 // pred_region
        %s449 = smul.u32 2, %s14
      $region36: #{unet_forward.30} parent=31 // pred_fallthru
        _
    $region32: #{unet_forward.30} parent=5 // pred_fallthru
      _
    %p450 = scmp.le.s32.totalorder 2, %s9
    // Predicated region
    $region37: #{unet_forward.30} parent=5 // pred_check
      %p451 = pneg %p450
    $region38: #{unet_forward.30} parent=5 // pred_check_branch
      %453 = sbr.rel (%p451) target = $region40
    $region39: #{unet_forward.30} parent=5 // pred_region
      %s454 = ssub.s32 %s9, 2
      // Predicated region
      $region41: #{unet_forward.30} parent=39 // pred_check
        %p455 = pneg %p106
      $region42: #{unet_forward.30} parent=39 // pred_check_branch
        %457 = sbr.rel (%p455) target = $region44
      $region43: #{unet_forward.30} parent=39 // pred_region
        %s458 = smul.u32 2, %s15
        %p459 = scmp.lt.s32.totalorder %s458, 3
        %s460 = scalar_select %p459, %s458, 3
        %s461 = smul.addr %s460, 4
        %s462 = scalar_lea.vmem %s3, %s461
      $region44: #{unet_forward.30} parent=39 // pred_fallthru
        _
    $region40: #{unet_forward.30} parent=5 // pred_fallthru
      _
  $region6: #{unet_forward.30} parent=0 // loop_footer
    %s13 = sadd.s32 1, %s9
  $region7: #{unet_forward.30} parent=0 // loop_footer_branch
    %8 = sbr.rel target = $region3
  $region8: #{unet_forward.30} parent=0 // loop_exit
    _

// kernel: tile.38
$region0: #{tile.38}
  #allocation0 [shape = 's32[1]{0}', space=sflag, size = 0x4, scoped, tag = 'scoped memory for tile.38']
  %s0 = inlined_call_operand.vmem [shape: f32[16], index: 0, kind: input, shape index: {}]
  %s1 = inlined_call_operand.vmem [shape: f32[4,16], index: 1, kind: output, shape index: {}]
  // Predicated region
  $region2: #{tile.38} parent=0 // pred_check
    _
  $region3: #{tile.38} parent=0 // pred_check_branch
    %3 = sbr.rel (0) target = $region5
  $region4: #{tile.38} parent=0 // pred_region
    _
  $region5: #{tile.38} parent=0 // pred_fallthru
    _
  %v4 = vld [vmem:[%s0] ss:$0 sm:$0xff]
  %5 = vst [vmem:[%s1] sm:$0xf] %v4

// kernel: tile.39
$region0: #{tile.39}
  %s0 = inlined_call_operand.vmem [shape: f32[4,16], index: 0, kind: input, shape index: {}]
  %s1 = inlined_call_operand.vmem [shape: f32[64], index: 1, kind: output, shape index: {}]
  $region1: #{tile.39} parent=0
    #allocation0 [shape = 'u8[4096]{0}', space=vmem, size = 0x1000, scoped, tag = 'scoped mem for output reshape']
    #allocation1 [shape = 'u8[4096]{0}', space=vmem, size = 0x1000, scoped, tag = 'scoped mem for input reshape']
    %s3 = ssub.s32 16, 1
    %v4 = vld [vmem:[%s0] sm:%s3]
    %5 = vst [vmem:[#allocation1] sm:%s3] %v4
    %v6 = vld [vmem:[#allocation1] sm:$0x1]
    %vm7 = vcmask 130048
    %8 = vst.msk [vmem:[#allocation0] sm:$0x1] %vm7, %v6
    %s9 = scalar_lea.vmem [#allocation1], 3
    %v10 = vld [vmem:[%s9] sm:$0x1]
    %11 = vrot.lane.b32.xlu0 %v10, 48
    %v12 = vpop.permute.xlu0 %11
    %vm13 = vcmask 523648
    %14 = vst.msk [vmem:[#allocation0] sm:$0x1] %vm13, %v12
    %s15 = scalar_lea.vmem [#allocation1], 2
    %v16 = vld [vmem:[%s15] sm:$0x1]
    %17 = vrot.lane.b32.xlu0 %v16, 32
    %v18 = vpop.permute.xlu0 %17
    %vm19 = vcmask 392448
    %20 = vst.msk [vmem:[#allocation0] sm:$0x1] %vm19, %v18
    %s21 = scalar_lea.vmem [#allocation1], 1
    %v22 = vld [vmem:[%s21] sm:$0x1]
    %23 = vrot.lane.b32.xlu0 %v22, 16
    %v24 = vpop.permute.xlu0 %23
    %vm25 = vcmask 261248
    %26 = vst.msk [vmem:[#allocation0] sm:$0x1] %vm25, %v24
    %s28 = ssub.s32 2, 1
    %v29 = vld [vmem:[#allocation0] sm:%s28]
    %s31 = ssub.s32 2, 1
    %32 = vst [vmem:[%s1] sm:%s31] %v29

// kernel: unet_forward.31
$region0: #{unet_forward.31}
  #allocation0 [shape = 'u32[]', space=smem, size = 0x4, offset = 0x4, fixed_abs, tag = 'smem constant byte address 0x4 - core index']
  #allocation1 [shape = 'u32[72,128]{1,0:T(1,128)}', space=vmem, size = 0x9000, scoped, tag = 'internal scratch']
  %s0 = inlined_call_operand.vmem [shape: bf16[128,192], index: 0, kind: input, shape index: {}]
  %s1 = inlined_call_operand.vmem [shape: bf16[192,128], index: 1, kind: input, shape index: {}]
  %s2 = inlined_call_operand.vmem [shape: f32[1,128], index: 2, kind: input, shape index: {}]
  %s3 = inlined_call_operand.vmem [shape: bf16[128,128], index: 3, kind: output, shape index: {}]
  %s4 = sld [smem:[#allocation0]]
  $region45: #{unet_forward.31} parent=0
    _
  %s6 = ssub.s32 1, %s4
  %s7 = scalar_select 0, %s6, %s4
  loop: start=0, step=1, limit=4
  $region2: #{unet_forward.31} parent=0 // loop_pre_header
    _
  $region3: #{unet_forward.31} parent=0 // loop_header
    %s9 = sphi 0, %s13
    %p10 = scmp.ge.s32.totalorder %s9, 4
    %s19 = sphi 0, %s21
    %s22 = sphi 0, %s19
    %s23 = sphi 0, %s22
    %s39 = sphi 0, %s23
    %s43 = sphi 0, %s43
    %s45 = sphi 0, %s43
    %s46 = sphi 0, %s45
    %s60 = sphi 0, %s46
    %s64 = sphi 0, %s64
    %s66 = sphi 0, %s64
    %s67 = sphi 0, %s66
    %s81 = sphi 0, %s67
    %s87 = sphi 0, %s89
    %s90 = sphi 0, %s87
    %s91 = sphi 0, %s90
    %s107 = sphi 0, %s91
  $region4: #{unet_forward.31} parent=0 // loop_header_branch
    %12 = sbr.rel (%p10) target = $region8
  $region5: #{unet_forward.31} parent=0 // loop_body
    %s14 = ssub.s32 %s9, 1
    %s15 = ssub.s32 %s9, 2
    %s16 = sadd.s32 %s9, 1
    %s17 = ssub.s32 %s9, %s16
    %p18 = scmp.eq.s32.totalorder %s17, 0
    %s20 = sadd.s32 %s19, 1
    %s21 = scalar_select %p18, %s19, %s20
    %p24 = pneg %p18
    %p25 = scmp.eq.s32.totalorder %s9, 1
    %p26 = por %p24, %p25
    %p27 = scmp.ne.s32.totalorder %s19, %s22
    %p28 = scmp.eq.s32.totalorder %s9, 0
    %p29 = por %p27, %p28
    %p30 = scmp.ne.s32.totalorder %s19, %s22
    %p31 = scmp.eq.s32.totalorder %s14, 1
    %p32 = por %p30, %p31
    %p33 = scmp.ne.s32.totalorder %s22, %s23
    %p34 = scmp.eq.s32.totalorder %s14, 0
    %p35 = por %p33, %p34
    %p36 = scmp.ne.s32.totalorder %s22, %s23
    %p37 = scmp.eq.s32.totalorder %s15, 1
    %p38 = por %p36, %p37
    %p40 = scmp.ne.s32.totalorder %s23, %s39
    %p41 = scmp.eq.s32.totalorder %s15, 0
    %p42 = por %p40, %p41
    %s44 = sadd.s32 %s43, 1
    %p47 = scmp.eq.s32.totalorder %s9, 1
    %p48 = scmp.ne.s32.totalorder %s43, %s45
    %p49 = scmp.eq.s32.totalorder %s9, 0
    %p50 = por %p48, %p49
    %p51 = scmp.ne.s32.totalorder %s43, %s45
    %p52 = scmp.eq.s32.totalorder %s14, 1
    %p53 = por %p51, %p52
    %p54 = scmp.ne.s32.totalorder %s45, %s46
    %p55 = scmp.eq.s32.totalorder %s14, 0
    %p56 = por %p54, %p55
    %p57 = scmp.ne.s32.totalorder %s45, %s46
    %p58 = scmp.eq.s32.totalorder %s15, 1
    %p59 = por %p57, %p58
    %p61 = scmp.ne.s32.totalorder %s46, %s60
    %p62 = scmp.eq.s32.totalorder %s15, 0
    %p63 = por %p61, %p62
    %s65 = sadd.s32 %s64, 1
    %p68 = scmp.eq.s32.totalorder %s9, 1
    %p69 = scmp.ne.s32.totalorder %s64, %s66
    %p70 = scmp.eq.s32.totalorder %s9, 0
    %p71 = por %p69, %p70
    %p72 = scmp.ne.s32.totalorder %s64, %s66
    %p73 = scmp.eq.s32.totalorder %s14, 1
    %p74 = por %p72, %p73
    %p75 = scmp.ne.s32.totalorder %s66, %s67
    %p76 = scmp.eq.s32.totalorder %s14, 0
    %p77 = por %p75, %p76
    %p78 = scmp.ne.s32.totalorder %s66, %s67
    %p79 = scmp.eq.s32.totalorder %s15, 1
    %p80 = por %p78, %p79
    %p82 = scmp.ne.s32.totalorder %s67, %s81
    %p83 = scmp.eq.s32.totalorder %s15, 0
    %p84 = por %p82, %p83
    %s85 = ssub.s32 %s9, %s16
    %p86 = scmp.eq.s32.totalorder %s85, 0
    %s88 = sadd.s32 %s87, 1
    %s89 = scalar_select %p86, %s87, %s88
    %p92 = pneg %p86
    %p93 = scmp.eq.s32.totalorder %s9, 1
    %p94 = por %p92, %p93
    %p95 = scmp.ne.s32.totalorder %s87, %s90
    %p96 = scmp.eq.s32.totalorder %s9, 0
    %p97 = por %p95, %p96
    %p98 = scmp.ne.s32.totalorder %s87, %s90
    %p99 = scmp.eq.s32.totalorder %s14, 1
    %p100 = por %p98, %p99
    %p101 = scmp.ne.s32.totalorder %s90, %s91
    %p102 = scmp.eq.s32.totalorder %s14, 0
    %p103 = por %p101, %p102
    %p104 = scmp.ne.s32.totalorder %s90, %s91
    %p105 = scmp.eq.s32.totalorder %s15, 1
    %p106 = por %p104, %p105
    %p108 = scmp.ne.s32.totalorder %s91, %s107
    %p109 = scmp.eq.s32.totalorder %s15, 0
    %p110 = por %p108, %p109
    %p111 = scmp.le.s32.totalorder 1, %s9
    %p112 = scmp.lt.s32.totalorder %s9, 3
    %p113 = pnand %p111, %p112
    %p114 = pneg %p113
    // Predicated region
    $region9: #{unet_forward.31} parent=5 // pred_check
      _
    $region10: #{unet_forward.31} parent=5 // pred_check_branch
      %116 = sbr.rel (%p113) target = $region12
    $region11: #{unet_forward.31} parent=5 // pred_region
      %s117 = ssub.s32 %s9, 1
      // Predicated region
      $region13: #{unet_forward.31} parent=11 // pred_check
        %p118 = pneg %p56
      $region14: #{unet_forward.31} parent=11 // pred_check_branch
        %120 = sbr.rel (%p118) target = $region16
      $region15: #{unet_forward.31} parent=11 // pred_region
        _
      $region16: #{unet_forward.31} parent=11 // pred_fallthru
        _
      // Predicated region
      $region17: #{unet_forward.31} parent=11 // pred_check
        %p121 = pneg %p77
      $region18: #{unet_forward.31} parent=11 // pred_check_branch
        %123 = sbr.rel (%p121) target = $region20
      $region19: #{unet_forward.31} parent=11 // pred_region
        _
      $region20: #{unet_forward.31} parent=11 // pred_fallthru
        _
    $region12: #{unet_forward.31} parent=5 // pred_fallthru
      _
    %p124 = scmp.lt.s32.totalorder %s9, 2
    // Predicated region
    $region21: #{unet_forward.31} parent=5 // pred_check
      %p125 = pneg %p124
    $region22: #{unet_forward.31} parent=5 // pred_check_branch
      %127 = sbr.rel (%p125) target = $region24
    $region23: #{unet_forward.31} parent=5 // pred_region
      // Predicated region
      $region25: #{unet_forward.31} parent=23 // pred_check
        %p128 = pneg %p29
      $region26: #{unet_forward.31} parent=23 // pred_check_branch
        %130 = sbr.rel (%p128) target = $region28
      $region27: #{unet_forward.31} parent=23 // pred_region
        %s131 = smul.u32 8, %s9
        %p132 = scmp.lt.s32.totalorder %s131, 15
        %s133 = scalar_select %p132, %s131, 15
        %s134 = smul.addr %s133, 2
        %s135 = smul.addr %s134, 4
        %s136 = scalar_lea.vmem %s0, %s135
        %s137 = smul.u32 8, %s9
      $region28: #{unet_forward.31} parent=23 // pred_fallthru
        _
    $region24: #{unet_forward.31} parent=5 // pred_fallthru
      _
    %p138 = scmp.le.s32.totalorder 1, %s9
    %p139 = scmp.lt.s32.totalorder %s9, 3
    %p140 = pnand %p138, %p139
    %p141 = pneg %p140
    // Predicated region
    $region29: #{unet_forward.31} parent=5 // pred_check
      _
    $region30: #{unet_forward.31} parent=5 // pred_check_branch
      %143 = sbr.rel (%p140) target = $region32
    $region31: #{unet_forward.31} parent=5 // pred_region
      %s144 = ssub.s32 %s9, 1
      %s145 = smul.u32 8, %s14
      %p146 = scmp.lt.s32.totalorder %s145, 15
      %s147 = scalar_select %p146, %s145, 15
      %s148 = smul.addr %s147, 2
      %s149 = smul.addr %s148, 4
      %s150 = scalar_lea.vmem %s0, %s149
      %p151 = pneg %p35
      %p152 = pneg %p32
      %p153 = pneg %p56
      %p154 = pneg %p53
      %p155 = pneg %p77
      %p156 = pneg %p74
      %p157 = pneg %p103
      %p158 = pneg %p100
      %s159 = smul.u32 8, %s14
      %p160 = scmp.lt.s32.totalorder %s159, 15
      %s161 = scalar_select %p160, %s159, 15
      %s162 = smul.addr %s161, 4
      %s163 = scalar_lea.vmem %s3, %s162
      %s164 = smul.u32 8, %s14
      %p165 = scmp.lt.s32.totalorder %s164, 15
      %s166 = scalar_select %p165, %s164, 15
      %s167 = smul.addr %s166, 2
      %s168 = smul.addr %s167, 4
      %s169 = scalar_lea.vmem %s0, %s168
      %s170 = smul.u32 8, %s14
      %s171 = smul.u32 8, %s14
      %p172 = scmp.lt.s32.totalorder %s171, 15
      %s173 = scalar_select %p172, %s171, 15
      %s174 = smul.addr %s173, 4
      %s175 = scalar_lea.vmem %s3, %s174
      %s176 = smul.u32 8, %s14
      %v178 = vld [vmem:[%s169] sm:$0xff]
      %v179 = vld [vmem:[%s169 + $0x8] sm:$0xff]
      %v180 = vld [vmem:[%s169 + $0x10] sm:$0xff]
      %v181 = vld [vmem:[%s169 + $0x18] sm:$0xff]
      %v182 = vld [vmem:[%s169 + $0x20] sm:$0xff]
      %v183 = vld [vmem:[%s169 + $0x28] sm:$0xff]
      %v184 = vld [vmem:[%s169 + $0x30] sm:$0xff]
      %v185 = vld [vmem:[%s169 + $0x38] sm:$0xff]
      %v186 = vld [vmem:[%s1] sm:$0xf]
      %v187 = vld [vmem:[%s1 + $0x4] sm:$0xf]
      %v188 = vld [vmem:[%s1 + $0x8] sm:$0xf]
      %v189 = vld [vmem:[%s1 + $0xc] sm:$0xf]
      %v190 = vld [vmem:[%s1 + $0x10] sm:$0xf]
      %v191 = vld [vmem:[%s1 + $0x14] sm:$0xf]
      %v192 = vld [vmem:[%s1 + $0x18] sm:$0xf]
      %v193 = vld [vmem:[%s1 + $0x1c] sm:$0xf]
      %v194 = vld [vmem:[%s1 + $0x20] sm:$0xf]
      %v195 = vld [vmem:[%s1 + $0x24] sm:$0xf]
      %v196 = vld [vmem:[%s1 + $0x28] sm:$0xf]
      %v197 = vld [vmem:[%s1 + $0x2c] sm:$0xf]
      %v198 = vld [vmem:[%s1 + $0x30] sm:$0xf]
      %v199 = vld [vmem:[%s1 + $0x34] sm:$0xf]
      %v200 = vld [vmem:[%s1 + $0x38] sm:$0xf]
      %v201 = vld [vmem:[%s1 + $0x3c] sm:$0xf]
      %v202 = vld [vmem:[%s1 + $0x40] sm:$0xf]
      %v203 = vld [vmem:[%s1 + $0x44] sm:$0xf]
      %v204 = vld [vmem:[%s1 + $0x48] sm:$0xf]
      %v205 = vld [vmem:[%s1 + $0x4c] sm:$0xf]
      %v206 = vld [vmem:[%s1 + $0x50] sm:$0xf]
      %v207 = vld [vmem:[%s1 + $0x54] sm:$0xf]
      %v208 = vld [vmem:[%s1 + $0x58] sm:$0xf]
      %v209 = vld [vmem:[%s1 + $0x5c] sm:$0xf]
      %v210 = vld [vmem:[%s2] sm:$0x1]
      %v212 = vperm.slane %v210, 0
      %v222 = vunpack.c.l.b16 %v178
      %v223 = vunpack.c.h.b16 %v178
      %v224 = vunpack.c.l.b16 %v179
      %v225 = vunpack.c.h.b16 %v179
      %v226 = vunpack.c.l.b16 %v180
      %v227 = vunpack.c.h.b16 %v180
      %v228 = vunpack.c.l.b16 %v181
      %v229 = vunpack.c.h.b16 %v181
      %v230 = vunpack.c.l.b16 %v182
      %v231 = vunpack.c.h.b16 %v182
      %v232 = vunpack.c.l.b16 %v183
      %v233 = vunpack.c.h.b16 %v183
      %v234 = vunpack.c.l.b16 %v184
      %v235 = vunpack.c.h.b16 %v184
      %v236 = vunpack.c.l.b16 %v185
      %v237 = vunpack.c.h.b16 %v185
      %v238 = vpack.c.b16 %v224, %v222
      %v239 = vpack.c.b16 %v225, %v223
      %v240 = vpack.c.b16 %v228, %v226
      %v241 = vpack.c.b16 %v229, %v227
      %v242 = vpack.c.b16 %v232, %v230
      %v243 = vpack.c.b16 %v233, %v231
      %v244 = vpack.c.b16 %v236, %v234
      %v245 = vpack.c.b16 %v237, %v235
      %v274 = vunpack.c.l.b16 %v186
      %v275 = vunpack.c.l.b16 %v187
      %v276 = vunpack.c.l.b16 %v188
      %v277 = vunpack.c.l.b16 %v189
      %v278 = vunpack.c.l.b16 %v190
      %v279 = vunpack.c.l.b16 %v191
      %v280 = vunpack.c.l.b16 %v192
      %v281 = vunpack.c.l.b16 %v193
      %v282 = vunpack.c.l.b16 %v194
      %v283 = vunpack.c.l.b16 %v195
      %v284 = vunpack.c.l.b16 %v196
      %v285 = vunpack.c.l.b16 %v197
      %v286 = vunpack.c.l.b16 %v198
      %v287 = vunpack.c.l.b16 %v199
      %v288 = vunpack.c.l.b16 %v200
      %v289 = vunpack.c.l.b16 %v201
      %v290 = vunpack.c.l.b16 %v202
      %v291 = vunpack.c.l.b16 %v203
      %v292 = vunpack.c.l.b16 %v204
      %v293 = vunpack.c.l.b16 %v205
      %v294 = vunpack.c.l.b16 %v206
      %v295 = vunpack.c.l.b16 %v207
      %v296 = vunpack.c.l.b16 %v208
      %v297 = vunpack.c.l.b16 %v209
      %v298 = vpack.c.b16 %v275, %v274
      %v299 = vpack.c.b16 %v277, %v276
      %v300 = vpack.c.b16 %v279, %v278
      %v301 = vpack.c.b16 %v281, %v280
      %v302 = vpack.c.b16 %v283, %v282
      %v303 = vpack.c.b16 %v285, %v284
      %v304 = vpack.c.b16 %v287, %v286
      %v305 = vpack.c.b16 %v289, %v288
      %v306 = vpack.c.b16 %v291, %v290
      %v307 = vpack.c.b16 %v293, %v292
      %v308 = vpack.c.b16 %v295, %v294
      %v309 = vpack.c.b16 %v297, %v296
      %vm322 = vcmask 523264
      %v324 = vsel %vm322, %v239, 0
      %v327 = vsel %vm322, %v241, 0
      %v330 = vsel %vm322, %v243, 0
      %v333 = vsel %vm322, %v245, 0
      %335 = vmatpush.bf16.msra.mxu0 %v305
      %336 = vmatpush.bf16.msra.mxu0 %v304
      %337 = vmatpush.bf16.msra.mxu0 %v303
      %338 = vmatpush.bf16.msra.mxu0 %v302
      %339 = vmatpush.bf16.msra.mxu0 %v301
      %340 = vmatpush.bf16.msra.mxu0 %v300
      %341 = vmatpush.bf16.msra.mxu0 %v299
      %342 = vmatpush.bf16.msra.mxu0 %v298
      %343 = vmatmul.bf16.gmra.mxu0 %v238
      %v344 = vpop.f32.mrf.mxu0
      %v345 = vadd.f32 %v212, %v344
      %v346 = vpop.f32.mrf.mxu0
      %v347 = vadd.f32 %v212, %v346
      %348 = vmatmul.bf16.gmra.mxu0 %v240
      %v349 = vpop.f32.mrf.mxu0
      %v350 = vadd.f32 %v212, %v349
      %v351 = vpop.f32.mrf.mxu0
      %v352 = vadd.f32 %v212, %v351
      %353 = vmatmul.bf16.gmra.mxu0 %v242
      %v354 = vpop.f32.mrf.mxu0
      %v355 = vadd.f32 %v212, %v354
      %v356 = vpop.f32.mrf.mxu0
      %v357 = vadd.f32 %v212, %v356
      %358 = vmatmul.bf16.gmra.mxu0 %v244
      %v359 = vpop.f32.mrf.mxu0
      %v360 = vadd.f32 %v212, %v359
      %v361 = vpop.f32.mrf.mxu0
      %v362 = vadd.f32 %v212, %v361
      %363 = vdwg.mxu0
      %364 = vmatpush.bf16.msra.mxu0 0
      %365 = vmatpush.bf16.msra.mxu0 0
      %366 = vmatpush.bf16.msra.mxu0 0
      %367 = vmatpush.bf16.msra.mxu0 0
      %368 = vmatpush.bf16.msra.mxu0 %v309
      %369 = vmatpush.bf16.msra.mxu0 %v308
      %370 = vmatpush.bf16.msra.mxu0 %v307
      %371 = vmatpush.bf16.msra.mxu0 %v306
      %372 = vmatmul.bf16.gmra.mxu0 %v324
      %v373 = vpop.f32.mrf.mxu0
      %v374 = vadd.f32 %v345, %v373
      %v375 = vpop.f32.mrf.mxu0
      %v376 = vadd.f32 %v347, %v375
      %377 = vmatmul.bf16.gmra.mxu0 %v327
      %v378 = vpop.f32.mrf.mxu0
      %v379 = vadd.f32 %v350, %v378
      %v380 = vpop.f32.mrf.mxu0
      %v381 = vadd.f32 %v352, %v380
      %382 = vmatmul.bf16.gmra.mxu0 %v330
      %v383 = vpop.f32.mrf.mxu0
      %v384 = vadd.f32 %v355, %v383
      %v385 = vpop.f32.mrf.mxu0
      %v386 = vadd.f32 %v357, %v385
      %387 = vmatmul.bf16.gmra.mxu0 %v333
      %v388 = vpop.f32.mrf.mxu0
      %v389 = vadd.f32 %v360, %v388
      %v390 = vpop.f32.mrf.mxu0
      %v391 = vadd.f32 %v362, %v390
      %392 = vdwg.mxu0
      %v393 = vmax.f32 %v374, 0.0
      %v394 = vmax.f32 %v376, 0.0
      %v395 = vmax.f32 %v379, 0.0
      %v396 = vmax.f32 %v381, 0.0
      %v397 = vmax.f32 %v384, 0.0
      %v398 = vmax.f32 %v386, 0.0
      %v399 = vmax.f32 %v389, 0.0
      %v400 = vmax.f32 %v391, 0.0
      %v401 = vpack.c.bf16 %v393, %v393
      %v402 = vpack.c.bf16 %v394, %v394
      %v403 = vpack.c.bf16 %v395, %v395
      %v404 = vpack.c.bf16 %v396, %v396
      %v405 = vpack.c.bf16 %v397, %v397
      %v406 = vpack.c.bf16 %v398, %v398
      %v407 = vpack.c.bf16 %v399, %v399
      %v408 = vpack.c.bf16 %v400, %v400
      %409 = vst [vmem:[%s175] sm:$0xf] %v401
      %410 = vst [vmem:[%s175 + $0x4] sm:$0xf] %v402
      %411 = vst [vmem:[%s175 + $0x8] sm:$0xf] %v403
      %412 = vst [vmem:[%s175 + $0xc] sm:$0xf] %v404
      %413 = vst [vmem:[%s175 + $0x10] sm:$0xf] %v405
      %414 = vst [vmem:[%s175 + $0x14] sm:$0xf] %v406
      %415 = vst [vmem:[%s175 + $0x18] sm:$0xf] %v407
      %416 = vst [vmem:[%s175 + $0x1c] sm:$0xf] %v408
      %s417 = smul.u32 8, %s14
      %p418 = scmp.lt.s32.totalorder %s417, 15
      %s419 = scalar_select %p418, %s417, 15
      %s420 = smul.addr %s419, 4
      %s421 = scalar_lea.vmem %s3, %s420
      // Predicated region
      $region33: #{unet_forward.31} parent=31 // pred_check
        %p422 = pneg %p100
      $region34: #{unet_forward.31} parent=31 // pred_check_branch
        %424 = sbr.rel (%p422) target = $region36
      $region35: #{unet_forward.31} parent=31 // pred_region
        %s425 = smul.u32 8, %s14
      $region36: #{unet_forward.31} parent=31 // pred_fallthru
        _
    $region32: #{unet_forward.31} parent=5 // pred_fallthru
      _
    %p426 = scmp.le.s32.totalorder 2, %s9
    // Predicated region
    $region37: #{unet_forward.31} parent=5 // pred_check
      %p427 = pneg %p426
    $region38: #{unet_forward.31} parent=5 // pred_check_branch
      %429 = sbr.rel (%p427) target = $region40
    $region39: #{unet_forward.31} parent=5 // pred_region
      %s430 = ssub.s32 %s9, 2
      // Predicated region
      $region41: #{unet_forward.31} parent=39 // pred_check
        %p431 = pneg %p106
      $region42: #{unet_forward.31} parent=39 // pred_check_branch
        %433 = sbr.rel (%p431) target = $region44
      $region43: #{unet_forward.31} parent=39 // pred_region
        %s434 = smul.u32 8, %s15
        %p435 = scmp.lt.s32.totalorder %s434, 15
        %s436 = scalar_select %p435, %s434, 15
        %s437 = smul.addr %s436, 4
        %s438 = scalar_lea.vmem %s3, %s437
      $region44: #{unet_forward.31} parent=39 // pred_fallthru
        _
    $region40: #{unet_forward.31} parent=5 // pred_fallthru
      _
  $region6: #{unet_forward.31} parent=0 // loop_footer
    %s13 = sadd.s32 1, %s9
  $region7: #{unet_forward.31} parent=0 // loop_footer_branch
    %8 = sbr.rel target = $region3
  $region8: #{unet_forward.31} parent=0 // loop_exit
    _

</llo_original>
